<compile_context>
chip_gen: v6e
topology: v6e:2x2x1
jax: 0.10.0
libtpu: 0.0.40
codegen_flags: <defaults>
</compile_context>

<pallas_src>
import functools

import jax
import jax.numpy as jnp
from jax import lax
from jax.experimental import pallas as pl
from jax.experimental.pallas import tpu as pltpu

_BN_EPS = 1e-5
_LANES = 128


def _round_up(x, m):
    return (x + m - 1) // m * m


# ---------------------------------------------------------------------------
# Kernels
# ---------------------------------------------------------------------------

def _conv3x3_stats_kernel(xw_ref, w_ref, y_ref, stats_ref):
    """3x3 'SAME' conv on one row tile + per-tile BN partial statistics.

    xw_ref    : (N, th+2, W+2, Cin)  bf16  zero-padded input row window (halo)
    w_ref     : (9, Cin, Cp)         bf16  per-tap weights, Cout padded to Cp
    y_ref     : (N, th, W, Cp)             pre-BN conv output tile
    stats_ref : (1, 2, Cp)           f32   [sum, sum-of-squares] over this tile
    """
    n, thp, wp, cin = xw_ref.shape
    th, w_out = thp - 2, wp - 2
    cp = w_ref.shape[-1]
    m = n * th * w_out

    acc = jnp.zeros((m, cp), jnp.float32)
    for tap in range(9):                       # static unroll: 9 shifted matmuls
        dy, dx = divmod(tap, 3)
        lhs = xw_ref[:, dy:dy + th, dx:dx + w_out, :].reshape(m, cin)
        acc = acc + jnp.dot(lhs, w_ref[tap], preferred_element_type=jnp.float32)

    y_ref[...] = acc.astype(y_ref.dtype).reshape(n, th, w_out, cp)

    # One-pass partial stats, reduced on the MXU (ones-row matmul) so the
    # cross-sublane reduction stays off the VPU/XLU.
    ones = jnp.ones((1, m), jnp.float32)
    stats_ref[0, 0:1, :] = jnp.dot(ones, acc, preferred_element_type=jnp.float32)
    stats_ref[0, 1:2, :] = jnp.dot(ones, acc * acc, preferred_element_type=jnp.float32)


def _bn_relu_kernel(y_ref, scale_ref, shift_ref, o_ref):
    y = y_ref[...].astype(jnp.float32)
    o_ref[...] = jnp.maximum(y * scale_ref[...] + shift_ref[...], 0.0).astype(o_ref.dtype)


# ---------------------------------------------------------------------------
# Pallas-call wrappers
# ---------------------------------------------------------------------------

def _pick_tile_rows(n, h, w, cin_max, cp_max, max_tile_rows):
    # Largest row tile (divisor of H) whose working set fits a conservative
    # VMEM budget (safe for v7x's 64 MiB as well as v5e/v6e's 128 MiB).
    # TODO(synk): also tile W for extremely wide images.
    budget = 24 << 20
    best = 1
    for th in range(1, h + 1):
        if h % th:
            continue
        rows = n * th * w
        need = (2 * n * (th + 2) * (w + 2) * cin_max * 2   # double-buffered bf16 windows
                + 2 * rows * cp_max * 4                    # double-buffered output tile
                + rows * cp_max * 4                        # f32 accumulator
                + 2 * 9 * cin_max * cp_max * 2)            # weights
        if rows <= max_tile_rows and need <= budget:
            best = th
    return best


def _conv3x3_with_stats(xg, w_taps, n, h, w, th, y_dtype):
    tn, thp, wp, cin = xg.shape
    t = tn // n
    cp = w_taps.shape[-1]
    y_bytes = jnp.dtype(y_dtype).itemsize
    block_bytes = (2 * n * thp * wp * cin * 2
                   + 2 * 9 * cin * cp * 2
                   + 2 * n * th * w * cp * y_bytes
                   + n * th * w * cp * 4
                   + 2 * 2 * cp * 4)
    vmem_limit = int(min(max(2 * block_bytes, 32 << 20), 64 << 20))

    return pl.pallas_call(
        _conv3x3_stats_kernel,
        grid=(t,),
        in_specs=[
            pl.BlockSpec((n, thp, wp, cin), lambda i: (i, 0, 0, 0)),
            pl.BlockSpec((9, cin, cp), lambda i: (0, 0, 0)),   # weights stay resident
        ],
        out_specs=[
            pl.BlockSpec((n, th, w, cp), lambda i: (0, i, 0, 0)),
            pl.BlockSpec((1, 2, cp), lambda i: (i, 0, 0)),
        ],
        out_shape=[
            jax.ShapeDtypeStruct((n, h, w, cp), y_dtype),
            jax.ShapeDtypeStruct((t, 2, cp), jnp.float32),
        ],
        compiler_params=pltpu.CompilerParams(
            dimension_semantics=("parallel",),
            vmem_limit_bytes=vmem_limit,
        ),
    )(xg, w_taps)


def _bn_relu(y, scale, shift, th):
    n, h, w, cp = y.shape
    t = h // th
    block_bytes = 4 * n * th * w * cp * 4 + 4 * cp * 4
    vmem_limit = int(min(max(2 * block_bytes, 32 << 20), 64 << 20))
    return pl.pallas_call(
        _bn_relu_kernel,
        grid=(t,),
        in_specs=[
            pl.BlockSpec((n, th, w, cp), lambda i: (0, i, 0, 0)),
            pl.BlockSpec((1, 1, 1, cp), lambda i: (0, 0, 0, 0)),
            pl.BlockSpec((1, 1, 1, cp), lambda i: (0, 0, 0, 0)),
        ],
        out_specs=pl.BlockSpec((n, th, w, cp), lambda i: (0, i, 0, 0)),
        out_shape=jax.ShapeDtypeStruct((n, h, w, cp), jnp.float32),
        compiler_params=pltpu.CompilerParams(
            dimension_semantics=("parallel",),
            vmem_limit_bytes=vmem_limit,
        ),
    )(y, scale.reshape(1, 1, 1, cp), shift.reshape(1, 1, 1, cp))


# ---------------------------------------------------------------------------
# Plain-JAX glue (cheap, fuses with neighbouring ops)
# ---------------------------------------------------------------------------

def _row_windows(xp, th):
    # xp: (N, H+2, W+2, C) zero-padded.  Returns overlapping row windows
    # stacked along the batch axis: (T*N, th+2, W+2, C); window i covers output
    # rows [i*th, (i+1)*th).
    n, hp, wp, c = xp.shape
    t = (hp - 2) // th
    wins = [lax.dynamic_slice_in_dim(xp, i * th, th + 2, axis=1) for i in range(t)]
    return jnp.concatenate(wins, axis=0)


def _pack_w_taps(w_oihw, cp):
    cout, cin = w_oihw.shape[0], w_oihw.shape[1]
    w = jnp.transpose(w_oihw, (2, 3, 1, 0)).reshape(9, cin, cout)  # (tap, Cin, Cout)
    w = jnp.pad(w, ((0, 0), (0, 0), (0, cp - cout)))               # lane-dense Cout
    return w.astype(jnp.bfloat16)


def _bn_affine(stats, gamma, beta, count, cp):
    # stats: (T, 2, Cp) per-tile [sum, sumsq].  Fold BN into y*scale + shift.
    s = jnp.sum(stats, axis=0)
    mean = s[0] / count
    var = jnp.maximum(s[1] / count - mean * mean, 0.0)
    g = jnp.zeros((cp,), jnp.float32).at[: gamma.shape[0]].set(gamma)
    b = jnp.zeros((cp,), jnp.float32).at[: beta.shape[0]].set(beta)
    scale = g * lax.rsqrt(var + _BN_EPS)
    shift = b - mean * scale
    return scale, shift


@functools.partial(jax.jit, static_argnames=("max_tile_rows",))
def double_conv(x_nchw, params, max_tile_rows=1024):
    w1, g1, b1, w2, g2, b2 = params
    n, cin, h, w = x_nchw.shape
    cmid, cout = w1.shape[0], w2.shape[0]
    cmid_p, cout_p = _round_up(cmid, _LANES), _round_up(cout, _LANES)

    th = _pick_tile_rows(n, h, w, max(cin, cmid), max(cmid_p, cout_p), max_tile_rows)

    # NCHW -> NHWC, bf16 matmul inputs, zero pad for 'SAME' 3x3.
    x = jnp.transpose(x_nchw, (0, 2, 3, 1)).astype(jnp.bfloat16)
    xg = _row_windows(jnp.pad(x, ((0, 0), (1, 1), (1, 1), (0, 0))), th)

    # ---- conv1 + streamed BN statistics (Pallas) ----
    y1, st1 = _conv3x3_with_stats(xg, _pack_w_taps(w1, cmid_p), n, h, w, th, jnp.bfloat16)
    scale1, shift1 = _bn_affine(st1, g1, b1, n * h * w, cmid_p)

    # Intermediate BN+ReLU is folded (fused by XLA) into the overlapping halo
    # window gather that conv2 needs anyway: no extra HBM round trip, no im2col.
    hmid = jnp.maximum(y1.astype(jnp.float32) * scale1 + shift1, 0.0)
    hmid = hmid[..., :cmid].astype(jnp.bfloat16)
    hg = _row_windows(jnp.pad(hmid, ((0, 0), (1, 1), (1, 1), (0, 0))), th)

    # ---- conv2 + streamed BN statistics (Pallas) ----
    y2, st2 = _conv3x3_with_stats(hg, _pack_w_taps(w2, cout_p), n, h, w, th, jnp.float32)
    scale2, shift2 = _bn_affine(st2, g2, b2, n * h * w, cout_p)

    # ---- final BN + ReLU (Pallas, lane-dense) ----
    out_p = _bn_relu(y2, scale2, shift2, th)
    return jnp.transpose(out_p[..., :cout], (0, 3, 1, 2))  # NHWC -> NCHW


# ---------------------------------------------------------------------------
# Reference / params / demo
# ---------------------------------------------------------------------------

def _ref_double_conv(x_nchw, params):
    # Pure-JAX (XLA conv) reference that mirrors the kernel's precision policy
    # (bf16 conv inputs and bf16 intermediate, f32 accumulation and BN math) so
    # the check isolates structural errors from expected bf16 rounding.
    w1, g1, b1, w2, g2, b2 = params
    x = jnp.transpose(x_nchw, (0, 2, 3, 1)).astype(jnp.bfloat16)

    def conv(v, w_oihw):
        w_hwio = jnp.transpose(w_oihw, (2, 3, 1, 0)).astype(jnp.bfloat16)
        return lax.conv_general_dilated(
            v, w_hwio, (1, 1), "SAME",
            dimension_numbers=("NHWC", "HWIO", "NHWC"),
            preferred_element_type=jnp.float32)

    def bn_relu(y, g, b):
        mean = jnp.mean(y, axis=(0, 1, 2))
        var = jnp.mean(jnp.square(y - mean), axis=(0, 1, 2))
        return jnp.maximum((y - mean) * lax.rsqrt(var + _BN_EPS) * g + b, 0.0)

    hmid = bn_relu(conv(x, w1), g1, b1).astype(jnp.bfloat16)
    out = bn_relu(conv(hmid, w2), g2, b2)
    return jnp.transpose(out, (0, 3, 1, 2))


def init_params(key, in_channels, out_channels, mid_channels=None):
    if mid_channels is None:
        mid_channels = out_channels
    k1, k2 = jax.random.split(key)

    def conv_w(k, cout, cin):
        # nn.Conv2d default init -> U(-1/sqrt(fan_in), 1/sqrt(fan_in))
        bound = 1.0 / (cin * 9) ** 0.5
        return jax.random.uniform(k, (cout, cin, 3, 3), jnp.float32, -bound, bound)

    w1 = conv_w(k1, mid_channels, in_channels)
    w2 = conv_w(k2, out_channels, mid_channels)
    g1 = jnp.ones((mid_channels,), jnp.float32)
    b1 = jnp.zeros((mid_channels,), jnp.float32)
    g2 = jnp.ones((out_channels,), jnp.float32)
    b2 = jnp.zeros((out_channels,), jnp.float32)
    # TODO(synk): running_mean/running_var updates (training-time stateful side
    # effect) are not modeled; they do not affect the training-mode forward.
    return (w1, g1, b1, w2, g2, b2)


if __name__ == "__main__":
    key = jax.random.PRNGKey(0)
    kx, kp = jax.random.split(key)
    N, Cin, H, W = 2, 4, 16, 16
    Cout = 8
    x = jax.random.normal(kx, (N, Cin, H, W), jnp.float32)
    params = init_params(kp, Cin, Cout)

    # max_tile_rows=256 forces 2 row tiles at this toy size so the multi-tile
    # streamed-BN-stats path is exercised; production sizes use the default.
    out = double_conv(x, params, max_tile_rows=256)
    out = jax.block_until_ready(out)

    ref = _ref_double_conv(x, params)
    assert out.shape == (N, Cout, H, W), out.shape
    max_err = float(jnp.max(jnp.abs(out - ref)))
    assert jnp.allclose(out, ref, atol=2e-2, rtol=2e-2), max_err
    print("KERNEL_OK")
</pallas_src>

<mosaic_0001>
module attributes {stable_mosaic.version = 11 : i64} {
  func.func @_conv3x3_stats_kernel(%arg0: i32, %arg1: memref<2x10x18x4xbf16, #tpu.memory_space<vmem>>, %arg2: memref<9x4x128xbf16, #tpu.memory_space<vmem>>, %arg3: memref<2x8x16x128xbf16, #tpu.memory_space<vmem>>, %arg4: memref<1x2x128xf32, #tpu.memory_space<vmem>>) attributes {dimension_semantics = [#tpu.dimension_semantics<parallel>], iteration_bounds = array<i64: 2>, scalar_prefetch = 0 : i64, scratch_operands = 0 : i64, tpu.core_type = #tpu.core_type<tc>, window_params = [{transform_indices = @transform_0, window_bounds = array<i64: 2, 10, 18, 4>}, {pipeline_mode = #tpu.pipeline_mode<synchronous>, transform_indices = @transform_1, window_bounds = array<i64: 9, 4, 128>}, {transform_indices = @transform_2, window_bounds = array<i64: 2, 8, 16, 128>}, {transform_indices = @transform_3, window_bounds = array<i64: 1, 2, 128>}]} {
    %cst = arith.constant 0.000000e+00 : f32
    %0 = vector.broadcast %cst : f32 to vector<256x128xf32>
    %c0 = arith.constant 0 : index
    %c0_0 = arith.constant 0 : index
    %c0_1 = arith.constant 0 : index
    %c0_2 = arith.constant 0 : index
    %1 = vector.load %arg1[%c0, %c0_0, %c0_1, %c0_2] : memref<2x10x18x4xbf16, #tpu.memory_space<vmem>>, vector<2x8x16x4xbf16>
    %2 = vector.shape_cast %1 : vector<2x8x16x4xbf16> to vector<256x4xbf16>
    %c0_3 = arith.constant 0 : index
    %c0_4 = arith.constant 0 : index
    %c0_5 = arith.constant 0 : index
    %3 = vector.load %arg2[%c0_3, %c0_4, %c0_5] : memref<9x4x128xbf16, #tpu.memory_space<vmem>>, vector<1x4x128xbf16>
    %4 = vector.shape_cast %3 : vector<1x4x128xbf16> to vector<4x128xbf16>
    %cst_6 = arith.constant dense<0.000000e+00> : vector<256x128xf32>
    %5 = tpu.matmul %2, %4, %cst_6 {dimension_numbers = #tpu.dot_dimension_numbers<[1], [0], [0], [1], [0, 0, 1, 1], [], []>} : vector<256x4xbf16>, vector<4x128xbf16>, vector<256x128xf32> -> vector<256x128xf32>
    %6 = arith.addf %0, %5 : vector<256x128xf32>
    %c0_7 = arith.constant 0 : index
    %c0_8 = arith.constant 0 : index
    %c1 = arith.constant 1 : index
    %c0_9 = arith.constant 0 : index
    %7 = vector.load %arg1[%c0_7, %c0_8, %c1, %c0_9] : memref<2x10x18x4xbf16, #tpu.memory_space<vmem>>, vector<2x8x16x4xbf16>
    %8 = vector.shape_cast %7 : vector<2x8x16x4xbf16> to vector<256x4xbf16>
    %c1_10 = arith.constant 1 : index
    %c0_11 = arith.constant 0 : index
    %c0_12 = arith.constant 0 : index
    %9 = vector.load %arg2[%c1_10, %c0_11, %c0_12] : memref<9x4x128xbf16, #tpu.memory_space<vmem>>, vector<1x4x128xbf16>
    %10 = vector.shape_cast %9 : vector<1x4x128xbf16> to vector<4x128xbf16>
    %cst_13 = arith.constant dense<0.000000e+00> : vector<256x128xf32>
    %11 = tpu.matmul %8, %10, %cst_13 {dimension_numbers = #tpu.dot_dimension_numbers<[1], [0], [0], [1], [0, 0, 1, 1], [], []>} : vector<256x4xbf16>, vector<4x128xbf16>, vector<256x128xf32> -> vector<256x128xf32>
    %12 = arith.addf %6, %11 : vector<256x128xf32>
    %c0_14 = arith.constant 0 : index
    %c0_15 = arith.constant 0 : index
    %c2 = arith.constant 2 : index
    %c0_16 = arith.constant 0 : index
    %13 = vector.load %arg1[%c0_14, %c0_15, %c2, %c0_16] : memref<2x10x18x4xbf16, #tpu.memory_space<vmem>>, vector<2x8x16x4xbf16>
    %14 = vector.shape_cast %13 : vector<2x8x16x4xbf16> to vector<256x4xbf16>
    %c2_17 = arith.constant 2 : index
    %c0_18 = arith.constant 0 : index
    %c0_19 = arith.constant 0 : index
    %15 = vector.load %arg2[%c2_17, %c0_18, %c0_19] : memref<9x4x128xbf16, #tpu.memory_space<vmem>>, vector<1x4x128xbf16>
    %16 = vector.shape_cast %15 : vector<1x4x128xbf16> to vector<4x128xbf16>
    %cst_20 = arith.constant dense<0.000000e+00> : vector<256x128xf32>
    %17 = tpu.matmul %14, %16, %cst_20 {dimension_numbers = #tpu.dot_dimension_numbers<[1], [0], [0], [1], [0, 0, 1, 1], [], []>} : vector<256x4xbf16>, vector<4x128xbf16>, vector<256x128xf32> -> vector<256x128xf32>
    %18 = arith.addf %12, %17 : vector<256x128xf32>
    %c0_21 = arith.constant 0 : index
    %c1_22 = arith.constant 1 : index
    %c0_23 = arith.constant 0 : index
    %c0_24 = arith.constant 0 : index
    %19 = vector.load %arg1[%c0_21, %c1_22, %c0_23, %c0_24] : memref<2x10x18x4xbf16, #tpu.memory_space<vmem>>, vector<2x8x16x4xbf16>
    %20 = vector.shape_cast %19 : vector<2x8x16x4xbf16> to vector<256x4xbf16>
    %c3 = arith.constant 3 : index
    %c0_25 = arith.constant 0 : index
    %c0_26 = arith.constant 0 : index
    %21 = vector.load %arg2[%c3, %c0_25, %c0_26] : memref<9x4x128xbf16, #tpu.memory_space<vmem>>, vector<1x4x128xbf16>
    %22 = vector.shape_cast %21 : vector<1x4x128xbf16> to vector<4x128xbf16>
    %cst_27 = arith.constant dense<0.000000e+00> : vector<256x128xf32>
    %23 = tpu.matmul %20, %22, %cst_27 {dimension_numbers = #tpu.dot_dimension_numbers<[1], [0], [0], [1], [0, 0, 1, 1], [], []>} : vector<256x4xbf16>, vector<4x128xbf16>, vector<256x128xf32> -> vector<256x128xf32>
    %24 = arith.addf %18, %23 : vector<256x128xf32>
    %c0_28 = arith.constant 0 : index
    %c1_29 = arith.constant 1 : index
    %c1_30 = arith.constant 1 : index
    %c0_31 = arith.constant 0 : index
    %25 = vector.load %arg1[%c0_28, %c1_29, %c1_30, %c0_31] : memref<2x10x18x4xbf16, #tpu.memory_space<vmem>>, vector<2x8x16x4xbf16>
    %26 = vector.shape_cast %25 : vector<2x8x16x4xbf16> to vector<256x4xbf16>
    %c4 = arith.constant 4 : index
    %c0_32 = arith.constant 0 : index
    %c0_33 = arith.constant 0 : index
    %27 = vector.load %arg2[%c4, %c0_32, %c0_33] : memref<9x4x128xbf16, #tpu.memory_space<vmem>>, vector<1x4x128xbf16>
    %28 = vector.shape_cast %27 : vector<1x4x128xbf16> to vector<4x128xbf16>
    %cst_34 = arith.constant dense<0.000000e+00> : vector<256x128xf32>
    %29 = tpu.matmul %26, %28, %cst_34 {dimension_numbers = #tpu.dot_dimension_numbers<[1], [0], [0], [1], [0, 0, 1, 1], [], []>} : vector<256x4xbf16>, vector<4x128xbf16>, vector<256x128xf32> -> vector<256x128xf32>
    %30 = arith.addf %24, %29 : vector<256x128xf32>
    %c0_35 = arith.constant 0 : index
    %c1_36 = arith.constant 1 : index
    %c2_37 = arith.constant 2 : index
    %c0_38 = arith.constant 0 : index
    %31 = vector.load %arg1[%c0_35, %c1_36, %c2_37, %c0_38] : memref<2x10x18x4xbf16, #tpu.memory_space<vmem>>, vector<2x8x16x4xbf16>
    %32 = vector.shape_cast %31 : vector<2x8x16x4xbf16> to vector<256x4xbf16>
    %c5 = arith.constant 5 : index
    %c0_39 = arith.constant 0 : index
    %c0_40 = arith.constant 0 : index
    %33 = vector.load %arg2[%c5, %c0_39, %c0_40] : memref<9x4x128xbf16, #tpu.memory_space<vmem>>, vector<1x4x128xbf16>
    %34 = vector.shape_cast %33 : vector<1x4x128xbf16> to vector<4x128xbf16>
    %cst_41 = arith.constant dense<0.000000e+00> : vector<256x128xf32>
    %35 = tpu.matmul %32, %34, %cst_41 {dimension_numbers = #tpu.dot_dimension_numbers<[1], [0], [0], [1], [0, 0, 1, 1], [], []>} : vector<256x4xbf16>, vector<4x128xbf16>, vector<256x128xf32> -> vector<256x128xf32>
    %36 = arith.addf %30, %35 : vector<256x128xf32>
    %c0_42 = arith.constant 0 : index
    %c2_43 = arith.constant 2 : index
    %c0_44 = arith.constant 0 : index
    %c0_45 = arith.constant 0 : index
    %37 = vector.load %arg1[%c0_42, %c2_43, %c0_44, %c0_45] : memref<2x10x18x4xbf16, #tpu.memory_space<vmem>>, vector<2x8x16x4xbf16>
    %38 = vector.shape_cast %37 : vector<2x8x16x4xbf16> to vector<256x4xbf16>
    %c6 = arith.constant 6 : index
    %c0_46 = arith.constant 0 : index
    %c0_47 = arith.constant 0 : index
    %39 = vector.load %arg2[%c6, %c0_46, %c0_47] : memref<9x4x128xbf16, #tpu.memory_space<vmem>>, vector<1x4x128xbf16>
    %40 = vector.shape_cast %39 : vector<1x4x128xbf16> to vector<4x128xbf16>
    %cst_48 = arith.constant dense<0.000000e+00> : vector<256x128xf32>
    %41 = tpu.matmul %38, %40, %cst_48 {dimension_numbers = #tpu.dot_dimension_numbers<[1], [0], [0], [1], [0, 0, 1, 1], [], []>} : vector<256x4xbf16>, vector<4x128xbf16>, vector<256x128xf32> -> vector<256x128xf32>
    %42 = arith.addf %36, %41 : vector<256x128xf32>
    %c0_49 = arith.constant 0 : index
    %c2_50 = arith.constant 2 : index
    %c1_51 = arith.constant 1 : index
    %c0_52 = arith.constant 0 : index
    %43 = vector.load %arg1[%c0_49, %c2_50, %c1_51, %c0_52] : memref<2x10x18x4xbf16, #tpu.memory_space<vmem>>, vector<2x8x16x4xbf16>
    %44 = vector.shape_cast %43 : vector<2x8x16x4xbf16> to vector<256x4xbf16>
    %c7 = arith.constant 7 : index
    %c0_53 = arith.constant 0 : index
    %c0_54 = arith.constant 0 : index
    %45 = vector.load %arg2[%c7, %c0_53, %c0_54] : memref<9x4x128xbf16, #tpu.memory_space<vmem>>, vector<1x4x128xbf16>
    %46 = vector.shape_cast %45 : vector<1x4x128xbf16> to vector<4x128xbf16>
    %cst_55 = arith.constant dense<0.000000e+00> : vector<256x128xf32>
    %47 = tpu.matmul %44, %46, %cst_55 {dimension_numbers = #tpu.dot_dimension_numbers<[1], [0], [0], [1], [0, 0, 1, 1], [], []>} : vector<256x4xbf16>, vector<4x128xbf16>, vector<256x128xf32> -> vector<256x128xf32>
    %48 = arith.addf %42, %47 : vector<256x128xf32>
    %c0_56 = arith.constant 0 : index
    %c2_57 = arith.constant 2 : index
    %c2_58 = arith.constant 2 : index
    %c0_59 = arith.constant 0 : index
    %49 = vector.load %arg1[%c0_56, %c2_57, %c2_58, %c0_59] : memref<2x10x18x4xbf16, #tpu.memory_space<vmem>>, vector<2x8x16x4xbf16>
    %50 = vector.shape_cast %49 : vector<2x8x16x4xbf16> to vector<256x4xbf16>
    %c8 = arith.constant 8 : index
    %c0_60 = arith.constant 0 : index
    %c0_61 = arith.constant 0 : index
    %51 = vector.load %arg2[%c8, %c0_60, %c0_61] : memref<9x4x128xbf16, #tpu.memory_space<vmem>>, vector<1x4x128xbf16>
    %52 = vector.shape_cast %51 : vector<1x4x128xbf16> to vector<4x128xbf16>
    %cst_62 = arith.constant dense<0.000000e+00> : vector<256x128xf32>
    %53 = tpu.matmul %50, %52, %cst_62 {dimension_numbers = #tpu.dot_dimension_numbers<[1], [0], [0], [1], [0, 0, 1, 1], [], []>} : vector<256x4xbf16>, vector<4x128xbf16>, vector<256x128xf32> -> vector<256x128xf32>
    %54 = arith.addf %48, %53 : vector<256x128xf32>
    %55 = arith.truncf %54 : vector<256x128xf32> to vector<256x128xbf16>
    %56 = vector.shape_cast %55 : vector<256x128xbf16> to vector<2x8x16x128xbf16>
    %c0_63 = arith.constant 0 : index
    %c0_64 = arith.constant 0 : index
    %c0_65 = arith.constant 0 : index
    %c0_66 = arith.constant 0 : index
    %57 = vector.load %arg3[%c0_63, %c0_64, %c0_65, %c0_66] : memref<2x8x16x128xbf16, #tpu.memory_space<vmem>>, vector<2x8x16x128xbf16>
    tpu.vector_store %arg3[%c0_63, %c0_64, %c0_65, %c0_66], %56 {strides = array<i32>} : memref<2x8x16x128xbf16, #tpu.memory_space<vmem>>, vector<2x8x16x128xbf16>,
    %cst_67 = arith.constant 1.000000e+00 : f32
    %58 = vector.broadcast %cst_67 : f32 to vector<1x256xf32>
    %cst_68 = arith.constant dense<0.000000e+00> : vector<1x128xf32>
    %59 = tpu.matmul %58, %54, %cst_68 {dimension_numbers = #tpu.dot_dimension_numbers<[1], [0], [0], [1], [0, 0, 1, 1], [], []>} : vector<1x256xf32>, vector<256x128xf32>, vector<1x128xf32> -> vector<1x128xf32>
    %c0_69 = arith.constant 0 : index
    %c0_70 = arith.constant 0 : index
    %c0_71 = arith.constant 0 : index
    %60 = vector.load %arg4[%c0_69, %c0_70, %c0_71] : memref<1x2x128xf32, #tpu.memory_space<vmem>>, vector<1x1x128xf32>
    %61 = vector.shape_cast %60 : vector<1x1x128xf32> to vector<1x128xf32>
    %62 = vector.shape_cast %59 : vector<1x128xf32> to vector<1x1x128xf32>
    tpu.vector_store %arg4[%c0_69, %c0_70, %c0_71], %62 {strides = array<i32>} : memref<1x2x128xf32, #tpu.memory_space<vmem>>, vector<1x1x128xf32>,
    %63 = arith.mulf %54, %54 : vector<256x128xf32>
    %cst_72 = arith.constant dense<0.000000e+00> : vector<1x128xf32>
    %64 = tpu.matmul %58, %63, %cst_72 {dimension_numbers = #tpu.dot_dimension_numbers<[1], [0], [0], [1], [0, 0, 1, 1], [], []>} : vector<1x256xf32>, vector<256x128xf32>, vector<1x128xf32> -> vector<1x128xf32>
    %c0_73 = arith.constant 0 : index
    %c1_74 = arith.constant 1 : index
    %c0_75 = arith.constant 0 : index
    %65 = vector.load %arg4[%c0_73, %c1_74, %c0_75] : memref<1x2x128xf32, #tpu.memory_space<vmem>>, vector<1x1x128xf32>
    %66 = vector.shape_cast %65 : vector<1x1x128xf32> to vector<1x128xf32>
    %67 = vector.shape_cast %64 : vector<1x128xf32> to vector<1x1x128xf32>
    tpu.vector_store %arg4[%c0_73, %c1_74, %c0_75], %67 {strides = array<i32>} : memref<1x2x128xf32, #tpu.memory_space<vmem>>, vector<1x1x128xf32>,
    return
  }
  func.func @transform_0(%arg0: i32) -> (i32, i32, i32, i32) {
    %c0_i32 = arith.constant 0 : i32
    %c0_i32_0 = arith.constant 0 : i32
    %c0_i32_1 = arith.constant 0 : i32
    %c0_i32_2 = arith.constant 0 : i32
    return %arg0, %c0_i32, %c0_i32_0, %c0_i32_1 : i32, i32, i32, i32
  }
  func.func @transform_1(%arg0: i32) -> (i32, i32, i32) {
    %c0_i32 = arith.constant 0 : i32
    %c0_i32_0 = arith.constant 0 : i32
    %c0_i32_1 = arith.constant 0 : i32
    %c0_i32_2 = arith.constant 0 : i32
    return %c0_i32, %c0_i32_0, %c0_i32_1 : i32, i32, i32
  }
  func.func @transform_2(%arg0: i32) -> (i32, i32, i32, i32) {
    %c0_i32 = arith.constant 0 : i32
    %c0_i32_0 = arith.constant 0 : i32
    %c0_i32_1 = arith.constant 0 : i32
    %c0_i32_2 = arith.constant 0 : i32
    return %c0_i32, %arg0, %c0_i32_0, %c0_i32_1 : i32, i32, i32, i32
  }
  func.func @transform_3(%arg0: i32) -> (i32, i32, i32) {
    %c0_i32 = arith.constant 0 : i32
    %c0_i32_0 = arith.constant 0 : i32
    %c0_i32_1 = arith.constant 0 : i32
    return %arg0, %c0_i32, %c0_i32_0 : i32, i32, i32
  }
}

module attributes {stable_mosaic.version = 11 : i64} {
  func.func @_conv3x3_stats_kernel(%arg0: i32, %arg1: memref<2x10x18x8xbf16, #tpu.memory_space<vmem>>, %arg2: memref<9x8x128xbf16, #tpu.memory_space<vmem>>, %arg3: memref<2x8x16x128xf32, #tpu.memory_space<vmem>>, %arg4: memref<1x2x128xf32, #tpu.memory_space<vmem>>) attributes {dimension_semantics = [#tpu.dimension_semantics<parallel>], iteration_bounds = array<i64: 2>, scalar_prefetch = 0 : i64, scratch_operands = 0 : i64, tpu.core_type = #tpu.core_type<tc>, window_params = [{transform_indices = @transform_0, window_bounds = array<i64: 2, 10, 18, 8>}, {pipeline_mode = #tpu.pipeline_mode<synchronous>, transform_indices = @transform_1, window_bounds = array<i64: 9, 8, 128>}, {transform_indices = @transform_2, window_bounds = array<i64: 2, 8, 16, 128>}, {transform_indices = @transform_3, window_bounds = array<i64: 1, 2, 128>}]} {
    %cst = arith.constant 0.000000e+00 : f32
    %0 = vector.broadcast %cst : f32 to vector<256x128xf32>
    %c0 = arith.constant 0 : index
    %c0_0 = arith.constant 0 : index
    %c0_1 = arith.constant 0 : index
    %c0_2 = arith.constant 0 : index
    %1 = vector.load %arg1[%c0, %c0_0, %c0_1, %c0_2] : memref<2x10x18x8xbf16, #tpu.memory_space<vmem>>, vector<2x8x16x8xbf16>
    %2 = vector.shape_cast %1 : vector<2x8x16x8xbf16> to vector<256x8xbf16>
    %c0_3 = arith.constant 0 : index
    %c0_4 = arith.constant 0 : index
    %c0_5 = arith.constant 0 : index
    %3 = vector.load %arg2[%c0_3, %c0_4, %c0_5] : memref<9x8x128xbf16, #tpu.memory_space<vmem>>, vector<1x8x128xbf16>
    %4 = vector.shape_cast %3 : vector<1x8x128xbf16> to vector<8x128xbf16>
    %cst_6 = arith.constant dense<0.000000e+00> : vector<256x128xf32>
    %5 = tpu.matmul %2, %4, %cst_6 {dimension_numbers = #tpu.dot_dimension_numbers<[1], [0], [0], [1], [0, 0, 1, 1], [], []>} : vector<256x8xbf16>, vector<8x128xbf16>, vector<256x128xf32> -> vector<256x128xf32>
    %6 = arith.addf %0, %5 : vector<256x128xf32>
    %c0_7 = arith.constant 0 : index
    %c0_8 = arith.constant 0 : index
    %c1 = arith.constant 1 : index
    %c0_9 = arith.constant 0 : index
    %7 = vector.load %arg1[%c0_7, %c0_8, %c1, %c0_9] : memref<2x10x18x8xbf16, #tpu.memory_space<vmem>>, vector<2x8x16x8xbf16>
    %8 = vector.shape_cast %7 : vector<2x8x16x8xbf16> to vector<256x8xbf16>
    %c1_10 = arith.constant 1 : index
    %c0_11 = arith.constant 0 : index
    %c0_12 = arith.constant 0 : index
    %9 = vector.load %arg2[%c1_10, %c0_11, %c0_12] : memref<9x8x128xbf16, #tpu.memory_space<vmem>>, vector<1x8x128xbf16>
    %10 = vector.shape_cast %9 : vector<1x8x128xbf16> to vector<8x128xbf16>
    %cst_13 = arith.constant dense<0.000000e+00> : vector<256x128xf32>
    %11 = tpu.matmul %8, %10, %cst_13 {dimension_numbers = #tpu.dot_dimension_numbers<[1], [0], [0], [1], [0, 0, 1, 1], [], []>} : vector<256x8xbf16>, vector<8x128xbf16>, vector<256x128xf32> -> vector<256x128xf32>
    %12 = arith.addf %6, %11 : vector<256x128xf32>
    %c0_14 = arith.constant 0 : index
    %c0_15 = arith.constant 0 : index
    %c2 = arith.constant 2 : index
    %c0_16 = arith.constant 0 : index
    %13 = vector.load %arg1[%c0_14, %c0_15, %c2, %c0_16] : memref<2x10x18x8xbf16, #tpu.memory_space<vmem>>, vector<2x8x16x8xbf16>
    %14 = vector.shape_cast %13 : vector<2x8x16x8xbf16> to vector<256x8xbf16>
    %c2_17 = arith.constant 2 : index
    %c0_18 = arith.constant 0 : index
    %c0_19 = arith.constant 0 : index
    %15 = vector.load %arg2[%c2_17, %c0_18, %c0_19] : memref<9x8x128xbf16, #tpu.memory_space<vmem>>, vector<1x8x128xbf16>
    %16 = vector.shape_cast %15 : vector<1x8x128xbf16> to vector<8x128xbf16>
    %cst_20 = arith.constant dense<0.000000e+00> : vector<256x128xf32>
    %17 = tpu.matmul %14, %16, %cst_20 {dimension_numbers = #tpu.dot_dimension_numbers<[1], [0], [0], [1], [0, 0, 1, 1], [], []>} : vector<256x8xbf16>, vector<8x128xbf16>, vector<256x128xf32> -> vector<256x128xf32>
    %18 = arith.addf %12, %17 : vector<256x128xf32>
    %c0_21 = arith.constant 0 : index
    %c1_22 = arith.constant 1 : index
    %c0_23 = arith.constant 0 : index
    %c0_24 = arith.constant 0 : index
    %19 = vector.load %arg1[%c0_21, %c1_22, %c0_23, %c0_24] : memref<2x10x18x8xbf16, #tpu.memory_space<vmem>>, vector<2x8x16x8xbf16>
    %20 = vector.shape_cast %19 : vector<2x8x16x8xbf16> to vector<256x8xbf16>
    %c3 = arith.constant 3 : index
    %c0_25 = arith.constant 0 : index
    %c0_26 = arith.constant 0 : index
    %21 = vector.load %arg2[%c3, %c0_25, %c0_26] : memref<9x8x128xbf16, #tpu.memory_space<vmem>>, vector<1x8x128xbf16>
    %22 = vector.shape_cast %21 : vector<1x8x128xbf16> to vector<8x128xbf16>
    %cst_27 = arith.constant dense<0.000000e+00> : vector<256x128xf32>
    %23 = tpu.matmul %20, %22, %cst_27 {dimension_numbers = #tpu.dot_dimension_numbers<[1], [0], [0], [1], [0, 0, 1, 1], [], []>} : vector<256x8xbf16>, vector<8x128xbf16>, vector<256x128xf32> -> vector<256x128xf32>
    %24 = arith.addf %18, %23 : vector<256x128xf32>
    %c0_28 = arith.constant 0 : index
    %c1_29 = arith.constant 1 : index
    %c1_30 = arith.constant 1 : index
    %c0_31 = arith.constant 0 : index
    %25 = vector.load %arg1[%c0_28, %c1_29, %c1_30, %c0_31] : memref<2x10x18x8xbf16, #tpu.memory_space<vmem>>, vector<2x8x16x8xbf16>
    %26 = vector.shape_cast %25 : vector<2x8x16x8xbf16> to vector<256x8xbf16>
    %c4 = arith.constant 4 : index
    %c0_32 = arith.constant 0 : index
    %c0_33 = arith.constant 0 : index
    %27 = vector.load %arg2[%c4, %c0_32, %c0_33] : memref<9x8x128xbf16, #tpu.memory_space<vmem>>, vector<1x8x128xbf16>
    %28 = vector.shape_cast %27 : vector<1x8x128xbf16> to vector<8x128xbf16>
    %cst_34 = arith.constant dense<0.000000e+00> : vector<256x128xf32>
    %29 = tpu.matmul %26, %28, %cst_34 {dimension_numbers = #tpu.dot_dimension_numbers<[1], [0], [0], [1], [0, 0, 1, 1], [], []>} : vector<256x8xbf16>, vector<8x128xbf16>, vector<256x128xf32> -> vector<256x128xf32>
    %30 = arith.addf %24, %29 : vector<256x128xf32>
    %c0_35 = arith.constant 0 : index
    %c1_36 = arith.constant 1 : index
    %c2_37 = arith.constant 2 : index
    %c0_38 = arith.constant 0 : index
    %31 = vector.load %arg1[%c0_35, %c1_36, %c2_37, %c0_38] : memref<2x10x18x8xbf16, #tpu.memory_space<vmem>>, vector<2x8x16x8xbf16>
    %32 = vector.shape_cast %31 : vector<2x8x16x8xbf16> to vector<256x8xbf16>
    %c5 = arith.constant 5 : index
    %c0_39 = arith.constant 0 : index
    %c0_40 = arith.constant 0 : index
    %33 = vector.load %arg2[%c5, %c0_39, %c0_40] : memref<9x8x128xbf16, #tpu.memory_space<vmem>>, vector<1x8x128xbf16>
    %34 = vector.shape_cast %33 : vector<1x8x128xbf16> to vector<8x128xbf16>
    %cst_41 = arith.constant dense<0.000000e+00> : vector<256x128xf32>
    %35 = tpu.matmul %32, %34, %cst_41 {dimension_numbers = #tpu.dot_dimension_numbers<[1], [0], [0], [1], [0, 0, 1, 1], [], []>} : vector<256x8xbf16>, vector<8x128xbf16>, vector<256x128xf32> -> vector<256x128xf32>
    %36 = arith.addf %30, %35 : vector<256x128xf32>
    %c0_42 = arith.constant 0 : index
    %c2_43 = arith.constant 2 : index
    %c0_44 = arith.constant 0 : index
    %c0_45 = arith.constant 0 : index
    %37 = vector.load %arg1[%c0_42, %c2_43, %c0_44, %c0_45] : memref<2x10x18x8xbf16, #tpu.memory_space<vmem>>, vector<2x8x16x8xbf16>
    %38 = vector.shape_cast %37 : vector<2x8x16x8xbf16> to vector<256x8xbf16>
    %c6 = arith.constant 6 : index
    %c0_46 = arith.constant 0 : index
    %c0_47 = arith.constant 0 : index
    %39 = vector.load %arg2[%c6, %c0_46, %c0_47] : memref<9x8x128xbf16, #tpu.memory_space<vmem>>, vector<1x8x128xbf16>
    %40 = vector.shape_cast %39 : vector<1x8x128xbf16> to vector<8x128xbf16>
    %cst_48 = arith.constant dense<0.000000e+00> : vector<256x128xf32>
    %41 = tpu.matmul %38, %40, %cst_48 {dimension_numbers = #tpu.dot_dimension_numbers<[1], [0], [0], [1], [0, 0, 1, 1], [], []>} : vector<256x8xbf16>, vector<8x128xbf16>, vector<256x128xf32> -> vector<256x128xf32>
    %42 = arith.addf %36, %41 : vector<256x128xf32>
    %c0_49 = arith.constant 0 : index
    %c2_50 = arith.constant 2 : index
    %c1_51 = arith.constant 1 : index
    %c0_52 = arith.constant 0 : index
    %43 = vector.load %arg1[%c0_49, %c2_50, %c1_51, %c0_52] : memref<2x10x18x8xbf16, #tpu.memory_space<vmem>>, vector<2x8x16x8xbf16>
    %44 = vector.shape_cast %43 : vector<2x8x16x8xbf16> to vector<256x8xbf16>
    %c7 = arith.constant 7 : index
    %c0_53 = arith.constant 0 : index
    %c0_54 = arith.constant 0 : index
    %45 = vector.load %arg2[%c7, %c0_53, %c0_54] : memref<9x8x128xbf16, #tpu.memory_space<vmem>>, vector<1x8x128xbf16>
    %46 = vector.shape_cast %45 : vector<1x8x128xbf16> to vector<8x128xbf16>
    %cst_55 = arith.constant dense<0.000000e+00> : vector<256x128xf32>
    %47 = tpu.matmul %44, %46, %cst_55 {dimension_numbers = #tpu.dot_dimension_numbers<[1], [0], [0], [1], [0, 0, 1, 1], [], []>} : vector<256x8xbf16>, vector<8x128xbf16>, vector<256x128xf32> -> vector<256x128xf32>
    %48 = arith.addf %42, %47 : vector<256x128xf32>
    %c0_56 = arith.constant 0 : index
    %c2_57 = arith.constant 2 : index
    %c2_58 = arith.constant 2 : index
    %c0_59 = arith.constant 0 : index
    %49 = vector.load %arg1[%c0_56, %c2_57, %c2_58, %c0_59] : memref<2x10x18x8xbf16, #tpu.memory_space<vmem>>, vector<2x8x16x8xbf16>
    %50 = vector.shape_cast %49 : vector<2x8x16x8xbf16> to vector<256x8xbf16>
    %c8 = arith.constant 8 : index
    %c0_60 = arith.constant 0 : index
    %c0_61 = arith.constant 0 : index
    %51 = vector.load %arg2[%c8, %c0_60, %c0_61] : memref<9x8x128xbf16, #tpu.memory_space<vmem>>, vector<1x8x128xbf16>
    %52 = vector.shape_cast %51 : vector<1x8x128xbf16> to vector<8x128xbf16>
    %cst_62 = arith.constant dense<0.000000e+00> : vector<256x128xf32>
    %53 = tpu.matmul %50, %52, %cst_62 {dimension_numbers = #tpu.dot_dimension_numbers<[1], [0], [0], [1], [0, 0, 1, 1], [], []>} : vector<256x8xbf16>, vector<8x128xbf16>, vector<256x128xf32> -> vector<256x128xf32>
    %54 = arith.addf %48, %53 : vector<256x128xf32>
    %55 = vector.shape_cast %54 : vector<256x128xf32> to vector<2x8x16x128xf32>
    %c0_63 = arith.constant 0 : index
    %c0_64 = arith.constant 0 : index
    %c0_65 = arith.constant 0 : index
    %c0_66 = arith.constant 0 : index
    %56 = vector.load %arg3[%c0_63, %c0_64, %c0_65, %c0_66] : memref<2x8x16x128xf32, #tpu.memory_space<vmem>>, vector<2x8x16x128xf32>
    tpu.vector_store %arg3[%c0_63, %c0_64, %c0_65, %c0_66], %55 {strides = array<i32>} : memref<2x8x16x128xf32, #tpu.memory_space<vmem>>, vector<2x8x16x128xf32>,
    %cst_67 = arith.constant 1.000000e+00 : f32
    %57 = vector.broadcast %cst_67 : f32 to vector<1x256xf32>
    %cst_68 = arith.constant dense<0.000000e+00> : vector<1x128xf32>
    %58 = tpu.matmul %57, %54, %cst_68 {dimension_numbers = #tpu.dot_dimension_numbers<[1], [0], [0], [1], [0, 0, 1, 1], [], []>} : vector<1x256xf32>, vector<256x128xf32>, vector<1x128xf32> -> vector<1x128xf32>
    %c0_69 = arith.constant 0 : index
    %c0_70 = arith.constant 0 : index
    %c0_71 = arith.constant 0 : index
    %59 = vector.load %arg4[%c0_69, %c0_70, %c0_71] : memref<1x2x128xf32, #tpu.memory_space<vmem>>, vector<1x1x128xf32>
    %60 = vector.shape_cast %59 : vector<1x1x128xf32> to vector<1x128xf32>
    %61 = vector.shape_cast %58 : vector<1x128xf32> to vector<1x1x128xf32>
    tpu.vector_store %arg4[%c0_69, %c0_70, %c0_71], %61 {strides = array<i32>} : memref<1x2x128xf32, #tpu.memory_space<vmem>>, vector<1x1x128xf32>,
    %62 = arith.mulf %54, %54 : vector<256x128xf32>
    %cst_72 = arith.constant dense<0.000000e+00> : vector<1x128xf32>
    %63 = tpu.matmul %57, %62, %cst_72 {dimension_numbers = #tpu.dot_dimension_numbers<[1], [0], [0], [1], [0, 0, 1, 1], [], []>} : vector<1x256xf32>, vector<256x128xf32>, vector<1x128xf32> -> vector<1x128xf32>
    %c0_73 = arith.constant 0 : index
    %c1_74 = arith.constant 1 : index
    %c0_75 = arith.constant 0 : index
    %64 = vector.load %arg4[%c0_73, %c1_74, %c0_75] : memref<1x2x128xf32, #tpu.memory_space<vmem>>, vector<1x1x128xf32>
    %65 = vector.shape_cast %64 : vector<1x1x128xf32> to vector<1x128xf32>
    %66 = vector.shape_cast %63 : vector<1x128xf32> to vector<1x1x128xf32>
    tpu.vector_store %arg4[%c0_73, %c1_74, %c0_75], %66 {strides = array<i32>} : memref<1x2x128xf32, #tpu.memory_space<vmem>>, vector<1x1x128xf32>,
    return
  }
  func.func @transform_0(%arg0: i32) -> (i32, i32, i32, i32) {
    %c0_i32 = arith.constant 0 : i32
    %c0_i32_0 = arith.constant 0 : i32
    %c0_i32_1 = arith.constant 0 : i32
    %c0_i32_2 = arith.constant 0 : i32
    return %arg0, %c0_i32, %c0_i32_0, %c0_i32_1 : i32, i32, i32, i32
  }
  func.func @transform_1(%arg0: i32) -> (i32, i32, i32) {
    %c0_i32 = arith.constant 0 : i32
    %c0_i32_0 = arith.constant 0 : i32
    %c0_i32_1 = arith.constant 0 : i32
    %c0_i32_2 = arith.constant 0 : i32
    return %c0_i32, %c0_i32_0, %c0_i32_1 : i32, i32, i32
  }
  func.func @transform_2(%arg0: i32) -> (i32, i32, i32, i32) {
    %c0_i32 = arith.constant 0 : i32
    %c0_i32_0 = arith.constant 0 : i32
    %c0_i32_1 = arith.constant 0 : i32
    %c0_i32_2 = arith.constant 0 : i32
    return %c0_i32, %arg0, %c0_i32_0, %c0_i32_1 : i32, i32, i32, i32
  }
  func.func @transform_3(%arg0: i32) -> (i32, i32, i32) {
    %c0_i32 = arith.constant 0 : i32
    %c0_i32_0 = arith.constant 0 : i32
    %c0_i32_1 = arith.constant 0 : i32
    return %arg0, %c0_i32, %c0_i32_0 : i32, i32, i32
  }
}

module attributes {stable_mosaic.version = 11 : i64} {
  func.func @_bn_relu_kernel(%arg0: i32, %arg1: memref<2x8x16x128xf32, #tpu.memory_space<vmem>>, %arg2: memref<1x1x1x128xf32, #tpu.memory_space<vmem>>, %arg3: memref<1x1x1x128xf32, #tpu.memory_space<vmem>>, %arg4: memref<2x8x16x128xf32, #tpu.memory_space<vmem>>) attributes {dimension_semantics = [#tpu.dimension_semantics<parallel>], iteration_bounds = array<i64: 2>, scalar_prefetch = 0 : i64, scratch_operands = 0 : i64, tpu.core_type = #tpu.core_type<tc>, window_params = [{transform_indices = @transform_0, window_bounds = array<i64: 2, 8, 16, 128>}, {pipeline_mode = #tpu.pipeline_mode<synchronous>, transform_indices = @transform_1, window_bounds = array<i64: 1, 1, 1, 128>}, {pipeline_mode = #tpu.pipeline_mode<synchronous>, transform_indices = @transform_2, window_bounds = array<i64: 1, 1, 1, 128>}, {transform_indices = @transform_3, window_bounds = array<i64: 2, 8, 16, 128>}]} {
    %c0 = arith.constant 0 : index
    %c0_0 = arith.constant 0 : index
    %c0_1 = arith.constant 0 : index
    %c0_2 = arith.constant 0 : index
    %0 = vector.load %arg1[%c0, %c0_0, %c0_1, %c0_2] : memref<2x8x16x128xf32, #tpu.memory_space<vmem>>, vector<2x8x16x128xf32>
    %c0_3 = arith.constant 0 : index
    %c0_4 = arith.constant 0 : index
    %c0_5 = arith.constant 0 : index
    %c0_6 = arith.constant 0 : index
    %1 = vector.load %arg2[%c0_3, %c0_4, %c0_5, %c0_6] : memref<1x1x1x128xf32, #tpu.memory_space<vmem>>, vector<1x1x1x128xf32>
    %2 = vector.broadcast %1 : vector<1x1x1x128xf32> to vector<2x8x16x128xf32>
    %3 = arith.mulf %0, %2 : vector<2x8x16x128xf32>
    %c0_7 = arith.constant 0 : index
    %c0_8 = arith.constant 0 : index
    %c0_9 = arith.constant 0 : index
    %c0_10 = arith.constant 0 : index
    %4 = vector.load %arg3[%c0_7, %c0_8, %c0_9, %c0_10] : memref<1x1x1x128xf32, #tpu.memory_space<vmem>>, vector<1x1x1x128xf32>
    %5 = vector.broadcast %4 : vector<1x1x1x128xf32> to vector<2x8x16x128xf32>
    %6 = arith.addf %3, %5 : vector<2x8x16x128xf32>
    %cst = arith.constant 0.000000e+00 : f32
    %7 = vector.broadcast %cst : f32 to vector<2x8x16x128xf32>
    %8 = arith.maximumf %6, %7 : vector<2x8x16x128xf32>
    %c0_11 = arith.constant 0 : index
    %c0_12 = arith.constant 0 : index
    %c0_13 = arith.constant 0 : index
    %c0_14 = arith.constant 0 : index
    %9 = vector.load %arg4[%c0_11, %c0_12, %c0_13, %c0_14] : memref<2x8x16x128xf32, #tpu.memory_space<vmem>>, vector<2x8x16x128xf32>
    tpu.vector_store %arg4[%c0_11, %c0_12, %c0_13, %c0_14], %8 {strides = array<i32>} : memref<2x8x16x128xf32, #tpu.memory_space<vmem>>, vector<2x8x16x128xf32>,
    return
  }
  func.func @transform_0(%arg0: i32) -> (i32, i32, i32, i32) {
    %c0_i32 = arith.constant 0 : i32
    %c0_i32_0 = arith.constant 0 : i32
    %c0_i32_1 = arith.constant 0 : i32
    %c0_i32_2 = arith.constant 0 : i32
    return %c0_i32, %arg0, %c0_i32_0, %c0_i32_1 : i32, i32, i32, i32
  }
  func.func @transform_1(%arg0: i32) -> (i32, i32, i32, i32) {
    %c0_i32 = arith.constant 0 : i32
    %c0_i32_0 = arith.constant 0 : i32
    %c0_i32_1 = arith.constant 0 : i32
    %c0_i32_2 = arith.constant 0 : i32
    %c0_i32_3 = arith.constant 0 : i32
    return %c0_i32, %c0_i32_0, %c0_i32_1, %c0_i32_2 : i32, i32, i32, i32
  }
  func.func @transform_2(%arg0: i32) -> (i32, i32, i32, i32) {
    %c0_i32 = arith.constant 0 : i32
    %c0_i32_0 = arith.constant 0 : i32
    %c0_i32_1 = arith.constant 0 : i32
    %c0_i32_2 = arith.constant 0 : i32
    %c0_i32_3 = arith.constant 0 : i32
    return %c0_i32, %c0_i32_0, %c0_i32_1, %c0_i32_2 : i32, i32, i32, i32
  }
  func.func @transform_3(%arg0: i32) -> (i32, i32, i32, i32) {
    %c0_i32 = arith.constant 0 : i32
    %c0_i32_0 = arith.constant 0 : i32
    %c0_i32_1 = arith.constant 0 : i32
    %c0_i32_2 = arith.constant 0 : i32
    return %c0_i32, %arg0, %c0_i32_0, %c0_i32_1 : i32, i32, i32, i32
  }
}

</mosaic_0001>

<llo_original>
// kernel: double_conv.5
$region0: #{double_conv.5}
  #allocation0 [shape = 'u32[]', space=smem, size = 0x4, offset = 0x4, fixed_abs, tag = 'smem constant byte address 0x4 - core index']
  #allocation1 [shape = 'u32[144,128]{1,0:T(1,128)}', space=vmem, size = 0x12000, scoped, tag = 'internal scratch']
  %s0 = inlined_call_operand.vmem [shape: f32[2,16,16,128], index: 0, kind: input, shape index: {}]
  %s1 = inlined_call_operand.vmem [shape: f32[1,1,1,128], index: 1, kind: input, shape index: {}]
  %s2 = inlined_call_operand.vmem [shape: f32[1,1,1,128], index: 2, kind: input, shape index: {}]
  %s3 = inlined_call_operand.vmem [shape: f32[2,16,16,128], index: 3, kind: output, shape index: {}]
  %s4 = sld [smem:[#allocation0]]
  $region117: #{double_conv.5} parent=0
    _
  %s6 = ssub.s32 1, %s4
  %s7 = scalar_select 0, %s6, %s4
  $region1: #{double_conv.5} parent=0
    #allocation2 [shape = 'u8[262144]{0}', space=vmem, size = 0x40000, scoped, tag = 'input window, operand 0']
    #allocation3 [shape = 'u8[262144]{0}', space=vmem, size = 0x40000, scoped, tag = 'output window, operand 0']
    loop: start=0, step=1, limit=4
    $region2: #{double_conv.5} parent=1 // loop_pre_header
      _
    $region3: #{double_conv.5} parent=1 // loop_header
      %s9 = sphi 0, %s13
      %p10 = scmp.ge.s32.totalorder %s9, 4
      %s19 = sphi 0, %s21
      %s22 = sphi 0, %s19
      %s23 = sphi 0, %s22
      %s39 = sphi 0, %s23
      %s43 = sphi 0, %s43
      %s45 = sphi 0, %s43
      %s46 = sphi 0, %s45
      %s60 = sphi 0, %s46
      %s64 = sphi 0, %s64
      %s66 = sphi 0, %s64
      %s67 = sphi 0, %s66
      %s81 = sphi 0, %s67
      %s87 = sphi 0, %s89
      %s90 = sphi 0, %s87
      %s91 = sphi 0, %s90
      %s107 = sphi 0, %s91
    $region4: #{double_conv.5} parent=1 // loop_header_branch
      %12 = sbr.rel (%p10) target = $region8
    $region5: #{double_conv.5} parent=1 // loop_body
      %s14 = ssub.s32 %s9, 1
      %s15 = ssub.s32 %s9, 2
      %s16 = sadd.s32 %s9, 1
      %s17 = ssub.s32 %s9, %s16
      %p18 = scmp.eq.s32.totalorder %s17, 0
      %s20 = sadd.s32 %s19, 1
      %s21 = scalar_select %p18, %s19, %s20
      %p24 = pneg %p18
      %p25 = scmp.eq.s32.totalorder %s9, 1
      %p26 = por %p24, %p25
      %p27 = scmp.ne.s32.totalorder %s19, %s22
      %p28 = scmp.eq.s32.totalorder %s9, 0
      %p29 = por %p27, %p28
      %p30 = scmp.ne.s32.totalorder %s19, %s22
      %p31 = scmp.eq.s32.totalorder %s14, 1
      %p32 = por %p30, %p31
      %p33 = scmp.ne.s32.totalorder %s22, %s23
      %p34 = scmp.eq.s32.totalorder %s14, 0
      %p35 = por %p33, %p34
      %p36 = scmp.ne.s32.totalorder %s22, %s23
      %p37 = scmp.eq.s32.totalorder %s15, 1
      %p38 = por %p36, %p37
      %p40 = scmp.ne.s32.totalorder %s23, %s39
      %p41 = scmp.eq.s32.totalorder %s15, 0
      %p42 = por %p40, %p41
      %s44 = sadd.s32 %s43, 1
      %p47 = scmp.eq.s32.totalorder %s9, 1
      %p48 = scmp.ne.s32.totalorder %s43, %s45
      %p49 = scmp.eq.s32.totalorder %s9, 0
      %p50 = por %p48, %p49
      %p51 = scmp.ne.s32.totalorder %s43, %s45
      %p52 = scmp.eq.s32.totalorder %s14, 1
      %p53 = por %p51, %p52
      %p54 = scmp.ne.s32.totalorder %s45, %s46
      %p55 = scmp.eq.s32.totalorder %s14, 0
      %p56 = por %p54, %p55
      %p57 = scmp.ne.s32.totalorder %s45, %s46
      %p58 = scmp.eq.s32.totalorder %s15, 1
      %p59 = por %p57, %p58
      %p61 = scmp.ne.s32.totalorder %s46, %s60
      %p62 = scmp.eq.s32.totalorder %s15, 0
      %p63 = por %p61, %p62
      %s65 = sadd.s32 %s64, 1
      %p68 = scmp.eq.s32.totalorder %s9, 1
      %p69 = scmp.ne.s32.totalorder %s64, %s66
      %p70 = scmp.eq.s32.totalorder %s9, 0
      %p71 = por %p69, %p70
      %p72 = scmp.ne.s32.totalorder %s64, %s66
      %p73 = scmp.eq.s32.totalorder %s14, 1
      %p74 = por %p72, %p73
      %p75 = scmp.ne.s32.totalorder %s66, %s67
      %p76 = scmp.eq.s32.totalorder %s14, 0
      %p77 = por %p75, %p76
      %p78 = scmp.ne.s32.totalorder %s66, %s67
      %p79 = scmp.eq.s32.totalorder %s15, 1
      %p80 = por %p78, %p79
      %p82 = scmp.ne.s32.totalorder %s67, %s81
      %p83 = scmp.eq.s32.totalorder %s15, 0
      %p84 = por %p82, %p83
      %s85 = ssub.s32 %s9, %s16
      %p86 = scmp.eq.s32.totalorder %s85, 0
      %s88 = sadd.s32 %s87, 1
      %s89 = scalar_select %p86, %s87, %s88
      %p92 = pneg %p86
      %p93 = scmp.eq.s32.totalorder %s9, 1
      %p94 = por %p92, %p93
      %p95 = scmp.ne.s32.totalorder %s87, %s90
      %p96 = scmp.eq.s32.totalorder %s9, 0
      %p97 = por %p95, %p96
      %p98 = scmp.ne.s32.totalorder %s87, %s90
      %p99 = scmp.eq.s32.totalorder %s14, 1
      %p100 = por %p98, %p99
      %p101 = scmp.ne.s32.totalorder %s90, %s91
      %p102 = scmp.eq.s32.totalorder %s14, 0
      %p103 = por %p101, %p102
      %p104 = scmp.ne.s32.totalorder %s90, %s91
      %p105 = scmp.eq.s32.totalorder %s15, 1
      %p106 = por %p104, %p105
      %p108 = scmp.ne.s32.totalorder %s91, %s107
      %p109 = scmp.eq.s32.totalorder %s15, 0
      %p110 = por %p108, %p109
      %p111 = scmp.le.s32.totalorder 1, %s9
      %p112 = scmp.lt.s32.totalorder %s9, 3
      %p113 = pnand %p111, %p112
      %p114 = pneg %p113
      // Predicated region
      $region9: #{double_conv.5} parent=5 // pred_check
        _
      $region10: #{double_conv.5} parent=5 // pred_check_branch
        %116 = sbr.rel (%p113) target = $region12
      $region11: #{double_conv.5} parent=5 // pred_region
        %s117 = ssub.s32 %s9, 1
        // Predicated region
        $region13: #{double_conv.5} parent=11 // pred_check
          %p118 = pneg %p56
        $region14: #{double_conv.5} parent=11 // pred_check_branch
          %120 = sbr.rel (%p118) target = $region16
        $region15: #{double_conv.5} parent=11 // pred_region
          _
        $region16: #{double_conv.5} parent=11 // pred_fallthru
          _
        // Predicated region
        $region17: #{double_conv.5} parent=11 // pred_check
          %p121 = pneg %p77
        $region18: #{double_conv.5} parent=11 // pred_check_branch
          %123 = sbr.rel (%p121) target = $region20
        $region19: #{double_conv.5} parent=11 // pred_region
          _
        $region20: #{double_conv.5} parent=11 // pred_fallthru
          _
      $region12: #{double_conv.5} parent=5 // pred_fallthru
        _
      %p124 = scmp.lt.s32.totalorder %s9, 2
      // Predicated region
      $region21: #{double_conv.5} parent=5 // pred_check
        %p125 = pneg %p124
      $region22: #{double_conv.5} parent=5 // pred_check_branch
        %127 = sbr.rel (%p125) target = $region24
      $region23: #{double_conv.5} parent=5 // pred_region
        // Predicated region
        $region25: #{double_conv.5} parent=23 // pred_check
          %p128 = pneg %p29
        $region26: #{double_conv.5} parent=23 // pred_check_branch
          %130 = sbr.rel (%p128) target = $region28
        $region27: #{double_conv.5} parent=23 // pred_region
          %s131 = sand.u32 %s19, 1
          %s132 = sand.u32 %s19, 1
          %s133 = smul.addr %s132, 256
          %s134 = scalar_lea.vmem [#allocation2], %s133
          %s135 = smul.u32 8, %s9
          %s136 = smul.addr %s135, 2
          %s137 = smul.addr %s136, 8
          %s138 = scalar_lea.vmem %s0, %s137
          // Predicated region
          $region29: #{double_conv.5} parent=27 // pred_check
            _
          $region30: #{double_conv.5} parent=27 // pred_check_branch
            %140 = sbr.rel (0) target = $region32
          $region31: #{double_conv.5} parent=27 // pred_region
            // Predicated region
            $region33: #{double_conv.5} parent=31 // pred_check
              _
            $region34: #{double_conv.5} parent=31 // pred_check_branch
              %142 = sbr.rel (0) target = $region36
            $region35: #{double_conv.5} parent=31 // pred_region
              // Predicated region
              $region48: #{double_conv.5} parent=35 // pred_check
                _
              $region49: #{double_conv.5} parent=35 // pred_check_branch
                %220 = sbr.rel (0) target = $region51
              $region50: #{double_conv.5} parent=35 // pred_region
                loop: start=0, step=1, limit=1
                $region52: #{double_conv.5} parent=50 // loop_pre_header
                  _
                $region53: #{double_conv.5} parent=50 // loop_header
                  %s222 = sphi 0, %s226
                  %p223 = scmp.ge.s32.totalorder %s222, 1
                  %s227 = sphi %s138, %s138
                  %s228 = sphi %s134, %s134
                $region54: #{double_conv.5} parent=50 // loop_header_branch
                  %225 = sbr.rel (%p223) target = $region58
                $region55: #{double_conv.5} parent=50 // loop_body
                  %v229 = vld [vmem:[%s227] sm:$0xff]
                  %230 = vst [vmem:[%s228] sm:$0xff] %v229
                  %v231 = vld [vmem:[%s227 + $0x8] sm:$0xff]
                  %232 = vst [vmem:[%s228 + $0x8] sm:$0xff] %v231
                  %v233 = vld [vmem:[%s227 + $0x10] sm:$0xff]
                  %234 = vst [vmem:[%s228 + $0x10] sm:$0xff] %v233
                  %v235 = vld [vmem:[%s227 + $0x18] sm:$0xff]
                  %236 = vst [vmem:[%s228 + $0x18] sm:$0xff] %v235
                  %v237 = vld [vmem:[%s227 + $0x20] sm:$0xff]
                  %238 = vst [vmem:[%s228 + $0x20] sm:$0xff] %v237
                  %v239 = vld [vmem:[%s227 + $0x28] sm:$0xff]
                  %240 = vst [vmem:[%s228 + $0x28] sm:$0xff] %v239
                  %v241 = vld [vmem:[%s227 + $0x30] sm:$0xff]
                  %242 = vst [vmem:[%s228 + $0x30] sm:$0xff] %v241
                  %v243 = vld [vmem:[%s227 + $0x38] sm:$0xff]
                  %244 = vst [vmem:[%s228 + $0x38] sm:$0xff] %v243
                  %v245 = vld [vmem:[%s227 + $0x40] sm:$0xff]
                  %246 = vst [vmem:[%s228 + $0x40] sm:$0xff] %v245
                  %v247 = vld [vmem:[%s227 + $0x48] sm:$0xff]
                  %248 = vst [vmem:[%s228 + $0x48] sm:$0xff] %v247
                  %v249 = vld [vmem:[%s227 + $0x50] sm:$0xff]
                  %250 = vst [vmem:[%s228 + $0x50] sm:$0xff] %v249
                  %v251 = vld [vmem:[%s227 + $0x58] sm:$0xff]
                  %252 = vst [vmem:[%s228 + $0x58] sm:$0xff] %v251
                  %v253 = vld [vmem:[%s227 + $0x60] sm:$0xff]
                  %254 = vst [vmem:[%s228 + $0x60] sm:$0xff] %v253
                  %v255 = vld [vmem:[%s227 + $0x68] sm:$0xff]
                  %256 = vst [vmem:[%s228 + $0x68] sm:$0xff] %v255
                  %v257 = vld [vmem:[%s227 + $0x70] sm:$0xff]
                  %258 = vst [vmem:[%s228 + $0x70] sm:$0xff] %v257
                  %v259 = vld [vmem:[%s227 + $0x78] sm:$0xff]
                  %260 = vst [vmem:[%s228 + $0x78] sm:$0xff] %v259
                  %v261 = vld [vmem:[%s227 + $0x100] sm:$0xff]
                  %262 = vst [vmem:[%s228 + $0x80] sm:$0xff] %v261
                  %v263 = vld [vmem:[%s227 + $0x108] sm:$0xff]
                  %264 = vst [vmem:[%s228 + $0x88] sm:$0xff] %v263
                  %v265 = vld [vmem:[%s227 + $0x110] sm:$0xff]
                  %266 = vst [vmem:[%s228 + $0x90] sm:$0xff] %v265
                  %v267 = vld [vmem:[%s227 + $0x118] sm:$0xff]
                  %268 = vst [vmem:[%s228 + $0x98] sm:$0xff] %v267
                  %v269 = vld [vmem:[%s227 + $0x120] sm:$0xff]
                  %270 = vst [vmem:[%s228 + $0xa0] sm:$0xff] %v269
                  %v271 = vld [vmem:[%s227 + $0x128] sm:$0xff]
                  %272 = vst [vmem:[%s228 + $0xa8] sm:$0xff] %v271
                  %v273 = vld [vmem:[%s227 + $0x130] sm:$0xff]
                  %274 = vst [vmem:[%s228 + $0xb0] sm:$0xff] %v273
                  %v275 = vld [vmem:[%s227 + $0x138] sm:$0xff]
                  %276 = vst [vmem:[%s228 + $0xb8] sm:$0xff] %v275
                  %v277 = vld [vmem:[%s227 + $0x140] sm:$0xff]
                  %278 = vst [vmem:[%s228 + $0xc0] sm:$0xff] %v277
                  %v279 = vld [vmem:[%s227 + $0x148] sm:$0xff]
                  %280 = vst [vmem:[%s228 + $0xc8] sm:$0xff] %v279
                  %v281 = vld [vmem:[%s227 + $0x150] sm:$0xff]
                  %282 = vst [vmem:[%s228 + $0xd0] sm:$0xff] %v281
                  %v283 = vld [vmem:[%s227 + $0x158] sm:$0xff]
                  %284 = vst [vmem:[%s228 + $0xd8] sm:$0xff] %v283
                  %v285 = vld [vmem:[%s227 + $0x160] sm:$0xff]
                  %286 = vst [vmem:[%s228 + $0xe0] sm:$0xff] %v285
                  %v287 = vld [vmem:[%s227 + $0x168] sm:$0xff]
                  %288 = vst [vmem:[%s228 + $0xe8] sm:$0xff] %v287
                  %v289 = vld [vmem:[%s227 + $0x170] sm:$0xff]
                  %290 = vst [vmem:[%s228 + $0xf0] sm:$0xff] %v289
                  %v291 = vld [vmem:[%s227 + $0x178] sm:$0xff]
                  %292 = vst [vmem:[%s228 + $0xf8] sm:$0xff] %v291
                $region56: #{double_conv.5} parent=50 // loop_footer
                  %s226 = sadd.s32 1, %s222
                $region57: #{double_conv.5} parent=50 // loop_footer_branch
                  %221 = sbr.rel target = $region53
                $region58: #{double_conv.5} parent=50 // loop_exit
                  _
              $region51: #{double_conv.5} parent=35 // pred_fallthru
                _
              // Predicated region
              $region59: #{double_conv.5} parent=35 // pred_check
                _
              $region60: #{double_conv.5} parent=35 // pred_check_branch
                %294 = sbr.rel target = $region62
              $region61: #{double_conv.5} parent=35 // pred_region
                _
              $region62: #{double_conv.5} parent=35 // pred_fallthru
                _
            $region36: #{double_conv.5} parent=31 // pred_fallthru
              _
            // Predicated region
            $region37: #{double_conv.5} parent=31 // pred_check
              _
            $region38: #{double_conv.5} parent=31 // pred_check_branch
              %144 = sbr.rel target = $region40
            $region39: #{double_conv.5} parent=31 // pred_region
              %s146 = ssub.s32 256, 1
              loop: start=0, step=1, limit=1
              $region41: #{double_conv.5} parent=39 // loop_pre_header
                _
              $region42: #{double_conv.5} parent=39 // loop_header
                %s148 = sphi 0, %s152
                %p149 = scmp.ge.s32.totalorder %s148, 1
                %s153 = sphi %s138, %s138
                %s154 = sphi %s134, %s134
              $region43: #{double_conv.5} parent=39 // loop_header_branch
                %151 = sbr.rel (%p149) target = $region47
              $region44: #{double_conv.5} parent=39 // loop_body
                %v155 = vld [vmem:[%s153] sm:%s146]
                %156 = vst [vmem:[%s154] sm:%s146] %v155
                %v157 = vld [vmem:[%s153 + $0x8] sm:%s146]
                %158 = vst [vmem:[%s154 + $0x8] sm:%s146] %v157
                %v159 = vld [vmem:[%s153 + $0x10] sm:%s146]
                %160 = vst [vmem:[%s154 + $0x10] sm:%s146] %v159
                %v161 = vld [vmem:[%s153 + $0x18] sm:%s146]
                %162 = vst [vmem:[%s154 + $0x18] sm:%s146] %v161
                %v163 = vld [vmem:[%s153 + $0x20] sm:%s146]
                %164 = vst [vmem:[%s154 + $0x20] sm:%s146] %v163
                %v165 = vld [vmem:[%s153 + $0x28] sm:%s146]
                %166 = vst [vmem:[%s154 + $0x28] sm:%s146] %v165
                %v167 = vld [vmem:[%s153 + $0x30] sm:%s146]
                %168 = vst [vmem:[%s154 + $0x30] sm:%s146] %v167
                %v169 = vld [vmem:[%s153 + $0x38] sm:%s146]
                %170 = vst [vmem:[%s154 + $0x38] sm:%s146] %v169
                %v171 = vld [vmem:[%s153 + $0x40] sm:%s146]
                %172 = vst [vmem:[%s154 + $0x40] sm:%s146] %v171
                %v173 = vld [vmem:[%s153 + $0x48] sm:%s146]
                %174 = vst [vmem:[%s154 + $0x48] sm:%s146] %v173
                %v175 = vld [vmem:[%s153 + $0x50] sm:%s146]
                %176 = vst [vmem:[%s154 + $0x50] sm:%s146] %v175
                %v177 = vld [vmem:[%s153 + $0x58] sm:%s146]
                %178 = vst [vmem:[%s154 + $0x58] sm:%s146] %v177
                %v179 = vld [vmem:[%s153 + $0x60] sm:%s146]
                %180 = vst [vmem:[%s154 + $0x60] sm:%s146] %v179
                %v181 = vld [vmem:[%s153 + $0x68] sm:%s146]
                %182 = vst [vmem:[%s154 + $0x68] sm:%s146] %v181
                %v183 = vld [vmem:[%s153 + $0x70] sm:%s146]
                %184 = vst [vmem:[%s154 + $0x70] sm:%s146] %v183
                %v185 = vld [vmem:[%s153 + $0x78] sm:%s146]
                %186 = vst [vmem:[%s154 + $0x78] sm:%s146] %v185
                %v187 = vld [vmem:[%s153 + $0x100] sm:%s146]
                %188 = vst [vmem:[%s154 + $0x80] sm:%s146] %v187
                %v189 = vld [vmem:[%s153 + $0x108] sm:%s146]
                %190 = vst [vmem:[%s154 + $0x88] sm:%s146] %v189
                %v191 = vld [vmem:[%s153 + $0x110] sm:%s146]
                %192 = vst [vmem:[%s154 + $0x90] sm:%s146] %v191
                %v193 = vld [vmem:[%s153 + $0x118] sm:%s146]
                %194 = vst [vmem:[%s154 + $0x98] sm:%s146] %v193
                %v195 = vld [vmem:[%s153 + $0x120] sm:%s146]
                %196 = vst [vmem:[%s154 + $0xa0] sm:%s146] %v195
                %v197 = vld [vmem:[%s153 + $0x128] sm:%s146]
                %198 = vst [vmem:[%s154 + $0xa8] sm:%s146] %v197
                %v199 = vld [vmem:[%s153 + $0x130] sm:%s146]
                %200 = vst [vmem:[%s154 + $0xb0] sm:%s146] %v199
                %v201 = vld [vmem:[%s153 + $0x138] sm:%s146]
                %202 = vst [vmem:[%s154 + $0xb8] sm:%s146] %v201
                %v203 = vld [vmem:[%s153 + $0x140] sm:%s146]
                %204 = vst [vmem:[%s154 + $0xc0] sm:%s146] %v203
                %v205 = vld [vmem:[%s153 + $0x148] sm:%s146]
                %206 = vst [vmem:[%s154 + $0xc8] sm:%s146] %v205
                %v207 = vld [vmem:[%s153 + $0x150] sm:%s146]
                %208 = vst [vmem:[%s154 + $0xd0] sm:%s146] %v207
                %v209 = vld [vmem:[%s153 + $0x158] sm:%s146]
                %210 = vst [vmem:[%s154 + $0xd8] sm:%s146] %v209
                %v211 = vld [vmem:[%s153 + $0x160] sm:%s146]
                %212 = vst [vmem:[%s154 + $0xe0] sm:%s146] %v211
                %v213 = vld [vmem:[%s153 + $0x168] sm:%s146]
                %214 = vst [vmem:[%s154 + $0xe8] sm:%s146] %v213
                %v215 = vld [vmem:[%s153 + $0x170] sm:%s146]
                %216 = vst [vmem:[%s154 + $0xf0] sm:%s146] %v215
                %v217 = vld [vmem:[%s153 + $0x178] sm:%s146]
                %218 = vst [vmem:[%s154 + $0xf8] sm:%s146] %v217
              $region45: #{double_conv.5} parent=39 // loop_footer
                %s152 = sadd.s32 1, %s148
              $region46: #{double_conv.5} parent=39 // loop_footer_branch
                %147 = sbr.rel target = $region42
              $region47: #{double_conv.5} parent=39 // loop_exit
                _
            $region40: #{double_conv.5} parent=31 // pred_fallthru
              _
          $region32: #{double_conv.5} parent=27 // pred_fallthru
            _
          %295 = vnop
        $region28: #{double_conv.5} parent=23 // pred_fallthru
          _
      $region24: #{double_conv.5} parent=5 // pred_fallthru
        _
      %p296 = scmp.le.s32.totalorder 1, %s9
      %p297 = scmp.lt.s32.totalorder %s9, 3
      %p298 = pnand %p296, %p297
      %p299 = pneg %p298
      // Predicated region
      $region63: #{double_conv.5} parent=5 // pred_check
        _
      $region64: #{double_conv.5} parent=5 // pred_check_branch
        %301 = sbr.rel (%p298) target = $region66
      $region65: #{double_conv.5} parent=5 // pred_region
        %s302 = ssub.s32 %s9, 1
        %s303 = sand.u32 %s22, 1
        %s304 = sand.u32 %s22, 1
        %s305 = smul.addr %s304, 256
        %s306 = scalar_lea.vmem [#allocation2], %s305
        // Predicated region
        $region67: #{double_conv.5} parent=65 // pred_check
          %p307 = pneg %p35
        $region68: #{double_conv.5} parent=65 // pred_check_branch
          %309 = sbr.rel (%p307) target = $region70
        $region69: #{double_conv.5} parent=65 // pred_region
          _
        $region70: #{double_conv.5} parent=65 // pred_fallthru
          _
        %s310 = sand.u32 %s22, 1
        %s311 = sand.u32 %s22, 1
        %s312 = smul.addr %s311, 256
        %s313 = scalar_lea.vmem [#allocation2], %s312
        %p314 = pneg %p35
        %p315 = pneg %p32
        %p316 = pneg %p56
        %p317 = pneg %p53
        %p318 = pneg %p77
        %p319 = pneg %p74
        %p320 = pneg %p103
        %p321 = pneg %p100
        %s322 = sand.u32 %s90, 1
        %s323 = sand.u32 %s90, 1
        %s324 = smul.addr %s323, 256
        %s325 = scalar_lea.vmem [#allocation3], %s324
        %s326 = smul.u32 8, %s14
        %s327 = smul.u32 8, %s14
        %v328 = vld [vmem:[%s306] sm:$0xff]
        %v329 = vld [vmem:[%s306 + $0x8] sm:$0xff]
        %v330 = vld [vmem:[%s306 + $0x10] sm:$0xff]
        %v331 = vld [vmem:[%s306 + $0x18] sm:$0xff]
        %v332 = vld [vmem:[%s306 + $0x20] sm:$0xff]
        %v333 = vld [vmem:[%s306 + $0x28] sm:$0xff]
        %v334 = vld [vmem:[%s306 + $0x30] sm:$0xff]
        %v335 = vld [vmem:[%s306 + $0x38] sm:$0xff]
        %v336 = vld [vmem:[%s306 + $0x40] sm:$0xff]
        %v337 = vld [vmem:[%s306 + $0x48] sm:$0xff]
        %v338 = vld [vmem:[%s306 + $0x50] sm:$0xff]
        %v339 = vld [vmem:[%s306 + $0x58] sm:$0xff]
        %v340 = vld [vmem:[%s306 + $0x60] sm:$0xff]
        %v341 = vld [vmem:[%s306 + $0x68] sm:$0xff]
        %v342 = vld [vmem:[%s306 + $0x70] sm:$0xff]
        %v343 = vld [vmem:[%s306 + $0x78] sm:$0xff]
        %v344 = vld [vmem:[%s306 + $0x80] sm:$0xff]
        %v345 = vld [vmem:[%s306 + $0x88] sm:$0xff]
        %v346 = vld [vmem:[%s306 + $0x90] sm:$0xff]
        %v347 = vld [vmem:[%s306 + $0x98] sm:$0xff]
        %v348 = vld [vmem:[%s306 + $0xa0] sm:$0xff]
        %v349 = vld [vmem:[%s306 + $0xa8] sm:$0xff]
        %v350 = vld [vmem:[%s306 + $0xb0] sm:$0xff]
        %v351 = vld [vmem:[%s306 + $0xb8] sm:$0xff]
        %v352 = vld [vmem:[%s306 + $0xc0] sm:$0xff]
        %v353 = vld [vmem:[%s306 + $0xc8] sm:$0xff]
        %v354 = vld [vmem:[%s306 + $0xd0] sm:$0xff]
        %v355 = vld [vmem:[%s306 + $0xd8] sm:$0xff]
        %v356 = vld [vmem:[%s306 + $0xe0] sm:$0xff]
        %v357 = vld [vmem:[%s306 + $0xe8] sm:$0xff]
        %v358 = vld [vmem:[%s306 + $0xf0] sm:$0xff]
        %v359 = vld [vmem:[%s306 + $0xf8] sm:$0xff]
        %v360 = vld [vmem:[%s1] sm:$0x1]
        %v362 = vlaneseq
        %v363 = vshrl.u32 %v362, 7
        %v364 = vsub.s32 0, %v363
        %v365 = vrot.slane %v360, %v364
        %v367 = vmul.f32 %v328, %v365
        %v368 = vmul.f32 %v329, %v365
        %v369 = vmul.f32 %v330, %v365
        %v370 = vmul.f32 %v331, %v365
        %v371 = vmul.f32 %v332, %v365
        %v372 = vmul.f32 %v333, %v365
        %v373 = vmul.f32 %v334, %v365
        %v374 = vmul.f32 %v335, %v365
        %v375 = vmul.f32 %v336, %v365
        %v376 = vmul.f32 %v337, %v365
        %v377 = vmul.f32 %v338, %v365
        %v378 = vmul.f32 %v339, %v365
        %v379 = vmul.f32 %v340, %v365
        %v380 = vmul.f32 %v341, %v365
        %v381 = vmul.f32 %v342, %v365
        %v382 = vmul.f32 %v343, %v365
        %v383 = vmul.f32 %v344, %v365
        %v384 = vmul.f32 %v345, %v365
        %v385 = vmul.f32 %v346, %v365
        %v386 = vmul.f32 %v347, %v365
        %v387 = vmul.f32 %v348, %v365
        %v388 = vmul.f32 %v349, %v365
        %v389 = vmul.f32 %v350, %v365
        %v390 = vmul.f32 %v351, %v365
        %v391 = vmul.f32 %v352, %v365
        %v392 = vmul.f32 %v353, %v365
        %v393 = vmul.f32 %v354, %v365
        %v394 = vmul.f32 %v355, %v365
        %v395 = vmul.f32 %v356, %v365
        %v396 = vmul.f32 %v357, %v365
        %v397 = vmul.f32 %v358, %v365
        %v398 = vmul.f32 %v359, %v365
        %v399 = vld [vmem:[%s2] sm:$0x1]
        %v401 = vlaneseq
        %v402 = vshrl.u32 %v401, 7
        %v403 = vsub.s32 0, %v402
        %v404 = vrot.slane %v399, %v403
        %v406 = vadd.f32 %v367, %v404
        %v407 = vadd.f32 %v368, %v404
        %v408 = vadd.f32 %v369, %v404
        %v409 = vadd.f32 %v370, %v404
        %v410 = vadd.f32 %v371, %v404
        %v411 = vadd.f32 %v372, %v404
        %v412 = vadd.f32 %v373, %v404
        %v413 = vadd.f32 %v374, %v404
        %v414 = vadd.f32 %v375, %v404
        %v415 = vadd.f32 %v376, %v404
        %v416 = vadd.f32 %v377, %v404
        %v417 = vadd.f32 %v378, %v404
        %v418 = vadd.f32 %v379, %v404
        %v419 = vadd.f32 %v380, %v404
        %v420 = vadd.f32 %v381, %v404
        %v421 = vadd.f32 %v382, %v404
        %v422 = vadd.f32 %v383, %v404
        %v423 = vadd.f32 %v384, %v404
        %v424 = vadd.f32 %v385, %v404
        %v425 = vadd.f32 %v386, %v404
        %v426 = vadd.f32 %v387, %v404
        %v427 = vadd.f32 %v388, %v404
        %v428 = vadd.f32 %v389, %v404
        %v429 = vadd.f32 %v390, %v404
        %v430 = vadd.f32 %v391, %v404
        %v431 = vadd.f32 %v392, %v404
        %v432 = vadd.f32 %v393, %v404
        %v433 = vadd.f32 %v394, %v404
        %v434 = vadd.f32 %v395, %v404
        %v435 = vadd.f32 %v396, %v404
        %v436 = vadd.f32 %v397, %v404
        %v437 = vadd.f32 %v398, %v404
        %v438 = vmax.f32 %v406, 0.0
        %v439 = vmax.f32 %v407, 0.0
        %v440 = vmax.f32 %v408, 0.0
        %v441 = vmax.f32 %v409, 0.0
        %v442 = vmax.f32 %v410, 0.0
        %v443 = vmax.f32 %v411, 0.0
        %v444 = vmax.f32 %v412, 0.0
        %v445 = vmax.f32 %v413, 0.0
        %v446 = vmax.f32 %v414, 0.0
        %v447 = vmax.f32 %v415, 0.0
        %v448 = vmax.f32 %v416, 0.0
        %v449 = vmax.f32 %v417, 0.0
        %v450 = vmax.f32 %v418, 0.0
        %v451 = vmax.f32 %v419, 0.0
        %v452 = vmax.f32 %v420, 0.0
        %v453 = vmax.f32 %v421, 0.0
        %v454 = vmax.f32 %v422, 0.0
        %v455 = vmax.f32 %v423, 0.0
        %v456 = vmax.f32 %v424, 0.0
        %v457 = vmax.f32 %v425, 0.0
        %v458 = vmax.f32 %v426, 0.0
        %v459 = vmax.f32 %v427, 0.0
        %v460 = vmax.f32 %v428, 0.0
        %v461 = vmax.f32 %v429, 0.0
        %v462 = vmax.f32 %v430, 0.0
        %v463 = vmax.f32 %v431, 0.0
        %v464 = vmax.f32 %v432, 0.0
        %v465 = vmax.f32 %v433, 0.0
        %v466 = vmax.f32 %v434, 0.0
        %v467 = vmax.f32 %v435, 0.0
        %v468 = vmax.f32 %v436, 0.0
        %v469 = vmax.f32 %v437, 0.0
        %470 = vst [vmem:[%s325] sm:$0xff] %v438
        %471 = vst [vmem:[%s325 + $0x8] sm:$0xff] %v439
        %472 = vst [vmem:[%s325 + $0x10] sm:$0xff] %v440
        %473 = vst [vmem:[%s325 + $0x18] sm:$0xff] %v441
        %474 = vst [vmem:[%s325 + $0x20] sm:$0xff] %v442
        %475 = vst [vmem:[%s325 + $0x28] sm:$0xff] %v443
        %476 = vst [vmem:[%s325 + $0x30] sm:$0xff] %v444
        %477 = vst [vmem:[%s325 + $0x38] sm:$0xff] %v445
        %478 = vst [vmem:[%s325 + $0x40] sm:$0xff] %v446
        %479 = vst [vmem:[%s325 + $0x48] sm:$0xff] %v447
        %480 = vst [vmem:[%s325 + $0x50] sm:$0xff] %v448
        %481 = vst [vmem:[%s325 + $0x58] sm:$0xff] %v449
        %482 = vst [vmem:[%s325 + $0x60] sm:$0xff] %v450
        %483 = vst [vmem:[%s325 + $0x68] sm:$0xff] %v451
        %484 = vst [vmem:[%s325 + $0x70] sm:$0xff] %v452
        %485 = vst [vmem:[%s325 + $0x78] sm:$0xff] %v453
        %486 = vst [vmem:[%s325 + $0x80] sm:$0xff] %v454
        %487 = vst [vmem:[%s325 + $0x88] sm:$0xff] %v455
        %488 = vst [vmem:[%s325 + $0x90] sm:$0xff] %v456
        %489 = vst [vmem:[%s325 + $0x98] sm:$0xff] %v457
        %490 = vst [vmem:[%s325 + $0xa0] sm:$0xff] %v458
        %491 = vst [vmem:[%s325 + $0xa8] sm:$0xff] %v459
        %492 = vst [vmem:[%s325 + $0xb0] sm:$0xff] %v460
        %493 = vst [vmem:[%s325 + $0xb8] sm:$0xff] %v461
        %494 = vst [vmem:[%s325 + $0xc0] sm:$0xff] %v462
        %495 = vst [vmem:[%s325 + $0xc8] sm:$0xff] %v463
        %496 = vst [vmem:[%s325 + $0xd0] sm:$0xff] %v464
        %497 = vst [vmem:[%s325 + $0xd8] sm:$0xff] %v465
        %498 = vst [vmem:[%s325 + $0xe0] sm:$0xff] %v466
        %499 = vst [vmem:[%s325 + $0xe8] sm:$0xff] %v467
        %500 = vst [vmem:[%s325 + $0xf0] sm:$0xff] %v468
        %501 = vst [vmem:[%s325 + $0xf8] sm:$0xff] %v469
        %s502 = sand.u32 %s90, 1
        %s503 = sand.u32 %s90, 1
        %s504 = smul.addr %s503, 256
        %s505 = scalar_lea.vmem [#allocation3], %s504
        // Predicated region
        $region71: #{double_conv.5} parent=65 // pred_check
          %p506 = pneg %p100
        $region72: #{double_conv.5} parent=65 // pred_check_branch
          %508 = sbr.rel (%p506) target = $region74
        $region73: #{double_conv.5} parent=65 // pred_region
          %s509 = smul.u32 8, %s14
          %s510 = smul.addr %s509, 2
          %s511 = smul.addr %s510, 8
          %s512 = scalar_lea.vmem %s3, %s511
          // Predicated region
          $region75: #{double_conv.5} parent=73 // pred_check
            _
          $region76: #{double_conv.5} parent=73 // pred_check_branch
            %514 = sbr.rel (0) target = $region78
          $region77: #{double_conv.5} parent=73 // pred_region
            // Predicated region
            $region79: #{double_conv.5} parent=77 // pred_check
              _
            $region80: #{double_conv.5} parent=77 // pred_check_branch
              %516 = sbr.rel (0) target = $region82
            $region81: #{double_conv.5} parent=77 // pred_region
              // Predicated region
              $region94: #{double_conv.5} parent=81 // pred_check
                _
              $region95: #{double_conv.5} parent=81 // pred_check_branch
                %594 = sbr.rel (0) target = $region97
              $region96: #{double_conv.5} parent=81 // pred_region
                loop: start=0, step=1, limit=1
                $region98: #{double_conv.5} parent=96 // loop_pre_header
                  _
                $region99: #{double_conv.5} parent=96 // loop_header
                  %s596 = sphi 0, %s600
                  %p597 = scmp.ge.s32.totalorder %s596, 1
                  %s601 = sphi %s505, %s505
                  %s602 = sphi %s512, %s512
                $region100: #{double_conv.5} parent=96 // loop_header_branch
                  %599 = sbr.rel (%p597) target = $region104
                $region101: #{double_conv.5} parent=96 // loop_body
                  %v603 = vld [vmem:[%s601] sm:$0xff]
                  %604 = vst [vmem:[%s602] sm:$0xff] %v603
                  %v605 = vld [vmem:[%s601 + $0x8] sm:$0xff]
                  %606 = vst [vmem:[%s602 + $0x8] sm:$0xff] %v605
                  %v607 = vld [vmem:[%s601 + $0x10] sm:$0xff]
                  %608 = vst [vmem:[%s602 + $0x10] sm:$0xff] %v607
                  %v609 = vld [vmem:[%s601 + $0x18] sm:$0xff]
                  %610 = vst [vmem:[%s602 + $0x18] sm:$0xff] %v609
                  %v611 = vld [vmem:[%s601 + $0x20] sm:$0xff]
                  %612 = vst [vmem:[%s602 + $0x20] sm:$0xff] %v611
                  %v613 = vld [vmem:[%s601 + $0x28] sm:$0xff]
                  %614 = vst [vmem:[%s602 + $0x28] sm:$0xff] %v613
                  %v615 = vld [vmem:[%s601 + $0x30] sm:$0xff]
                  %616 = vst [vmem:[%s602 + $0x30] sm:$0xff] %v615
                  %v617 = vld [vmem:[%s601 + $0x38] sm:$0xff]
                  %618 = vst [vmem:[%s602 + $0x38] sm:$0xff] %v617
                  %v619 = vld [vmem:[%s601 + $0x40] sm:$0xff]
                  %620 = vst [vmem:[%s602 + $0x40] sm:$0xff] %v619
                  %v621 = vld [vmem:[%s601 + $0x48] sm:$0xff]
                  %622 = vst [vmem:[%s602 + $0x48] sm:$0xff] %v621
                  %v623 = vld [vmem:[%s601 + $0x50] sm:$0xff]
                  %624 = vst [vmem:[%s602 + $0x50] sm:$0xff] %v623
                  %v625 = vld [vmem:[%s601 + $0x58] sm:$0xff]
                  %626 = vst [vmem:[%s602 + $0x58] sm:$0xff] %v625
                  %v627 = vld [vmem:[%s601 + $0x60] sm:$0xff]
                  %628 = vst [vmem:[%s602 + $0x60] sm:$0xff] %v627
                  %v629 = vld [vmem:[%s601 + $0x68] sm:$0xff]
                  %630 = vst [vmem:[%s602 + $0x68] sm:$0xff] %v629
                  %v631 = vld [vmem:[%s601 + $0x70] sm:$0xff]
                  %632 = vst [vmem:[%s602 + $0x70] sm:$0xff] %v631
                  %v633 = vld [vmem:[%s601 + $0x78] sm:$0xff]
                  %634 = vst [vmem:[%s602 + $0x78] sm:$0xff] %v633
                  %v635 = vld [vmem:[%s601 + $0x80] sm:$0xff]
                  %636 = vst [vmem:[%s602 + $0x100] sm:$0xff] %v635
                  %v637 = vld [vmem:[%s601 + $0x88] sm:$0xff]
                  %638 = vst [vmem:[%s602 + $0x108] sm:$0xff] %v637
                  %v639 = vld [vmem:[%s601 + $0x90] sm:$0xff]
                  %640 = vst [vmem:[%s602 + $0x110] sm:$0xff] %v639
                  %v641 = vld [vmem:[%s601 + $0x98] sm:$0xff]
                  %642 = vst [vmem:[%s602 + $0x118] sm:$0xff] %v641
                  %v643 = vld [vmem:[%s601 + $0xa0] sm:$0xff]
                  %644 = vst [vmem:[%s602 + $0x120] sm:$0xff] %v643
                  %v645 = vld [vmem:[%s601 + $0xa8] sm:$0xff]
                  %646 = vst [vmem:[%s602 + $0x128] sm:$0xff] %v645
                  %v647 = vld [vmem:[%s601 + $0xb0] sm:$0xff]
                  %648 = vst [vmem:[%s602 + $0x130] sm:$0xff] %v647
                  %v649 = vld [vmem:[%s601 + $0xb8] sm:$0xff]
                  %650 = vst [vmem:[%s602 + $0x138] sm:$0xff] %v649
                  %v651 = vld [vmem:[%s601 + $0xc0] sm:$0xff]
                  %652 = vst [vmem:[%s602 + $0x140] sm:$0xff] %v651
                  %v653 = vld [vmem:[%s601 + $0xc8] sm:$0xff]
                  %654 = vst [vmem:[%s602 + $0x148] sm:$0xff] %v653
                  %v655 = vld [vmem:[%s601 + $0xd0] sm:$0xff]
                  %656 = vst [vmem:[%s602 + $0x150] sm:$0xff] %v655
                  %v657 = vld [vmem:[%s601 + $0xd8] sm:$0xff]
                  %658 = vst [vmem:[%s602 + $0x158] sm:$0xff] %v657
                  %v659 = vld [vmem:[%s601 + $0xe0] sm:$0xff]
                  %660 = vst [vmem:[%s602 + $0x160] sm:$0xff] %v659
                  %v661 = vld [vmem:[%s601 + $0xe8] sm:$0xff]
                  %662 = vst [vmem:[%s602 + $0x168] sm:$0xff] %v661
                  %v663 = vld [vmem:[%s601 + $0xf0] sm:$0xff]
                  %664 = vst [vmem:[%s602 + $0x170] sm:$0xff] %v663
                  %v665 = vld [vmem:[%s601 + $0xf8] sm:$0xff]
                  %666 = vst [vmem:[%s602 + $0x178] sm:$0xff] %v665
                $region102: #{double_conv.5} parent=96 // loop_footer
                  %s600 = sadd.s32 1, %s596
                $region103: #{double_conv.5} parent=96 // loop_footer_branch
                  %595 = sbr.rel target = $region99
                $region104: #{double_conv.5} parent=96 // loop_exit
                  _
              $region97: #{double_conv.5} parent=81 // pred_fallthru
                _
              // Predicated region
              $region105: #{double_conv.5} parent=81 // pred_check
                _
              $region106: #{double_conv.5} parent=81 // pred_check_branch
                %668 = sbr.rel target = $region108
              $region107: #{double_conv.5} parent=81 // pred_region
                _
              $region108: #{double_conv.5} parent=81 // pred_fallthru
                _
            $region82: #{double_conv.5} parent=77 // pred_fallthru
              _
            // Predicated region
            $region83: #{double_conv.5} parent=77 // pred_check
              _
            $region84: #{double_conv.5} parent=77 // pred_check_branch
              %518 = sbr.rel target = $region86
            $region85: #{double_conv.5} parent=77 // pred_region
              %s520 = ssub.s32 256, 1
              loop: start=0, step=1, limit=1
              $region87: #{double_conv.5} parent=85 // loop_pre_header
                _
              $region88: #{double_conv.5} parent=85 // loop_header
                %s522 = sphi 0, %s526
                %p523 = scmp.ge.s32.totalorder %s522, 1
                %s527 = sphi %s505, %s505
                %s528 = sphi %s512, %s512
              $region89: #{double_conv.5} parent=85 // loop_header_branch
                %525 = sbr.rel (%p523) target = $region93
              $region90: #{double_conv.5} parent=85 // loop_body
                %v529 = vld [vmem:[%s527] sm:%s520]
                %530 = vst [vmem:[%s528] sm:%s520] %v529
                %v531 = vld [vmem:[%s527 + $0x8] sm:%s520]
                %532 = vst [vmem:[%s528 + $0x8] sm:%s520] %v531
                %v533 = vld [vmem:[%s527 + $0x10] sm:%s520]
                %534 = vst [vmem:[%s528 + $0x10] sm:%s520] %v533
                %v535 = vld [vmem:[%s527 + $0x18] sm:%s520]
                %536 = vst [vmem:[%s528 + $0x18] sm:%s520] %v535
                %v537 = vld [vmem:[%s527 + $0x20] sm:%s520]
                %538 = vst [vmem:[%s528 + $0x20] sm:%s520] %v537
                %v539 = vld [vmem:[%s527 + $0x28] sm:%s520]
                %540 = vst [vmem:[%s528 + $0x28] sm:%s520] %v539
                %v541 = vld [vmem:[%s527 + $0x30] sm:%s520]
                %542 = vst [vmem:[%s528 + $0x30] sm:%s520] %v541
                %v543 = vld [vmem:[%s527 + $0x38] sm:%s520]
                %544 = vst [vmem:[%s528 + $0x38] sm:%s520] %v543
                %v545 = vld [vmem:[%s527 + $0x40] sm:%s520]
                %546 = vst [vmem:[%s528 + $0x40] sm:%s520] %v545
                %v547 = vld [vmem:[%s527 + $0x48] sm:%s520]
                %548 = vst [vmem:[%s528 + $0x48] sm:%s520] %v547
                %v549 = vld [vmem:[%s527 + $0x50] sm:%s520]
                %550 = vst [vmem:[%s528 + $0x50] sm:%s520] %v549
                %v551 = vld [vmem:[%s527 + $0x58] sm:%s520]
                %552 = vst [vmem:[%s528 + $0x58] sm:%s520] %v551
                %v553 = vld [vmem:[%s527 + $0x60] sm:%s520]
                %554 = vst [vmem:[%s528 + $0x60] sm:%s520] %v553
                %v555 = vld [vmem:[%s527 + $0x68] sm:%s520]
                %556 = vst [vmem:[%s528 + $0x68] sm:%s520] %v555
                %v557 = vld [vmem:[%s527 + $0x70] sm:%s520]
                %558 = vst [vmem:[%s528 + $0x70] sm:%s520] %v557
                %v559 = vld [vmem:[%s527 + $0x78] sm:%s520]
                %560 = vst [vmem:[%s528 + $0x78] sm:%s520] %v559
                %v561 = vld [vmem:[%s527 + $0x80] sm:%s520]
                %562 = vst [vmem:[%s528 + $0x100] sm:%s520] %v561
                %v563 = vld [vmem:[%s527 + $0x88] sm:%s520]
                %564 = vst [vmem:[%s528 + $0x108] sm:%s520] %v563
                %v565 = vld [vmem:[%s527 + $0x90] sm:%s520]
                %566 = vst [vmem:[%s528 + $0x110] sm:%s520] %v565
                %v567 = vld [vmem:[%s527 + $0x98] sm:%s520]
                %568 = vst [vmem:[%s528 + $0x118] sm:%s520] %v567
                %v569 = vld [vmem:[%s527 + $0xa0] sm:%s520]
                %570 = vst [vmem:[%s528 + $0x120] sm:%s520] %v569
                %v571 = vld [vmem:[%s527 + $0xa8] sm:%s520]
                %572 = vst [vmem:[%s528 + $0x128] sm:%s520] %v571
                %v573 = vld [vmem:[%s527 + $0xb0] sm:%s520]
                %574 = vst [vmem:[%s528 + $0x130] sm:%s520] %v573
                %v575 = vld [vmem:[%s527 + $0xb8] sm:%s520]
                %576 = vst [vmem:[%s528 + $0x138] sm:%s520] %v575
                %v577 = vld [vmem:[%s527 + $0xc0] sm:%s520]
                %578 = vst [vmem:[%s528 + $0x140] sm:%s520] %v577
                %v579 = vld [vmem:[%s527 + $0xc8] sm:%s520]
                %580 = vst [vmem:[%s528 + $0x148] sm:%s520] %v579
                %v581 = vld [vmem:[%s527 + $0xd0] sm:%s520]
                %582 = vst [vmem:[%s528 + $0x150] sm:%s520] %v581
                %v583 = vld [vmem:[%s527 + $0xd8] sm:%s520]
                %584 = vst [vmem:[%s528 + $0x158] sm:%s520] %v583
                %v585 = vld [vmem:[%s527 + $0xe0] sm:%s520]
                %586 = vst [vmem:[%s528 + $0x160] sm:%s520] %v585
                %v587 = vld [vmem:[%s527 + $0xe8] sm:%s520]
                %588 = vst [vmem:[%s528 + $0x168] sm:%s520] %v587
                %v589 = vld [vmem:[%s527 + $0xf0] sm:%s520]
                %590 = vst [vmem:[%s528 + $0x170] sm:%s520] %v589
                %v591 = vld [vmem:[%s527 + $0xf8] sm:%s520]
                %592 = vst [vmem:[%s528 + $0x178] sm:%s520] %v591
              $region91: #{double_conv.5} parent=85 // loop_footer
                %s526 = sadd.s32 1, %s522
              $region92: #{double_conv.5} parent=85 // loop_footer_branch
                %521 = sbr.rel target = $region88
              $region93: #{double_conv.5} parent=85 // loop_exit
                _
            $region86: #{double_conv.5} parent=77 // pred_fallthru
              _
          $region78: #{double_conv.5} parent=73 // pred_fallthru
            _
          %669 = vnop
        $region74: #{double_conv.5} parent=65 // pred_fallthru
          _
      $region66: #{double_conv.5} parent=5 // pred_fallthru
        _
      %p670 = scmp.le.s32.totalorder 2, %s9
      // Predicated region
      $region109: #{double_conv.5} parent=5 // pred_check
        %p671 = pneg %p670
      $region110: #{double_conv.5} parent=5 // pred_check_branch
        %673 = sbr.rel (%p671) target = $region112
      $region111: #{double_conv.5} parent=5 // pred_region
        %s674 = ssub.s32 %s9, 2
        // Predicated region
        $region113: #{double_conv.5} parent=111 // pred_check
          %p675 = pneg %p106
        $region114: #{double_conv.5} parent=111 // pred_check_branch
          %677 = sbr.rel (%p675) target = $region116
        $region115: #{double_conv.5} parent=111 // pred_region
          %s678 = sand.u32 %s91, 1
          %s679 = sand.u32 %s91, 1
          %s680 = smul.addr %s679, 256
          %s681 = scalar_lea.vmem [#allocation3], %s680
        $region116: #{double_conv.5} parent=111 // pred_fallthru
          _
      $region112: #{double_conv.5} parent=5 // pred_fallthru
        _
    $region6: #{double_conv.5} parent=1 // loop_footer
      %s13 = sadd.s32 1, %s9
    $region7: #{double_conv.5} parent=1 // loop_footer_branch
      %8 = sbr.rel target = $region3
    $region8: #{double_conv.5} parent=1 // loop_exit
      _

// kernel: double_conv.4
$region0: #{double_conv.4}
  #allocation0 [shape = 'u32[]', space=smem, size = 0x4, offset = 0x4, fixed_abs, tag = 'smem constant byte address 0x4 - core index']
  #allocation1 [shape = 'u32[144,128]{1,0:T(1,128)}', space=vmem, size = 0x12000, scoped, tag = 'internal scratch']
  %s0 = inlined_call_operand.vmem [shape: bf16[4,10,18,8], index: 0, kind: input, shape index: {}]
  %s1 = inlined_call_operand.vmem [shape: bf16[9,8,128], index: 1, kind: input, shape index: {}]
  %s2 = inlined_call_operand.vmem [shape: f32[2,16,16,128], index: 2, kind: output, shape index: {0}]
  %s3 = inlined_call_operand.vmem [shape: f32[2,2,128], index: 3, kind: output, shape index: {1}]
  %4 = xla_tuple %s2, %s3
  %s5 = sld [smem:[#allocation0]]
  $region83: #{double_conv.4} parent=0
    _
  %s7 = ssub.s32 1, %s5
  %s8 = scalar_select 0, %s7, %s5
  $region1: #{double_conv.4} parent=0
    #allocation2 [shape = 'u8[262144]{0}', space=vmem, size = 0x40000, scoped, tag = 'output window, operand 0']
    loop: start=0, step=1, limit=4
    $region2: #{double_conv.4} parent=1 // loop_pre_header
      _
    $region3: #{double_conv.4} parent=1 // loop_header
      %s10 = sphi 0, %s14
      %p11 = scmp.ge.s32.totalorder %s10, 4
      %s20 = sphi 0, %s22
      %s23 = sphi 0, %s20
      %s24 = sphi 0, %s23
      %s40 = sphi 0, %s24
      %s44 = sphi 0, %s44
      %s46 = sphi 0, %s44
      %s47 = sphi 0, %s46
      %s61 = sphi 0, %s47
      %s67 = sphi 0, %s69
      %s70 = sphi 0, %s67
      %s71 = sphi 0, %s70
      %s87 = sphi 0, %s71
      %s93 = sphi 0, %s95
      %s96 = sphi 0, %s93
      %s97 = sphi 0, %s96
      %s113 = sphi 0, %s97
    $region4: #{double_conv.4} parent=1 // loop_header_branch
      %13 = sbr.rel (%p11) target = $region8
    $region5: #{double_conv.4} parent=1 // loop_body
      %s15 = ssub.s32 %s10, 1
      %s16 = ssub.s32 %s10, 2
      %s17 = sadd.s32 %s10, 1
      %s18 = ssub.s32 %s10, %s17
      %p19 = scmp.eq.s32.totalorder %s18, 0
      %s21 = sadd.s32 %s20, 1
      %s22 = scalar_select %p19, %s20, %s21
      %p25 = pneg %p19
      %p26 = scmp.eq.s32.totalorder %s10, 1
      %p27 = por %p25, %p26
      %p28 = scmp.ne.s32.totalorder %s20, %s23
      %p29 = scmp.eq.s32.totalorder %s10, 0
      %p30 = por %p28, %p29
      %p31 = scmp.ne.s32.totalorder %s20, %s23
      %p32 = scmp.eq.s32.totalorder %s15, 1
      %p33 = por %p31, %p32
      %p34 = scmp.ne.s32.totalorder %s23, %s24
      %p35 = scmp.eq.s32.totalorder %s15, 0
      %p36 = por %p34, %p35
      %p37 = scmp.ne.s32.totalorder %s23, %s24
      %p38 = scmp.eq.s32.totalorder %s16, 1
      %p39 = por %p37, %p38
      %p41 = scmp.ne.s32.totalorder %s24, %s40
      %p42 = scmp.eq.s32.totalorder %s16, 0
      %p43 = por %p41, %p42
      %s45 = sadd.s32 %s44, 1
      %p48 = scmp.eq.s32.totalorder %s10, 1
      %p49 = scmp.ne.s32.totalorder %s44, %s46
      %p50 = scmp.eq.s32.totalorder %s10, 0
      %p51 = por %p49, %p50
      %p52 = scmp.ne.s32.totalorder %s44, %s46
      %p53 = scmp.eq.s32.totalorder %s15, 1
      %p54 = por %p52, %p53
      %p55 = scmp.ne.s32.totalorder %s46, %s47
      %p56 = scmp.eq.s32.totalorder %s15, 0
      %p57 = por %p55, %p56
      %p58 = scmp.ne.s32.totalorder %s46, %s47
      %p59 = scmp.eq.s32.totalorder %s16, 1
      %p60 = por %p58, %p59
      %p62 = scmp.ne.s32.totalorder %s47, %s61
      %p63 = scmp.eq.s32.totalorder %s16, 0
      %p64 = por %p62, %p63
      %s65 = ssub.s32 %s10, %s17
      %p66 = scmp.eq.s32.totalorder %s65, 0
      %s68 = sadd.s32 %s67, 1
      %s69 = scalar_select %p66, %s67, %s68
      %p72 = pneg %p66
      %p73 = scmp.eq.s32.totalorder %s10, 1
      %p74 = por %p72, %p73
      %p75 = scmp.ne.s32.totalorder %s67, %s70
      %p76 = scmp.eq.s32.totalorder %s10, 0
      %p77 = por %p75, %p76
      %p78 = scmp.ne.s32.totalorder %s67, %s70
      %p79 = scmp.eq.s32.totalorder %s15, 1
      %p80 = por %p78, %p79
      %p81 = scmp.ne.s32.totalorder %s70, %s71
      %p82 = scmp.eq.s32.totalorder %s15, 0
      %p83 = por %p81, %p82
      %p84 = scmp.ne.s32.totalorder %s70, %s71
      %p85 = scmp.eq.s32.totalorder %s16, 1
      %p86 = por %p84, %p85
      %p88 = scmp.ne.s32.totalorder %s71, %s87
      %p89 = scmp.eq.s32.totalorder %s16, 0
      %p90 = por %p88, %p89
      %s91 = ssub.s32 %s10, %s17
      %p92 = scmp.eq.s32.totalorder %s91, 0
      %s94 = sadd.s32 %s93, 1
      %s95 = scalar_select %p92, %s93, %s94
      %p98 = pneg %p92
      %p99 = scmp.eq.s32.totalorder %s10, 1
      %p100 = por %p98, %p99
      %p101 = scmp.ne.s32.totalorder %s93, %s96
      %p102 = scmp.eq.s32.totalorder %s10, 0
      %p103 = por %p101, %p102
      %p104 = scmp.ne.s32.totalorder %s93, %s96
      %p105 = scmp.eq.s32.totalorder %s15, 1
      %p106 = por %p104, %p105
      %p107 = scmp.ne.s32.totalorder %s96, %s97
      %p108 = scmp.eq.s32.totalorder %s15, 0
      %p109 = por %p107, %p108
      %p110 = scmp.ne.s32.totalorder %s96, %s97
      %p111 = scmp.eq.s32.totalorder %s16, 1
      %p112 = por %p110, %p111
      %p114 = scmp.ne.s32.totalorder %s97, %s113
      %p115 = scmp.eq.s32.totalorder %s16, 0
      %p116 = por %p114, %p115
      %p117 = scmp.le.s32.totalorder 1, %s10
      %p118 = scmp.lt.s32.totalorder %s10, 3
      %p119 = pnand %p117, %p118
      %p120 = pneg %p119
      // Predicated region
      $region9: #{double_conv.4} parent=5 // pred_check
        _
      $region10: #{double_conv.4} parent=5 // pred_check_branch
        %122 = sbr.rel (%p119) target = $region12
      $region11: #{double_conv.4} parent=5 // pred_region
        %s123 = ssub.s32 %s10, 1
        // Predicated region
        $region13: #{double_conv.4} parent=11 // pred_check
          %p124 = pneg %p57
        $region14: #{double_conv.4} parent=11 // pred_check_branch
          %126 = sbr.rel (%p124) target = $region16
        $region15: #{double_conv.4} parent=11 // pred_region
          _
        $region16: #{double_conv.4} parent=11 // pred_fallthru
          _
      $region12: #{double_conv.4} parent=5 // pred_fallthru
        _
      %p127 = scmp.lt.s32.totalorder %s10, 2
      // Predicated region
      $region17: #{double_conv.4} parent=5 // pred_check
        %p128 = pneg %p127
      $region18: #{double_conv.4} parent=5 // pred_check_branch
        %130 = sbr.rel (%p128) target = $region20
      $region19: #{double_conv.4} parent=5 // pred_region
        // Predicated region
        $region21: #{double_conv.4} parent=19 // pred_check
          %p131 = pneg %p30
        $region22: #{double_conv.4} parent=19 // pred_check_branch
          %133 = sbr.rel (%p131) target = $region24
        $region23: #{double_conv.4} parent=19 // pred_region
          %s134 = smul.u32 2, %s10
          %p135 = scmp.lt.s32.totalorder %s134, 3
          %s136 = scalar_select %p135, %s134, 3
          %s137 = smul.addr %s136, 30
          %s138 = smul.addr %s137, 4
          %s139 = scalar_lea.vmem %s0, %s138
          %s140 = smul.u32 2, %s10
        $region24: #{double_conv.4} parent=19 // pred_fallthru
          _
      $region20: #{double_conv.4} parent=5 // pred_fallthru
        _
      %p141 = scmp.le.s32.totalorder 1, %s10
      %p142 = scmp.lt.s32.totalorder %s10, 3
      %p143 = pnand %p141, %p142
      %p144 = pneg %p143
      // Predicated region
      $region25: #{double_conv.4} parent=5 // pred_check
        _
      $region26: #{double_conv.4} parent=5 // pred_check_branch
        %146 = sbr.rel (%p143) target = $region28
      $region27: #{double_conv.4} parent=5 // pred_region
        %s147 = ssub.s32 %s10, 1
        %s148 = smul.u32 2, %s15
        %p149 = scmp.lt.s32.totalorder %s148, 3
        %s150 = scalar_select %p149, %s148, 3
        %s151 = smul.addr %s150, 30
        %s152 = smul.addr %s151, 4
        %s153 = scalar_lea.vmem %s0, %s152
        %p154 = pneg %p36
        %p155 = pneg %p33
        %p156 = pneg %p57
        %p157 = pneg %p54
        %p158 = pneg %p83
        %p159 = pneg %p80
        %s160 = sand.u32 %s70, 1
        %s161 = sand.u32 %s70, 1
        %s162 = smul.addr %s161, 256
        %s163 = scalar_lea.vmem [#allocation2], %s162
        %p164 = pneg %p109
        %p165 = pneg %p106
        %p166 = scmp.lt.s32.totalorder %s15, 1
        %s167 = scalar_select %p166, %s15, 1
        %s168 = smul.addr %s167, 2
        %s169 = scalar_lea.vmem %s3, %s168
        %s170 = smul.u32 2, %s15
        %p171 = scmp.lt.s32.totalorder %s170, 3
        %s172 = scalar_select %p171, %s170, 3
        %s173 = smul.addr %s172, 30
        %s174 = smul.addr %s173, 4
        %s175 = scalar_lea.vmem %s0, %s174
        %s176 = smul.u32 2, %s15
        %s177 = smul.u32 8, %s15
        %p178 = scmp.lt.s32.totalorder %s15, 1
        %s179 = scalar_select %p178, %s15, 1
        %s180 = smul.addr %s179, 2
        %s181 = scalar_lea.vmem %s3, %s180
        %v183 = vld [vmem:[%s175] sm:$0xf]
        %v184 = vld [vmem:[%s175 + $0x4] sm:$0xf]
        %v185 = vld [vmem:[%s175 + $0xc] sm:$0xf]
        %v186 = vld [vmem:[%s175 + $0x10] sm:$0xf]
        %v187 = vld [vmem:[%s175 + $0x18] sm:$0xf]
        %v188 = vld [vmem:[%s175 + $0x1c] sm:$0xf]
        %v189 = vld [vmem:[%s175 + $0x24] sm:$0xf]
        %v190 = vld [vmem:[%s175 + $0x28] sm:$0xf]
        %v191 = vld [vmem:[%s175 + $0x30] sm:$0xf]
        %v192 = vld [vmem:[%s175 + $0x34] sm:$0xf]
        %v193 = vld [vmem:[%s175 + $0x3c] sm:$0xf]
        %v194 = vld [vmem:[%s175 + $0x40] sm:$0xf]
        %v195 = vld [vmem:[%s175 + $0x48] sm:$0xf]
        %v196 = vld [vmem:[%s175 + $0x4c] sm:$0xf]
        %v197 = vld [vmem:[%s175 + $0x54] sm:$0xf]
        %v198 = vld [vmem:[%s175 + $0x58] sm:$0xf]
        %v199 = vld [vmem:[%s175 + $0x78] sm:$0xf]
        %v200 = vld [vmem:[%s175 + $0x7c] sm:$0xf]
        %v201 = vld [vmem:[%s175 + $0x84] sm:$0xf]
        %v202 = vld [vmem:[%s175 + $0x88] sm:$0xf]
        %v203 = vld [vmem:[%s175 + $0x90] sm:$0xf]
        %v204 = vld [vmem:[%s175 + $0x94] sm:$0xf]
        %v205 = vld [vmem:[%s175 + $0x9c] sm:$0xf]
        %v206 = vld [vmem:[%s175 + $0xa0] sm:$0xf]
        %v207 = vld [vmem:[%s175 + $0xa8] sm:$0xf]
        %v208 = vld [vmem:[%s175 + $0xac] sm:$0xf]
        %v209 = vld [vmem:[%s175 + $0xb4] sm:$0xf]
        %v210 = vld [vmem:[%s175 + $0xb8] sm:$0xf]
        %v211 = vld [vmem:[%s175 + $0xc0] sm:$0xf]
        %v212 = vld [vmem:[%s175 + $0xc4] sm:$0xf]
        %v213 = vld [vmem:[%s175 + $0xcc] sm:$0xf]
        %v214 = vld [vmem:[%s175 + $0xd0] sm:$0xf]
        %v215 = vld [vmem:[%s1] sm:$0xf]
        %v216 = vld [vmem:[%s175 + $0x8] sm:$0x1]
        %v217 = vld [vmem:[%s175 + $0x14] sm:$0x1]
        %v218 = vld [vmem:[%s175 + $0x20] sm:$0x1]
        %v219 = vld [vmem:[%s175 + $0x2c] sm:$0x1]
        %v220 = vld [vmem:[%s175 + $0x38] sm:$0x1]
        %v221 = vld [vmem:[%s175 + $0x44] sm:$0x1]
        %v222 = vld [vmem:[%s175 + $0x50] sm:$0x1]
        %v223 = vld [vmem:[%s175 + $0x5c] sm:$0x1]
        %v224 = vld [vmem:[%s175 + $0x80] sm:$0x1]
        %v225 = vld [vmem:[%s175 + $0x8c] sm:$0x1]
        %v226 = vld [vmem:[%s175 + $0x98] sm:$0x1]
        %v227 = vld [vmem:[%s175 + $0xa4] sm:$0x1]
        %v228 = vld [vmem:[%s175 + $0xb0] sm:$0x1]
        %v229 = vld [vmem:[%s175 + $0xbc] sm:$0x1]
        %v230 = vld [vmem:[%s175 + $0xc8] sm:$0x1]
        %v231 = vld [vmem:[%s175 + $0xd4] sm:$0x1]
        %vm232 = vsmask.f32 3328
        %vm233 = vsmask.f32 7440
        %vm234 = vmor %vm232, %vm233
        %v236 = vshrl.u32 %v183, 16
        %v238 = vrot.slane %v236, 4
        %v239 = vshll.u32 %v183, 16
        %v241 = vrot.slane %v239, 5
        %v242 = vor.u32 %v238, %v241
        %v243 = vrot.slane %v242, 4
        %v245 = vshll.u32 %v184, 16
        %v247 = vrot.slane %v245, 5
        %v248 = vsel %vm234, %v243, %v247
        %v249 = vshrl.u32 %v184, 16
        %v251 = vrot.slane %v249, 4
        %v252 = vor.u32 %v251, %v247
        %v253 = vrot.slane %v252, 4
        %v255 = vshll.u32 %v216, 16
        %v257 = vrot.slane %v255, 5
        %v258 = vsel %vm234, %v253, %v257
        %v260 = vshrl.u32 %v185, 16
        %v262 = vrot.slane %v260, 4
        %v263 = vshll.u32 %v185, 16
        %v265 = vrot.slane %v263, 5
        %v266 = vor.u32 %v262, %v265
        %v267 = vrot.slane %v266, 4
        %v269 = vshll.u32 %v186, 16
        %v271 = vrot.slane %v269, 5
        %v272 = vsel %vm234, %v267, %v271
        %v273 = vshrl.u32 %v186, 16
        %v275 = vrot.slane %v273, 4
        %v276 = vor.u32 %v275, %v271
        %v277 = vrot.slane %v276, 4
        %v279 = vshll.u32 %v217, 16
        %v281 = vrot.slane %v279, 5
        %v282 = vsel %vm234, %v277, %v281
        %v284 = vshrl.u32 %v187, 16
        %v286 = vrot.slane %v284, 4
        %v287 = vshll.u32 %v187, 16
        %v289 = vrot.slane %v287, 5
        %v290 = vor.u32 %v286, %v289
        %v291 = vrot.slane %v290, 4
        %v293 = vshll.u32 %v188, 16
        %v295 = vrot.slane %v293, 5
        %v296 = vsel %vm234, %v291, %v295
        %v297 = vshrl.u32 %v188, 16
        %v299 = vrot.slane %v297, 4
        %v300 = vor.u32 %v299, %v295
        %v301 = vrot.slane %v300, 4
        %v303 = vshll.u32 %v218, 16
        %v305 = vrot.slane %v303, 5
        %v306 = vsel %vm234, %v301, %v305
        %v308 = vshrl.u32 %v189, 16
        %v310 = vrot.slane %v308, 4
        %v311 = vshll.u32 %v189, 16
        %v313 = vrot.slane %v311, 5
        %v314 = vor.u32 %v310, %v313
        %v315 = vrot.slane %v314, 4
        %v317 = vshll.u32 %v190, 16
        %v319 = vrot.slane %v317, 5
        %v320 = vsel %vm234, %v315, %v319
        %v321 = vshrl.u32 %v190, 16
        %v323 = vrot.slane %v321, 4
        %v324 = vor.u32 %v323, %v319
        %v325 = vrot.slane %v324, 4
        %v327 = vshll.u32 %v219, 16
        %v329 = vrot.slane %v327, 5
        %v330 = vsel %vm234, %v325, %v329
        %v332 = vshrl.u32 %v191, 16
        %v334 = vrot.slane %v332, 4
        %v335 = vshll.u32 %v191, 16
        %v337 = vrot.slane %v335, 5
        %v338 = vor.u32 %v334, %v337
        %v339 = vrot.slane %v338, 4
        %v341 = vshll.u32 %v192, 16
        %v343 = vrot.slane %v341, 5
        %v344 = vsel %vm234, %v339, %v343
        %v345 = vshrl.u32 %v192, 16
        %v347 = vrot.slane %v345, 4
        %v348 = vor.u32 %v347, %v343
        %v349 = vrot.slane %v348, 4
        %v351 = vshll.u32 %v220, 16
        %v353 = vrot.slane %v351, 5
        %v354 = vsel %vm234, %v349, %v353
        %v356 = vshrl.u32 %v193, 16
        %v358 = vrot.slane %v356, 4
        %v359 = vshll.u32 %v193, 16
        %v361 = vrot.slane %v359, 5
        %v362 = vor.u32 %v358, %v361
        %v363 = vrot.slane %v362, 4
        %v365 = vshll.u32 %v194, 16
        %v367 = vrot.slane %v365, 5
        %v368 = vsel %vm234, %v363, %v367
        %v369 = vshrl.u32 %v194, 16
        %v371 = vrot.slane %v369, 4
        %v372 = vor.u32 %v371, %v367
        %v373 = vrot.slane %v372, 4
        %v375 = vshll.u32 %v221, 16
        %v377 = vrot.slane %v375, 5
        %v378 = vsel %vm234, %v373, %v377
        %v380 = vshrl.u32 %v195, 16
        %v382 = vrot.slane %v380, 4
        %v383 = vshll.u32 %v195, 16
        %v385 = vrot.slane %v383, 5
        %v386 = vor.u32 %v382, %v385
        %v387 = vrot.slane %v386, 4
        %v389 = vshll.u32 %v196, 16
        %v391 = vrot.slane %v389, 5
        %v392 = vsel %vm234, %v387, %v391
        %v393 = vshrl.u32 %v196, 16
        %v395 = vrot.slane %v393, 4
        %v396 = vor.u32 %v395, %v391
        %v397 = vrot.slane %v396, 4
        %v399 = vshll.u32 %v222, 16
        %v401 = vrot.slane %v399, 5
        %v402 = vsel %vm234, %v397, %v401
        %v404 = vshrl.u32 %v197, 16
        %v406 = vrot.slane %v404, 4
        %v407 = vshll.u32 %v197, 16
        %v409 = vrot.slane %v407, 5
        %v410 = vor.u32 %v406, %v409
        %v411 = vrot.slane %v410, 4
        %v413 = vshll.u32 %v198, 16
        %v415 = vrot.slane %v413, 5
        %v416 = vsel %vm234, %v411, %v415
        %v417 = vshrl.u32 %v198, 16
        %v419 = vrot.slane %v417, 4
        %v420 = vor.u32 %v419, %v415
        %v421 = vrot.slane %v420, 4
        %v423 = vshll.u32 %v223, 16
        %v425 = vrot.slane %v423, 5
        %v426 = vsel %vm234, %v421, %v425
        %v428 = vshrl.u32 %v199, 16
        %v430 = vrot.slane %v428, 4
        %v431 = vshll.u32 %v199, 16
        %v433 = vrot.slane %v431, 5
        %v434 = vor.u32 %v430, %v433
        %v435 = vrot.slane %v434, 4
        %v437 = vshll.u32 %v200, 16
        %v439 = vrot.slane %v437, 5
        %v440 = vsel %vm234, %v435, %v439
        %v441 = vshrl.u32 %v200, 16
        %v443 = vrot.slane %v441, 4
        %v444 = vor.u32 %v443, %v439
        %v445 = vrot.slane %v444, 4
        %v447 = vshll.u32 %v224, 16
        %v449 = vrot.slane %v447, 5
        %v450 = vsel %vm234, %v445, %v449
        %v452 = vshrl.u32 %v201, 16
        %v454 = vrot.slane %v452, 4
        %v455 = vshll.u32 %v201, 16
        %v457 = vrot.slane %v455, 5
        %v458 = vor.u32 %v454, %v457
        %v459 = vrot.slane %v458, 4
        %v461 = vshll.u32 %v202, 16
        %v463 = vrot.slane %v461, 5
        %v464 = vsel %vm234, %v459, %v463
        %v465 = vshrl.u32 %v202, 16
        %v467 = vrot.slane %v465, 4
        %v468 = vor.u32 %v467, %v463
        %v469 = vrot.slane %v468, 4
        %v471 = vshll.u32 %v225, 16
        %v473 = vrot.slane %v471, 5
        %v474 = vsel %vm234, %v469, %v473
        %v476 = vshrl.u32 %v203, 16
        %v478 = vrot.slane %v476, 4
        %v479 = vshll.u32 %v203, 16
        %v481 = vrot.slane %v479, 5
        %v482 = vor.u32 %v478, %v481
        %v483 = vrot.slane %v482, 4
        %v485 = vshll.u32 %v204, 16
        %v487 = vrot.slane %v485, 5
        %v488 = vsel %vm234, %v483, %v487
        %v489 = vshrl.u32 %v204, 16
        %v491 = vrot.slane %v489, 4
        %v492 = vor.u32 %v491, %v487
        %v493 = vrot.slane %v492, 4
        %v495 = vshll.u32 %v226, 16
        %v497 = vrot.slane %v495, 5
        %v498 = vsel %vm234, %v493, %v497
        %v500 = vshrl.u32 %v205, 16
        %v502 = vrot.slane %v500, 4
        %v503 = vshll.u32 %v205, 16
        %v505 = vrot.slane %v503, 5
        %v506 = vor.u32 %v502, %v505
        %v507 = vrot.slane %v506, 4
        %v509 = vshll.u32 %v206, 16
        %v511 = vrot.slane %v509, 5
        %v512 = vsel %vm234, %v507, %v511
        %v513 = vshrl.u32 %v206, 16
        %v515 = vrot.slane %v513, 4
        %v516 = vor.u32 %v515, %v511
        %v517 = vrot.slane %v516, 4
        %v519 = vshll.u32 %v227, 16
        %v521 = vrot.slane %v519, 5
        %v522 = vsel %vm234, %v517, %v521
        %v524 = vshrl.u32 %v207, 16
        %v526 = vrot.slane %v524, 4
        %v527 = vshll.u32 %v207, 16
        %v529 = vrot.slane %v527, 5
        %v530 = vor.u32 %v526, %v529
        %v531 = vrot.slane %v530, 4
        %v533 = vshll.u32 %v208, 16
        %v535 = vrot.slane %v533, 5
        %v536 = vsel %vm234, %v531, %v535
        %v537 = vshrl.u32 %v208, 16
        %v539 = vrot.slane %v537, 4
        %v540 = vor.u32 %v539, %v535
        %v541 = vrot.slane %v540, 4
        %v543 = vshll.u32 %v228, 16
        %v545 = vrot.slane %v543, 5
        %v546 = vsel %vm234, %v541, %v545
        %v548 = vshrl.u32 %v209, 16
        %v550 = vrot.slane %v548, 4
        %v551 = vshll.u32 %v209, 16
        %v553 = vrot.slane %v551, 5
        %v554 = vor.u32 %v550, %v553
        %v555 = vrot.slane %v554, 4
        %v557 = vshll.u32 %v210, 16
        %v559 = vrot.slane %v557, 5
        %v560 = vsel %vm234, %v555, %v559
        %v561 = vshrl.u32 %v210, 16
        %v563 = vrot.slane %v561, 4
        %v564 = vor.u32 %v563, %v559
        %v565 = vrot.slane %v564, 4
        %v567 = vshll.u32 %v229, 16
        %v569 = vrot.slane %v567, 5
        %v570 = vsel %vm234, %v565, %v569
        %v572 = vshrl.u32 %v211, 16
        %v574 = vrot.slane %v572, 4
        %v575 = vshll.u32 %v211, 16
        %v577 = vrot.slane %v575, 5
        %v578 = vor.u32 %v574, %v577
        %v579 = vrot.slane %v578, 4
        %v581 = vshll.u32 %v212, 16
        %v583 = vrot.slane %v581, 5
        %v584 = vsel %vm234, %v579, %v583
        %v585 = vshrl.u32 %v212, 16
        %v587 = vrot.slane %v585, 4
        %v588 = vor.u32 %v587, %v583
        %v589 = vrot.slane %v588, 4
        %v591 = vshll.u32 %v230, 16
        %v593 = vrot.slane %v591, 5
        %v594 = vsel %vm234, %v589, %v593
        %v596 = vshrl.u32 %v213, 16
        %v598 = vrot.slane %v596, 4
        %v599 = vshll.u32 %v213, 16
        %v601 = vrot.slane %v599, 5
        %v602 = vor.u32 %v598, %v601
        %v603 = vrot.slane %v602, 4
        %v605 = vshll.u32 %v214, 16
        %v607 = vrot.slane %v605, 5
        %v608 = vsel %vm234, %v603, %v607
        %v609 = vshrl.u32 %v214, 16
        %v611 = vrot.slane %v609, 4
        %v612 = vor.u32 %v611, %v607
        %v613 = vrot.slane %v612, 4
        %v615 = vshll.u32 %v231, 16
        %v617 = vrot.slane %v615, 5
        %v618 = vsel %vm234, %v613, %v617
        %s619 = scalar_lea.vmem %s1, 4
        %v620 = vld [vmem:[%s619] sm:$0xf]
        %v621 = vunpack.c.l.b16 %v248
        %v622 = vunpack.c.l.b16 %v258
        %v623 = vunpack.c.l.b16 %v272
        %v624 = vunpack.c.l.b16 %v282
        %v625 = vunpack.c.l.b16 %v296
        %v626 = vunpack.c.l.b16 %v306
        %v627 = vunpack.c.l.b16 %v320
        %v628 = vunpack.c.l.b16 %v330
        %v629 = vunpack.c.l.b16 %v344
        %v630 = vunpack.c.l.b16 %v354
        %v631 = vunpack.c.l.b16 %v368
        %v632 = vunpack.c.l.b16 %v378
        %v633 = vunpack.c.l.b16 %v392
        %v634 = vunpack.c.l.b16 %v402
        %v635 = vunpack.c.l.b16 %v416
        %v636 = vunpack.c.l.b16 %v426
        %v637 = vunpack.c.l.b16 %v440
        %v638 = vunpack.c.l.b16 %v450
        %v639 = vunpack.c.l.b16 %v464
        %v640 = vunpack.c.l.b16 %v474
        %v641 = vunpack.c.l.b16 %v488
        %v642 = vunpack.c.l.b16 %v498
        %v643 = vunpack.c.l.b16 %v512
        %v644 = vunpack.c.l.b16 %v522
        %v645 = vunpack.c.l.b16 %v536
        %v646 = vunpack.c.l.b16 %v546
        %v647 = vunpack.c.l.b16 %v560
        %v648 = vunpack.c.l.b16 %v570
        %v649 = vunpack.c.l.b16 %v584
        %v650 = vunpack.c.l.b16 %v594
        %v651 = vunpack.c.l.b16 %v608
        %v652 = vunpack.c.l.b16 %v618
        %v653 = vpack.c.b16 %v622, %v621
        %v654 = vpack.c.b16 %v624, %v623
        %v655 = vpack.c.b16 %v626, %v625
        %v656 = vpack.c.b16 %v628, %v627
        %v657 = vpack.c.b16 %v630, %v629
        %v658 = vpack.c.b16 %v632, %v631
        %v659 = vpack.c.b16 %v634, %v633
        %v660 = vpack.c.b16 %v636, %v635
        %v661 = vpack.c.b16 %v638, %v637
        %v662 = vpack.c.b16 %v640, %v639
        %v663 = vpack.c.b16 %v642, %v641
        %v664 = vpack.c.b16 %v644, %v643
        %v665 = vpack.c.b16 %v646, %v645
        %v666 = vpack.c.b16 %v648, %v647
        %v667 = vpack.c.b16 %v650, %v649
        %v668 = vpack.c.b16 %v652, %v651
        %vm669 = vcmask 64512
        %v671 = vsel %vm669, %v653, 0
        %v674 = vsel %vm669, %v654, 0
        %v677 = vsel %vm669, %v655, 0
        %v680 = vsel %vm669, %v656, 0
        %v683 = vsel %vm669, %v657, 0
        %v686 = vsel %vm669, %v658, 0
        %v689 = vsel %vm669, %v659, 0
        %v692 = vsel %vm669, %v660, 0
        %v695 = vsel %vm669, %v661, 0
        %v698 = vsel %vm669, %v662, 0
        %v701 = vsel %vm669, %v663, 0
        %v704 = vsel %vm669, %v664, 0
        %v707 = vsel %vm669, %v665, 0
        %v710 = vsel %vm669, %v666, 0
        %v713 = vsel %vm669, %v667, 0
        %v716 = vsel %vm669, %v668, 0
        %vm718 = vcmask 1043456
        %v720 = vsel %vm718, %v620, 0
        %722 = vmatprep.subr.bf16.mxu0 0
        %723 = vmatpush1.bf16.msra.mxu0 0
        %724 = vmatprep.subr.bf16.mxu0 0
        %725 = vmatpush1.bf16.msra.mxu0 0
        %726 = vmatprep.subr.bf16.mxu0 0
        %727 = vmatpush1.bf16.msra.mxu0 0
        %728 = vmatprep.subr.bf16.mxu0 0
        %729 = vmatpush1.bf16.msra.mxu0 0
        %730 = vmatprep.subr.bf16.mxu0 0
        %731 = vmatpush1.bf16.msra.mxu0 0
        %732 = vmatprep.subr.bf16.mxu0 0
        %733 = vmatpush1.bf16.msra.mxu0 0
        %734 = vmatprep.subr.bf16.mxu0 0
        %735 = vmatpush1.bf16.msra.mxu0 0
        %736 = vmatprep.subr.bf16.mxu0 0
        %737 = vmatpush1.bf16.msra.mxu0 %v720
        %738 = vmatprep.subr.bf16.mxu0 0
        %739 = vmatpush2.bf16.msra.mxu0 0
        %740 = vmatprep.subr.bf16.mxu0 0
        %741 = vmatpush2.bf16.msra.mxu0 0
        %742 = vmatprep.subr.bf16.mxu0 0
        %743 = vmatpush2.bf16.msra.mxu0 0
        %744 = vmatprep.subr.bf16.mxu0 0
        %745 = vmatpush2.bf16.msra.mxu0 0
        %746 = vmatprep.subr.bf16.mxu0 0
        %747 = vmatpush2.bf16.msra.mxu0 0
        %748 = vmatprep.subr.bf16.mxu0 0
        %749 = vmatpush2.bf16.msra.mxu0 0
        %750 = vmatprep.subr.bf16.mxu0 0
        %751 = vmatpush2.bf16.msra.mxu0 0
        %752 = vmatprep.subr.bf16.mxu0 0
        %753 = vmatpush2.bf16.msra.mxu0 0
        %754 = vmatprep.mubr.bf16.mxu0 0
        %755 = vmatmul.mubr.bf16.gmra.mxu0 %v671
        %v756 = vpop.f32.mrf.mxu0
        %v757 = vadd.f32 0.0, %v756
        %v758 = vpop.f32.mrf.mxu0
        %v759 = vpop.f32.mrf.mxu0
        %v760 = vadd.f32 0.0, %v759
        %v761 = vpop.f32.mrf.mxu0
        %762 = vmatprep.mubr.bf16.mxu0 0
        %763 = vmatmul.mubr.bf16.gmra.mxu0 %v674
        %v764 = vpop.f32.mrf.mxu0
        %v765 = vadd.f32 0.0, %v764
        %v766 = vpop.f32.mrf.mxu0
        %v767 = vpop.f32.mrf.mxu0
        %v768 = vadd.f32 0.0, %v767
        %v769 = vpop.f32.mrf.mxu0
        %770 = vmatprep.mubr.bf16.mxu0 0
        %771 = vmatmul.mubr.bf16.gmra.mxu0 %v677
        %v772 = vpop.f32.mrf.mxu0
        %v773 = vadd.f32 0.0, %v772
        %v774 = vpop.f32.mrf.mxu0
        %v775 = vpop.f32.mrf.mxu0
        %v776 = vadd.f32 0.0, %v775
        %v777 = vpop.f32.mrf.mxu0
        %778 = vmatprep.mubr.bf16.mxu0 0
        %779 = vmatmul.mubr.bf16.gmra.mxu0 %v680
        %v780 = vpop.f32.mrf.mxu0
        %v781 = vadd.f32 0.0, %v780
        %v782 = vpop.f32.mrf.mxu0
        %v783 = vpop.f32.mrf.mxu0
        %v784 = vadd.f32 0.0, %v783
        %v785 = vpop.f32.mrf.mxu0
        %786 = vmatprep.mubr.bf16.mxu0 0
        %787 = vmatmul.mubr.bf16.gmra.mxu0 %v683
        %v788 = vpop.f32.mrf.mxu0
        %v789 = vadd.f32 0.0, %v788
        %v790 = vpop.f32.mrf.mxu0
        %v791 = vpop.f32.mrf.mxu0
        %v792 = vadd.f32 0.0, %v791
        %v793 = vpop.f32.mrf.mxu0
        %794 = vmatprep.mubr.bf16.mxu0 0
        %795 = vmatmul.mubr.bf16.gmra.mxu0 %v686
        %v796 = vpop.f32.mrf.mxu0
        %v797 = vadd.f32 0.0, %v796
        %v798 = vpop.f32.mrf.mxu0
        %v799 = vpop.f32.mrf.mxu0
        %v800 = vadd.f32 0.0, %v799
        %v801 = vpop.f32.mrf.mxu0
        %802 = vmatprep.mubr.bf16.mxu0 0
        %803 = vmatmul.mubr.bf16.gmra.mxu0 %v689
        %v804 = vpop.f32.mrf.mxu0
        %v805 = vadd.f32 0.0, %v804
        %v806 = vpop.f32.mrf.mxu0
        %v807 = vpop.f32.mrf.mxu0
        %v808 = vadd.f32 0.0, %v807
        %v809 = vpop.f32.mrf.mxu0
        %810 = vmatprep.mubr.bf16.mxu0 0
        %811 = vmatmul.mubr.bf16.gmra.mxu0 %v692
        %v812 = vpop.f32.mrf.mxu0
        %v813 = vadd.f32 0.0, %v812
        %v814 = vpop.f32.mrf.mxu0
        %v815 = vpop.f32.mrf.mxu0
        %v816 = vadd.f32 0.0, %v815
        %v817 = vpop.f32.mrf.mxu0
        %818 = vmatprep.mubr.bf16.mxu0 0
        %819 = vmatmul.mubr.bf16.gmra.mxu0 %v695
        %v820 = vpop.f32.mrf.mxu0
        %v821 = vadd.f32 0.0, %v820
        %v822 = vpop.f32.mrf.mxu0
        %v823 = vpop.f32.mrf.mxu0
        %v824 = vadd.f32 0.0, %v823
        %v825 = vpop.f32.mrf.mxu0
        %826 = vmatprep.mubr.bf16.mxu0 0
        %827 = vmatmul.mubr.bf16.gmra.mxu0 %v698
        %v828 = vpop.f32.mrf.mxu0
        %v829 = vadd.f32 0.0, %v828
        %v830 = vpop.f32.mrf.mxu0
        %v831 = vpop.f32.mrf.mxu0
        %v832 = vadd.f32 0.0, %v831
        %v833 = vpop.f32.mrf.mxu0
        %834 = vmatprep.mubr.bf16.mxu0 0
        %835 = vmatmul.mubr.bf16.gmra.mxu0 %v701
        %v836 = vpop.f32.mrf.mxu0
        %v837 = vadd.f32 0.0, %v836
        %v838 = vpop.f32.mrf.mxu0
        %v839 = vpop.f32.mrf.mxu0
        %v840 = vadd.f32 0.0, %v839
        %v841 = vpop.f32.mrf.mxu0
        %842 = vmatprep.mubr.bf16.mxu0 0
        %843 = vmatmul.mubr.bf16.gmra.mxu0 %v704
        %v844 = vpop.f32.mrf.mxu0
        %v845 = vadd.f32 0.0, %v844
        %v846 = vpop.f32.mrf.mxu0
        %v847 = vpop.f32.mrf.mxu0
        %v848 = vadd.f32 0.0, %v847
        %v849 = vpop.f32.mrf.mxu0
        %850 = vmatprep.mubr.bf16.mxu0 0
        %851 = vmatmul.mubr.bf16.gmra.mxu0 %v707
        %v852 = vpop.f32.mrf.mxu0
        %v853 = vadd.f32 0.0, %v852
        %v854 = vpop.f32.mrf.mxu0
        %v855 = vpop.f32.mrf.mxu0
        %v856 = vadd.f32 0.0, %v855
        %v857 = vpop.f32.mrf.mxu0
        %858 = vmatprep.mubr.bf16.mxu0 0
        %859 = vmatmul.mubr.bf16.gmra.mxu0 %v710
        %v860 = vpop.f32.mrf.mxu0
        %v861 = vadd.f32 0.0, %v860
        %v862 = vpop.f32.mrf.mxu0
        %v863 = vpop.f32.mrf.mxu0
        %v864 = vadd.f32 0.0, %v863
        %v865 = vpop.f32.mrf.mxu0
        %866 = vmatprep.mubr.bf16.mxu0 0
        %867 = vmatmul.mubr.bf16.gmra.mxu0 %v713
        %v868 = vpop.f32.mrf.mxu0
        %v869 = vadd.f32 0.0, %v868
        %v870 = vpop.f32.mrf.mxu0
        %v871 = vpop.f32.mrf.mxu0
        %v872 = vadd.f32 0.0, %v871
        %v873 = vpop.f32.mrf.mxu0
        %874 = vmatprep.mubr.bf16.mxu0 0
        %875 = vmatmul.mubr.bf16.gmra.mxu0 %v716
        %v876 = vpop.f32.mrf.mxu0
        %v877 = vadd.f32 0.0, %v876
        %v878 = vpop.f32.mrf.mxu0
        %v879 = vpop.f32.mrf.mxu0
        %v880 = vadd.f32 0.0, %v879
        %v881 = vpop.f32.mrf.mxu0
        %882 = vdwg.mxu0
        %v915 = vunpack.c.l.b16 %v183
        %v916 = vunpack.c.l.b16 %v184
        %v917 = vunpack.c.l.b16 %v185
        %v918 = vunpack.c.l.b16 %v186
        %v919 = vunpack.c.l.b16 %v187
        %v920 = vunpack.c.l.b16 %v188
        %v921 = vunpack.c.l.b16 %v189
        %v922 = vunpack.c.l.b16 %v190
        %v923 = vunpack.c.l.b16 %v191
        %v924 = vunpack.c.l.b16 %v192
        %v925 = vunpack.c.l.b16 %v193
        %v926 = vunpack.c.l.b16 %v194
        %v927 = vunpack.c.l.b16 %v195
        %v928 = vunpack.c.l.b16 %v196
        %v929 = vunpack.c.l.b16 %v197
        %v930 = vunpack.c.l.b16 %v198
        %v931 = vunpack.c.l.b16 %v199
        %v932 = vunpack.c.l.b16 %v200
        %v933 = vunpack.c.l.b16 %v201
        %v934 = vunpack.c.l.b16 %v202
        %v935 = vunpack.c.l.b16 %v203
        %v936 = vunpack.c.l.b16 %v204
        %v937 = vunpack.c.l.b16 %v205
        %v938 = vunpack.c.l.b16 %v206
        %v939 = vunpack.c.l.b16 %v207
        %v940 = vunpack.c.l.b16 %v208
        %v941 = vunpack.c.l.b16 %v209
        %v942 = vunpack.c.l.b16 %v210
        %v943 = vunpack.c.l.b16 %v211
        %v944 = vunpack.c.l.b16 %v212
        %v945 = vunpack.c.l.b16 %v213
        %v946 = vunpack.c.l.b16 %v214
        %v947 = vpack.c.b16 %v916, %v915
        %v948 = vpack.c.b16 %v918, %v917
        %v949 = vpack.c.b16 %v920, %v919
        %v950 = vpack.c.b16 %v922, %v921
        %v951 = vpack.c.b16 %v924, %v923
        %v952 = vpack.c.b16 %v926, %v925
        %v953 = vpack.c.b16 %v928, %v927
        %v954 = vpack.c.b16 %v930, %v929
        %v955 = vpack.c.b16 %v932, %v931
        %v956 = vpack.c.b16 %v934, %v933
        %v957 = vpack.c.b16 %v936, %v935
        %v958 = vpack.c.b16 %v938, %v937
        %v959 = vpack.c.b16 %v940, %v939
        %v960 = vpack.c.b16 %v942, %v941
        %v961 = vpack.c.b16 %v944, %v943
        %v962 = vpack.c.b16 %v946, %v945
        %v964 = vsel %vm669, %v947, 0
        %v967 = vsel %vm669, %v948, 0
        %v970 = vsel %vm669, %v949, 0
        %v973 = vsel %vm669, %v950, 0
        %v976 = vsel %vm669, %v951, 0
        %v979 = vsel %vm669, %v952, 0
        %v982 = vsel %vm669, %v953, 0
        %v985 = vsel %vm669, %v954, 0
        %v988 = vsel %vm669, %v955, 0
        %v991 = vsel %vm669, %v956, 0
        %v994 = vsel %vm669, %v957, 0
        %v997 = vsel %vm669, %v958, 0
        %v1000 = vsel %vm669, %v959, 0
        %v1003 = vsel %vm669, %v960, 0
        %v1006 = vsel %vm669, %v961, 0
        %v1009 = vsel %vm669, %v962, 0
        %v1012 = vsel %vm718, %v215, 0
        %1014 = vmatprep.subr.bf16.mxu0 0
        %1015 = vmatpush1.bf16.msra.mxu0 0
        %1016 = vmatprep.subr.bf16.mxu0 0
        %1017 = vmatpush1.bf16.msra.mxu0 0
        %1018 = vmatprep.subr.bf16.mxu0 0
        %1019 = vmatpush1.bf16.msra.mxu0 0
        %1020 = vmatprep.subr.bf16.mxu0 0
        %1021 = vmatpush1.bf16.msra.mxu0 0
        %1022 = vmatprep.subr.bf16.mxu0 0
        %1023 = vmatpush1.bf16.msra.mxu0 0
        %1024 = vmatprep.subr.bf16.mxu0 0
        %1025 = vmatpush1.bf16.msra.mxu0 0
        %1026 = vmatprep.subr.bf16.mxu0 0
        %1027 = vmatpush1.bf16.msra.mxu0 0
        %1028 = vmatprep.subr.bf16.mxu0 0
        %1029 = vmatpush1.bf16.msra.mxu0 %v1012
        %1030 = vmatprep.subr.bf16.mxu0 0
        %1031 = vmatpush2.bf16.msra.mxu0 0
        %1032 = vmatprep.subr.bf16.mxu0 0
        %1033 = vmatpush2.bf16.msra.mxu0 0
        %1034 = vmatprep.subr.bf16.mxu0 0
        %1035 = vmatpush2.bf16.msra.mxu0 0
        %1036 = vmatprep.subr.bf16.mxu0 0
        %1037 = vmatpush2.bf16.msra.mxu0 0
        %1038 = vmatprep.subr.bf16.mxu0 0
        %1039 = vmatpush2.bf16.msra.mxu0 0
        %1040 = vmatprep.subr.bf16.mxu0 0
        %1041 = vmatpush2.bf16.msra.mxu0 0
        %1042 = vmatprep.subr.bf16.mxu0 0
        %1043 = vmatpush2.bf16.msra.mxu0 0
        %1044 = vmatprep.subr.bf16.mxu0 0
        %1045 = vmatpush2.bf16.msra.mxu0 0
        %1046 = vmatprep.mubr.bf16.mxu0 0
        %1047 = vmatmul.mubr.bf16.gmra.mxu0 %v964
        %v1048 = vpop.f32.mrf.mxu0
        %v1049 = vadd.f32 %v757, %v1048
        %v1050 = vpop.f32.mrf.mxu0
        %v1051 = vpop.f32.mrf.mxu0
        %v1052 = vadd.f32 %v760, %v1051
        %v1053 = vpop.f32.mrf.mxu0
        %1054 = vmatprep.mubr.bf16.mxu0 0
        %1055 = vmatmul.mubr.bf16.gmra.mxu0 %v967
        %v1056 = vpop.f32.mrf.mxu0
        %v1057 = vadd.f32 %v765, %v1056
        %v1058 = vpop.f32.mrf.mxu0
        %v1059 = vpop.f32.mrf.mxu0
        %v1060 = vadd.f32 %v768, %v1059
        %v1061 = vpop.f32.mrf.mxu0
        %1062 = vmatprep.mubr.bf16.mxu0 0
        %1063 = vmatmul.mubr.bf16.gmra.mxu0 %v970
        %v1064 = vpop.f32.mrf.mxu0
        %v1065 = vadd.f32 %v773, %v1064
        %v1066 = vpop.f32.mrf.mxu0
        %v1067 = vpop.f32.mrf.mxu0
        %v1068 = vadd.f32 %v776, %v1067
        %v1069 = vpop.f32.mrf.mxu0
        %1070 = vmatprep.mubr.bf16.mxu0 0
        %1071 = vmatmul.mubr.bf16.gmra.mxu0 %v973
        %v1072 = vpop.f32.mrf.mxu0
        %v1073 = vadd.f32 %v781, %v1072
        %v1074 = vpop.f32.mrf.mxu0
        %v1075 = vpop.f32.mrf.mxu0
        %v1076 = vadd.f32 %v784, %v1075
        %v1077 = vpop.f32.mrf.mxu0
        %1078 = vmatprep.mubr.bf16.mxu0 0
        %1079 = vmatmul.mubr.bf16.gmra.mxu0 %v976
        %v1080 = vpop.f32.mrf.mxu0
        %v1081 = vadd.f32 %v789, %v1080
        %v1082 = vpop.f32.mrf.mxu0
        %v1083 = vpop.f32.mrf.mxu0
        %v1084 = vadd.f32 %v792, %v1083
        %v1085 = vpop.f32.mrf.mxu0
        %1086 = vmatprep.mubr.bf16.mxu0 0
        %1087 = vmatmul.mubr.bf16.gmra.mxu0 %v979
        %v1088 = vpop.f32.mrf.mxu0
        %v1089 = vadd.f32 %v797, %v1088
        %v1090 = vpop.f32.mrf.mxu0
        %v1091 = vpop.f32.mrf.mxu0
        %v1092 = vadd.f32 %v800, %v1091
        %v1093 = vpop.f32.mrf.mxu0
        %1094 = vmatprep.mubr.bf16.mxu0 0
        %1095 = vmatmul.mubr.bf16.gmra.mxu0 %v982
        %v1096 = vpop.f32.mrf.mxu0
        %v1097 = vadd.f32 %v805, %v1096
        %v1098 = vpop.f32.mrf.mxu0
        %v1099 = vpop.f32.mrf.mxu0
        %v1100 = vadd.f32 %v808, %v1099
        %v1101 = vpop.f32.mrf.mxu0
        %1102 = vmatprep.mubr.bf16.mxu0 0
        %1103 = vmatmul.mubr.bf16.gmra.mxu0 %v985
        %v1104 = vpop.f32.mrf.mxu0
        %v1105 = vadd.f32 %v813, %v1104
        %v1106 = vpop.f32.mrf.mxu0
        %v1107 = vpop.f32.mrf.mxu0
        %v1108 = vadd.f32 %v816, %v1107
        %v1109 = vpop.f32.mrf.mxu0
        %1110 = vmatprep.mubr.bf16.mxu0 0
        %1111 = vmatmul.mubr.bf16.gmra.mxu0 %v988
        %v1112 = vpop.f32.mrf.mxu0
        %v1113 = vadd.f32 %v821, %v1112
        %v1114 = vpop.f32.mrf.mxu0
        %v1115 = vpop.f32.mrf.mxu0
        %v1116 = vadd.f32 %v824, %v1115
        %v1117 = vpop.f32.mrf.mxu0
        %1118 = vmatprep.mubr.bf16.mxu0 0
        %1119 = vmatmul.mubr.bf16.gmra.mxu0 %v991
        %v1120 = vpop.f32.mrf.mxu0
        %v1121 = vadd.f32 %v829, %v1120
        %v1122 = vpop.f32.mrf.mxu0
        %v1123 = vpop.f32.mrf.mxu0
        %v1124 = vadd.f32 %v832, %v1123
        %v1125 = vpop.f32.mrf.mxu0
        %1126 = vmatprep.mubr.bf16.mxu0 0
        %1127 = vmatmul.mubr.bf16.gmra.mxu0 %v994
        %v1128 = vpop.f32.mrf.mxu0
        %v1129 = vadd.f32 %v837, %v1128
        %v1130 = vpop.f32.mrf.mxu0
        %v1131 = vpop.f32.mrf.mxu0
        %v1132 = vadd.f32 %v840, %v1131
        %v1133 = vpop.f32.mrf.mxu0
        %1134 = vmatprep.mubr.bf16.mxu0 0
        %1135 = vmatmul.mubr.bf16.gmra.mxu0 %v997
        %v1136 = vpop.f32.mrf.mxu0
        %v1137 = vadd.f32 %v845, %v1136
        %v1138 = vpop.f32.mrf.mxu0
        %v1139 = vpop.f32.mrf.mxu0
        %v1140 = vadd.f32 %v848, %v1139
        %v1141 = vpop.f32.mrf.mxu0
        %1142 = vmatprep.mubr.bf16.mxu0 0
        %1143 = vmatmul.mubr.bf16.gmra.mxu0 %v1000
        %v1144 = vpop.f32.mrf.mxu0
        %v1145 = vadd.f32 %v853, %v1144
        %v1146 = vpop.f32.mrf.mxu0
        %v1147 = vpop.f32.mrf.mxu0
        %v1148 = vadd.f32 %v856, %v1147
        %v1149 = vpop.f32.mrf.mxu0
        %1150 = vmatprep.mubr.bf16.mxu0 0
        %1151 = vmatmul.mubr.bf16.gmra.mxu0 %v1003
        %v1152 = vpop.f32.mrf.mxu0
        %v1153 = vadd.f32 %v861, %v1152
        %v1154 = vpop.f32.mrf.mxu0
        %v1155 = vpop.f32.mrf.mxu0
        %v1156 = vadd.f32 %v864, %v1155
        %v1157 = vpop.f32.mrf.mxu0
        %1158 = vmatprep.mubr.bf16.mxu0 0
        %1159 = vmatmul.mubr.bf16.gmra.mxu0 %v1006
        %v1160 = vpop.f32.mrf.mxu0
        %v1161 = vadd.f32 %v869, %v1160
        %v1162 = vpop.f32.mrf.mxu0
        %v1163 = vpop.f32.mrf.mxu0
        %v1164 = vadd.f32 %v872, %v1163
        %v1165 = vpop.f32.mrf.mxu0
        %1166 = vmatprep.mubr.bf16.mxu0 0
        %1167 = vmatmul.mubr.bf16.gmra.mxu0 %v1009
        %v1168 = vpop.f32.mrf.mxu0
        %v1169 = vadd.f32 %v877, %v1168
        %v1170 = vpop.f32.mrf.mxu0
        %v1171 = vpop.f32.mrf.mxu0
        %v1172 = vadd.f32 %v880, %v1171
        %v1173 = vpop.f32.mrf.mxu0
        %1174 = vdwg.mxu0
        %v1175 = vld [vmem:[%s175] sm:$0xe]
        %v1176 = vld [vmem:[%s175 + $0xc] sm:$0xe]
        %v1177 = vld [vmem:[%s175 + $0x18] sm:$0xe]
        %v1178 = vld [vmem:[%s175 + $0x24] sm:$0xe]
        %v1179 = vld [vmem:[%s175 + $0x30] sm:$0xe]
        %v1180 = vld [vmem:[%s175 + $0x3c] sm:$0xe]
        %v1181 = vld [vmem:[%s175 + $0x48] sm:$0xe]
        %v1182 = vld [vmem:[%s175 + $0x54] sm:$0xe]
        %v1183 = vld [vmem:[%s175 + $0x78] sm:$0xe]
        %v1184 = vld [vmem:[%s175 + $0x84] sm:$0xe]
        %v1185 = vld [vmem:[%s175 + $0x90] sm:$0xe]
        %v1186 = vld [vmem:[%s175 + $0x9c] sm:$0xe]
        %v1187 = vld [vmem:[%s175 + $0xa8] sm:$0xe]
        %v1188 = vld [vmem:[%s175 + $0xb4] sm:$0xe]
        %v1189 = vld [vmem:[%s175 + $0xc0] sm:$0xe]
        %v1190 = vld [vmem:[%s175 + $0xcc] sm:$0xe]
        %vm1223 = vcmask 1042432
        %vm1224 = vcmask 1046532
        %vm1225 = vmor %vm1223, %vm1224
        %v1226 = vrot.slane %v1175, 5
        %v1227 = vrot.slane %v1226, 4
        %v1228 = vrot.slane %v184, 5
        %v1229 = vsel %vm1225, %v1227, %v1228
        %v1230 = vrot.slane %v1228, 4
        %v1231 = vrot.slane %v216, 5
        %v1232 = vsel %vm1225, %v1230, %v1231
        %v1233 = vrot.slane %v1176, 5
        %v1234 = vrot.slane %v1233, 4
        %v1235 = vrot.slane %v186, 5
        %v1236 = vsel %vm1225, %v1234, %v1235
        %v1237 = vrot.slane %v1235, 4
        %v1238 = vrot.slane %v217, 5
        %v1239 = vsel %vm1225, %v1237, %v1238
        %v1240 = vrot.slane %v1177, 5
        %v1241 = vrot.slane %v1240, 4
        %v1242 = vrot.slane %v188, 5
        %v1243 = vsel %vm1225, %v1241, %v1242
        %v1244 = vrot.slane %v1242, 4
        %v1245 = vrot.slane %v218, 5
        %v1246 = vsel %vm1225, %v1244, %v1245
        %v1247 = vrot.slane %v1178, 5
        %v1248 = vrot.slane %v1247, 4
        %v1249 = vrot.slane %v190, 5
        %v1250 = vsel %vm1225, %v1248, %v1249
        %v1251 = vrot.slane %v1249, 4
        %v1252 = vrot.slane %v219, 5
        %v1253 = vsel %vm1225, %v1251, %v1252
        %v1254 = vrot.slane %v1179, 5
        %v1255 = vrot.slane %v1254, 4
        %v1256 = vrot.slane %v192, 5
        %v1257 = vsel %vm1225, %v1255, %v1256
        %v1258 = vrot.slane %v1256, 4
        %v1259 = vrot.slane %v220, 5
        %v1260 = vsel %vm1225, %v1258, %v1259
        %v1261 = vrot.slane %v1180, 5
        %v1262 = vrot.slane %v1261, 4
        %v1263 = vrot.slane %v194, 5
        %v1264 = vsel %vm1225, %v1262, %v1263
        %v1265 = vrot.slane %v1263, 4
        %v1266 = vrot.slane %v221, 5
        %v1267 = vsel %vm1225, %v1265, %v1266
        %v1268 = vrot.slane %v1181, 5
        %v1269 = vrot.slane %v1268, 4
        %v1270 = vrot.slane %v196, 5
        %v1271 = vsel %vm1225, %v1269, %v1270
        %v1272 = vrot.slane %v1270, 4
        %v1273 = vrot.slane %v222, 5
        %v1274 = vsel %vm1225, %v1272, %v1273
        %v1275 = vrot.slane %v1182, 5
        %v1276 = vrot.slane %v1275, 4
        %v1277 = vrot.slane %v198, 5
        %v1278 = vsel %vm1225, %v1276, %v1277
        %v1279 = vrot.slane %v1277, 4
        %v1280 = vrot.slane %v223, 5
        %v1281 = vsel %vm1225, %v1279, %v1280
        %v1282 = vrot.slane %v1183, 5
        %v1283 = vrot.slane %v1282, 4
        %v1284 = vrot.slane %v200, 5
        %v1285 = vsel %vm1225, %v1283, %v1284
        %v1286 = vrot.slane %v1284, 4
        %v1287 = vrot.slane %v224, 5
        %v1288 = vsel %vm1225, %v1286, %v1287
        %v1289 = vrot.slane %v1184, 5
        %v1290 = vrot.slane %v1289, 4
        %v1291 = vrot.slane %v202, 5
        %v1292 = vsel %vm1225, %v1290, %v1291
        %v1293 = vrot.slane %v1291, 4
        %v1294 = vrot.slane %v225, 5
        %v1295 = vsel %vm1225, %v1293, %v1294
        %v1296 = vrot.slane %v1185, 5
        %v1297 = vrot.slane %v1296, 4
        %v1298 = vrot.slane %v204, 5
        %v1299 = vsel %vm1225, %v1297, %v1298
        %v1300 = vrot.slane %v1298, 4
        %v1301 = vrot.slane %v226, 5
        %v1302 = vsel %vm1225, %v1300, %v1301
        %v1303 = vrot.slane %v1186, 5
        %v1304 = vrot.slane %v1303, 4
        %v1305 = vrot.slane %v206, 5
        %v1306 = vsel %vm1225, %v1304, %v1305
        %v1307 = vrot.slane %v1305, 4
        %v1308 = vrot.slane %v227, 5
        %v1309 = vsel %vm1225, %v1307, %v1308
        %v1310 = vrot.slane %v1187, 5
        %v1311 = vrot.slane %v1310, 4
        %v1312 = vrot.slane %v208, 5
        %v1313 = vsel %vm1225, %v1311, %v1312
        %v1314 = vrot.slane %v1312, 4
        %v1315 = vrot.slane %v228, 5
        %v1316 = vsel %vm1225, %v1314, %v1315
        %v1317 = vrot.slane %v1188, 5
        %v1318 = vrot.slane %v1317, 4
        %v1319 = vrot.slane %v210, 5
        %v1320 = vsel %vm1225, %v1318, %v1319
        %v1321 = vrot.slane %v1319, 4
        %v1322 = vrot.slane %v229, 5
        %v1323 = vsel %vm1225, %v1321, %v1322
        %v1324 = vrot.slane %v1189, 5
        %v1325 = vrot.slane %v1324, 4
        %v1326 = vrot.slane %v212, 5
        %v1327 = vsel %vm1225, %v1325, %v1326
        %v1328 = vrot.slane %v1326, 4
        %v1329 = vrot.slane %v230, 5
        %v1330 = vsel %vm1225, %v1328, %v1329
        %v1331 = vrot.slane %v1190, 5
        %v1332 = vrot.slane %v1331, 4
        %v1333 = vrot.slane %v214, 5
        %v1334 = vsel %vm1225, %v1332, %v1333
        %v1335 = vrot.slane %v1333, 4
        %v1336 = vrot.slane %v231, 5
        %v1337 = vsel %vm1225, %v1335, %v1336
        %s1338 = scalar_lea.vmem %s1, 8
        %v1339 = vld [vmem:[%s1338] sm:$0xf]
        %v1340 = vunpack.c.l.b16 %v1229
        %v1341 = vunpack.c.l.b16 %v1232
        %v1342 = vunpack.c.l.b16 %v1236
        %v1343 = vunpack.c.l.b16 %v1239
        %v1344 = vunpack.c.l.b16 %v1243
        %v1345 = vunpack.c.l.b16 %v1246
        %v1346 = vunpack.c.l.b16 %v1250
        %v1347 = vunpack.c.l.b16 %v1253
        %v1348 = vunpack.c.l.b16 %v1257
        %v1349 = vunpack.c.l.b16 %v1260
        %v1350 = vunpack.c.l.b16 %v1264
        %v1351 = vunpack.c.l.b16 %v1267
        %v1352 = vunpack.c.l.b16 %v1271
        %v1353 = vunpack.c.l.b16 %v1274
        %v1354 = vunpack.c.l.b16 %v1278
        %v1355 = vunpack.c.l.b16 %v1281
        %v1356 = vunpack.c.l.b16 %v1285
        %v1357 = vunpack.c.l.b16 %v1288
        %v1358 = vunpack.c.l.b16 %v1292
        %v1359 = vunpack.c.l.b16 %v1295
        %v1360 = vunpack.c.l.b16 %v1299
        %v1361 = vunpack.c.l.b16 %v1302
        %v1362 = vunpack.c.l.b16 %v1306
        %v1363 = vunpack.c.l.b16 %v1309
        %v1364 = vunpack.c.l.b16 %v1313
        %v1365 = vunpack.c.l.b16 %v1316
        %v1366 = vunpack.c.l.b16 %v1320
        %v1367 = vunpack.c.l.b16 %v1323
        %v1368 = vunpack.c.l.b16 %v1327
        %v1369 = vunpack.c.l.b16 %v1330
        %v1370 = vunpack.c.l.b16 %v1334
        %v1371 = vunpack.c.l.b16 %v1337
        %v1372 = vpack.c.b16 %v1341, %v1340
        %v1373 = vpack.c.b16 %v1343, %v1342
        %v1374 = vpack.c.b16 %v1345, %v1344
        %v1375 = vpack.c.b16 %v1347, %v1346
        %v1376 = vpack.c.b16 %v1349, %v1348
        %v1377 = vpack.c.b16 %v1351, %v1350
        %v1378 = vpack.c.b16 %v1353, %v1352
        %v1379 = vpack.c.b16 %v1355, %v1354
        %v1380 = vpack.c.b16 %v1357, %v1356
        %v1381 = vpack.c.b16 %v1359, %v1358
        %v1382 = vpack.c.b16 %v1361, %v1360
        %v1383 = vpack.c.b16 %v1363, %v1362
        %v1384 = vpack.c.b16 %v1365, %v1364
        %v1385 = vpack.c.b16 %v1367, %v1366
        %v1386 = vpack.c.b16 %v1369, %v1368
        %v1387 = vpack.c.b16 %v1371, %v1370
        %v1389 = vsel %vm669, %v1372, 0
        %v1392 = vsel %vm669, %v1373, 0
        %v1395 = vsel %vm669, %v1374, 0
        %v1398 = vsel %vm669, %v1375, 0
        %v1401 = vsel %vm669, %v1376, 0
        %v1404 = vsel %vm669, %v1377, 0
        %v1407 = vsel %vm669, %v1378, 0
        %v1410 = vsel %vm669, %v1379, 0
        %v1413 = vsel %vm669, %v1380, 0
        %v1416 = vsel %vm669, %v1381, 0
        %v1419 = vsel %vm669, %v1382, 0
        %v1422 = vsel %vm669, %v1383, 0
        %v1425 = vsel %vm669, %v1384, 0
        %v1428 = vsel %vm669, %v1385, 0
        %v1431 = vsel %vm669, %v1386, 0
        %v1434 = vsel %vm669, %v1387, 0
        %v1437 = vsel %vm718, %v1339, 0
        %1439 = vmatprep.subr.bf16.mxu0 0
        %1440 = vmatpush1.bf16.msra.mxu0 0
        %1441 = vmatprep.subr.bf16.mxu0 0
        %1442 = vmatpush1.bf16.msra.mxu0 0
        %1443 = vmatprep.subr.bf16.mxu0 0
        %1444 = vmatpush1.bf16.msra.mxu0 0
        %1445 = vmatprep.subr.bf16.mxu0 0
        %1446 = vmatpush1.bf16.msra.mxu0 0
        %1447 = vmatprep.subr.bf16.mxu0 0
        %1448 = vmatpush1.bf16.msra.mxu0 0
        %1449 = vmatprep.subr.bf16.mxu0 0
        %1450 = vmatpush1.bf16.msra.mxu0 0
        %1451 = vmatprep.subr.bf16.mxu0 0
        %1452 = vmatpush1.bf16.msra.mxu0 0
        %1453 = vmatprep.subr.bf16.mxu0 0
        %1454 = vmatpush1.bf16.msra.mxu0 %v1437
        %1455 = vmatprep.subr.bf16.mxu0 0
        %1456 = vmatpush2.bf16.msra.mxu0 0
        %1457 = vmatprep.subr.bf16.mxu0 0
        %1458 = vmatpush2.bf16.msra.mxu0 0
        %1459 = vmatprep.subr.bf16.mxu0 0
        %1460 = vmatpush2.bf16.msra.mxu0 0
        %1461 = vmatprep.subr.bf16.mxu0 0
        %1462 = vmatpush2.bf16.msra.mxu0 0
        %1463 = vmatprep.subr.bf16.mxu0 0
        %1464 = vmatpush2.bf16.msra.mxu0 0
        %1465 = vmatprep.subr.bf16.mxu0 0
        %1466 = vmatpush2.bf16.msra.mxu0 0
        %1467 = vmatprep.subr.bf16.mxu0 0
        %1468 = vmatpush2.bf16.msra.mxu0 0
        %1469 = vmatprep.subr.bf16.mxu0 0
        %1470 = vmatpush2.bf16.msra.mxu0 0
        %1471 = vmatprep.mubr.bf16.mxu0 0
        %1472 = vmatmul.mubr.bf16.gmra.mxu0 %v1389
        %v1473 = vpop.f32.mrf.mxu0
        %v1474 = vadd.f32 0.0, %v1473
        %v1475 = vpop.f32.mrf.mxu0
        %v1476 = vpop.f32.mrf.mxu0
        %v1477 = vadd.f32 0.0, %v1476
        %v1478 = vpop.f32.mrf.mxu0
        %1479 = vmatprep.mubr.bf16.mxu0 0
        %1480 = vmatmul.mubr.bf16.gmra.mxu0 %v1392
        %v1481 = vpop.f32.mrf.mxu0
        %v1482 = vadd.f32 0.0, %v1481
        %v1483 = vpop.f32.mrf.mxu0
        %v1484 = vpop.f32.mrf.mxu0
        %v1485 = vadd.f32 0.0, %v1484
        %v1486 = vpop.f32.mrf.mxu0
        %1487 = vmatprep.mubr.bf16.mxu0 0
        %1488 = vmatmul.mubr.bf16.gmra.mxu0 %v1395
        %v1489 = vpop.f32.mrf.mxu0
        %v1490 = vadd.f32 0.0, %v1489
        %v1491 = vpop.f32.mrf.mxu0
        %v1492 = vpop.f32.mrf.mxu0
        %v1493 = vadd.f32 0.0, %v1492
        %v1494 = vpop.f32.mrf.mxu0
        %1495 = vmatprep.mubr.bf16.mxu0 0
        %1496 = vmatmul.mubr.bf16.gmra.mxu0 %v1398
        %v1497 = vpop.f32.mrf.mxu0
        %v1498 = vadd.f32 0.0, %v1497
        %v1499 = vpop.f32.mrf.mxu0
        %v1500 = vpop.f32.mrf.mxu0
        %v1501 = vadd.f32 0.0, %v1500
        %v1502 = vpop.f32.mrf.mxu0
        %1503 = vmatprep.mubr.bf16.mxu0 0
        %1504 = vmatmul.mubr.bf16.gmra.mxu0 %v1401
        %v1505 = vpop.f32.mrf.mxu0
        %v1506 = vadd.f32 0.0, %v1505
        %v1507 = vpop.f32.mrf.mxu0
        %v1508 = vpop.f32.mrf.mxu0
        %v1509 = vadd.f32 0.0, %v1508
        %v1510 = vpop.f32.mrf.mxu0
        %1511 = vmatprep.mubr.bf16.mxu0 0
        %1512 = vmatmul.mubr.bf16.gmra.mxu0 %v1404
        %v1513 = vpop.f32.mrf.mxu0
        %v1514 = vadd.f32 0.0, %v1513
        %v1515 = vpop.f32.mrf.mxu0
        %v1516 = vpop.f32.mrf.mxu0
        %v1517 = vadd.f32 0.0, %v1516
        %v1518 = vpop.f32.mrf.mxu0
        %1519 = vmatprep.mubr.bf16.mxu0 0
        %1520 = vmatmul.mubr.bf16.gmra.mxu0 %v1407
        %v1521 = vpop.f32.mrf.mxu0
        %v1522 = vadd.f32 0.0, %v1521
        %v1523 = vpop.f32.mrf.mxu0
        %v1524 = vpop.f32.mrf.mxu0
        %v1525 = vadd.f32 0.0, %v1524
        %v1526 = vpop.f32.mrf.mxu0
        %1527 = vmatprep.mubr.bf16.mxu0 0
        %1528 = vmatmul.mubr.bf16.gmra.mxu0 %v1410
        %v1529 = vpop.f32.mrf.mxu0
        %v1530 = vadd.f32 0.0, %v1529
        %v1531 = vpop.f32.mrf.mxu0
        %v1532 = vpop.f32.mrf.mxu0
        %v1533 = vadd.f32 0.0, %v1532
        %v1534 = vpop.f32.mrf.mxu0
        %1535 = vmatprep.mubr.bf16.mxu0 0
        %1536 = vmatmul.mubr.bf16.gmra.mxu0 %v1413
        %v1537 = vpop.f32.mrf.mxu0
        %v1538 = vadd.f32 0.0, %v1537
        %v1539 = vpop.f32.mrf.mxu0
        %v1540 = vpop.f32.mrf.mxu0
        %v1541 = vadd.f32 0.0, %v1540
        %v1542 = vpop.f32.mrf.mxu0
        %1543 = vmatprep.mubr.bf16.mxu0 0
        %1544 = vmatmul.mubr.bf16.gmra.mxu0 %v1416
        %v1545 = vpop.f32.mrf.mxu0
        %v1546 = vadd.f32 0.0, %v1545
        %v1547 = vpop.f32.mrf.mxu0
        %v1548 = vpop.f32.mrf.mxu0
        %v1549 = vadd.f32 0.0, %v1548
        %v1550 = vpop.f32.mrf.mxu0
        %1551 = vmatprep.mubr.bf16.mxu0 0
        %1552 = vmatmul.mubr.bf16.gmra.mxu0 %v1419
        %v1553 = vpop.f32.mrf.mxu0
        %v1554 = vadd.f32 0.0, %v1553
        %v1555 = vpop.f32.mrf.mxu0
        %v1556 = vpop.f32.mrf.mxu0
        %v1557 = vadd.f32 0.0, %v1556
        %v1558 = vpop.f32.mrf.mxu0
        %1559 = vmatprep.mubr.bf16.mxu0 0
        %1560 = vmatmul.mubr.bf16.gmra.mxu0 %v1422
        %v1561 = vpop.f32.mrf.mxu0
        %v1562 = vadd.f32 0.0, %v1561
        %v1563 = vpop.f32.mrf.mxu0
        %v1564 = vpop.f32.mrf.mxu0
        %v1565 = vadd.f32 0.0, %v1564
        %v1566 = vpop.f32.mrf.mxu0
        %1567 = vmatprep.mubr.bf16.mxu0 0
        %1568 = vmatmul.mubr.bf16.gmra.mxu0 %v1425
        %v1569 = vpop.f32.mrf.mxu0
        %v1570 = vadd.f32 0.0, %v1569
        %v1571 = vpop.f32.mrf.mxu0
        %v1572 = vpop.f32.mrf.mxu0
        %v1573 = vadd.f32 0.0, %v1572
        %v1574 = vpop.f32.mrf.mxu0
        %1575 = vmatprep.mubr.bf16.mxu0 0
        %1576 = vmatmul.mubr.bf16.gmra.mxu0 %v1428
        %v1577 = vpop.f32.mrf.mxu0
        %v1578 = vadd.f32 0.0, %v1577
        %v1579 = vpop.f32.mrf.mxu0
        %v1580 = vpop.f32.mrf.mxu0
        %v1581 = vadd.f32 0.0, %v1580
        %v1582 = vpop.f32.mrf.mxu0
        %1583 = vmatprep.mubr.bf16.mxu0 0
        %1584 = vmatmul.mubr.bf16.gmra.mxu0 %v1431
        %v1585 = vpop.f32.mrf.mxu0
        %v1586 = vadd.f32 0.0, %v1585
        %v1587 = vpop.f32.mrf.mxu0
        %v1588 = vpop.f32.mrf.mxu0
        %v1589 = vadd.f32 0.0, %v1588
        %v1590 = vpop.f32.mrf.mxu0
        %1591 = vmatprep.mubr.bf16.mxu0 0
        %1592 = vmatmul.mubr.bf16.gmra.mxu0 %v1434
        %v1593 = vpop.f32.mrf.mxu0
        %v1594 = vadd.f32 0.0, %v1593
        %v1595 = vpop.f32.mrf.mxu0
        %v1596 = vpop.f32.mrf.mxu0
        %v1597 = vadd.f32 0.0, %v1596
        %v1598 = vpop.f32.mrf.mxu0
        %1599 = vdwg.mxu0
        %v1600 = vadd.f32 %v1049, %v1474
        %v1601 = vadd.f32 %v1052, %v1477
        %v1602 = vadd.f32 %v1057, %v1482
        %v1603 = vadd.f32 %v1060, %v1485
        %v1604 = vadd.f32 %v1065, %v1490
        %v1605 = vadd.f32 %v1068, %v1493
        %v1606 = vadd.f32 %v1073, %v1498
        %v1607 = vadd.f32 %v1076, %v1501
        %v1608 = vadd.f32 %v1081, %v1506
        %v1609 = vadd.f32 %v1084, %v1509
        %v1610 = vadd.f32 %v1089, %v1514
        %v1611 = vadd.f32 %v1092, %v1517
        %v1612 = vadd.f32 %v1097, %v1522
        %v1613 = vadd.f32 %v1100, %v1525
        %v1614 = vadd.f32 %v1105, %v1530
        %v1615 = vadd.f32 %v1108, %v1533
        %v1616 = vadd.f32 %v1113, %v1538
        %v1617 = vadd.f32 %v1116, %v1541
        %v1618 = vadd.f32 %v1121, %v1546
        %v1619 = vadd.f32 %v1124, %v1549
        %v1620 = vadd.f32 %v1129, %v1554
        %v1621 = vadd.f32 %v1132, %v1557
        %v1622 = vadd.f32 %v1137, %v1562
        %v1623 = vadd.f32 %v1140, %v1565
        %v1624 = vadd.f32 %v1145, %v1570
        %v1625 = vadd.f32 %v1148, %v1573
        %v1626 = vadd.f32 %v1153, %v1578
        %v1627 = vadd.f32 %v1156, %v1581
        %v1628 = vadd.f32 %v1161, %v1586
        %v1629 = vadd.f32 %v1164, %v1589
        %v1630 = vadd.f32 %v1169, %v1594
        %v1631 = vadd.f32 %v1172, %v1597
        %s1632 = scalar_lea.vmem %s175, 12
        %v1633 = vld [vmem:[%s1632] sm:$0xf]
        %v1634 = vld [vmem:[%s1632 + $0x4] sm:$0xf]
        %v1635 = vld [vmem:[%s1632 + $0xc] sm:$0xf]
        %v1636 = vld [vmem:[%s1632 + $0x10] sm:$0xf]
        %v1637 = vld [vmem:[%s1632 + $0x18] sm:$0xf]
        %v1638 = vld [vmem:[%s1632 + $0x1c] sm:$0xf]
        %v1639 = vld [vmem:[%s1632 + $0x24] sm:$0xf]
        %v1640 = vld [vmem:[%s1632 + $0x28] sm:$0xf]
        %v1641 = vld [vmem:[%s1632 + $0x30] sm:$0xf]
        %v1642 = vld [vmem:[%s1632 + $0x34] sm:$0xf]
        %v1643 = vld [vmem:[%s1632 + $0x3c] sm:$0xf]
        %v1644 = vld [vmem:[%s1632 + $0x40] sm:$0xf]
        %v1645 = vld [vmem:[%s1632 + $0x48] sm:$0xf]
        %v1646 = vld [vmem:[%s1632 + $0x4c] sm:$0xf]
        %v1647 = vld [vmem:[%s1632 + $0x54] sm:$0xf]
        %v1648 = vld [vmem:[%s1632 + $0x58] sm:$0xf]
        %v1649 = vld [vmem:[%s1632 + $0x78] sm:$0xf]
        %v1650 = vld [vmem:[%s1632 + $0x7c] sm:$0xf]
        %v1651 = vld [vmem:[%s1632 + $0x84] sm:$0xf]
        %v1652 = vld [vmem:[%s1632 + $0x88] sm:$0xf]
        %v1653 = vld [vmem:[%s1632 + $0x90] sm:$0xf]
        %v1654 = vld [vmem:[%s1632 + $0x94] sm:$0xf]
        %v1655 = vld [vmem:[%s1632 + $0x9c] sm:$0xf]
        %v1656 = vld [vmem:[%s1632 + $0xa0] sm:$0xf]
        %v1657 = vld [vmem:[%s1632 + $0xa8] sm:$0xf]
        %v1658 = vld [vmem:[%s1632 + $0xac] sm:$0xf]
        %v1659 = vld [vmem:[%s1632 + $0xb4] sm:$0xf]
        %v1660 = vld [vmem:[%s1632 + $0xb8] sm:$0xf]
        %v1661 = vld [vmem:[%s1632 + $0xc0] sm:$0xf]
        %v1662 = vld [vmem:[%s1632 + $0xc4] sm:$0xf]
        %v1663 = vld [vmem:[%s1632 + $0xcc] sm:$0xf]
        %v1664 = vld [vmem:[%s1632 + $0xd0] sm:$0xf]
        %s1665 = scalar_lea.vmem %s1, 12
        %v1666 = vld [vmem:[%s1665] sm:$0xf]
        %v1699 = vunpack.c.l.b16 %v1633
        %v1700 = vunpack.c.l.b16 %v1634
        %v1701 = vunpack.c.l.b16 %v1635
        %v1702 = vunpack.c.l.b16 %v1636
        %v1703 = vunpack.c.l.b16 %v1637
        %v1704 = vunpack.c.l.b16 %v1638
        %v1705 = vunpack.c.l.b16 %v1639
        %v1706 = vunpack.c.l.b16 %v1640
        %v1707 = vunpack.c.l.b16 %v1641
        %v1708 = vunpack.c.l.b16 %v1642
        %v1709 = vunpack.c.l.b16 %v1643
        %v1710 = vunpack.c.l.b16 %v1644
        %v1711 = vunpack.c.l.b16 %v1645
        %v1712 = vunpack.c.l.b16 %v1646
        %v1713 = vunpack.c.l.b16 %v1647
        %v1714 = vunpack.c.l.b16 %v1648
        %v1715 = vunpack.c.l.b16 %v1649
        %v1716 = vunpack.c.l.b16 %v1650
        %v1717 = vunpack.c.l.b16 %v1651
        %v1718 = vunpack.c.l.b16 %v1652
        %v1719 = vunpack.c.l.b16 %v1653
        %v1720 = vunpack.c.l.b16 %v1654
        %v1721 = vunpack.c.l.b16 %v1655
        %v1722 = vunpack.c.l.b16 %v1656
        %v1723 = vunpack.c.l.b16 %v1657
        %v1724 = vunpack.c.l.b16 %v1658
        %v1725 = vunpack.c.l.b16 %v1659
        %v1726 = vunpack.c.l.b16 %v1660
        %v1727 = vunpack.c.l.b16 %v1661
        %v1728 = vunpack.c.l.b16 %v1662
        %v1729 = vunpack.c.l.b16 %v1663
        %v1730 = vunpack.c.l.b16 %v1664
        %v1731 = vpack.c.b16 %v1700, %v1699
        %v1732 = vpack.c.b16 %v1702, %v1701
        %v1733 = vpack.c.b16 %v1704, %v1703
        %v1734 = vpack.c.b16 %v1706, %v1705
        %v1735 = vpack.c.b16 %v1708, %v1707
        %v1736 = vpack.c.b16 %v1710, %v1709
        %v1737 = vpack.c.b16 %v1712, %v1711
        %v1738 = vpack.c.b16 %v1714, %v1713
        %v1739 = vpack.c.b16 %v1716, %v1715
        %v1740 = vpack.c.b16 %v1718, %v1717
        %v1741 = vpack.c.b16 %v1720, %v1719
        %v1742 = vpack.c.b16 %v1722, %v1721
        %v1743 = vpack.c.b16 %v1724, %v1723
        %v1744 = vpack.c.b16 %v1726, %v1725
        %v1745 = vpack.c.b16 %v1728, %v1727
        %v1746 = vpack.c.b16 %v1730, %v1729
        %v1748 = vsel %vm669, %v1731, 0
        %v1751 = vsel %vm669, %v1732, 0
        %v1754 = vsel %vm669, %v1733, 0
        %v1757 = vsel %vm669, %v1734, 0
        %v1760 = vsel %vm669, %v1735, 0
        %v1763 = vsel %vm669, %v1736, 0
        %v1766 = vsel %vm669, %v1737, 0
        %v1769 = vsel %vm669, %v1738, 0
        %v1772 = vsel %vm669, %v1739, 0
        %v1775 = vsel %vm669, %v1740, 0
        %v1778 = vsel %vm669, %v1741, 0
        %v1781 = vsel %vm669, %v1742, 0
        %v1784 = vsel %vm669, %v1743, 0
        %v1787 = vsel %vm669, %v1744, 0
        %v1790 = vsel %vm669, %v1745, 0
        %v1793 = vsel %vm669, %v1746, 0
        %v1796 = vsel %vm718, %v1666, 0
        %1798 = vmatprep.subr.bf16.mxu0 0
        %1799 = vmatpush1.bf16.msra.mxu0 0
        %1800 = vmatprep.subr.bf16.mxu0 0
        %1801 = vmatpush1.bf16.msra.mxu0 0
        %1802 = vmatprep.subr.bf16.mxu0 0
        %1803 = vmatpush1.bf16.msra.mxu0 0
        %1804 = vmatprep.subr.bf16.mxu0 0
        %1805 = vmatpush1.bf16.msra.mxu0 0
        %1806 = vmatprep.subr.bf16.mxu0 0
        %1807 = vmatpush1.bf16.msra.mxu0 0
        %1808 = vmatprep.subr.bf16.mxu0 0
        %1809 = vmatpush1.bf16.msra.mxu0 0
        %1810 = vmatprep.subr.bf16.mxu0 0
        %1811 = vmatpush1.bf16.msra.mxu0 0
        %1812 = vmatprep.subr.bf16.mxu0 0
        %1813 = vmatpush1.bf16.msra.mxu0 %v1796
        %1814 = vmatprep.subr.bf16.mxu0 0
        %1815 = vmatpush2.bf16.msra.mxu0 0
        %1816 = vmatprep.subr.bf16.mxu0 0
        %1817 = vmatpush2.bf16.msra.mxu0 0
        %1818 = vmatprep.subr.bf16.mxu0 0
        %1819 = vmatpush2.bf16.msra.mxu0 0
        %1820 = vmatprep.subr.bf16.mxu0 0
        %1821 = vmatpush2.bf16.msra.mxu0 0
        %1822 = vmatprep.subr.bf16.mxu0 0
        %1823 = vmatpush2.bf16.msra.mxu0 0
        %1824 = vmatprep.subr.bf16.mxu0 0
        %1825 = vmatpush2.bf16.msra.mxu0 0
        %1826 = vmatprep.subr.bf16.mxu0 0
        %1827 = vmatpush2.bf16.msra.mxu0 0
        %1828 = vmatprep.subr.bf16.mxu0 0
        %1829 = vmatpush2.bf16.msra.mxu0 0
        %1830 = vmatprep.mubr.bf16.mxu0 0
        %1831 = vmatmul.mubr.bf16.gmra.mxu0 %v1748
        %v1832 = vpop.f32.mrf.mxu0
        %v1833 = vadd.f32 0.0, %v1832
        %v1834 = vpop.f32.mrf.mxu0
        %v1835 = vpop.f32.mrf.mxu0
        %v1836 = vadd.f32 0.0, %v1835
        %v1837 = vpop.f32.mrf.mxu0
        %1838 = vmatprep.mubr.bf16.mxu0 0
        %1839 = vmatmul.mubr.bf16.gmra.mxu0 %v1751
        %v1840 = vpop.f32.mrf.mxu0
        %v1841 = vadd.f32 0.0, %v1840
        %v1842 = vpop.f32.mrf.mxu0
        %v1843 = vpop.f32.mrf.mxu0
        %v1844 = vadd.f32 0.0, %v1843
        %v1845 = vpop.f32.mrf.mxu0
        %1846 = vmatprep.mubr.bf16.mxu0 0
        %1847 = vmatmul.mubr.bf16.gmra.mxu0 %v1754
        %v1848 = vpop.f32.mrf.mxu0
        %v1849 = vadd.f32 0.0, %v1848
        %v1850 = vpop.f32.mrf.mxu0
        %v1851 = vpop.f32.mrf.mxu0
        %v1852 = vadd.f32 0.0, %v1851
        %v1853 = vpop.f32.mrf.mxu0
        %1854 = vmatprep.mubr.bf16.mxu0 0
        %1855 = vmatmul.mubr.bf16.gmra.mxu0 %v1757
        %v1856 = vpop.f32.mrf.mxu0
        %v1857 = vadd.f32 0.0, %v1856
        %v1858 = vpop.f32.mrf.mxu0
        %v1859 = vpop.f32.mrf.mxu0
        %v1860 = vadd.f32 0.0, %v1859
        %v1861 = vpop.f32.mrf.mxu0
        %1862 = vmatprep.mubr.bf16.mxu0 0
        %1863 = vmatmul.mubr.bf16.gmra.mxu0 %v1760
        %v1864 = vpop.f32.mrf.mxu0
        %v1865 = vadd.f32 0.0, %v1864
        %v1866 = vpop.f32.mrf.mxu0
        %v1867 = vpop.f32.mrf.mxu0
        %v1868 = vadd.f32 0.0, %v1867
        %v1869 = vpop.f32.mrf.mxu0
        %1870 = vmatprep.mubr.bf16.mxu0 0
        %1871 = vmatmul.mubr.bf16.gmra.mxu0 %v1763
        %v1872 = vpop.f32.mrf.mxu0
        %v1873 = vadd.f32 0.0, %v1872
        %v1874 = vpop.f32.mrf.mxu0
        %v1875 = vpop.f32.mrf.mxu0
        %v1876 = vadd.f32 0.0, %v1875
        %v1877 = vpop.f32.mrf.mxu0
        %1878 = vmatprep.mubr.bf16.mxu0 0
        %1879 = vmatmul.mubr.bf16.gmra.mxu0 %v1766
        %v1880 = vpop.f32.mrf.mxu0
        %v1881 = vadd.f32 0.0, %v1880
        %v1882 = vpop.f32.mrf.mxu0
        %v1883 = vpop.f32.mrf.mxu0
        %v1884 = vadd.f32 0.0, %v1883
        %v1885 = vpop.f32.mrf.mxu0
        %1886 = vmatprep.mubr.bf16.mxu0 0
        %1887 = vmatmul.mubr.bf16.gmra.mxu0 %v1769
        %v1888 = vpop.f32.mrf.mxu0
        %v1889 = vadd.f32 0.0, %v1888
        %v1890 = vpop.f32.mrf.mxu0
        %v1891 = vpop.f32.mrf.mxu0
        %v1892 = vadd.f32 0.0, %v1891
        %v1893 = vpop.f32.mrf.mxu0
        %1894 = vmatprep.mubr.bf16.mxu0 0
        %1895 = vmatmul.mubr.bf16.gmra.mxu0 %v1772
        %v1896 = vpop.f32.mrf.mxu0
        %v1897 = vadd.f32 0.0, %v1896
        %v1898 = vpop.f32.mrf.mxu0
        %v1899 = vpop.f32.mrf.mxu0
        %v1900 = vadd.f32 0.0, %v1899
        %v1901 = vpop.f32.mrf.mxu0
        %1902 = vmatprep.mubr.bf16.mxu0 0
        %1903 = vmatmul.mubr.bf16.gmra.mxu0 %v1775
        %v1904 = vpop.f32.mrf.mxu0
        %v1905 = vadd.f32 0.0, %v1904
        %v1906 = vpop.f32.mrf.mxu0
        %v1907 = vpop.f32.mrf.mxu0
        %v1908 = vadd.f32 0.0, %v1907
        %v1909 = vpop.f32.mrf.mxu0
        %1910 = vmatprep.mubr.bf16.mxu0 0
        %1911 = vmatmul.mubr.bf16.gmra.mxu0 %v1778
        %v1912 = vpop.f32.mrf.mxu0
        %v1913 = vadd.f32 0.0, %v1912
        %v1914 = vpop.f32.mrf.mxu0
        %v1915 = vpop.f32.mrf.mxu0
        %v1916 = vadd.f32 0.0, %v1915
        %v1917 = vpop.f32.mrf.mxu0
        %1918 = vmatprep.mubr.bf16.mxu0 0
        %1919 = vmatmul.mubr.bf16.gmra.mxu0 %v1781
        %v1920 = vpop.f32.mrf.mxu0
        %v1921 = vadd.f32 0.0, %v1920
        %v1922 = vpop.f32.mrf.mxu0
        %v1923 = vpop.f32.mrf.mxu0
        %v1924 = vadd.f32 0.0, %v1923
        %v1925 = vpop.f32.mrf.mxu0
        %1926 = vmatprep.mubr.bf16.mxu0 0
        %1927 = vmatmul.mubr.bf16.gmra.mxu0 %v1784
        %v1928 = vpop.f32.mrf.mxu0
        %v1929 = vadd.f32 0.0, %v1928
        %v1930 = vpop.f32.mrf.mxu0
        %v1931 = vpop.f32.mrf.mxu0
        %v1932 = vadd.f32 0.0, %v1931
        %v1933 = vpop.f32.mrf.mxu0
        %1934 = vmatprep.mubr.bf16.mxu0 0
        %1935 = vmatmul.mubr.bf16.gmra.mxu0 %v1787
        %v1936 = vpop.f32.mrf.mxu0
        %v1937 = vadd.f32 0.0, %v1936
        %v1938 = vpop.f32.mrf.mxu0
        %v1939 = vpop.f32.mrf.mxu0
        %v1940 = vadd.f32 0.0, %v1939
        %v1941 = vpop.f32.mrf.mxu0
        %1942 = vmatprep.mubr.bf16.mxu0 0
        %1943 = vmatmul.mubr.bf16.gmra.mxu0 %v1790
        %v1944 = vpop.f32.mrf.mxu0
        %v1945 = vadd.f32 0.0, %v1944
        %v1946 = vpop.f32.mrf.mxu0
        %v1947 = vpop.f32.mrf.mxu0
        %v1948 = vadd.f32 0.0, %v1947
        %v1949 = vpop.f32.mrf.mxu0
        %1950 = vmatprep.mubr.bf16.mxu0 0
        %1951 = vmatmul.mubr.bf16.gmra.mxu0 %v1793
        %v1952 = vpop.f32.mrf.mxu0
        %v1953 = vadd.f32 0.0, %v1952
        %v1954 = vpop.f32.mrf.mxu0
        %v1955 = vpop.f32.mrf.mxu0
        %v1956 = vadd.f32 0.0, %v1955
        %v1957 = vpop.f32.mrf.mxu0
        %1958 = vdwg.mxu0
        %v1959 = vadd.f32 %v1600, %v1833
        %v1960 = vadd.f32 %v1601, %v1836
        %v1961 = vadd.f32 %v1602, %v1841
        %v1962 = vadd.f32 %v1603, %v1844
        %v1963 = vadd.f32 %v1604, %v1849
        %v1964 = vadd.f32 %v1605, %v1852
        %v1965 = vadd.f32 %v1606, %v1857
        %v1966 = vadd.f32 %v1607, %v1860
        %v1967 = vadd.f32 %v1608, %v1865
        %v1968 = vadd.f32 %v1609, %v1868
        %v1969 = vadd.f32 %v1610, %v1873
        %v1970 = vadd.f32 %v1611, %v1876
        %v1971 = vadd.f32 %v1612, %v1881
        %v1972 = vadd.f32 %v1613, %v1884
        %v1973 = vadd.f32 %v1614, %v1889
        %v1974 = vadd.f32 %v1615, %v1892
        %v1975 = vadd.f32 %v1616, %v1897
        %v1976 = vadd.f32 %v1617, %v1900
        %v1977 = vadd.f32 %v1618, %v1905
        %v1978 = vadd.f32 %v1619, %v1908
        %v1979 = vadd.f32 %v1620, %v1913
        %v1980 = vadd.f32 %v1621, %v1916
        %v1981 = vadd.f32 %v1622, %v1921
        %v1982 = vadd.f32 %v1623, %v1924
        %v1983 = vadd.f32 %v1624, %v1929
        %v1984 = vadd.f32 %v1625, %v1932
        %v1985 = vadd.f32 %v1626, %v1937
        %v1986 = vadd.f32 %v1627, %v1940
        %v1987 = vadd.f32 %v1628, %v1945
        %v1988 = vadd.f32 %v1629, %v1948
        %v1989 = vadd.f32 %v1630, %v1953
        %v1990 = vadd.f32 %v1631, %v1956
        %v1991 = vld [vmem:[%s1632] sm:$0xf]
        %v1992 = vld [vmem:[%s1632 + $0x4] sm:$0xf]
        %v1993 = vld [vmem:[%s1632 + $0x8] sm:$0x1]
        %v1994 = vld [vmem:[%s1632 + $0xc] sm:$0xf]
        %v1995 = vld [vmem:[%s1632 + $0x10] sm:$0xf]
        %v1996 = vld [vmem:[%s1632 + $0x14] sm:$0x1]
        %v1997 = vld [vmem:[%s1632 + $0x18] sm:$0xf]
        %v1998 = vld [vmem:[%s1632 + $0x1c] sm:$0xf]
        %v1999 = vld [vmem:[%s1632 + $0x20] sm:$0x1]
        %v2000 = vld [vmem:[%s1632 + $0x24] sm:$0xf]
        %v2001 = vld [vmem:[%s1632 + $0x28] sm:$0xf]
        %v2002 = vld [vmem:[%s1632 + $0x2c] sm:$0x1]
        %v2003 = vld [vmem:[%s1632 + $0x30] sm:$0xf]
        %v2004 = vld [vmem:[%s1632 + $0x34] sm:$0xf]
        %v2005 = vld [vmem:[%s1632 + $0x38] sm:$0x1]
        %v2006 = vld [vmem:[%s1632 + $0x3c] sm:$0xf]
        %v2007 = vld [vmem:[%s1632 + $0x40] sm:$0xf]
        %v2008 = vld [vmem:[%s1632 + $0x44] sm:$0x1]
        %v2009 = vld [vmem:[%s1632 + $0x48] sm:$0xf]
        %v2010 = vld [vmem:[%s1632 + $0x4c] sm:$0xf]
        %v2011 = vld [vmem:[%s1632 + $0x50] sm:$0x1]
        %v2012 = vld [vmem:[%s1632 + $0x54] sm:$0xf]
        %v2013 = vld [vmem:[%s1632 + $0x58] sm:$0xf]
        %v2014 = vld [vmem:[%s1632 + $0x5c] sm:$0x1]
        %v2015 = vld [vmem:[%s1632 + $0x78] sm:$0xf]
        %v2016 = vld [vmem:[%s1632 + $0x7c] sm:$0xf]
        %v2017 = vld [vmem:[%s1632 + $0x80] sm:$0x1]
        %v2018 = vld [vmem:[%s1632 + $0x84] sm:$0xf]
        %v2019 = vld [vmem:[%s1632 + $0x88] sm:$0xf]
        %v2020 = vld [vmem:[%s1632 + $0x8c] sm:$0x1]
        %v2021 = vld [vmem:[%s1632 + $0x90] sm:$0xf]
        %v2022 = vld [vmem:[%s1632 + $0x94] sm:$0xf]
        %v2023 = vld [vmem:[%s1632 + $0x98] sm:$0x1]
        %v2024 = vld [vmem:[%s1632 + $0x9c] sm:$0xf]
        %v2025 = vld [vmem:[%s1632 + $0xa0] sm:$0xf]
        %v2026 = vld [vmem:[%s1632 + $0xa4] sm:$0x1]
        %v2027 = vld [vmem:[%s1632 + $0xa8] sm:$0xf]
        %v2028 = vld [vmem:[%s1632 + $0xac] sm:$0xf]
        %v2029 = vld [vmem:[%s1632 + $0xb0] sm:$0x1]
        %v2030 = vld [vmem:[%s1632 + $0xb4] sm:$0xf]
        %v2031 = vld [vmem:[%s1632 + $0xb8] sm:$0xf]
        %v2032 = vld [vmem:[%s1632 + $0xbc] sm:$0x1]
        %v2033 = vld [vmem:[%s1632 + $0xc0] sm:$0xf]
        %v2034 = vld [vmem:[%s1632 + $0xc4] sm:$0xf]
        %v2035 = vld [vmem:[%s1632 + $0xc8] sm:$0x1]
        %v2036 = vld [vmem:[%s1632 + $0xcc] sm:$0xf]
        %v2037 = vld [vmem:[%s1632 + $0xd0] sm:$0xf]
        %v2038 = vld [vmem:[%s1632 + $0xd4] sm:$0x1]
        %v2040 = vshrl.u32 %v1991, 16
        %v2042 = vrot.slane %v2040, 4
        %v2043 = vshll.u32 %v1991, 16
        %v2045 = vrot.slane %v2043, 5
        %v2046 = vor.u32 %v2042, %v2045
        %v2047 = vrot.slane %v2046, 4
        %v2049 = vshll.u32 %v1992, 16
        %v2051 = vrot.slane %v2049, 5
        %v2052 = vsel %vm234, %v2047, %v2051
        %v2053 = vshrl.u32 %v1992, 16
        %v2055 = vrot.slane %v2053, 4
        %v2056 = vor.u32 %v2055, %v2051
        %v2057 = vrot.slane %v2056, 4
        %v2059 = vshll.u32 %v1993, 16
        %v2061 = vrot.slane %v2059, 5
        %v2062 = vsel %vm234, %v2057, %v2061
        %v2064 = vshrl.u32 %v1994, 16
        %v2066 = vrot.slane %v2064, 4
        %v2067 = vshll.u32 %v1994, 16
        %v2069 = vrot.slane %v2067, 5
        %v2070 = vor.u32 %v2066, %v2069
        %v2071 = vrot.slane %v2070, 4
        %v2073 = vshll.u32 %v1995, 16
        %v2075 = vrot.slane %v2073, 5
        %v2076 = vsel %vm234, %v2071, %v2075
        %v2077 = vshrl.u32 %v1995, 16
        %v2079 = vrot.slane %v2077, 4
        %v2080 = vor.u32 %v2079, %v2075
        %v2081 = vrot.slane %v2080, 4
        %v2083 = vshll.u32 %v1996, 16
        %v2085 = vrot.slane %v2083, 5
        %v2086 = vsel %vm234, %v2081, %v2085
        %v2088 = vshrl.u32 %v1997, 16
        %v2090 = vrot.slane %v2088, 4
        %v2091 = vshll.u32 %v1997, 16
        %v2093 = vrot.slane %v2091, 5
        %v2094 = vor.u32 %v2090, %v2093
        %v2095 = vrot.slane %v2094, 4
        %v2097 = vshll.u32 %v1998, 16
        %v2099 = vrot.slane %v2097, 5
        %v2100 = vsel %vm234, %v2095, %v2099
        %v2101 = vshrl.u32 %v1998, 16
        %v2103 = vrot.slane %v2101, 4
        %v2104 = vor.u32 %v2103, %v2099
        %v2105 = vrot.slane %v2104, 4
        %v2107 = vshll.u32 %v1999, 16
        %v2109 = vrot.slane %v2107, 5
        %v2110 = vsel %vm234, %v2105, %v2109
        %v2112 = vshrl.u32 %v2000, 16
        %v2114 = vrot.slane %v2112, 4
        %v2115 = vshll.u32 %v2000, 16
        %v2117 = vrot.slane %v2115, 5
        %v2118 = vor.u32 %v2114, %v2117
        %v2119 = vrot.slane %v2118, 4
        %v2121 = vshll.u32 %v2001, 16
        %v2123 = vrot.slane %v2121, 5
        %v2124 = vsel %vm234, %v2119, %v2123
        %v2125 = vshrl.u32 %v2001, 16
        %v2127 = vrot.slane %v2125, 4
        %v2128 = vor.u32 %v2127, %v2123
        %v2129 = vrot.slane %v2128, 4
        %v2131 = vshll.u32 %v2002, 16
        %v2133 = vrot.slane %v2131, 5
        %v2134 = vsel %vm234, %v2129, %v2133
        %v2136 = vshrl.u32 %v2003, 16
        %v2138 = vrot.slane %v2136, 4
        %v2139 = vshll.u32 %v2003, 16
        %v2141 = vrot.slane %v2139, 5
        %v2142 = vor.u32 %v2138, %v2141
        %v2143 = vrot.slane %v2142, 4
        %v2145 = vshll.u32 %v2004, 16
        %v2147 = vrot.slane %v2145, 5
        %v2148 = vsel %vm234, %v2143, %v2147
        %v2149 = vshrl.u32 %v2004, 16
        %v2151 = vrot.slane %v2149, 4
        %v2152 = vor.u32 %v2151, %v2147
        %v2153 = vrot.slane %v2152, 4
        %v2155 = vshll.u32 %v2005, 16
        %v2157 = vrot.slane %v2155, 5
        %v2158 = vsel %vm234, %v2153, %v2157
        %v2160 = vshrl.u32 %v2006, 16
        %v2162 = vrot.slane %v2160, 4
        %v2163 = vshll.u32 %v2006, 16
        %v2165 = vrot.slane %v2163, 5
        %v2166 = vor.u32 %v2162, %v2165
        %v2167 = vrot.slane %v2166, 4
        %v2169 = vshll.u32 %v2007, 16
        %v2171 = vrot.slane %v2169, 5
        %v2172 = vsel %vm234, %v2167, %v2171
        %v2173 = vshrl.u32 %v2007, 16
        %v2175 = vrot.slane %v2173, 4
        %v2176 = vor.u32 %v2175, %v2171
        %v2177 = vrot.slane %v2176, 4
        %v2179 = vshll.u32 %v2008, 16
        %v2181 = vrot.slane %v2179, 5
        %v2182 = vsel %vm234, %v2177, %v2181
        %v2184 = vshrl.u32 %v2009, 16
        %v2186 = vrot.slane %v2184, 4
        %v2187 = vshll.u32 %v2009, 16
        %v2189 = vrot.slane %v2187, 5
        %v2190 = vor.u32 %v2186, %v2189
        %v2191 = vrot.slane %v2190, 4
        %v2193 = vshll.u32 %v2010, 16
        %v2195 = vrot.slane %v2193, 5
        %v2196 = vsel %vm234, %v2191, %v2195
        %v2197 = vshrl.u32 %v2010, 16
        %v2199 = vrot.slane %v2197, 4
        %v2200 = vor.u32 %v2199, %v2195
        %v2201 = vrot.slane %v2200, 4
        %v2203 = vshll.u32 %v2011, 16
        %v2205 = vrot.slane %v2203, 5
        %v2206 = vsel %vm234, %v2201, %v2205
        %v2208 = vshrl.u32 %v2012, 16
        %v2210 = vrot.slane %v2208, 4
        %v2211 = vshll.u32 %v2012, 16
        %v2213 = vrot.slane %v2211, 5
        %v2214 = vor.u32 %v2210, %v2213
        %v2215 = vrot.slane %v2214, 4
        %v2217 = vshll.u32 %v2013, 16
        %v2219 = vrot.slane %v2217, 5
        %v2220 = vsel %vm234, %v2215, %v2219
        %v2221 = vshrl.u32 %v2013, 16
        %v2223 = vrot.slane %v2221, 4
        %v2224 = vor.u32 %v2223, %v2219
        %v2225 = vrot.slane %v2224, 4
        %v2227 = vshll.u32 %v2014, 16
        %v2229 = vrot.slane %v2227, 5
        %v2230 = vsel %vm234, %v2225, %v2229
        %v2232 = vshrl.u32 %v2015, 16
        %v2234 = vrot.slane %v2232, 4
        %v2235 = vshll.u32 %v2015, 16
        %v2237 = vrot.slane %v2235, 5
        %v2238 = vor.u32 %v2234, %v2237
        %v2239 = vrot.slane %v2238, 4
        %v2241 = vshll.u32 %v2016, 16
        %v2243 = vrot.slane %v2241, 5
        %v2244 = vsel %vm234, %v2239, %v2243
        %v2245 = vshrl.u32 %v2016, 16
        %v2247 = vrot.slane %v2245, 4
        %v2248 = vor.u32 %v2247, %v2243
        %v2249 = vrot.slane %v2248, 4
        %v2251 = vshll.u32 %v2017, 16
        %v2253 = vrot.slane %v2251, 5
        %v2254 = vsel %vm234, %v2249, %v2253
        %v2256 = vshrl.u32 %v2018, 16
        %v2258 = vrot.slane %v2256, 4
        %v2259 = vshll.u32 %v2018, 16
        %v2261 = vrot.slane %v2259, 5
        %v2262 = vor.u32 %v2258, %v2261
        %v2263 = vrot.slane %v2262, 4
        %v2265 = vshll.u32 %v2019, 16
        %v2267 = vrot.slane %v2265, 5
        %v2268 = vsel %vm234, %v2263, %v2267
        %v2269 = vshrl.u32 %v2019, 16
        %v2271 = vrot.slane %v2269, 4
        %v2272 = vor.u32 %v2271, %v2267
        %v2273 = vrot.slane %v2272, 4
        %v2275 = vshll.u32 %v2020, 16
        %v2277 = vrot.slane %v2275, 5
        %v2278 = vsel %vm234, %v2273, %v2277
        %v2280 = vshrl.u32 %v2021, 16
        %v2282 = vrot.slane %v2280, 4
        %v2283 = vshll.u32 %v2021, 16
        %v2285 = vrot.slane %v2283, 5
        %v2286 = vor.u32 %v2282, %v2285
        %v2287 = vrot.slane %v2286, 4
        %v2289 = vshll.u32 %v2022, 16
        %v2291 = vrot.slane %v2289, 5
        %v2292 = vsel %vm234, %v2287, %v2291
        %v2293 = vshrl.u32 %v2022, 16
        %v2295 = vrot.slane %v2293, 4
        %v2296 = vor.u32 %v2295, %v2291
        %v2297 = vrot.slane %v2296, 4
        %v2299 = vshll.u32 %v2023, 16
        %v2301 = vrot.slane %v2299, 5
        %v2302 = vsel %vm234, %v2297, %v2301
        %v2304 = vshrl.u32 %v2024, 16
        %v2306 = vrot.slane %v2304, 4
        %v2307 = vshll.u32 %v2024, 16
        %v2309 = vrot.slane %v2307, 5
        %v2310 = vor.u32 %v2306, %v2309
        %v2311 = vrot.slane %v2310, 4
        %v2313 = vshll.u32 %v2025, 16
        %v2315 = vrot.slane %v2313, 5
        %v2316 = vsel %vm234, %v2311, %v2315
        %v2317 = vshrl.u32 %v2025, 16
        %v2319 = vrot.slane %v2317, 4
        %v2320 = vor.u32 %v2319, %v2315
        %v2321 = vrot.slane %v2320, 4
        %v2323 = vshll.u32 %v2026, 16
        %v2325 = vrot.slane %v2323, 5
        %v2326 = vsel %vm234, %v2321, %v2325
        %v2328 = vshrl.u32 %v2027, 16
        %v2330 = vrot.slane %v2328, 4
        %v2331 = vshll.u32 %v2027, 16
        %v2333 = vrot.slane %v2331, 5
        %v2334 = vor.u32 %v2330, %v2333
        %v2335 = vrot.slane %v2334, 4
        %v2337 = vshll.u32 %v2028, 16
        %v2339 = vrot.slane %v2337, 5
        %v2340 = vsel %vm234, %v2335, %v2339
        %v2341 = vshrl.u32 %v2028, 16
        %v2343 = vrot.slane %v2341, 4
        %v2344 = vor.u32 %v2343, %v2339
        %v2345 = vrot.slane %v2344, 4
        %v2347 = vshll.u32 %v2029, 16
        %v2349 = vrot.slane %v2347, 5
        %v2350 = vsel %vm234, %v2345, %v2349
        %v2352 = vshrl.u32 %v2030, 16
        %v2354 = vrot.slane %v2352, 4
        %v2355 = vshll.u32 %v2030, 16
        %v2357 = vrot.slane %v2355, 5
        %v2358 = vor.u32 %v2354, %v2357
        %v2359 = vrot.slane %v2358, 4
        %v2361 = vshll.u32 %v2031, 16
        %v2363 = vrot.slane %v2361, 5
        %v2364 = vsel %vm234, %v2359, %v2363
        %v2365 = vshrl.u32 %v2031, 16
        %v2367 = vrot.slane %v2365, 4
        %v2368 = vor.u32 %v2367, %v2363
        %v2369 = vrot.slane %v2368, 4
        %v2371 = vshll.u32 %v2032, 16
        %v2373 = vrot.slane %v2371, 5
        %v2374 = vsel %vm234, %v2369, %v2373
        %v2376 = vshrl.u32 %v2033, 16
        %v2378 = vrot.slane %v2376, 4
        %v2379 = vshll.u32 %v2033, 16
        %v2381 = vrot.slane %v2379, 5
        %v2382 = vor.u32 %v2378, %v2381
        %v2383 = vrot.slane %v2382, 4
        %v2385 = vshll.u32 %v2034, 16
        %v2387 = vrot.slane %v2385, 5
        %v2388 = vsel %vm234, %v2383, %v2387
        %v2389 = vshrl.u32 %v2034, 16
        %v2391 = vrot.slane %v2389, 4
        %v2392 = vor.u32 %v2391, %v2387
        %v2393 = vrot.slane %v2392, 4
        %v2395 = vshll.u32 %v2035, 16
        %v2397 = vrot.slane %v2395, 5
        %v2398 = vsel %vm234, %v2393, %v2397
        %v2400 = vshrl.u32 %v2036, 16
        %v2402 = vrot.slane %v2400, 4
        %v2403 = vshll.u32 %v2036, 16
        %v2405 = vrot.slane %v2403, 5
        %v2406 = vor.u32 %v2402, %v2405
        %v2407 = vrot.slane %v2406, 4
        %v2409 = vshll.u32 %v2037, 16
        %v2411 = vrot.slane %v2409, 5
        %v2412 = vsel %vm234, %v2407, %v2411
        %v2413 = vshrl.u32 %v2037, 16
        %v2415 = vrot.slane %v2413, 4
        %v2416 = vor.u32 %v2415, %v2411
        %v2417 = vrot.slane %v2416, 4
        %v2419 = vshll.u32 %v2038, 16
        %v2421 = vrot.slane %v2419, 5
        %v2422 = vsel %vm234, %v2417, %v2421
        %s2423 = scalar_lea.vmem %s1, 16
        %v2424 = vld [vmem:[%s2423] sm:$0xf]
        %v2425 = vunpack.c.l.b16 %v2052
        %v2426 = vunpack.c.l.b16 %v2062
        %v2427 = vunpack.c.l.b16 %v2076
        %v2428 = vunpack.c.l.b16 %v2086
        %v2429 = vunpack.c.l.b16 %v2100
        %v2430 = vunpack.c.l.b16 %v2110
        %v2431 = vunpack.c.l.b16 %v2124
        %v2432 = vunpack.c.l.b16 %v2134
        %v2433 = vunpack.c.l.b16 %v2148
        %v2434 = vunpack.c.l.b16 %v2158
        %v2435 = vunpack.c.l.b16 %v2172
        %v2436 = vunpack.c.l.b16 %v2182
        %v2437 = vunpack.c.l.b16 %v2196
        %v2438 = vunpack.c.l.b16 %v2206
        %v2439 = vunpack.c.l.b16 %v2220
        %v2440 = vunpack.c.l.b16 %v2230
        %v2441 = vunpack.c.l.b16 %v2244
        %v2442 = vunpack.c.l.b16 %v2254
        %v2443 = vunpack.c.l.b16 %v2268
        %v2444 = vunpack.c.l.b16 %v2278
        %v2445 = vunpack.c.l.b16 %v2292
        %v2446 = vunpack.c.l.b16 %v2302
        %v2447 = vunpack.c.l.b16 %v2316
        %v2448 = vunpack.c.l.b16 %v2326
        %v2449 = vunpack.c.l.b16 %v2340
        %v2450 = vunpack.c.l.b16 %v2350
        %v2451 = vunpack.c.l.b16 %v2364
        %v2452 = vunpack.c.l.b16 %v2374
        %v2453 = vunpack.c.l.b16 %v2388
        %v2454 = vunpack.c.l.b16 %v2398
        %v2455 = vunpack.c.l.b16 %v2412
        %v2456 = vunpack.c.l.b16 %v2422
        %v2457 = vpack.c.b16 %v2426, %v2425
        %v2458 = vpack.c.b16 %v2428, %v2427
        %v2459 = vpack.c.b16 %v2430, %v2429
        %v2460 = vpack.c.b16 %v2432, %v2431
        %v2461 = vpack.c.b16 %v2434, %v2433
        %v2462 = vpack.c.b16 %v2436, %v2435
        %v2463 = vpack.c.b16 %v2438, %v2437
        %v2464 = vpack.c.b16 %v2440, %v2439
        %v2465 = vpack.c.b16 %v2442, %v2441
        %v2466 = vpack.c.b16 %v2444, %v2443
        %v2467 = vpack.c.b16 %v2446, %v2445
        %v2468 = vpack.c.b16 %v2448, %v2447
        %v2469 = vpack.c.b16 %v2450, %v2449
        %v2470 = vpack.c.b16 %v2452, %v2451
        %v2471 = vpack.c.b16 %v2454, %v2453
        %v2472 = vpack.c.b16 %v2456, %v2455
        %v2474 = vsel %vm669, %v2457, 0
        %v2477 = vsel %vm669, %v2458, 0
        %v2480 = vsel %vm669, %v2459, 0
        %v2483 = vsel %vm669, %v2460, 0
        %v2486 = vsel %vm669, %v2461, 0
        %v2489 = vsel %vm669, %v2462, 0
        %v2492 = vsel %vm669, %v2463, 0
        %v2495 = vsel %vm669, %v2464, 0
        %v2498 = vsel %vm669, %v2465, 0
        %v2501 = vsel %vm669, %v2466, 0
        %v2504 = vsel %vm669, %v2467, 0
        %v2507 = vsel %vm669, %v2468, 0
        %v2510 = vsel %vm669, %v2469, 0
        %v2513 = vsel %vm669, %v2470, 0
        %v2516 = vsel %vm669, %v2471, 0
        %v2519 = vsel %vm669, %v2472, 0
        %v2522 = vsel %vm718, %v2424, 0
        %2524 = vmatprep.subr.bf16.mxu0 0
        %2525 = vmatpush1.bf16.msra.mxu0 0
        %2526 = vmatprep.subr.bf16.mxu0 0
        %2527 = vmatpush1.bf16.msra.mxu0 0
        %2528 = vmatprep.subr.bf16.mxu0 0
        %2529 = vmatpush1.bf16.msra.mxu0 0
        %2530 = vmatprep.subr.bf16.mxu0 0
        %2531 = vmatpush1.bf16.msra.mxu0 0
        %2532 = vmatprep.subr.bf16.mxu0 0
        %2533 = vmatpush1.bf16.msra.mxu0 0
        %2534 = vmatprep.subr.bf16.mxu0 0
        %2535 = vmatpush1.bf16.msra.mxu0 0
        %2536 = vmatprep.subr.bf16.mxu0 0
        %2537 = vmatpush1.bf16.msra.mxu0 0
        %2538 = vmatprep.subr.bf16.mxu0 0
        %2539 = vmatpush1.bf16.msra.mxu0 %v2522
        %2540 = vmatprep.subr.bf16.mxu0 0
        %2541 = vmatpush2.bf16.msra.mxu0 0
        %2542 = vmatprep.subr.bf16.mxu0 0
        %2543 = vmatpush2.bf16.msra.mxu0 0
        %2544 = vmatprep.subr.bf16.mxu0 0
        %2545 = vmatpush2.bf16.msra.mxu0 0
        %2546 = vmatprep.subr.bf16.mxu0 0
        %2547 = vmatpush2.bf16.msra.mxu0 0
        %2548 = vmatprep.subr.bf16.mxu0 0
        %2549 = vmatpush2.bf16.msra.mxu0 0
        %2550 = vmatprep.subr.bf16.mxu0 0
        %2551 = vmatpush2.bf16.msra.mxu0 0
        %2552 = vmatprep.subr.bf16.mxu0 0
        %2553 = vmatpush2.bf16.msra.mxu0 0
        %2554 = vmatprep.subr.bf16.mxu0 0
        %2555 = vmatpush2.bf16.msra.mxu0 0
        %2556 = vmatprep.mubr.bf16.mxu0 0
        %2557 = vmatmul.mubr.bf16.gmra.mxu0 %v2474
        %v2558 = vpop.f32.mrf.mxu0
        %v2559 = vadd.f32 0.0, %v2558
        %v2560 = vpop.f32.mrf.mxu0
        %v2561 = vpop.f32.mrf.mxu0
        %v2562 = vadd.f32 0.0, %v2561
        %v2563 = vpop.f32.mrf.mxu0
        %2564 = vmatprep.mubr.bf16.mxu0 0
        %2565 = vmatmul.mubr.bf16.gmra.mxu0 %v2477
        %v2566 = vpop.f32.mrf.mxu0
        %v2567 = vadd.f32 0.0, %v2566
        %v2568 = vpop.f32.mrf.mxu0
        %v2569 = vpop.f32.mrf.mxu0
        %v2570 = vadd.f32 0.0, %v2569
        %v2571 = vpop.f32.mrf.mxu0
        %2572 = vmatprep.mubr.bf16.mxu0 0
        %2573 = vmatmul.mubr.bf16.gmra.mxu0 %v2480
        %v2574 = vpop.f32.mrf.mxu0
        %v2575 = vadd.f32 0.0, %v2574
        %v2576 = vpop.f32.mrf.mxu0
        %v2577 = vpop.f32.mrf.mxu0
        %v2578 = vadd.f32 0.0, %v2577
        %v2579 = vpop.f32.mrf.mxu0
        %2580 = vmatprep.mubr.bf16.mxu0 0
        %2581 = vmatmul.mubr.bf16.gmra.mxu0 %v2483
        %v2582 = vpop.f32.mrf.mxu0
        %v2583 = vadd.f32 0.0, %v2582
        %v2584 = vpop.f32.mrf.mxu0
        %v2585 = vpop.f32.mrf.mxu0
        %v2586 = vadd.f32 0.0, %v2585
        %v2587 = vpop.f32.mrf.mxu0
        %2588 = vmatprep.mubr.bf16.mxu0 0
        %2589 = vmatmul.mubr.bf16.gmra.mxu0 %v2486
        %v2590 = vpop.f32.mrf.mxu0
        %v2591 = vadd.f32 0.0, %v2590
        %v2592 = vpop.f32.mrf.mxu0
        %v2593 = vpop.f32.mrf.mxu0
        %v2594 = vadd.f32 0.0, %v2593
        %v2595 = vpop.f32.mrf.mxu0
        %2596 = vmatprep.mubr.bf16.mxu0 0
        %2597 = vmatmul.mubr.bf16.gmra.mxu0 %v2489
        %v2598 = vpop.f32.mrf.mxu0
        %v2599 = vadd.f32 0.0, %v2598
        %v2600 = vpop.f32.mrf.mxu0
        %v2601 = vpop.f32.mrf.mxu0
        %v2602 = vadd.f32 0.0, %v2601
        %v2603 = vpop.f32.mrf.mxu0
        %2604 = vmatprep.mubr.bf16.mxu0 0
        %2605 = vmatmul.mubr.bf16.gmra.mxu0 %v2492
        %v2606 = vpop.f32.mrf.mxu0
        %v2607 = vadd.f32 0.0, %v2606
        %v2608 = vpop.f32.mrf.mxu0
        %v2609 = vpop.f32.mrf.mxu0
        %v2610 = vadd.f32 0.0, %v2609
        %v2611 = vpop.f32.mrf.mxu0
        %2612 = vmatprep.mubr.bf16.mxu0 0
        %2613 = vmatmul.mubr.bf16.gmra.mxu0 %v2495
        %v2614 = vpop.f32.mrf.mxu0
        %v2615 = vadd.f32 0.0, %v2614
        %v2616 = vpop.f32.mrf.mxu0
        %v2617 = vpop.f32.mrf.mxu0
        %v2618 = vadd.f32 0.0, %v2617
        %v2619 = vpop.f32.mrf.mxu0
        %2620 = vmatprep.mubr.bf16.mxu0 0
        %2621 = vmatmul.mubr.bf16.gmra.mxu0 %v2498
        %v2622 = vpop.f32.mrf.mxu0
        %v2623 = vadd.f32 0.0, %v2622
        %v2624 = vpop.f32.mrf.mxu0
        %v2625 = vpop.f32.mrf.mxu0
        %v2626 = vadd.f32 0.0, %v2625
        %v2627 = vpop.f32.mrf.mxu0
        %2628 = vmatprep.mubr.bf16.mxu0 0
        %2629 = vmatmul.mubr.bf16.gmra.mxu0 %v2501
        %v2630 = vpop.f32.mrf.mxu0
        %v2631 = vadd.f32 0.0, %v2630
        %v2632 = vpop.f32.mrf.mxu0
        %v2633 = vpop.f32.mrf.mxu0
        %v2634 = vadd.f32 0.0, %v2633
        %v2635 = vpop.f32.mrf.mxu0
        %2636 = vmatprep.mubr.bf16.mxu0 0
        %2637 = vmatmul.mubr.bf16.gmra.mxu0 %v2504
        %v2638 = vpop.f32.mrf.mxu0
        %v2639 = vadd.f32 0.0, %v2638
        %v2640 = vpop.f32.mrf.mxu0
        %v2641 = vpop.f32.mrf.mxu0
        %v2642 = vadd.f32 0.0, %v2641
        %v2643 = vpop.f32.mrf.mxu0
        %2644 = vmatprep.mubr.bf16.mxu0 0
        %2645 = vmatmul.mubr.bf16.gmra.mxu0 %v2507
        %v2646 = vpop.f32.mrf.mxu0
        %v2647 = vadd.f32 0.0, %v2646
        %v2648 = vpop.f32.mrf.mxu0
        %v2649 = vpop.f32.mrf.mxu0
        %v2650 = vadd.f32 0.0, %v2649
        %v2651 = vpop.f32.mrf.mxu0
        %2652 = vmatprep.mubr.bf16.mxu0 0
        %2653 = vmatmul.mubr.bf16.gmra.mxu0 %v2510
        %v2654 = vpop.f32.mrf.mxu0
        %v2655 = vadd.f32 0.0, %v2654
        %v2656 = vpop.f32.mrf.mxu0
        %v2657 = vpop.f32.mrf.mxu0
        %v2658 = vadd.f32 0.0, %v2657
        %v2659 = vpop.f32.mrf.mxu0
        %2660 = vmatprep.mubr.bf16.mxu0 0
        %2661 = vmatmul.mubr.bf16.gmra.mxu0 %v2513
        %v2662 = vpop.f32.mrf.mxu0
        %v2663 = vadd.f32 0.0, %v2662
        %v2664 = vpop.f32.mrf.mxu0
        %v2665 = vpop.f32.mrf.mxu0
        %v2666 = vadd.f32 0.0, %v2665
        %v2667 = vpop.f32.mrf.mxu0
        %2668 = vmatprep.mubr.bf16.mxu0 0
        %2669 = vmatmul.mubr.bf16.gmra.mxu0 %v2516
        %v2670 = vpop.f32.mrf.mxu0
        %v2671 = vadd.f32 0.0, %v2670
        %v2672 = vpop.f32.mrf.mxu0
        %v2673 = vpop.f32.mrf.mxu0
        %v2674 = vadd.f32 0.0, %v2673
        %v2675 = vpop.f32.mrf.mxu0
        %2676 = vmatprep.mubr.bf16.mxu0 0
        %2677 = vmatmul.mubr.bf16.gmra.mxu0 %v2519
        %v2678 = vpop.f32.mrf.mxu0
        %v2679 = vadd.f32 0.0, %v2678
        %v2680 = vpop.f32.mrf.mxu0
        %v2681 = vpop.f32.mrf.mxu0
        %v2682 = vadd.f32 0.0, %v2681
        %v2683 = vpop.f32.mrf.mxu0
        %2684 = vdwg.mxu0
        %v2685 = vadd.f32 %v1959, %v2559
        %v2686 = vadd.f32 %v1960, %v2562
        %v2687 = vadd.f32 %v1961, %v2567
        %v2688 = vadd.f32 %v1962, %v2570
        %v2689 = vadd.f32 %v1963, %v2575
        %v2690 = vadd.f32 %v1964, %v2578
        %v2691 = vadd.f32 %v1965, %v2583
        %v2692 = vadd.f32 %v1966, %v2586
        %v2693 = vadd.f32 %v1967, %v2591
        %v2694 = vadd.f32 %v1968, %v2594
        %v2695 = vadd.f32 %v1969, %v2599
        %v2696 = vadd.f32 %v1970, %v2602
        %v2697 = vadd.f32 %v1971, %v2607
        %v2698 = vadd.f32 %v1972, %v2610
        %v2699 = vadd.f32 %v1973, %v2615
        %v2700 = vadd.f32 %v1974, %v2618
        %v2701 = vadd.f32 %v1975, %v2623
        %v2702 = vadd.f32 %v1976, %v2626
        %v2703 = vadd.f32 %v1977, %v2631
        %v2704 = vadd.f32 %v1978, %v2634
        %v2705 = vadd.f32 %v1979, %v2639
        %v2706 = vadd.f32 %v1980, %v2642
        %v2707 = vadd.f32 %v1981, %v2647
        %v2708 = vadd.f32 %v1982, %v2650
        %v2709 = vadd.f32 %v1983, %v2655
        %v2710 = vadd.f32 %v1984, %v2658
        %v2711 = vadd.f32 %v1985, %v2663
        %v2712 = vadd.f32 %v1986, %v2666
        %v2713 = vadd.f32 %v1987, %v2671
        %v2714 = vadd.f32 %v1988, %v2674
        %v2715 = vadd.f32 %v1989, %v2679
        %v2716 = vadd.f32 %v1990, %v2682
        %v2717 = vld [vmem:[%s1632] sm:$0xe]
        %v2718 = vld [vmem:[%s1632 + $0xc] sm:$0xe]
        %v2719 = vld [vmem:[%s1632 + $0x18] sm:$0xe]
        %v2720 = vld [vmem:[%s1632 + $0x24] sm:$0xe]
        %v2721 = vld [vmem:[%s1632 + $0x30] sm:$0xe]
        %v2722 = vld [vmem:[%s1632 + $0x3c] sm:$0xe]
        %v2723 = vld [vmem:[%s1632 + $0x48] sm:$0xe]
        %v2724 = vld [vmem:[%s1632 + $0x54] sm:$0xe]
        %v2725 = vld [vmem:[%s1632 + $0x78] sm:$0xe]
        %v2726 = vld [vmem:[%s1632 + $0x84] sm:$0xe]
        %v2727 = vld [vmem:[%s1632 + $0x90] sm:$0xe]
        %v2728 = vld [vmem:[%s1632 + $0x9c] sm:$0xe]
        %v2729 = vld [vmem:[%s1632 + $0xa8] sm:$0xe]
        %v2730 = vld [vmem:[%s1632 + $0xb4] sm:$0xe]
        %v2731 = vld [vmem:[%s1632 + $0xc0] sm:$0xe]
        %v2732 = vld [vmem:[%s1632 + $0xcc] sm:$0xe]
        %v2781 = vrot.slane %v2717, 5
        %v2782 = vrot.slane %v2781, 4
        %v2783 = vrot.slane %v1992, 5
        %v2784 = vsel %vm1225, %v2782, %v2783
        %v2785 = vrot.slane %v2783, 4
        %v2786 = vrot.slane %v1993, 5
        %v2787 = vsel %vm1225, %v2785, %v2786
        %v2788 = vrot.slane %v2718, 5
        %v2789 = vrot.slane %v2788, 4
        %v2790 = vrot.slane %v1995, 5
        %v2791 = vsel %vm1225, %v2789, %v2790
        %v2792 = vrot.slane %v2790, 4
        %v2793 = vrot.slane %v1996, 5
        %v2794 = vsel %vm1225, %v2792, %v2793
        %v2795 = vrot.slane %v2719, 5
        %v2796 = vrot.slane %v2795, 4
        %v2797 = vrot.slane %v1998, 5
        %v2798 = vsel %vm1225, %v2796, %v2797
        %v2799 = vrot.slane %v2797, 4
        %v2800 = vrot.slane %v1999, 5
        %v2801 = vsel %vm1225, %v2799, %v2800
        %v2802 = vrot.slane %v2720, 5
        %v2803 = vrot.slane %v2802, 4
        %v2804 = vrot.slane %v2001, 5
        %v2805 = vsel %vm1225, %v2803, %v2804
        %v2806 = vrot.slane %v2804, 4
        %v2807 = vrot.slane %v2002, 5
        %v2808 = vsel %vm1225, %v2806, %v2807
        %v2809 = vrot.slane %v2721, 5
        %v2810 = vrot.slane %v2809, 4
        %v2811 = vrot.slane %v2004, 5
        %v2812 = vsel %vm1225, %v2810, %v2811
        %v2813 = vrot.slane %v2811, 4
        %v2814 = vrot.slane %v2005, 5
        %v2815 = vsel %vm1225, %v2813, %v2814
        %v2816 = vrot.slane %v2722, 5
        %v2817 = vrot.slane %v2816, 4
        %v2818 = vrot.slane %v2007, 5
        %v2819 = vsel %vm1225, %v2817, %v2818
        %v2820 = vrot.slane %v2818, 4
        %v2821 = vrot.slane %v2008, 5
        %v2822 = vsel %vm1225, %v2820, %v2821
        %v2823 = vrot.slane %v2723, 5
        %v2824 = vrot.slane %v2823, 4
        %v2825 = vrot.slane %v2010, 5
        %v2826 = vsel %vm1225, %v2824, %v2825
        %v2827 = vrot.slane %v2825, 4
        %v2828 = vrot.slane %v2011, 5
        %v2829 = vsel %vm1225, %v2827, %v2828
        %v2830 = vrot.slane %v2724, 5
        %v2831 = vrot.slane %v2830, 4
        %v2832 = vrot.slane %v2013, 5
        %v2833 = vsel %vm1225, %v2831, %v2832
        %v2834 = vrot.slane %v2832, 4
        %v2835 = vrot.slane %v2014, 5
        %v2836 = vsel %vm1225, %v2834, %v2835
        %v2837 = vrot.slane %v2725, 5
        %v2838 = vrot.slane %v2837, 4
        %v2839 = vrot.slane %v2016, 5
        %v2840 = vsel %vm1225, %v2838, %v2839
        %v2841 = vrot.slane %v2839, 4
        %v2842 = vrot.slane %v2017, 5
        %v2843 = vsel %vm1225, %v2841, %v2842
        %v2844 = vrot.slane %v2726, 5
        %v2845 = vrot.slane %v2844, 4
        %v2846 = vrot.slane %v2019, 5
        %v2847 = vsel %vm1225, %v2845, %v2846
        %v2848 = vrot.slane %v2846, 4
        %v2849 = vrot.slane %v2020, 5
        %v2850 = vsel %vm1225, %v2848, %v2849
        %v2851 = vrot.slane %v2727, 5
        %v2852 = vrot.slane %v2851, 4
        %v2853 = vrot.slane %v2022, 5
        %v2854 = vsel %vm1225, %v2852, %v2853
        %v2855 = vrot.slane %v2853, 4
        %v2856 = vrot.slane %v2023, 5
        %v2857 = vsel %vm1225, %v2855, %v2856
        %v2858 = vrot.slane %v2728, 5
        %v2859 = vrot.slane %v2858, 4
        %v2860 = vrot.slane %v2025, 5
        %v2861 = vsel %vm1225, %v2859, %v2860
        %v2862 = vrot.slane %v2860, 4
        %v2863 = vrot.slane %v2026, 5
        %v2864 = vsel %vm1225, %v2862, %v2863
        %v2865 = vrot.slane %v2729, 5
        %v2866 = vrot.slane %v2865, 4
        %v2867 = vrot.slane %v2028, 5
        %v2868 = vsel %vm1225, %v2866, %v2867
        %v2869 = vrot.slane %v2867, 4
        %v2870 = vrot.slane %v2029, 5
        %v2871 = vsel %vm1225, %v2869, %v2870
        %v2872 = vrot.slane %v2730, 5
        %v2873 = vrot.slane %v2872, 4
        %v2874 = vrot.slane %v2031, 5
        %v2875 = vsel %vm1225, %v2873, %v2874
        %v2876 = vrot.slane %v2874, 4
        %v2877 = vrot.slane %v2032, 5
        %v2878 = vsel %vm1225, %v2876, %v2877
        %v2879 = vrot.slane %v2731, 5
        %v2880 = vrot.slane %v2879, 4
        %v2881 = vrot.slane %v2034, 5
        %v2882 = vsel %vm1225, %v2880, %v2881
        %v2883 = vrot.slane %v2881, 4
        %v2884 = vrot.slane %v2035, 5
        %v2885 = vsel %vm1225, %v2883, %v2884
        %v2886 = vrot.slane %v2732, 5
        %v2887 = vrot.slane %v2886, 4
        %v2888 = vrot.slane %v2037, 5
        %v2889 = vsel %vm1225, %v2887, %v2888
        %v2890 = vrot.slane %v2888, 4
        %v2891 = vrot.slane %v2038, 5
        %v2892 = vsel %vm1225, %v2890, %v2891
        %s2893 = scalar_lea.vmem %s1, 20
        %v2894 = vld [vmem:[%s2893] sm:$0xf]
        %v2895 = vunpack.c.l.b16 %v2784
        %v2896 = vunpack.c.l.b16 %v2787
        %v2897 = vunpack.c.l.b16 %v2791
        %v2898 = vunpack.c.l.b16 %v2794
        %v2899 = vunpack.c.l.b16 %v2798
        %v2900 = vunpack.c.l.b16 %v2801
        %v2901 = vunpack.c.l.b16 %v2805
        %v2902 = vunpack.c.l.b16 %v2808
        %v2903 = vunpack.c.l.b16 %v2812
        %v2904 = vunpack.c.l.b16 %v2815
        %v2905 = vunpack.c.l.b16 %v2819
        %v2906 = vunpack.c.l.b16 %v2822
        %v2907 = vunpack.c.l.b16 %v2826
        %v2908 = vunpack.c.l.b16 %v2829
        %v2909 = vunpack.c.l.b16 %v2833
        %v2910 = vunpack.c.l.b16 %v2836
        %v2911 = vunpack.c.l.b16 %v2840
        %v2912 = vunpack.c.l.b16 %v2843
        %v2913 = vunpack.c.l.b16 %v2847
        %v2914 = vunpack.c.l.b16 %v2850
        %v2915 = vunpack.c.l.b16 %v2854
        %v2916 = vunpack.c.l.b16 %v2857
        %v2917 = vunpack.c.l.b16 %v2861
        %v2918 = vunpack.c.l.b16 %v2864
        %v2919 = vunpack.c.l.b16 %v2868
        %v2920 = vunpack.c.l.b16 %v2871
        %v2921 = vunpack.c.l.b16 %v2875
        %v2922 = vunpack.c.l.b16 %v2878
        %v2923 = vunpack.c.l.b16 %v2882
        %v2924 = vunpack.c.l.b16 %v2885
        %v2925 = vunpack.c.l.b16 %v2889
        %v2926 = vunpack.c.l.b16 %v2892
        %v2927 = vpack.c.b16 %v2896, %v2895
        %v2928 = vpack.c.b16 %v2898, %v2897
        %v2929 = vpack.c.b16 %v2900, %v2899
        %v2930 = vpack.c.b16 %v2902, %v2901
        %v2931 = vpack.c.b16 %v2904, %v2903
        %v2932 = vpack.c.b16 %v2906, %v2905
        %v2933 = vpack.c.b16 %v2908, %v2907
        %v2934 = vpack.c.b16 %v2910, %v2909
        %v2935 = vpack.c.b16 %v2912, %v2911
        %v2936 = vpack.c.b16 %v2914, %v2913
        %v2937 = vpack.c.b16 %v2916, %v2915
        %v2938 = vpack.c.b16 %v2918, %v2917
        %v2939 = vpack.c.b16 %v2920, %v2919
        %v2940 = vpack.c.b16 %v2922, %v2921
        %v2941 = vpack.c.b16 %v2924, %v2923
        %v2942 = vpack.c.b16 %v2926, %v2925
        %v2944 = vsel %vm669, %v2927, 0
        %v2947 = vsel %vm669, %v2928, 0
        %v2950 = vsel %vm669, %v2929, 0
        %v2953 = vsel %vm669, %v2930, 0
        %v2956 = vsel %vm669, %v2931, 0
        %v2959 = vsel %vm669, %v2932, 0
        %v2962 = vsel %vm669, %v2933, 0
        %v2965 = vsel %vm669, %v2934, 0
        %v2968 = vsel %vm669, %v2935, 0
        %v2971 = vsel %vm669, %v2936, 0
        %v2974 = vsel %vm669, %v2937, 0
        %v2977 = vsel %vm669, %v2938, 0
        %v2980 = vsel %vm669, %v2939, 0
        %v2983 = vsel %vm669, %v2940, 0
        %v2986 = vsel %vm669, %v2941, 0
        %v2989 = vsel %vm669, %v2942, 0
        %v2992 = vsel %vm718, %v2894, 0
        %2994 = vmatprep.subr.bf16.mxu0 0
        %2995 = vmatpush1.bf16.msra.mxu0 0
        %2996 = vmatprep.subr.bf16.mxu0 0
        %2997 = vmatpush1.bf16.msra.mxu0 0
        %2998 = vmatprep.subr.bf16.mxu0 0
        %2999 = vmatpush1.bf16.msra.mxu0 0
        %3000 = vmatprep.subr.bf16.mxu0 0
        %3001 = vmatpush1.bf16.msra.mxu0 0
        %3002 = vmatprep.subr.bf16.mxu0 0
        %3003 = vmatpush1.bf16.msra.mxu0 0
        %3004 = vmatprep.subr.bf16.mxu0 0
        %3005 = vmatpush1.bf16.msra.mxu0 0
        %3006 = vmatprep.subr.bf16.mxu0 0
        %3007 = vmatpush1.bf16.msra.mxu0 0
        %3008 = vmatprep.subr.bf16.mxu0 0
        %3009 = vmatpush1.bf16.msra.mxu0 %v2992
        %3010 = vmatprep.subr.bf16.mxu0 0
        %3011 = vmatpush2.bf16.msra.mxu0 0
        %3012 = vmatprep.subr.bf16.mxu0 0
        %3013 = vmatpush2.bf16.msra.mxu0 0
        %3014 = vmatprep.subr.bf16.mxu0 0
        %3015 = vmatpush2.bf16.msra.mxu0 0
        %3016 = vmatprep.subr.bf16.mxu0 0
        %3017 = vmatpush2.bf16.msra.mxu0 0
        %3018 = vmatprep.subr.bf16.mxu0 0
        %3019 = vmatpush2.bf16.msra.mxu0 0
        %3020 = vmatprep.subr.bf16.mxu0 0
        %3021 = vmatpush2.bf16.msra.mxu0 0
        %3022 = vmatprep.subr.bf16.mxu0 0
        %3023 = vmatpush2.bf16.msra.mxu0 0
        %3024 = vmatprep.subr.bf16.mxu0 0
        %3025 = vmatpush2.bf16.msra.mxu0 0
        %3026 = vmatprep.mubr.bf16.mxu0 0
        %3027 = vmatmul.mubr.bf16.gmra.mxu0 %v2944
        %v3028 = vpop.f32.mrf.mxu0
        %v3029 = vadd.f32 0.0, %v3028
        %v3030 = vpop.f32.mrf.mxu0
        %v3031 = vpop.f32.mrf.mxu0
        %v3032 = vadd.f32 0.0, %v3031
        %v3033 = vpop.f32.mrf.mxu0
        %3034 = vmatprep.mubr.bf16.mxu0 0
        %3035 = vmatmul.mubr.bf16.gmra.mxu0 %v2947
        %v3036 = vpop.f32.mrf.mxu0
        %v3037 = vadd.f32 0.0, %v3036
        %v3038 = vpop.f32.mrf.mxu0
        %v3039 = vpop.f32.mrf.mxu0
        %v3040 = vadd.f32 0.0, %v3039
        %v3041 = vpop.f32.mrf.mxu0
        %3042 = vmatprep.mubr.bf16.mxu0 0
        %3043 = vmatmul.mubr.bf16.gmra.mxu0 %v2950
        %v3044 = vpop.f32.mrf.mxu0
        %v3045 = vadd.f32 0.0, %v3044
        %v3046 = vpop.f32.mrf.mxu0
        %v3047 = vpop.f32.mrf.mxu0
        %v3048 = vadd.f32 0.0, %v3047
        %v3049 = vpop.f32.mrf.mxu0
        %3050 = vmatprep.mubr.bf16.mxu0 0
        %3051 = vmatmul.mubr.bf16.gmra.mxu0 %v2953
        %v3052 = vpop.f32.mrf.mxu0
        %v3053 = vadd.f32 0.0, %v3052
        %v3054 = vpop.f32.mrf.mxu0
        %v3055 = vpop.f32.mrf.mxu0
        %v3056 = vadd.f32 0.0, %v3055
        %v3057 = vpop.f32.mrf.mxu0
        %3058 = vmatprep.mubr.bf16.mxu0 0
        %3059 = vmatmul.mubr.bf16.gmra.mxu0 %v2956
        %v3060 = vpop.f32.mrf.mxu0
        %v3061 = vadd.f32 0.0, %v3060
        %v3062 = vpop.f32.mrf.mxu0
        %v3063 = vpop.f32.mrf.mxu0
        %v3064 = vadd.f32 0.0, %v3063
        %v3065 = vpop.f32.mrf.mxu0
        %3066 = vmatprep.mubr.bf16.mxu0 0
        %3067 = vmatmul.mubr.bf16.gmra.mxu0 %v2959
        %v3068 = vpop.f32.mrf.mxu0
        %v3069 = vadd.f32 0.0, %v3068
        %v3070 = vpop.f32.mrf.mxu0
        %v3071 = vpop.f32.mrf.mxu0
        %v3072 = vadd.f32 0.0, %v3071
        %v3073 = vpop.f32.mrf.mxu0
        %3074 = vmatprep.mubr.bf16.mxu0 0
        %3075 = vmatmul.mubr.bf16.gmra.mxu0 %v2962
        %v3076 = vpop.f32.mrf.mxu0
        %v3077 = vadd.f32 0.0, %v3076
        %v3078 = vpop.f32.mrf.mxu0
        %v3079 = vpop.f32.mrf.mxu0
        %v3080 = vadd.f32 0.0, %v3079
        %v3081 = vpop.f32.mrf.mxu0
        %3082 = vmatprep.mubr.bf16.mxu0 0
        %3083 = vmatmul.mubr.bf16.gmra.mxu0 %v2965
        %v3084 = vpop.f32.mrf.mxu0
        %v3085 = vadd.f32 0.0, %v3084
        %v3086 = vpop.f32.mrf.mxu0
        %v3087 = vpop.f32.mrf.mxu0
        %v3088 = vadd.f32 0.0, %v3087
        %v3089 = vpop.f32.mrf.mxu0
        %3090 = vmatprep.mubr.bf16.mxu0 0
        %3091 = vmatmul.mubr.bf16.gmra.mxu0 %v2968
        %v3092 = vpop.f32.mrf.mxu0
        %v3093 = vadd.f32 0.0, %v3092
        %v3094 = vpop.f32.mrf.mxu0
        %v3095 = vpop.f32.mrf.mxu0
        %v3096 = vadd.f32 0.0, %v3095
        %v3097 = vpop.f32.mrf.mxu0
        %3098 = vmatprep.mubr.bf16.mxu0 0
        %3099 = vmatmul.mubr.bf16.gmra.mxu0 %v2971
        %v3100 = vpop.f32.mrf.mxu0
        %v3101 = vadd.f32 0.0, %v3100
        %v3102 = vpop.f32.mrf.mxu0
        %v3103 = vpop.f32.mrf.mxu0
        %v3104 = vadd.f32 0.0, %v3103
        %v3105 = vpop.f32.mrf.mxu0
        %3106 = vmatprep.mubr.bf16.mxu0 0
        %3107 = vmatmul.mubr.bf16.gmra.mxu0 %v2974
        %v3108 = vpop.f32.mrf.mxu0
        %v3109 = vadd.f32 0.0, %v3108
        %v3110 = vpop.f32.mrf.mxu0
        %v3111 = vpop.f32.mrf.mxu0
        %v3112 = vadd.f32 0.0, %v3111
        %v3113 = vpop.f32.mrf.mxu0
        %3114 = vmatprep.mubr.bf16.mxu0 0
        %3115 = vmatmul.mubr.bf16.gmra.mxu0 %v2977
        %v3116 = vpop.f32.mrf.mxu0
        %v3117 = vadd.f32 0.0, %v3116
        %v3118 = vpop.f32.mrf.mxu0
        %v3119 = vpop.f32.mrf.mxu0
        %v3120 = vadd.f32 0.0, %v3119
        %v3121 = vpop.f32.mrf.mxu0
        %3122 = vmatprep.mubr.bf16.mxu0 0
        %3123 = vmatmul.mubr.bf16.gmra.mxu0 %v2980
        %v3124 = vpop.f32.mrf.mxu0
        %v3125 = vadd.f32 0.0, %v3124
        %v3126 = vpop.f32.mrf.mxu0
        %v3127 = vpop.f32.mrf.mxu0
        %v3128 = vadd.f32 0.0, %v3127
        %v3129 = vpop.f32.mrf.mxu0
        %3130 = vmatprep.mubr.bf16.mxu0 0
        %3131 = vmatmul.mubr.bf16.gmra.mxu0 %v2983
        %v3132 = vpop.f32.mrf.mxu0
        %v3133 = vadd.f32 0.0, %v3132
        %v3134 = vpop.f32.mrf.mxu0
        %v3135 = vpop.f32.mrf.mxu0
        %v3136 = vadd.f32 0.0, %v3135
        %v3137 = vpop.f32.mrf.mxu0
        %3138 = vmatprep.mubr.bf16.mxu0 0
        %3139 = vmatmul.mubr.bf16.gmra.mxu0 %v2986
        %v3140 = vpop.f32.mrf.mxu0
        %v3141 = vadd.f32 0.0, %v3140
        %v3142 = vpop.f32.mrf.mxu0
        %v3143 = vpop.f32.mrf.mxu0
        %v3144 = vadd.f32 0.0, %v3143
        %v3145 = vpop.f32.mrf.mxu0
        %3146 = vmatprep.mubr.bf16.mxu0 0
        %3147 = vmatmul.mubr.bf16.gmra.mxu0 %v2989
        %v3148 = vpop.f32.mrf.mxu0
        %v3149 = vadd.f32 0.0, %v3148
        %v3150 = vpop.f32.mrf.mxu0
        %v3151 = vpop.f32.mrf.mxu0
        %v3152 = vadd.f32 0.0, %v3151
        %v3153 = vpop.f32.mrf.mxu0
        %3154 = vdwg.mxu0
        %v3155 = vadd.f32 %v2685, %v3029
        %v3156 = vadd.f32 %v2686, %v3032
        %v3157 = vadd.f32 %v2687, %v3037
        %v3158 = vadd.f32 %v2688, %v3040
        %v3159 = vadd.f32 %v2689, %v3045
        %v3160 = vadd.f32 %v2690, %v3048
        %v3161 = vadd.f32 %v2691, %v3053
        %v3162 = vadd.f32 %v2692, %v3056
        %v3163 = vadd.f32 %v2693, %v3061
        %v3164 = vadd.f32 %v2694, %v3064
        %v3165 = vadd.f32 %v2695, %v3069
        %v3166 = vadd.f32 %v2696, %v3072
        %v3167 = vadd.f32 %v2697, %v3077
        %v3168 = vadd.f32 %v2698, %v3080
        %v3169 = vadd.f32 %v2699, %v3085
        %v3170 = vadd.f32 %v2700, %v3088
        %v3171 = vadd.f32 %v2701, %v3093
        %v3172 = vadd.f32 %v2702, %v3096
        %v3173 = vadd.f32 %v2703, %v3101
        %v3174 = vadd.f32 %v2704, %v3104
        %v3175 = vadd.f32 %v2705, %v3109
        %v3176 = vadd.f32 %v2706, %v3112
        %v3177 = vadd.f32 %v2707, %v3117
        %v3178 = vadd.f32 %v2708, %v3120
        %v3179 = vadd.f32 %v2709, %v3125
        %v3180 = vadd.f32 %v2710, %v3128
        %v3181 = vadd.f32 %v2711, %v3133
        %v3182 = vadd.f32 %v2712, %v3136
        %v3183 = vadd.f32 %v2713, %v3141
        %v3184 = vadd.f32 %v2714, %v3144
        %v3185 = vadd.f32 %v2715, %v3149
        %v3186 = vadd.f32 %v2716, %v3152
        %s3187 = scalar_lea.vmem %s175, 24
        %v3188 = vld [vmem:[%s3187] sm:$0xf]
        %v3189 = vld [vmem:[%s3187 + $0x4] sm:$0xf]
        %v3190 = vld [vmem:[%s3187 + $0xc] sm:$0xf]
        %v3191 = vld [vmem:[%s3187 + $0x10] sm:$0xf]
        %v3192 = vld [vmem:[%s3187 + $0x18] sm:$0xf]
        %v3193 = vld [vmem:[%s3187 + $0x1c] sm:$0xf]
        %v3194 = vld [vmem:[%s3187 + $0x24] sm:$0xf]
        %v3195 = vld [vmem:[%s3187 + $0x28] sm:$0xf]
        %v3196 = vld [vmem:[%s3187 + $0x30] sm:$0xf]
        %v3197 = vld [vmem:[%s3187 + $0x34] sm:$0xf]
        %v3198 = vld [vmem:[%s3187 + $0x3c] sm:$0xf]
        %v3199 = vld [vmem:[%s3187 + $0x40] sm:$0xf]
        %v3200 = vld [vmem:[%s3187 + $0x48] sm:$0xf]
        %v3201 = vld [vmem:[%s3187 + $0x4c] sm:$0xf]
        %v3202 = vld [vmem:[%s3187 + $0x54] sm:$0xf]
        %v3203 = vld [vmem:[%s3187 + $0x58] sm:$0xf]
        %v3204 = vld [vmem:[%s3187 + $0x78] sm:$0xf]
        %v3205 = vld [vmem:[%s3187 + $0x7c] sm:$0xf]
        %v3206 = vld [vmem:[%s3187 + $0x84] sm:$0xf]
        %v3207 = vld [vmem:[%s3187 + $0x88] sm:$0xf]
        %v3208 = vld [vmem:[%s3187 + $0x90] sm:$0xf]
        %v3209 = vld [vmem:[%s3187 + $0x94] sm:$0xf]
        %v3210 = vld [vmem:[%s3187 + $0x9c] sm:$0xf]
        %v3211 = vld [vmem:[%s3187 + $0xa0] sm:$0xf]
        %v3212 = vld [vmem:[%s3187 + $0xa8] sm:$0xf]
        %v3213 = vld [vmem:[%s3187 + $0xac] sm:$0xf]
        %v3214 = vld [vmem:[%s3187 + $0xb4] sm:$0xf]
        %v3215 = vld [vmem:[%s3187 + $0xb8] sm:$0xf]
        %v3216 = vld [vmem:[%s3187 + $0xc0] sm:$0xf]
        %v3217 = vld [vmem:[%s3187 + $0xc4] sm:$0xf]
        %v3218 = vld [vmem:[%s3187 + $0xcc] sm:$0xf]
        %v3219 = vld [vmem:[%s3187 + $0xd0] sm:$0xf]
        %s3220 = scalar_lea.vmem %s1, 24
        %v3221 = vld [vmem:[%s3220] sm:$0xf]
        %v3254 = vunpack.c.l.b16 %v3188
        %v3255 = vunpack.c.l.b16 %v3189
        %v3256 = vunpack.c.l.b16 %v3190
        %v3257 = vunpack.c.l.b16 %v3191
        %v3258 = vunpack.c.l.b16 %v3192
        %v3259 = vunpack.c.l.b16 %v3193
        %v3260 = vunpack.c.l.b16 %v3194
        %v3261 = vunpack.c.l.b16 %v3195
        %v3262 = vunpack.c.l.b16 %v3196
        %v3263 = vunpack.c.l.b16 %v3197
        %v3264 = vunpack.c.l.b16 %v3198
        %v3265 = vunpack.c.l.b16 %v3199
        %v3266 = vunpack.c.l.b16 %v3200
        %v3267 = vunpack.c.l.b16 %v3201
        %v3268 = vunpack.c.l.b16 %v3202
        %v3269 = vunpack.c.l.b16 %v3203
        %v3270 = vunpack.c.l.b16 %v3204
        %v3271 = vunpack.c.l.b16 %v3205
        %v3272 = vunpack.c.l.b16 %v3206
        %v3273 = vunpack.c.l.b16 %v3207
        %v3274 = vunpack.c.l.b16 %v3208
        %v3275 = vunpack.c.l.b16 %v3209
        %v3276 = vunpack.c.l.b16 %v3210
        %v3277 = vunpack.c.l.b16 %v3211
        %v3278 = vunpack.c.l.b16 %v3212
        %v3279 = vunpack.c.l.b16 %v3213
        %v3280 = vunpack.c.l.b16 %v3214
        %v3281 = vunpack.c.l.b16 %v3215
        %v3282 = vunpack.c.l.b16 %v3216
        %v3283 = vunpack.c.l.b16 %v3217
        %v3284 = vunpack.c.l.b16 %v3218
        %v3285 = vunpack.c.l.b16 %v3219
        %v3286 = vpack.c.b16 %v3255, %v3254
        %v3287 = vpack.c.b16 %v3257, %v3256
        %v3288 = vpack.c.b16 %v3259, %v3258
        %v3289 = vpack.c.b16 %v3261, %v3260
        %v3290 = vpack.c.b16 %v3263, %v3262
        %v3291 = vpack.c.b16 %v3265, %v3264
        %v3292 = vpack.c.b16 %v3267, %v3266
        %v3293 = vpack.c.b16 %v3269, %v3268
        %v3294 = vpack.c.b16 %v3271, %v3270
        %v3295 = vpack.c.b16 %v3273, %v3272
        %v3296 = vpack.c.b16 %v3275, %v3274
        %v3297 = vpack.c.b16 %v3277, %v3276
        %v3298 = vpack.c.b16 %v3279, %v3278
        %v3299 = vpack.c.b16 %v3281, %v3280
        %v3300 = vpack.c.b16 %v3283, %v3282
        %v3301 = vpack.c.b16 %v3285, %v3284
        %v3303 = vsel %vm669, %v3286, 0
        %v3306 = vsel %vm669, %v3287, 0
        %v3309 = vsel %vm669, %v3288, 0
        %v3312 = vsel %vm669, %v3289, 0
        %v3315 = vsel %vm669, %v3290, 0
        %v3318 = vsel %vm669, %v3291, 0
        %v3321 = vsel %vm669, %v3292, 0
        %v3324 = vsel %vm669, %v3293, 0
        %v3327 = vsel %vm669, %v3294, 0
        %v3330 = vsel %vm669, %v3295, 0
        %v3333 = vsel %vm669, %v3296, 0
        %v3336 = vsel %vm669, %v3297, 0
        %v3339 = vsel %vm669, %v3298, 0
        %v3342 = vsel %vm669, %v3299, 0
        %v3345 = vsel %vm669, %v3300, 0
        %v3348 = vsel %vm669, %v3301, 0
        %v3351 = vsel %vm718, %v3221, 0
        %3353 = vmatprep.subr.bf16.mxu0 0
        %3354 = vmatpush1.bf16.msra.mxu0 0
        %3355 = vmatprep.subr.bf16.mxu0 0
        %3356 = vmatpush1.bf16.msra.mxu0 0
        %3357 = vmatprep.subr.bf16.mxu0 0
        %3358 = vmatpush1.bf16.msra.mxu0 0
        %3359 = vmatprep.subr.bf16.mxu0 0
        %3360 = vmatpush1.bf16.msra.mxu0 0
        %3361 = vmatprep.subr.bf16.mxu0 0
        %3362 = vmatpush1.bf16.msra.mxu0 0
        %3363 = vmatprep.subr.bf16.mxu0 0
        %3364 = vmatpush1.bf16.msra.mxu0 0
        %3365 = vmatprep.subr.bf16.mxu0 0
        %3366 = vmatpush1.bf16.msra.mxu0 0
        %3367 = vmatprep.subr.bf16.mxu0 0
        %3368 = vmatpush1.bf16.msra.mxu0 %v3351
        %3369 = vmatprep.subr.bf16.mxu0 0
        %3370 = vmatpush2.bf16.msra.mxu0 0
        %3371 = vmatprep.subr.bf16.mxu0 0
        %3372 = vmatpush2.bf16.msra.mxu0 0
        %3373 = vmatprep.subr.bf16.mxu0 0
        %3374 = vmatpush2.bf16.msra.mxu0 0
        %3375 = vmatprep.subr.bf16.mxu0 0
        %3376 = vmatpush2.bf16.msra.mxu0 0
        %3377 = vmatprep.subr.bf16.mxu0 0
        %3378 = vmatpush2.bf16.msra.mxu0 0
        %3379 = vmatprep.subr.bf16.mxu0 0
        %3380 = vmatpush2.bf16.msra.mxu0 0
        %3381 = vmatprep.subr.bf16.mxu0 0
        %3382 = vmatpush2.bf16.msra.mxu0 0
        %3383 = vmatprep.subr.bf16.mxu0 0
        %3384 = vmatpush2.bf16.msra.mxu0 0
        %3385 = vmatprep.mubr.bf16.mxu0 0
        %3386 = vmatmul.mubr.bf16.gmra.mxu0 %v3303
        %v3387 = vpop.f32.mrf.mxu0
        %v3388 = vadd.f32 0.0, %v3387
        %v3389 = vpop.f32.mrf.mxu0
        %v3390 = vpop.f32.mrf.mxu0
        %v3391 = vadd.f32 0.0, %v3390
        %v3392 = vpop.f32.mrf.mxu0
        %3393 = vmatprep.mubr.bf16.mxu0 0
        %3394 = vmatmul.mubr.bf16.gmra.mxu0 %v3306
        %v3395 = vpop.f32.mrf.mxu0
        %v3396 = vadd.f32 0.0, %v3395
        %v3397 = vpop.f32.mrf.mxu0
        %v3398 = vpop.f32.mrf.mxu0
        %v3399 = vadd.f32 0.0, %v3398
        %v3400 = vpop.f32.mrf.mxu0
        %3401 = vmatprep.mubr.bf16.mxu0 0
        %3402 = vmatmul.mubr.bf16.gmra.mxu0 %v3309
        %v3403 = vpop.f32.mrf.mxu0
        %v3404 = vadd.f32 0.0, %v3403
        %v3405 = vpop.f32.mrf.mxu0
        %v3406 = vpop.f32.mrf.mxu0
        %v3407 = vadd.f32 0.0, %v3406
        %v3408 = vpop.f32.mrf.mxu0
        %3409 = vmatprep.mubr.bf16.mxu0 0
        %3410 = vmatmul.mubr.bf16.gmra.mxu0 %v3312
        %v3411 = vpop.f32.mrf.mxu0
        %v3412 = vadd.f32 0.0, %v3411
        %v3413 = vpop.f32.mrf.mxu0
        %v3414 = vpop.f32.mrf.mxu0
        %v3415 = vadd.f32 0.0, %v3414
        %v3416 = vpop.f32.mrf.mxu0
        %3417 = vmatprep.mubr.bf16.mxu0 0
        %3418 = vmatmul.mubr.bf16.gmra.mxu0 %v3315
        %v3419 = vpop.f32.mrf.mxu0
        %v3420 = vadd.f32 0.0, %v3419
        %v3421 = vpop.f32.mrf.mxu0
        %v3422 = vpop.f32.mrf.mxu0
        %v3423 = vadd.f32 0.0, %v3422
        %v3424 = vpop.f32.mrf.mxu0
        %3425 = vmatprep.mubr.bf16.mxu0 0
        %3426 = vmatmul.mubr.bf16.gmra.mxu0 %v3318
        %v3427 = vpop.f32.mrf.mxu0
        %v3428 = vadd.f32 0.0, %v3427
        %v3429 = vpop.f32.mrf.mxu0
        %v3430 = vpop.f32.mrf.mxu0
        %v3431 = vadd.f32 0.0, %v3430
        %v3432 = vpop.f32.mrf.mxu0
        %3433 = vmatprep.mubr.bf16.mxu0 0
        %3434 = vmatmul.mubr.bf16.gmra.mxu0 %v3321
        %v3435 = vpop.f32.mrf.mxu0
        %v3436 = vadd.f32 0.0, %v3435
        %v3437 = vpop.f32.mrf.mxu0
        %v3438 = vpop.f32.mrf.mxu0
        %v3439 = vadd.f32 0.0, %v3438
        %v3440 = vpop.f32.mrf.mxu0
        %3441 = vmatprep.mubr.bf16.mxu0 0
        %3442 = vmatmul.mubr.bf16.gmra.mxu0 %v3324
        %v3443 = vpop.f32.mrf.mxu0
        %v3444 = vadd.f32 0.0, %v3443
        %v3445 = vpop.f32.mrf.mxu0
        %v3446 = vpop.f32.mrf.mxu0
        %v3447 = vadd.f32 0.0, %v3446
        %v3448 = vpop.f32.mrf.mxu0
        %3449 = vmatprep.mubr.bf16.mxu0 0
        %3450 = vmatmul.mubr.bf16.gmra.mxu0 %v3327
        %v3451 = vpop.f32.mrf.mxu0
        %v3452 = vadd.f32 0.0, %v3451
        %v3453 = vpop.f32.mrf.mxu0
        %v3454 = vpop.f32.mrf.mxu0
        %v3455 = vadd.f32 0.0, %v3454
        %v3456 = vpop.f32.mrf.mxu0
        %3457 = vmatprep.mubr.bf16.mxu0 0
        %3458 = vmatmul.mubr.bf16.gmra.mxu0 %v3330
        %v3459 = vpop.f32.mrf.mxu0
        %v3460 = vadd.f32 0.0, %v3459
        %v3461 = vpop.f32.mrf.mxu0
        %v3462 = vpop.f32.mrf.mxu0
        %v3463 = vadd.f32 0.0, %v3462
        %v3464 = vpop.f32.mrf.mxu0
        %3465 = vmatprep.mubr.bf16.mxu0 0
        %3466 = vmatmul.mubr.bf16.gmra.mxu0 %v3333
        %v3467 = vpop.f32.mrf.mxu0
        %v3468 = vadd.f32 0.0, %v3467
        %v3469 = vpop.f32.mrf.mxu0
        %v3470 = vpop.f32.mrf.mxu0
        %v3471 = vadd.f32 0.0, %v3470
        %v3472 = vpop.f32.mrf.mxu0
        %3473 = vmatprep.mubr.bf16.mxu0 0
        %3474 = vmatmul.mubr.bf16.gmra.mxu0 %v3336
        %v3475 = vpop.f32.mrf.mxu0
        %v3476 = vadd.f32 0.0, %v3475
        %v3477 = vpop.f32.mrf.mxu0
        %v3478 = vpop.f32.mrf.mxu0
        %v3479 = vadd.f32 0.0, %v3478
        %v3480 = vpop.f32.mrf.mxu0
        %3481 = vmatprep.mubr.bf16.mxu0 0
        %3482 = vmatmul.mubr.bf16.gmra.mxu0 %v3339
        %v3483 = vpop.f32.mrf.mxu0
        %v3484 = vadd.f32 0.0, %v3483
        %v3485 = vpop.f32.mrf.mxu0
        %v3486 = vpop.f32.mrf.mxu0
        %v3487 = vadd.f32 0.0, %v3486
        %v3488 = vpop.f32.mrf.mxu0
        %3489 = vmatprep.mubr.bf16.mxu0 0
        %3490 = vmatmul.mubr.bf16.gmra.mxu0 %v3342
        %v3491 = vpop.f32.mrf.mxu0
        %v3492 = vadd.f32 0.0, %v3491
        %v3493 = vpop.f32.mrf.mxu0
        %v3494 = vpop.f32.mrf.mxu0
        %v3495 = vadd.f32 0.0, %v3494
        %v3496 = vpop.f32.mrf.mxu0
        %3497 = vmatprep.mubr.bf16.mxu0 0
        %3498 = vmatmul.mubr.bf16.gmra.mxu0 %v3345
        %v3499 = vpop.f32.mrf.mxu0
        %v3500 = vadd.f32 0.0, %v3499
        %v3501 = vpop.f32.mrf.mxu0
        %v3502 = vpop.f32.mrf.mxu0
        %v3503 = vadd.f32 0.0, %v3502
        %v3504 = vpop.f32.mrf.mxu0
        %3505 = vmatprep.mubr.bf16.mxu0 0
        %3506 = vmatmul.mubr.bf16.gmra.mxu0 %v3348
        %v3507 = vpop.f32.mrf.mxu0
        %v3508 = vadd.f32 0.0, %v3507
        %v3509 = vpop.f32.mrf.mxu0
        %v3510 = vpop.f32.mrf.mxu0
        %v3511 = vadd.f32 0.0, %v3510
        %v3512 = vpop.f32.mrf.mxu0
        %3513 = vdwg.mxu0
        %v3514 = vadd.f32 %v3155, %v3388
        %v3515 = vadd.f32 %v3156, %v3391
        %v3516 = vadd.f32 %v3157, %v3396
        %v3517 = vadd.f32 %v3158, %v3399
        %v3518 = vadd.f32 %v3159, %v3404
        %v3519 = vadd.f32 %v3160, %v3407
        %v3520 = vadd.f32 %v3161, %v3412
        %v3521 = vadd.f32 %v3162, %v3415
        %v3522 = vadd.f32 %v3163, %v3420
        %v3523 = vadd.f32 %v3164, %v3423
        %v3524 = vadd.f32 %v3165, %v3428
        %v3525 = vadd.f32 %v3166, %v3431
        %v3526 = vadd.f32 %v3167, %v3436
        %v3527 = vadd.f32 %v3168, %v3439
        %v3528 = vadd.f32 %v3169, %v3444
        %v3529 = vadd.f32 %v3170, %v3447
        %v3530 = vadd.f32 %v3171, %v3452
        %v3531 = vadd.f32 %v3172, %v3455
        %v3532 = vadd.f32 %v3173, %v3460
        %v3533 = vadd.f32 %v3174, %v3463
        %v3534 = vadd.f32 %v3175, %v3468
        %v3535 = vadd.f32 %v3176, %v3471
        %v3536 = vadd.f32 %v3177, %v3476
        %v3537 = vadd.f32 %v3178, %v3479
        %v3538 = vadd.f32 %v3179, %v3484
        %v3539 = vadd.f32 %v3180, %v3487
        %v3540 = vadd.f32 %v3181, %v3492
        %v3541 = vadd.f32 %v3182, %v3495
        %v3542 = vadd.f32 %v3183, %v3500
        %v3543 = vadd.f32 %v3184, %v3503
        %v3544 = vadd.f32 %v3185, %v3508
        %v3545 = vadd.f32 %v3186, %v3511
        %v3546 = vld [vmem:[%s3187] sm:$0xf]
        %v3547 = vld [vmem:[%s3187 + $0x4] sm:$0xf]
        %v3548 = vld [vmem:[%s3187 + $0x8] sm:$0x1]
        %v3549 = vld [vmem:[%s3187 + $0xc] sm:$0xf]
        %v3550 = vld [vmem:[%s3187 + $0x10] sm:$0xf]
        %v3551 = vld [vmem:[%s3187 + $0x14] sm:$0x1]
        %v3552 = vld [vmem:[%s3187 + $0x18] sm:$0xf]
        %v3553 = vld [vmem:[%s3187 + $0x1c] sm:$0xf]
        %v3554 = vld [vmem:[%s3187 + $0x20] sm:$0x1]
        %v3555 = vld [vmem:[%s3187 + $0x24] sm:$0xf]
        %v3556 = vld [vmem:[%s3187 + $0x28] sm:$0xf]
        %v3557 = vld [vmem:[%s3187 + $0x2c] sm:$0x1]
        %v3558 = vld [vmem:[%s3187 + $0x30] sm:$0xf]
        %v3559 = vld [vmem:[%s3187 + $0x34] sm:$0xf]
        %v3560 = vld [vmem:[%s3187 + $0x38] sm:$0x1]
        %v3561 = vld [vmem:[%s3187 + $0x3c] sm:$0xf]
        %v3562 = vld [vmem:[%s3187 + $0x40] sm:$0xf]
        %v3563 = vld [vmem:[%s3187 + $0x44] sm:$0x1]
        %v3564 = vld [vmem:[%s3187 + $0x48] sm:$0xf]
        %v3565 = vld [vmem:[%s3187 + $0x4c] sm:$0xf]
        %v3566 = vld [vmem:[%s3187 + $0x50] sm:$0x1]
        %v3567 = vld [vmem:[%s3187 + $0x54] sm:$0xf]
        %v3568 = vld [vmem:[%s3187 + $0x58] sm:$0xf]
        %v3569 = vld [vmem:[%s3187 + $0x5c] sm:$0x1]
        %v3570 = vld [vmem:[%s3187 + $0x78] sm:$0xf]
        %v3571 = vld [vmem:[%s3187 + $0x7c] sm:$0xf]
        %v3572 = vld [vmem:[%s3187 + $0x80] sm:$0x1]
        %v3573 = vld [vmem:[%s3187 + $0x84] sm:$0xf]
        %v3574 = vld [vmem:[%s3187 + $0x88] sm:$0xf]
        %v3575 = vld [vmem:[%s3187 + $0x8c] sm:$0x1]
        %v3576 = vld [vmem:[%s3187 + $0x90] sm:$0xf]
        %v3577 = vld [vmem:[%s3187 + $0x94] sm:$0xf]
        %v3578 = vld [vmem:[%s3187 + $0x98] sm:$0x1]
        %v3579 = vld [vmem:[%s3187 + $0x9c] sm:$0xf]
        %v3580 = vld [vmem:[%s3187 + $0xa0] sm:$0xf]
        %v3581 = vld [vmem:[%s3187 + $0xa4] sm:$0x1]
        %v3582 = vld [vmem:[%s3187 + $0xa8] sm:$0xf]
        %v3583 = vld [vmem:[%s3187 + $0xac] sm:$0xf]
        %v3584 = vld [vmem:[%s3187 + $0xb0] sm:$0x1]
        %v3585 = vld [vmem:[%s3187 + $0xb4] sm:$0xf]
        %v3586 = vld [vmem:[%s3187 + $0xb8] sm:$0xf]
        %v3587 = vld [vmem:[%s3187 + $0xbc] sm:$0x1]
        %v3588 = vld [vmem:[%s3187 + $0xc0] sm:$0xf]
        %v3589 = vld [vmem:[%s3187 + $0xc4] sm:$0xf]
        %v3590 = vld [vmem:[%s3187 + $0xc8] sm:$0x1]
        %v3591 = vld [vmem:[%s3187 + $0xcc] sm:$0xf]
        %v3592 = vld [vmem:[%s3187 + $0xd0] sm:$0xf]
        %v3593 = vld [vmem:[%s3187 + $0xd4] sm:$0x1]
        %v3595 = vshrl.u32 %v3546, 16
        %v3597 = vrot.slane %v3595, 4
        %v3598 = vshll.u32 %v3546, 16
        %v3600 = vrot.slane %v3598, 5
        %v3601 = vor.u32 %v3597, %v3600
        %v3602 = vrot.slane %v3601, 4
        %v3604 = vshll.u32 %v3547, 16
        %v3606 = vrot.slane %v3604, 5
        %v3607 = vsel %vm234, %v3602, %v3606
        %v3608 = vshrl.u32 %v3547, 16
        %v3610 = vrot.slane %v3608, 4
        %v3611 = vor.u32 %v3610, %v3606
        %v3612 = vrot.slane %v3611, 4
        %v3614 = vshll.u32 %v3548, 16
        %v3616 = vrot.slane %v3614, 5
        %v3617 = vsel %vm234, %v3612, %v3616
        %v3619 = vshrl.u32 %v3549, 16
        %v3621 = vrot.slane %v3619, 4
        %v3622 = vshll.u32 %v3549, 16
        %v3624 = vrot.slane %v3622, 5
        %v3625 = vor.u32 %v3621, %v3624
        %v3626 = vrot.slane %v3625, 4
        %v3628 = vshll.u32 %v3550, 16
        %v3630 = vrot.slane %v3628, 5
        %v3631 = vsel %vm234, %v3626, %v3630
        %v3632 = vshrl.u32 %v3550, 16
        %v3634 = vrot.slane %v3632, 4
        %v3635 = vor.u32 %v3634, %v3630
        %v3636 = vrot.slane %v3635, 4
        %v3638 = vshll.u32 %v3551, 16
        %v3640 = vrot.slane %v3638, 5
        %v3641 = vsel %vm234, %v3636, %v3640
        %v3643 = vshrl.u32 %v3552, 16
        %v3645 = vrot.slane %v3643, 4
        %v3646 = vshll.u32 %v3552, 16
        %v3648 = vrot.slane %v3646, 5
        %v3649 = vor.u32 %v3645, %v3648
        %v3650 = vrot.slane %v3649, 4
        %v3652 = vshll.u32 %v3553, 16
        %v3654 = vrot.slane %v3652, 5
        %v3655 = vsel %vm234, %v3650, %v3654
        %v3656 = vshrl.u32 %v3553, 16
        %v3658 = vrot.slane %v3656, 4
        %v3659 = vor.u32 %v3658, %v3654
        %v3660 = vrot.slane %v3659, 4
        %v3662 = vshll.u32 %v3554, 16
        %v3664 = vrot.slane %v3662, 5
        %v3665 = vsel %vm234, %v3660, %v3664
        %v3667 = vshrl.u32 %v3555, 16
        %v3669 = vrot.slane %v3667, 4
        %v3670 = vshll.u32 %v3555, 16
        %v3672 = vrot.slane %v3670, 5
        %v3673 = vor.u32 %v3669, %v3672
        %v3674 = vrot.slane %v3673, 4
        %v3676 = vshll.u32 %v3556, 16
        %v3678 = vrot.slane %v3676, 5
        %v3679 = vsel %vm234, %v3674, %v3678
        %v3680 = vshrl.u32 %v3556, 16
        %v3682 = vrot.slane %v3680, 4
        %v3683 = vor.u32 %v3682, %v3678
        %v3684 = vrot.slane %v3683, 4
        %v3686 = vshll.u32 %v3557, 16
        %v3688 = vrot.slane %v3686, 5
        %v3689 = vsel %vm234, %v3684, %v3688
        %v3691 = vshrl.u32 %v3558, 16
        %v3693 = vrot.slane %v3691, 4
        %v3694 = vshll.u32 %v3558, 16
        %v3696 = vrot.slane %v3694, 5
        %v3697 = vor.u32 %v3693, %v3696
        %v3698 = vrot.slane %v3697, 4
        %v3700 = vshll.u32 %v3559, 16
        %v3702 = vrot.slane %v3700, 5
        %v3703 = vsel %vm234, %v3698, %v3702
        %v3704 = vshrl.u32 %v3559, 16
        %v3706 = vrot.slane %v3704, 4
        %v3707 = vor.u32 %v3706, %v3702
        %v3708 = vrot.slane %v3707, 4
        %v3710 = vshll.u32 %v3560, 16
        %v3712 = vrot.slane %v3710, 5
        %v3713 = vsel %vm234, %v3708, %v3712
        %v3715 = vshrl.u32 %v3561, 16
        %v3717 = vrot.slane %v3715, 4
        %v3718 = vshll.u32 %v3561, 16
        %v3720 = vrot.slane %v3718, 5
        %v3721 = vor.u32 %v3717, %v3720
        %v3722 = vrot.slane %v3721, 4
        %v3724 = vshll.u32 %v3562, 16
        %v3726 = vrot.slane %v3724, 5
        %v3727 = vsel %vm234, %v3722, %v3726
        %v3728 = vshrl.u32 %v3562, 16
        %v3730 = vrot.slane %v3728, 4
        %v3731 = vor.u32 %v3730, %v3726
        %v3732 = vrot.slane %v3731, 4
        %v3734 = vshll.u32 %v3563, 16
        %v3736 = vrot.slane %v3734, 5
        %v3737 = vsel %vm234, %v3732, %v3736
        %v3739 = vshrl.u32 %v3564, 16
        %v3741 = vrot.slane %v3739, 4
        %v3742 = vshll.u32 %v3564, 16
        %v3744 = vrot.slane %v3742, 5
        %v3745 = vor.u32 %v3741, %v3744
        %v3746 = vrot.slane %v3745, 4
        %v3748 = vshll.u32 %v3565, 16
        %v3750 = vrot.slane %v3748, 5
        %v3751 = vsel %vm234, %v3746, %v3750
        %v3752 = vshrl.u32 %v3565, 16
        %v3754 = vrot.slane %v3752, 4
        %v3755 = vor.u32 %v3754, %v3750
        %v3756 = vrot.slane %v3755, 4
        %v3758 = vshll.u32 %v3566, 16
        %v3760 = vrot.slane %v3758, 5
        %v3761 = vsel %vm234, %v3756, %v3760
        %v3763 = vshrl.u32 %v3567, 16
        %v3765 = vrot.slane %v3763, 4
        %v3766 = vshll.u32 %v3567, 16
        %v3768 = vrot.slane %v3766, 5
        %v3769 = vor.u32 %v3765, %v3768
        %v3770 = vrot.slane %v3769, 4
        %v3772 = vshll.u32 %v3568, 16
        %v3774 = vrot.slane %v3772, 5
        %v3775 = vsel %vm234, %v3770, %v3774
        %v3776 = vshrl.u32 %v3568, 16
        %v3778 = vrot.slane %v3776, 4
        %v3779 = vor.u32 %v3778, %v3774
        %v3780 = vrot.slane %v3779, 4
        %v3782 = vshll.u32 %v3569, 16
        %v3784 = vrot.slane %v3782, 5
        %v3785 = vsel %vm234, %v3780, %v3784
        %v3787 = vshrl.u32 %v3570, 16
        %v3789 = vrot.slane %v3787, 4
        %v3790 = vshll.u32 %v3570, 16
        %v3792 = vrot.slane %v3790, 5
        %v3793 = vor.u32 %v3789, %v3792
        %v3794 = vrot.slane %v3793, 4
        %v3796 = vshll.u32 %v3571, 16
        %v3798 = vrot.slane %v3796, 5
        %v3799 = vsel %vm234, %v3794, %v3798
        %v3800 = vshrl.u32 %v3571, 16
        %v3802 = vrot.slane %v3800, 4
        %v3803 = vor.u32 %v3802, %v3798
        %v3804 = vrot.slane %v3803, 4
        %v3806 = vshll.u32 %v3572, 16
        %v3808 = vrot.slane %v3806, 5
        %v3809 = vsel %vm234, %v3804, %v3808
        %v3811 = vshrl.u32 %v3573, 16
        %v3813 = vrot.slane %v3811, 4
        %v3814 = vshll.u32 %v3573, 16
        %v3816 = vrot.slane %v3814, 5
        %v3817 = vor.u32 %v3813, %v3816
        %v3818 = vrot.slane %v3817, 4
        %v3820 = vshll.u32 %v3574, 16
        %v3822 = vrot.slane %v3820, 5
        %v3823 = vsel %vm234, %v3818, %v3822
        %v3824 = vshrl.u32 %v3574, 16
        %v3826 = vrot.slane %v3824, 4
        %v3827 = vor.u32 %v3826, %v3822
        %v3828 = vrot.slane %v3827, 4
        %v3830 = vshll.u32 %v3575, 16
        %v3832 = vrot.slane %v3830, 5
        %v3833 = vsel %vm234, %v3828, %v3832
        %v3835 = vshrl.u32 %v3576, 16
        %v3837 = vrot.slane %v3835, 4
        %v3838 = vshll.u32 %v3576, 16
        %v3840 = vrot.slane %v3838, 5
        %v3841 = vor.u32 %v3837, %v3840
        %v3842 = vrot.slane %v3841, 4
        %v3844 = vshll.u32 %v3577, 16
        %v3846 = vrot.slane %v3844, 5
        %v3847 = vsel %vm234, %v3842, %v3846
        %v3848 = vshrl.u32 %v3577, 16
        %v3850 = vrot.slane %v3848, 4
        %v3851 = vor.u32 %v3850, %v3846
        %v3852 = vrot.slane %v3851, 4
        %v3854 = vshll.u32 %v3578, 16
        %v3856 = vrot.slane %v3854, 5
        %v3857 = vsel %vm234, %v3852, %v3856
        %v3859 = vshrl.u32 %v3579, 16
        %v3861 = vrot.slane %v3859, 4
        %v3862 = vshll.u32 %v3579, 16
        %v3864 = vrot.slane %v3862, 5
        %v3865 = vor.u32 %v3861, %v3864
        %v3866 = vrot.slane %v3865, 4
        %v3868 = vshll.u32 %v3580, 16
        %v3870 = vrot.slane %v3868, 5
        %v3871 = vsel %vm234, %v3866, %v3870
        %v3872 = vshrl.u32 %v3580, 16
        %v3874 = vrot.slane %v3872, 4
        %v3875 = vor.u32 %v3874, %v3870
        %v3876 = vrot.slane %v3875, 4
        %v3878 = vshll.u32 %v3581, 16
        %v3880 = vrot.slane %v3878, 5
        %v3881 = vsel %vm234, %v3876, %v3880
        %v3883 = vshrl.u32 %v3582, 16
        %v3885 = vrot.slane %v3883, 4
        %v3886 = vshll.u32 %v3582, 16
        %v3888 = vrot.slane %v3886, 5
        %v3889 = vor.u32 %v3885, %v3888
        %v3890 = vrot.slane %v3889, 4
        %v3892 = vshll.u32 %v3583, 16
        %v3894 = vrot.slane %v3892, 5
        %v3895 = vsel %vm234, %v3890, %v3894
        %v3896 = vshrl.u32 %v3583, 16
        %v3898 = vrot.slane %v3896, 4
        %v3899 = vor.u32 %v3898, %v3894
        %v3900 = vrot.slane %v3899, 4
        %v3902 = vshll.u32 %v3584, 16
        %v3904 = vrot.slane %v3902, 5
        %v3905 = vsel %vm234, %v3900, %v3904
        %v3907 = vshrl.u32 %v3585, 16
        %v3909 = vrot.slane %v3907, 4
        %v3910 = vshll.u32 %v3585, 16
        %v3912 = vrot.slane %v3910, 5
        %v3913 = vor.u32 %v3909, %v3912
        %v3914 = vrot.slane %v3913, 4
        %v3916 = vshll.u32 %v3586, 16
        %v3918 = vrot.slane %v3916, 5
        %v3919 = vsel %vm234, %v3914, %v3918
        %v3920 = vshrl.u32 %v3586, 16
        %v3922 = vrot.slane %v3920, 4
        %v3923 = vor.u32 %v3922, %v3918
        %v3924 = vrot.slane %v3923, 4
        %v3926 = vshll.u32 %v3587, 16
        %v3928 = vrot.slane %v3926, 5
        %v3929 = vsel %vm234, %v3924, %v3928
        %v3931 = vshrl.u32 %v3588, 16
        %v3933 = vrot.slane %v3931, 4
        %v3934 = vshll.u32 %v3588, 16
        %v3936 = vrot.slane %v3934, 5
        %v3937 = vor.u32 %v3933, %v3936
        %v3938 = vrot.slane %v3937, 4
        %v3940 = vshll.u32 %v3589, 16
        %v3942 = vrot.slane %v3940, 5
        %v3943 = vsel %vm234, %v3938, %v3942
        %v3944 = vshrl.u32 %v3589, 16
        %v3946 = vrot.slane %v3944, 4
        %v3947 = vor.u32 %v3946, %v3942
        %v3948 = vrot.slane %v3947, 4
        %v3950 = vshll.u32 %v3590, 16
        %v3952 = vrot.slane %v3950, 5
        %v3953 = vsel %vm234, %v3948, %v3952
        %v3955 = vshrl.u32 %v3591, 16
        %v3957 = vrot.slane %v3955, 4
        %v3958 = vshll.u32 %v3591, 16
        %v3960 = vrot.slane %v3958, 5
        %v3961 = vor.u32 %v3957, %v3960
        %v3962 = vrot.slane %v3961, 4
        %v3964 = vshll.u32 %v3592, 16
        %v3966 = vrot.slane %v3964, 5
        %v3967 = vsel %vm234, %v3962, %v3966
        %v3968 = vshrl.u32 %v3592, 16
        %v3970 = vrot.slane %v3968, 4
        %v3971 = vor.u32 %v3970, %v3966
        %v3972 = vrot.slane %v3971, 4
        %v3974 = vshll.u32 %v3593, 16
        %v3976 = vrot.slane %v3974, 5
        %v3977 = vsel %vm234, %v3972, %v3976
        %s3978 = scalar_lea.vmem %s1, 28
        %v3979 = vld [vmem:[%s3978] sm:$0xf]
        %v3980 = vunpack.c.l.b16 %v3607
        %v3981 = vunpack.c.l.b16 %v3617
        %v3982 = vunpack.c.l.b16 %v3631
        %v3983 = vunpack.c.l.b16 %v3641
        %v3984 = vunpack.c.l.b16 %v3655
        %v3985 = vunpack.c.l.b16 %v3665
        %v3986 = vunpack.c.l.b16 %v3679
        %v3987 = vunpack.c.l.b16 %v3689
        %v3988 = vunpack.c.l.b16 %v3703
        %v3989 = vunpack.c.l.b16 %v3713
        %v3990 = vunpack.c.l.b16 %v3727
        %v3991 = vunpack.c.l.b16 %v3737
        %v3992 = vunpack.c.l.b16 %v3751
        %v3993 = vunpack.c.l.b16 %v3761
        %v3994 = vunpack.c.l.b16 %v3775
        %v3995 = vunpack.c.l.b16 %v3785
        %v3996 = vunpack.c.l.b16 %v3799
        %v3997 = vunpack.c.l.b16 %v3809
        %v3998 = vunpack.c.l.b16 %v3823
        %v3999 = vunpack.c.l.b16 %v3833
        %v4000 = vunpack.c.l.b16 %v3847
        %v4001 = vunpack.c.l.b16 %v3857
        %v4002 = vunpack.c.l.b16 %v3871
        %v4003 = vunpack.c.l.b16 %v3881
        %v4004 = vunpack.c.l.b16 %v3895
        %v4005 = vunpack.c.l.b16 %v3905
        %v4006 = vunpack.c.l.b16 %v3919
        %v4007 = vunpack.c.l.b16 %v3929
        %v4008 = vunpack.c.l.b16 %v3943
        %v4009 = vunpack.c.l.b16 %v3953
        %v4010 = vunpack.c.l.b16 %v3967
        %v4011 = vunpack.c.l.b16 %v3977
        %v4012 = vpack.c.b16 %v3981, %v3980
        %v4013 = vpack.c.b16 %v3983, %v3982
        %v4014 = vpack.c.b16 %v3985, %v3984
        %v4015 = vpack.c.b16 %v3987, %v3986
        %v4016 = vpack.c.b16 %v3989, %v3988
        %v4017 = vpack.c.b16 %v3991, %v3990
        %v4018 = vpack.c.b16 %v3993, %v3992
        %v4019 = vpack.c.b16 %v3995, %v3994
        %v4020 = vpack.c.b16 %v3997, %v3996
        %v4021 = vpack.c.b16 %v3999, %v3998
        %v4022 = vpack.c.b16 %v4001, %v4000
        %v4023 = vpack.c.b16 %v4003, %v4002
        %v4024 = vpack.c.b16 %v4005, %v4004
        %v4025 = vpack.c.b16 %v4007, %v4006
        %v4026 = vpack.c.b16 %v4009, %v4008
        %v4027 = vpack.c.b16 %v4011, %v4010
        %v4029 = vsel %vm669, %v4012, 0
        %v4032 = vsel %vm669, %v4013, 0
        %v4035 = vsel %vm669, %v4014, 0
        %v4038 = vsel %vm669, %v4015, 0
        %v4041 = vsel %vm669, %v4016, 0
        %v4044 = vsel %vm669, %v4017, 0
        %v4047 = vsel %vm669, %v4018, 0
        %v4050 = vsel %vm669, %v4019, 0
        %v4053 = vsel %vm669, %v4020, 0
        %v4056 = vsel %vm669, %v4021, 0
        %v4059 = vsel %vm669, %v4022, 0
        %v4062 = vsel %vm669, %v4023, 0
        %v4065 = vsel %vm669, %v4024, 0
        %v4068 = vsel %vm669, %v4025, 0
        %v4071 = vsel %vm669, %v4026, 0
        %v4074 = vsel %vm669, %v4027, 0
        %v4077 = vsel %vm718, %v3979, 0
        %4079 = vmatprep.subr.bf16.mxu0 0
        %4080 = vmatpush1.bf16.msra.mxu0 0
        %4081 = vmatprep.subr.bf16.mxu0 0
        %4082 = vmatpush1.bf16.msra.mxu0 0
        %4083 = vmatprep.subr.bf16.mxu0 0
        %4084 = vmatpush1.bf16.msra.mxu0 0
        %4085 = vmatprep.subr.bf16.mxu0 0
        %4086 = vmatpush1.bf16.msra.mxu0 0
        %4087 = vmatprep.subr.bf16.mxu0 0
        %4088 = vmatpush1.bf16.msra.mxu0 0
        %4089 = vmatprep.subr.bf16.mxu0 0
        %4090 = vmatpush1.bf16.msra.mxu0 0
        %4091 = vmatprep.subr.bf16.mxu0 0
        %4092 = vmatpush1.bf16.msra.mxu0 0
        %4093 = vmatprep.subr.bf16.mxu0 0
        %4094 = vmatpush1.bf16.msra.mxu0 %v4077
        %4095 = vmatprep.subr.bf16.mxu0 0
        %4096 = vmatpush2.bf16.msra.mxu0 0
        %4097 = vmatprep.subr.bf16.mxu0 0
        %4098 = vmatpush2.bf16.msra.mxu0 0
        %4099 = vmatprep.subr.bf16.mxu0 0
        %4100 = vmatpush2.bf16.msra.mxu0 0
        %4101 = vmatprep.subr.bf16.mxu0 0
        %4102 = vmatpush2.bf16.msra.mxu0 0
        %4103 = vmatprep.subr.bf16.mxu0 0
        %4104 = vmatpush2.bf16.msra.mxu0 0
        %4105 = vmatprep.subr.bf16.mxu0 0
        %4106 = vmatpush2.bf16.msra.mxu0 0
        %4107 = vmatprep.subr.bf16.mxu0 0
        %4108 = vmatpush2.bf16.msra.mxu0 0
        %4109 = vmatprep.subr.bf16.mxu0 0
        %4110 = vmatpush2.bf16.msra.mxu0 0
        %4111 = vmatprep.mubr.bf16.mxu0 0
        %4112 = vmatmul.mubr.bf16.gmra.mxu0 %v4029
        %v4113 = vpop.f32.mrf.mxu0
        %v4114 = vadd.f32 0.0, %v4113
        %v4115 = vpop.f32.mrf.mxu0
        %v4116 = vpop.f32.mrf.mxu0
        %v4117 = vadd.f32 0.0, %v4116
        %v4118 = vpop.f32.mrf.mxu0
        %4119 = vmatprep.mubr.bf16.mxu0 0
        %4120 = vmatmul.mubr.bf16.gmra.mxu0 %v4032
        %v4121 = vpop.f32.mrf.mxu0
        %v4122 = vadd.f32 0.0, %v4121
        %v4123 = vpop.f32.mrf.mxu0
        %v4124 = vpop.f32.mrf.mxu0
        %v4125 = vadd.f32 0.0, %v4124
        %v4126 = vpop.f32.mrf.mxu0
        %4127 = vmatprep.mubr.bf16.mxu0 0
        %4128 = vmatmul.mubr.bf16.gmra.mxu0 %v4035
        %v4129 = vpop.f32.mrf.mxu0
        %v4130 = vadd.f32 0.0, %v4129
        %v4131 = vpop.f32.mrf.mxu0
        %v4132 = vpop.f32.mrf.mxu0
        %v4133 = vadd.f32 0.0, %v4132
        %v4134 = vpop.f32.mrf.mxu0
        %4135 = vmatprep.mubr.bf16.mxu0 0
        %4136 = vmatmul.mubr.bf16.gmra.mxu0 %v4038
        %v4137 = vpop.f32.mrf.mxu0
        %v4138 = vadd.f32 0.0, %v4137
        %v4139 = vpop.f32.mrf.mxu0
        %v4140 = vpop.f32.mrf.mxu0
        %v4141 = vadd.f32 0.0, %v4140
        %v4142 = vpop.f32.mrf.mxu0
        %4143 = vmatprep.mubr.bf16.mxu0 0
        %4144 = vmatmul.mubr.bf16.gmra.mxu0 %v4041
        %v4145 = vpop.f32.mrf.mxu0
        %v4146 = vadd.f32 0.0, %v4145
        %v4147 = vpop.f32.mrf.mxu0
        %v4148 = vpop.f32.mrf.mxu0
        %v4149 = vadd.f32 0.0, %v4148
        %v4150 = vpop.f32.mrf.mxu0
        %4151 = vmatprep.mubr.bf16.mxu0 0
        %4152 = vmatmul.mubr.bf16.gmra.mxu0 %v4044
        %v4153 = vpop.f32.mrf.mxu0
        %v4154 = vadd.f32 0.0, %v4153
        %v4155 = vpop.f32.mrf.mxu0
        %v4156 = vpop.f32.mrf.mxu0
        %v4157 = vadd.f32 0.0, %v4156
        %v4158 = vpop.f32.mrf.mxu0
        %4159 = vmatprep.mubr.bf16.mxu0 0
        %4160 = vmatmul.mubr.bf16.gmra.mxu0 %v4047
        %v4161 = vpop.f32.mrf.mxu0
        %v4162 = vadd.f32 0.0, %v4161
        %v4163 = vpop.f32.mrf.mxu0
        %v4164 = vpop.f32.mrf.mxu0
        %v4165 = vadd.f32 0.0, %v4164
        %v4166 = vpop.f32.mrf.mxu0
        %4167 = vmatprep.mubr.bf16.mxu0 0
        %4168 = vmatmul.mubr.bf16.gmra.mxu0 %v4050
        %v4169 = vpop.f32.mrf.mxu0
        %v4170 = vadd.f32 0.0, %v4169
        %v4171 = vpop.f32.mrf.mxu0
        %v4172 = vpop.f32.mrf.mxu0
        %v4173 = vadd.f32 0.0, %v4172
        %v4174 = vpop.f32.mrf.mxu0
        %4175 = vmatprep.mubr.bf16.mxu0 0
        %4176 = vmatmul.mubr.bf16.gmra.mxu0 %v4053
        %v4177 = vpop.f32.mrf.mxu0
        %v4178 = vadd.f32 0.0, %v4177
        %v4179 = vpop.f32.mrf.mxu0
        %v4180 = vpop.f32.mrf.mxu0
        %v4181 = vadd.f32 0.0, %v4180
        %v4182 = vpop.f32.mrf.mxu0
        %4183 = vmatprep.mubr.bf16.mxu0 0
        %4184 = vmatmul.mubr.bf16.gmra.mxu0 %v4056
        %v4185 = vpop.f32.mrf.mxu0
        %v4186 = vadd.f32 0.0, %v4185
        %v4187 = vpop.f32.mrf.mxu0
        %v4188 = vpop.f32.mrf.mxu0
        %v4189 = vadd.f32 0.0, %v4188
        %v4190 = vpop.f32.mrf.mxu0
        %4191 = vmatprep.mubr.bf16.mxu0 0
        %4192 = vmatmul.mubr.bf16.gmra.mxu0 %v4059
        %v4193 = vpop.f32.mrf.mxu0
        %v4194 = vadd.f32 0.0, %v4193
        %v4195 = vpop.f32.mrf.mxu0
        %v4196 = vpop.f32.mrf.mxu0
        %v4197 = vadd.f32 0.0, %v4196
        %v4198 = vpop.f32.mrf.mxu0
        %4199 = vmatprep.mubr.bf16.mxu0 0
        %4200 = vmatmul.mubr.bf16.gmra.mxu0 %v4062
        %v4201 = vpop.f32.mrf.mxu0
        %v4202 = vadd.f32 0.0, %v4201
        %v4203 = vpop.f32.mrf.mxu0
        %v4204 = vpop.f32.mrf.mxu0
        %v4205 = vadd.f32 0.0, %v4204
        %v4206 = vpop.f32.mrf.mxu0
        %4207 = vmatprep.mubr.bf16.mxu0 0
        %4208 = vmatmul.mubr.bf16.gmra.mxu0 %v4065
        %v4209 = vpop.f32.mrf.mxu0
        %v4210 = vadd.f32 0.0, %v4209
        %v4211 = vpop.f32.mrf.mxu0
        %v4212 = vpop.f32.mrf.mxu0
        %v4213 = vadd.f32 0.0, %v4212
        %v4214 = vpop.f32.mrf.mxu0
        %4215 = vmatprep.mubr.bf16.mxu0 0
        %4216 = vmatmul.mubr.bf16.gmra.mxu0 %v4068
        %v4217 = vpop.f32.mrf.mxu0
        %v4218 = vadd.f32 0.0, %v4217
        %v4219 = vpop.f32.mrf.mxu0
        %v4220 = vpop.f32.mrf.mxu0
        %v4221 = vadd.f32 0.0, %v4220
        %v4222 = vpop.f32.mrf.mxu0
        %4223 = vmatprep.mubr.bf16.mxu0 0
        %4224 = vmatmul.mubr.bf16.gmra.mxu0 %v4071
        %v4225 = vpop.f32.mrf.mxu0
        %v4226 = vadd.f32 0.0, %v4225
        %v4227 = vpop.f32.mrf.mxu0
        %v4228 = vpop.f32.mrf.mxu0
        %v4229 = vadd.f32 0.0, %v4228
        %v4230 = vpop.f32.mrf.mxu0
        %4231 = vmatprep.mubr.bf16.mxu0 0
        %4232 = vmatmul.mubr.bf16.gmra.mxu0 %v4074
        %v4233 = vpop.f32.mrf.mxu0
        %v4234 = vadd.f32 0.0, %v4233
        %v4235 = vpop.f32.mrf.mxu0
        %v4236 = vpop.f32.mrf.mxu0
        %v4237 = vadd.f32 0.0, %v4236
        %v4238 = vpop.f32.mrf.mxu0
        %4239 = vdwg.mxu0
        %v4240 = vadd.f32 %v3514, %v4114
        %v4241 = vadd.f32 %v3515, %v4117
        %v4242 = vadd.f32 %v3516, %v4122
        %v4243 = vadd.f32 %v3517, %v4125
        %v4244 = vadd.f32 %v3518, %v4130
        %v4245 = vadd.f32 %v3519, %v4133
        %v4246 = vadd.f32 %v3520, %v4138
        %v4247 = vadd.f32 %v3521, %v4141
        %v4248 = vadd.f32 %v3522, %v4146
        %v4249 = vadd.f32 %v3523, %v4149
        %v4250 = vadd.f32 %v3524, %v4154
        %v4251 = vadd.f32 %v3525, %v4157
        %v4252 = vadd.f32 %v3526, %v4162
        %v4253 = vadd.f32 %v3527, %v4165
        %v4254 = vadd.f32 %v3528, %v4170
        %v4255 = vadd.f32 %v3529, %v4173
        %v4256 = vadd.f32 %v3530, %v4178
        %v4257 = vadd.f32 %v3531, %v4181
        %v4258 = vadd.f32 %v3532, %v4186
        %v4259 = vadd.f32 %v3533, %v4189
        %v4260 = vadd.f32 %v3534, %v4194
        %v4261 = vadd.f32 %v3535, %v4197
        %v4262 = vadd.f32 %v3536, %v4202
        %v4263 = vadd.f32 %v3537, %v4205
        %v4264 = vadd.f32 %v3538, %v4210
        %v4265 = vadd.f32 %v3539, %v4213
        %v4266 = vadd.f32 %v3540, %v4218
        %v4267 = vadd.f32 %v3541, %v4221
        %v4268 = vadd.f32 %v3542, %v4226
        %v4269 = vadd.f32 %v3543, %v4229
        %v4270 = vadd.f32 %v3544, %v4234
        %v4271 = vadd.f32 %v3545, %v4237
        %v4272 = vld [vmem:[%s3187] sm:$0xe]
        %v4273 = vld [vmem:[%s3187 + $0xc] sm:$0xe]
        %v4274 = vld [vmem:[%s3187 + $0x18] sm:$0xe]
        %v4275 = vld [vmem:[%s3187 + $0x24] sm:$0xe]
        %v4276 = vld [vmem:[%s3187 + $0x30] sm:$0xe]
        %v4277 = vld [vmem:[%s3187 + $0x3c] sm:$0xe]
        %v4278 = vld [vmem:[%s3187 + $0x48] sm:$0xe]
        %v4279 = vld [vmem:[%s3187 + $0x54] sm:$0xe]
        %v4280 = vld [vmem:[%s3187 + $0x78] sm:$0xe]
        %v4281 = vld [vmem:[%s3187 + $0x84] sm:$0xe]
        %v4282 = vld [vmem:[%s3187 + $0x90] sm:$0xe]
        %v4283 = vld [vmem:[%s3187 + $0x9c] sm:$0xe]
        %v4284 = vld [vmem:[%s3187 + $0xa8] sm:$0xe]
        %v4285 = vld [vmem:[%s3187 + $0xb4] sm:$0xe]
        %v4286 = vld [vmem:[%s3187 + $0xc0] sm:$0xe]
        %v4287 = vld [vmem:[%s3187 + $0xcc] sm:$0xe]
        %v4336 = vrot.slane %v4272, 5
        %v4337 = vrot.slane %v4336, 4
        %v4338 = vrot.slane %v3547, 5
        %v4339 = vsel %vm1225, %v4337, %v4338
        %v4340 = vrot.slane %v4338, 4
        %v4341 = vrot.slane %v3548, 5
        %v4342 = vsel %vm1225, %v4340, %v4341
        %v4343 = vrot.slane %v4273, 5
        %v4344 = vrot.slane %v4343, 4
        %v4345 = vrot.slane %v3550, 5
        %v4346 = vsel %vm1225, %v4344, %v4345
        %v4347 = vrot.slane %v4345, 4
        %v4348 = vrot.slane %v3551, 5
        %v4349 = vsel %vm1225, %v4347, %v4348
        %v4350 = vrot.slane %v4274, 5
        %v4351 = vrot.slane %v4350, 4
        %v4352 = vrot.slane %v3553, 5
        %v4353 = vsel %vm1225, %v4351, %v4352
        %v4354 = vrot.slane %v4352, 4
        %v4355 = vrot.slane %v3554, 5
        %v4356 = vsel %vm1225, %v4354, %v4355
        %v4357 = vrot.slane %v4275, 5
        %v4358 = vrot.slane %v4357, 4
        %v4359 = vrot.slane %v3556, 5
        %v4360 = vsel %vm1225, %v4358, %v4359
        %v4361 = vrot.slane %v4359, 4
        %v4362 = vrot.slane %v3557, 5
        %v4363 = vsel %vm1225, %v4361, %v4362
        %v4364 = vrot.slane %v4276, 5
        %v4365 = vrot.slane %v4364, 4
        %v4366 = vrot.slane %v3559, 5
        %v4367 = vsel %vm1225, %v4365, %v4366
        %v4368 = vrot.slane %v4366, 4
        %v4369 = vrot.slane %v3560, 5
        %v4370 = vsel %vm1225, %v4368, %v4369
        %v4371 = vrot.slane %v4277, 5
        %v4372 = vrot.slane %v4371, 4
        %v4373 = vrot.slane %v3562, 5
        %v4374 = vsel %vm1225, %v4372, %v4373
        %v4375 = vrot.slane %v4373, 4
        %v4376 = vrot.slane %v3563, 5
        %v4377 = vsel %vm1225, %v4375, %v4376
        %v4378 = vrot.slane %v4278, 5
        %v4379 = vrot.slane %v4378, 4
        %v4380 = vrot.slane %v3565, 5
        %v4381 = vsel %vm1225, %v4379, %v4380
        %v4382 = vrot.slane %v4380, 4
        %v4383 = vrot.slane %v3566, 5
        %v4384 = vsel %vm1225, %v4382, %v4383
        %v4385 = vrot.slane %v4279, 5
        %v4386 = vrot.slane %v4385, 4
        %v4387 = vrot.slane %v3568, 5
        %v4388 = vsel %vm1225, %v4386, %v4387
        %v4389 = vrot.slane %v4387, 4
        %v4390 = vrot.slane %v3569, 5
        %v4391 = vsel %vm1225, %v4389, %v4390
        %v4392 = vrot.slane %v4280, 5
        %v4393 = vrot.slane %v4392, 4
        %v4394 = vrot.slane %v3571, 5
        %v4395 = vsel %vm1225, %v4393, %v4394
        %v4396 = vrot.slane %v4394, 4
        %v4397 = vrot.slane %v3572, 5
        %v4398 = vsel %vm1225, %v4396, %v4397
        %v4399 = vrot.slane %v4281, 5
        %v4400 = vrot.slane %v4399, 4
        %v4401 = vrot.slane %v3574, 5
        %v4402 = vsel %vm1225, %v4400, %v4401
        %v4403 = vrot.slane %v4401, 4
        %v4404 = vrot.slane %v3575, 5
        %v4405 = vsel %vm1225, %v4403, %v4404
        %v4406 = vrot.slane %v4282, 5
        %v4407 = vrot.slane %v4406, 4
        %v4408 = vrot.slane %v3577, 5
        %v4409 = vsel %vm1225, %v4407, %v4408
        %v4410 = vrot.slane %v4408, 4
        %v4411 = vrot.slane %v3578, 5
        %v4412 = vsel %vm1225, %v4410, %v4411
        %v4413 = vrot.slane %v4283, 5
        %v4414 = vrot.slane %v4413, 4
        %v4415 = vrot.slane %v3580, 5
        %v4416 = vsel %vm1225, %v4414, %v4415
        %v4417 = vrot.slane %v4415, 4
        %v4418 = vrot.slane %v3581, 5
        %v4419 = vsel %vm1225, %v4417, %v4418
        %v4420 = vrot.slane %v4284, 5
        %v4421 = vrot.slane %v4420, 4
        %v4422 = vrot.slane %v3583, 5
        %v4423 = vsel %vm1225, %v4421, %v4422
        %v4424 = vrot.slane %v4422, 4
        %v4425 = vrot.slane %v3584, 5
        %v4426 = vsel %vm1225, %v4424, %v4425
        %v4427 = vrot.slane %v4285, 5
        %v4428 = vrot.slane %v4427, 4
        %v4429 = vrot.slane %v3586, 5
        %v4430 = vsel %vm1225, %v4428, %v4429
        %v4431 = vrot.slane %v4429, 4
        %v4432 = vrot.slane %v3587, 5
        %v4433 = vsel %vm1225, %v4431, %v4432
        %v4434 = vrot.slane %v4286, 5
        %v4435 = vrot.slane %v4434, 4
        %v4436 = vrot.slane %v3589, 5
        %v4437 = vsel %vm1225, %v4435, %v4436
        %v4438 = vrot.slane %v4436, 4
        %v4439 = vrot.slane %v3590, 5
        %v4440 = vsel %vm1225, %v4438, %v4439
        %v4441 = vrot.slane %v4287, 5
        %v4442 = vrot.slane %v4441, 4
        %v4443 = vrot.slane %v3592, 5
        %v4444 = vsel %vm1225, %v4442, %v4443
        %v4445 = vrot.slane %v4443, 4
        %v4446 = vrot.slane %v3593, 5
        %v4447 = vsel %vm1225, %v4445, %v4446
        %s4448 = scalar_lea.vmem %s1, 32
        %v4449 = vld [vmem:[%s4448] sm:$0xf]
        %v4450 = vunpack.c.l.b16 %v4339
        %v4451 = vunpack.c.l.b16 %v4342
        %v4452 = vunpack.c.l.b16 %v4346
        %v4453 = vunpack.c.l.b16 %v4349
        %v4454 = vunpack.c.l.b16 %v4353
        %v4455 = vunpack.c.l.b16 %v4356
        %v4456 = vunpack.c.l.b16 %v4360
        %v4457 = vunpack.c.l.b16 %v4363
        %v4458 = vunpack.c.l.b16 %v4367
        %v4459 = vunpack.c.l.b16 %v4370
        %v4460 = vunpack.c.l.b16 %v4374
        %v4461 = vunpack.c.l.b16 %v4377
        %v4462 = vunpack.c.l.b16 %v4381
        %v4463 = vunpack.c.l.b16 %v4384
        %v4464 = vunpack.c.l.b16 %v4388
        %v4465 = vunpack.c.l.b16 %v4391
        %v4466 = vunpack.c.l.b16 %v4395
        %v4467 = vunpack.c.l.b16 %v4398
        %v4468 = vunpack.c.l.b16 %v4402
        %v4469 = vunpack.c.l.b16 %v4405
        %v4470 = vunpack.c.l.b16 %v4409
        %v4471 = vunpack.c.l.b16 %v4412
        %v4472 = vunpack.c.l.b16 %v4416
        %v4473 = vunpack.c.l.b16 %v4419
        %v4474 = vunpack.c.l.b16 %v4423
        %v4475 = vunpack.c.l.b16 %v4426
        %v4476 = vunpack.c.l.b16 %v4430
        %v4477 = vunpack.c.l.b16 %v4433
        %v4478 = vunpack.c.l.b16 %v4437
        %v4479 = vunpack.c.l.b16 %v4440
        %v4480 = vunpack.c.l.b16 %v4444
        %v4481 = vunpack.c.l.b16 %v4447
        %v4482 = vpack.c.b16 %v4451, %v4450
        %v4483 = vpack.c.b16 %v4453, %v4452
        %v4484 = vpack.c.b16 %v4455, %v4454
        %v4485 = vpack.c.b16 %v4457, %v4456
        %v4486 = vpack.c.b16 %v4459, %v4458
        %v4487 = vpack.c.b16 %v4461, %v4460
        %v4488 = vpack.c.b16 %v4463, %v4462
        %v4489 = vpack.c.b16 %v4465, %v4464
        %v4490 = vpack.c.b16 %v4467, %v4466
        %v4491 = vpack.c.b16 %v4469, %v4468
        %v4492 = vpack.c.b16 %v4471, %v4470
        %v4493 = vpack.c.b16 %v4473, %v4472
        %v4494 = vpack.c.b16 %v4475, %v4474
        %v4495 = vpack.c.b16 %v4477, %v4476
        %v4496 = vpack.c.b16 %v4479, %v4478
        %v4497 = vpack.c.b16 %v4481, %v4480
        %v4499 = vsel %vm669, %v4482, 0
        %v4502 = vsel %vm669, %v4483, 0
        %v4505 = vsel %vm669, %v4484, 0
        %v4508 = vsel %vm669, %v4485, 0
        %v4511 = vsel %vm669, %v4486, 0
        %v4514 = vsel %vm669, %v4487, 0
        %v4517 = vsel %vm669, %v4488, 0
        %v4520 = vsel %vm669, %v4489, 0
        %v4523 = vsel %vm669, %v4490, 0
        %v4526 = vsel %vm669, %v4491, 0
        %v4529 = vsel %vm669, %v4492, 0
        %v4532 = vsel %vm669, %v4493, 0
        %v4535 = vsel %vm669, %v4494, 0
        %v4538 = vsel %vm669, %v4495, 0
        %v4541 = vsel %vm669, %v4496, 0
        %v4544 = vsel %vm669, %v4497, 0
        %v4547 = vsel %vm718, %v4449, 0
        %4549 = vmatprep.subr.bf16.mxu0 0
        %4550 = vmatpush1.bf16.msra.mxu0 0
        %4551 = vmatprep.subr.bf16.mxu0 0
        %4552 = vmatpush1.bf16.msra.mxu0 0
        %4553 = vmatprep.subr.bf16.mxu0 0
        %4554 = vmatpush1.bf16.msra.mxu0 0
        %4555 = vmatprep.subr.bf16.mxu0 0
        %4556 = vmatpush1.bf16.msra.mxu0 0
        %4557 = vmatprep.subr.bf16.mxu0 0
        %4558 = vmatpush1.bf16.msra.mxu0 0
        %4559 = vmatprep.subr.bf16.mxu0 0
        %4560 = vmatpush1.bf16.msra.mxu0 0
        %4561 = vmatprep.subr.bf16.mxu0 0
        %4562 = vmatpush1.bf16.msra.mxu0 0
        %4563 = vmatprep.subr.bf16.mxu0 0
        %4564 = vmatpush1.bf16.msra.mxu0 %v4547
        %4565 = vmatprep.subr.bf16.mxu0 0
        %4566 = vmatpush2.bf16.msra.mxu0 0
        %4567 = vmatprep.subr.bf16.mxu0 0
        %4568 = vmatpush2.bf16.msra.mxu0 0
        %4569 = vmatprep.subr.bf16.mxu0 0
        %4570 = vmatpush2.bf16.msra.mxu0 0
        %4571 = vmatprep.subr.bf16.mxu0 0
        %4572 = vmatpush2.bf16.msra.mxu0 0
        %4573 = vmatprep.subr.bf16.mxu0 0
        %4574 = vmatpush2.bf16.msra.mxu0 0
        %4575 = vmatprep.subr.bf16.mxu0 0
        %4576 = vmatpush2.bf16.msra.mxu0 0
        %4577 = vmatprep.subr.bf16.mxu0 0
        %4578 = vmatpush2.bf16.msra.mxu0 0
        %4579 = vmatprep.subr.bf16.mxu0 0
        %4580 = vmatpush2.bf16.msra.mxu0 0
        %4581 = vmatprep.mubr.bf16.mxu0 0
        %4582 = vmatmul.mubr.bf16.gmra.mxu0 %v4499
        %v4583 = vpop.f32.mrf.mxu0
        %v4584 = vadd.f32 0.0, %v4583
        %v4585 = vpop.f32.mrf.mxu0
        %v4586 = vpop.f32.mrf.mxu0
        %v4587 = vadd.f32 0.0, %v4586
        %v4588 = vpop.f32.mrf.mxu0
        %4589 = vmatprep.mubr.bf16.mxu0 0
        %4590 = vmatmul.mubr.bf16.gmra.mxu0 %v4502
        %v4591 = vpop.f32.mrf.mxu0
        %v4592 = vadd.f32 0.0, %v4591
        %v4593 = vpop.f32.mrf.mxu0
        %v4594 = vpop.f32.mrf.mxu0
        %v4595 = vadd.f32 0.0, %v4594
        %v4596 = vpop.f32.mrf.mxu0
        %4597 = vmatprep.mubr.bf16.mxu0 0
        %4598 = vmatmul.mubr.bf16.gmra.mxu0 %v4505
        %v4599 = vpop.f32.mrf.mxu0
        %v4600 = vadd.f32 0.0, %v4599
        %v4601 = vpop.f32.mrf.mxu0
        %v4602 = vpop.f32.mrf.mxu0
        %v4603 = vadd.f32 0.0, %v4602
        %v4604 = vpop.f32.mrf.mxu0
        %4605 = vmatprep.mubr.bf16.mxu0 0
        %4606 = vmatmul.mubr.bf16.gmra.mxu0 %v4508
        %v4607 = vpop.f32.mrf.mxu0
        %v4608 = vadd.f32 0.0, %v4607
        %v4609 = vpop.f32.mrf.mxu0
        %v4610 = vpop.f32.mrf.mxu0
        %v4611 = vadd.f32 0.0, %v4610
        %v4612 = vpop.f32.mrf.mxu0
        %4613 = vmatprep.mubr.bf16.mxu0 0
        %4614 = vmatmul.mubr.bf16.gmra.mxu0 %v4511
        %v4615 = vpop.f32.mrf.mxu0
        %v4616 = vadd.f32 0.0, %v4615
        %v4617 = vpop.f32.mrf.mxu0
        %v4618 = vpop.f32.mrf.mxu0
        %v4619 = vadd.f32 0.0, %v4618
        %v4620 = vpop.f32.mrf.mxu0
        %4621 = vmatprep.mubr.bf16.mxu0 0
        %4622 = vmatmul.mubr.bf16.gmra.mxu0 %v4514
        %v4623 = vpop.f32.mrf.mxu0
        %v4624 = vadd.f32 0.0, %v4623
        %v4625 = vpop.f32.mrf.mxu0
        %v4626 = vpop.f32.mrf.mxu0
        %v4627 = vadd.f32 0.0, %v4626
        %v4628 = vpop.f32.mrf.mxu0
        %4629 = vmatprep.mubr.bf16.mxu0 0
        %4630 = vmatmul.mubr.bf16.gmra.mxu0 %v4517
        %v4631 = vpop.f32.mrf.mxu0
        %v4632 = vadd.f32 0.0, %v4631
        %v4633 = vpop.f32.mrf.mxu0
        %v4634 = vpop.f32.mrf.mxu0
        %v4635 = vadd.f32 0.0, %v4634
        %v4636 = vpop.f32.mrf.mxu0
        %4637 = vmatprep.mubr.bf16.mxu0 0
        %4638 = vmatmul.mubr.bf16.gmra.mxu0 %v4520
        %v4639 = vpop.f32.mrf.mxu0
        %v4640 = vadd.f32 0.0, %v4639
        %v4641 = vpop.f32.mrf.mxu0
        %v4642 = vpop.f32.mrf.mxu0
        %v4643 = vadd.f32 0.0, %v4642
        %v4644 = vpop.f32.mrf.mxu0
        %4645 = vmatprep.mubr.bf16.mxu0 0
        %4646 = vmatmul.mubr.bf16.gmra.mxu0 %v4523
        %v4647 = vpop.f32.mrf.mxu0
        %v4648 = vadd.f32 0.0, %v4647
        %v4649 = vpop.f32.mrf.mxu0
        %v4650 = vpop.f32.mrf.mxu0
        %v4651 = vadd.f32 0.0, %v4650
        %v4652 = vpop.f32.mrf.mxu0
        %4653 = vmatprep.mubr.bf16.mxu0 0
        %4654 = vmatmul.mubr.bf16.gmra.mxu0 %v4526
        %v4655 = vpop.f32.mrf.mxu0
        %v4656 = vadd.f32 0.0, %v4655
        %v4657 = vpop.f32.mrf.mxu0
        %v4658 = vpop.f32.mrf.mxu0
        %v4659 = vadd.f32 0.0, %v4658
        %v4660 = vpop.f32.mrf.mxu0
        %4661 = vmatprep.mubr.bf16.mxu0 0
        %4662 = vmatmul.mubr.bf16.gmra.mxu0 %v4529
        %v4663 = vpop.f32.mrf.mxu0
        %v4664 = vadd.f32 0.0, %v4663
        %v4665 = vpop.f32.mrf.mxu0
        %v4666 = vpop.f32.mrf.mxu0
        %v4667 = vadd.f32 0.0, %v4666
        %v4668 = vpop.f32.mrf.mxu0
        %4669 = vmatprep.mubr.bf16.mxu0 0
        %4670 = vmatmul.mubr.bf16.gmra.mxu0 %v4532
        %v4671 = vpop.f32.mrf.mxu0
        %v4672 = vadd.f32 0.0, %v4671
        %v4673 = vpop.f32.mrf.mxu0
        %v4674 = vpop.f32.mrf.mxu0
        %v4675 = vadd.f32 0.0, %v4674
        %v4676 = vpop.f32.mrf.mxu0
        %4677 = vmatprep.mubr.bf16.mxu0 0
        %4678 = vmatmul.mubr.bf16.gmra.mxu0 %v4535
        %v4679 = vpop.f32.mrf.mxu0
        %v4680 = vadd.f32 0.0, %v4679
        %v4681 = vpop.f32.mrf.mxu0
        %v4682 = vpop.f32.mrf.mxu0
        %v4683 = vadd.f32 0.0, %v4682
        %v4684 = vpop.f32.mrf.mxu0
        %4685 = vmatprep.mubr.bf16.mxu0 0
        %4686 = vmatmul.mubr.bf16.gmra.mxu0 %v4538
        %v4687 = vpop.f32.mrf.mxu0
        %v4688 = vadd.f32 0.0, %v4687
        %v4689 = vpop.f32.mrf.mxu0
        %v4690 = vpop.f32.mrf.mxu0
        %v4691 = vadd.f32 0.0, %v4690
        %v4692 = vpop.f32.mrf.mxu0
        %4693 = vmatprep.mubr.bf16.mxu0 0
        %4694 = vmatmul.mubr.bf16.gmra.mxu0 %v4541
        %v4695 = vpop.f32.mrf.mxu0
        %v4696 = vadd.f32 0.0, %v4695
        %v4697 = vpop.f32.mrf.mxu0
        %v4698 = vpop.f32.mrf.mxu0
        %v4699 = vadd.f32 0.0, %v4698
        %v4700 = vpop.f32.mrf.mxu0
        %4701 = vmatprep.mubr.bf16.mxu0 0
        %4702 = vmatmul.mubr.bf16.gmra.mxu0 %v4544
        %v4703 = vpop.f32.mrf.mxu0
        %v4704 = vadd.f32 0.0, %v4703
        %v4705 = vpop.f32.mrf.mxu0
        %v4706 = vpop.f32.mrf.mxu0
        %v4707 = vadd.f32 0.0, %v4706
        %v4708 = vpop.f32.mrf.mxu0
        %4709 = vdwg.mxu0
        %v4710 = vadd.f32 %v4240, %v4584
        %v4711 = vadd.f32 %v4241, %v4587
        %v4712 = vadd.f32 %v4242, %v4592
        %v4713 = vadd.f32 %v4243, %v4595
        %v4714 = vadd.f32 %v4244, %v4600
        %v4715 = vadd.f32 %v4245, %v4603
        %v4716 = vadd.f32 %v4246, %v4608
        %v4717 = vadd.f32 %v4247, %v4611
        %v4718 = vadd.f32 %v4248, %v4616
        %v4719 = vadd.f32 %v4249, %v4619
        %v4720 = vadd.f32 %v4250, %v4624
        %v4721 = vadd.f32 %v4251, %v4627
        %v4722 = vadd.f32 %v4252, %v4632
        %v4723 = vadd.f32 %v4253, %v4635
        %v4724 = vadd.f32 %v4254, %v4640
        %v4725 = vadd.f32 %v4255, %v4643
        %v4726 = vadd.f32 %v4256, %v4648
        %v4727 = vadd.f32 %v4257, %v4651
        %v4728 = vadd.f32 %v4258, %v4656
        %v4729 = vadd.f32 %v4259, %v4659
        %v4730 = vadd.f32 %v4260, %v4664
        %v4731 = vadd.f32 %v4261, %v4667
        %v4732 = vadd.f32 %v4262, %v4672
        %v4733 = vadd.f32 %v4263, %v4675
        %v4734 = vadd.f32 %v4264, %v4680
        %v4735 = vadd.f32 %v4265, %v4683
        %v4736 = vadd.f32 %v4266, %v4688
        %v4737 = vadd.f32 %v4267, %v4691
        %v4738 = vadd.f32 %v4268, %v4696
        %v4739 = vadd.f32 %v4269, %v4699
        %v4740 = vadd.f32 %v4270, %v4704
        %v4741 = vadd.f32 %v4271, %v4707
        %4742 = vst [vmem:[%s163] sm:$0xff] %v4710
        %4743 = vst [vmem:[%s163 + $0x8] sm:$0xff] %v4711
        %4744 = vst [vmem:[%s163 + $0x10] sm:$0xff] %v4712
        %4745 = vst [vmem:[%s163 + $0x18] sm:$0xff] %v4713
        %4746 = vst [vmem:[%s163 + $0x20] sm:$0xff] %v4714
        %4747 = vst [vmem:[%s163 + $0x28] sm:$0xff] %v4715
        %4748 = vst [vmem:[%s163 + $0x30] sm:$0xff] %v4716
        %4749 = vst [vmem:[%s163 + $0x38] sm:$0xff] %v4717
        %4750 = vst [vmem:[%s163 + $0x40] sm:$0xff] %v4718
        %4751 = vst [vmem:[%s163 + $0x48] sm:$0xff] %v4719
        %4752 = vst [vmem:[%s163 + $0x50] sm:$0xff] %v4720
        %4753 = vst [vmem:[%s163 + $0x58] sm:$0xff] %v4721
        %4754 = vst [vmem:[%s163 + $0x60] sm:$0xff] %v4722
        %4755 = vst [vmem:[%s163 + $0x68] sm:$0xff] %v4723
        %4756 = vst [vmem:[%s163 + $0x70] sm:$0xff] %v4724
        %4757 = vst [vmem:[%s163 + $0x78] sm:$0xff] %v4725
        %4758 = vst [vmem:[%s163 + $0x80] sm:$0xff] %v4726
        %4759 = vst [vmem:[%s163 + $0x88] sm:$0xff] %v4727
        %4760 = vst [vmem:[%s163 + $0x90] sm:$0xff] %v4728
        %4761 = vst [vmem:[%s163 + $0x98] sm:$0xff] %v4729
        %4762 = vst [vmem:[%s163 + $0xa0] sm:$0xff] %v4730
        %4763 = vst [vmem:[%s163 + $0xa8] sm:$0xff] %v4731
        %4764 = vst [vmem:[%s163 + $0xb0] sm:$0xff] %v4732
        %4765 = vst [vmem:[%s163 + $0xb8] sm:$0xff] %v4733
        %4766 = vst [vmem:[%s163 + $0xc0] sm:$0xff] %v4734
        %4767 = vst [vmem:[%s163 + $0xc8] sm:$0xff] %v4735
        %4768 = vst [vmem:[%s163 + $0xd0] sm:$0xff] %v4736
        %4769 = vst [vmem:[%s163 + $0xd8] sm:$0xff] %v4737
        %4770 = vst [vmem:[%s163 + $0xe0] sm:$0xff] %v4738
        %4771 = vst [vmem:[%s163 + $0xe8] sm:$0xff] %v4739
        %4772 = vst [vmem:[%s163 + $0xf0] sm:$0xff] %v4740
        %4773 = vst [vmem:[%s163 + $0xf8] sm:$0xff] %v4741
        %4774 = vmatprep.subr.mxu0 0.0
        %4775 = vmatpush1.msra.mxu0 %v4725
        %4776 = vmatprep.subr.mxu0 0.0
        %4777 = vmatpush1.msra.mxu0 %v4724
        %4778 = vmatprep.subr.mxu0 0.0
        %4779 = vmatpush1.msra.mxu0 %v4723
        %4780 = vmatprep.subr.mxu0 0.0
        %4781 = vmatpush1.msra.mxu0 %v4722
        %4782 = vmatprep.subr.mxu0 0.0
        %4783 = vmatpush1.msra.mxu0 %v4721
        %4784 = vmatprep.subr.mxu0 0.0
        %4785 = vmatpush1.msra.mxu0 %v4720
        %4786 = vmatprep.subr.mxu0 0.0
        %4787 = vmatpush1.msra.mxu0 %v4719
        %4788 = vmatprep.subr.mxu0 0.0
        %4789 = vmatpush1.msra.mxu0 %v4718
        %4790 = vmatprep.subr.mxu0 0.0
        %4791 = vmatpush1.msra.mxu0 %v4717
        %4792 = vmatprep.subr.mxu0 0.0
        %4793 = vmatpush1.msra.mxu0 %v4716
        %4794 = vmatprep.subr.mxu0 0.0
        %4795 = vmatpush1.msra.mxu0 %v4715
        %4796 = vmatprep.subr.mxu0 0.0
        %4797 = vmatpush1.msra.mxu0 %v4714
        %4798 = vmatprep.subr.mxu0 0.0
        %4799 = vmatpush1.msra.mxu0 %v4713
        %4800 = vmatprep.subr.mxu0 0.0
        %4801 = vmatpush1.msra.mxu0 %v4712
        %4802 = vmatprep.subr.mxu0 0.0
        %4803 = vmatpush1.msra.mxu0 %v4711
        %4804 = vmatprep.subr.mxu0 0.0
        %4805 = vmatpush1.msra.mxu0 %v4710
        %4806 = vmatprep.subr.mxu0 0.0
        %4807 = vmatpush2.msra.mxu0 %v4741
        %4808 = vmatprep.subr.mxu0 0.0
        %4809 = vmatpush2.msra.mxu0 %v4740
        %4810 = vmatprep.subr.mxu0 0.0
        %4811 = vmatpush2.msra.mxu0 %v4739
        %4812 = vmatprep.subr.mxu0 0.0
        %4813 = vmatpush2.msra.mxu0 %v4738
        %4814 = vmatprep.subr.mxu0 0.0
        %4815 = vmatpush2.msra.mxu0 %v4737
        %4816 = vmatprep.subr.mxu0 0.0
        %4817 = vmatpush2.msra.mxu0 %v4736
        %4818 = vmatprep.subr.mxu0 0.0
        %4819 = vmatpush2.msra.mxu0 %v4735
        %4820 = vmatprep.subr.mxu0 0.0
        %4821 = vmatpush2.msra.mxu0 %v4734
        %4822 = vmatprep.subr.mxu0 0.0
        %4823 = vmatpush2.msra.mxu0 %v4733
        %4824 = vmatprep.subr.mxu0 0.0
        %4825 = vmatpush2.msra.mxu0 %v4732
        %4826 = vmatprep.subr.mxu0 0.0
        %4827 = vmatpush2.msra.mxu0 %v4731
        %4828 = vmatprep.subr.mxu0 0.0
        %4829 = vmatpush2.msra.mxu0 %v4730
        %4830 = vmatprep.subr.mxu0 0.0
        %4831 = vmatpush2.msra.mxu0 %v4729
        %4832 = vmatprep.subr.mxu0 0.0
        %4833 = vmatpush2.msra.mxu0 %v4728
        %4834 = vmatprep.subr.mxu0 0.0
        %4835 = vmatpush2.msra.mxu0 %v4727
        %4836 = vmatprep.subr.mxu0 0.0
        %4837 = vmatpush2.msra.mxu0 %v4726
        %4838 = vmatprep.mubr.f32.mxu0 1.0
        %4839 = vmatmul.mubr.f32.gmra.mxu0 1.0
        %v4840 = vpop.f32.mrf.mxu0
        %v4841 = vadd.f32 0.0, %v4840
        %v4842 = vpop.f32.mrf.mxu0
        %4843 = vdwg.mxu0
        %4844 = vst [vmem:[%s181] sm:$0x1] %v4841
        %v4845 = vmul.f32 %v4710, %v4710
        %v4846 = vmul.f32 %v4711, %v4711
        %v4847 = vmul.f32 %v4712, %v4712
        %v4848 = vmul.f32 %v4713, %v4713
        %v4849 = vmul.f32 %v4714, %v4714
        %v4850 = vmul.f32 %v4715, %v4715
        %v4851 = vmul.f32 %v4716, %v4716
        %v4852 = vmul.f32 %v4717, %v4717
        %v4853 = vmul.f32 %v4718, %v4718
        %v4854 = vmul.f32 %v4719, %v4719
        %v4855 = vmul.f32 %v4720, %v4720
        %v4856 = vmul.f32 %v4721, %v4721
        %v4857 = vmul.f32 %v4722, %v4722
        %v4858 = vmul.f32 %v4723, %v4723
        %v4859 = vmul.f32 %v4724, %v4724
        %v4860 = vmul.f32 %v4725, %v4725
        %v4861 = vmul.f32 %v4726, %v4726
        %v4862 = vmul.f32 %v4727, %v4727
        %v4863 = vmul.f32 %v4728, %v4728
        %v4864 = vmul.f32 %v4729, %v4729
        %v4865 = vmul.f32 %v4730, %v4730
        %v4866 = vmul.f32 %v4731, %v4731
        %v4867 = vmul.f32 %v4732, %v4732
        %v4868 = vmul.f32 %v4733, %v4733
        %v4869 = vmul.f32 %v4734, %v4734
        %v4870 = vmul.f32 %v4735, %v4735
        %v4871 = vmul.f32 %v4736, %v4736
        %v4872 = vmul.f32 %v4737, %v4737
        %v4873 = vmul.f32 %v4738, %v4738
        %v4874 = vmul.f32 %v4739, %v4739
        %v4875 = vmul.f32 %v4740, %v4740
        %v4876 = vmul.f32 %v4741, %v4741
        %4877 = vmatprep.subr.mxu0 0.0
        %4878 = vmatpush1.msra.mxu0 %v4860
        %4879 = vmatprep.subr.mxu0 0.0
        %4880 = vmatpush1.msra.mxu0 %v4859
        %4881 = vmatprep.subr.mxu0 0.0
        %4882 = vmatpush1.msra.mxu0 %v4858
        %4883 = vmatprep.subr.mxu0 0.0
        %4884 = vmatpush1.msra.mxu0 %v4857
        %4885 = vmatprep.subr.mxu0 0.0
        %4886 = vmatpush1.msra.mxu0 %v4856
        %4887 = vmatprep.subr.mxu0 0.0
        %4888 = vmatpush1.msra.mxu0 %v4855
        %4889 = vmatprep.subr.mxu0 0.0
        %4890 = vmatpush1.msra.mxu0 %v4854
        %4891 = vmatprep.subr.mxu0 0.0
        %4892 = vmatpush1.msra.mxu0 %v4853
        %4893 = vmatprep.subr.mxu0 0.0
        %4894 = vmatpush1.msra.mxu0 %v4852
        %4895 = vmatprep.subr.mxu0 0.0
        %4896 = vmatpush1.msra.mxu0 %v4851
        %4897 = vmatprep.subr.mxu0 0.0
        %4898 = vmatpush1.msra.mxu0 %v4850
        %4899 = vmatprep.subr.mxu0 0.0
        %4900 = vmatpush1.msra.mxu0 %v4849
        %4901 = vmatprep.subr.mxu0 0.0
        %4902 = vmatpush1.msra.mxu0 %v4848
        %4903 = vmatprep.subr.mxu0 0.0
        %4904 = vmatpush1.msra.mxu0 %v4847
        %4905 = vmatprep.subr.mxu0 0.0
        %4906 = vmatpush1.msra.mxu0 %v4846
        %4907 = vmatprep.subr.mxu0 0.0
        %4908 = vmatpush1.msra.mxu0 %v4845
        %4909 = vmatprep.subr.mxu0 0.0
        %4910 = vmatpush2.msra.mxu0 %v4876
        %4911 = vmatprep.subr.mxu0 0.0
        %4912 = vmatpush2.msra.mxu0 %v4875
        %4913 = vmatprep.subr.mxu0 0.0
        %4914 = vmatpush2.msra.mxu0 %v4874
        %4915 = vmatprep.subr.mxu0 0.0
        %4916 = vmatpush2.msra.mxu0 %v4873
        %4917 = vmatprep.subr.mxu0 0.0
        %4918 = vmatpush2.msra.mxu0 %v4872
        %4919 = vmatprep.subr.mxu0 0.0
        %4920 = vmatpush2.msra.mxu0 %v4871
        %4921 = vmatprep.subr.mxu0 0.0
        %4922 = vmatpush2.msra.mxu0 %v4870
        %4923 = vmatprep.subr.mxu0 0.0
        %4924 = vmatpush2.msra.mxu0 %v4869
        %4925 = vmatprep.subr.mxu0 0.0
        %4926 = vmatpush2.msra.mxu0 %v4868
        %4927 = vmatprep.subr.mxu0 0.0
        %4928 = vmatpush2.msra.mxu0 %v4867
        %4929 = vmatprep.subr.mxu0 0.0
        %4930 = vmatpush2.msra.mxu0 %v4866
        %4931 = vmatprep.subr.mxu0 0.0
        %4932 = vmatpush2.msra.mxu0 %v4865
        %4933 = vmatprep.subr.mxu0 0.0
        %4934 = vmatpush2.msra.mxu0 %v4864
        %4935 = vmatprep.subr.mxu0 0.0
        %4936 = vmatpush2.msra.mxu0 %v4863
        %4937 = vmatprep.subr.mxu0 0.0
        %4938 = vmatpush2.msra.mxu0 %v4862
        %4939 = vmatprep.subr.mxu0 0.0
        %4940 = vmatpush2.msra.mxu0 %v4861
        %4941 = vmatprep.mubr.f32.mxu0 1.0
        %4942 = vmatmul.mubr.f32.gmra.mxu0 1.0
        %v4943 = vpop.f32.mrf.mxu0
        %v4944 = vadd.f32 0.0, %v4943
        %v4945 = vpop.f32.mrf.mxu0
        %4946 = vdwg.mxu0
        %4947 = vst [vmem:[%s181 + $0x1] sm:$0x1] %v4944
        %s4948 = sand.u32 %s70, 1
        %s4949 = sand.u32 %s70, 1
        %s4950 = smul.addr %s4949, 256
        %s4951 = scalar_lea.vmem [#allocation2], %s4950
        %p4952 = scmp.lt.s32.totalorder %s15, 1
        %s4953 = scalar_select %p4952, %s15, 1
        %s4954 = smul.addr %s4953, 2
        %s4955 = scalar_lea.vmem %s3, %s4954
        // Predicated region
        $region29: #{double_conv.4} parent=27 // pred_check
          %p4956 = pneg %p80
        $region30: #{double_conv.4} parent=27 // pred_check_branch
          %4958 = sbr.rel (%p4956) target = $region32
        $region31: #{double_conv.4} parent=27 // pred_region
          %s4959 = smul.u32 8, %s15
          %s4960 = smul.addr %s4959, 2
          %s4961 = smul.addr %s4960, 8
          %s4962 = scalar_lea.vmem %s2, %s4961
          // Predicated region
          $region33: #{double_conv.4} parent=31 // pred_check
            _
          $region34: #{double_conv.4} parent=31 // pred_check_branch
            %4964 = sbr.rel (0) target = $region36
          $region35: #{double_conv.4} parent=31 // pred_region
            // Predicated region
            $region37: #{double_conv.4} parent=35 // pred_check
              _
            $region38: #{double_conv.4} parent=35 // pred_check_branch
              %4966 = sbr.rel (0) target = $region40
            $region39: #{double_conv.4} parent=35 // pred_region
              // Predicated region
              $region52: #{double_conv.4} parent=39 // pred_check
                _
              $region53: #{double_conv.4} parent=39 // pred_check_branch
                %5044 = sbr.rel (0) target = $region55
              $region54: #{double_conv.4} parent=39 // pred_region
                loop: start=0, step=1, limit=1
                $region56: #{double_conv.4} parent=54 // loop_pre_header
                  _
                $region57: #{double_conv.4} parent=54 // loop_header
                  %s5046 = sphi 0, %s5050
                  %p5047 = scmp.ge.s32.totalorder %s5046, 1
                  %s5051 = sphi %s4951, %s4951
                  %s5052 = sphi %s4962, %s4962
                $region58: #{double_conv.4} parent=54 // loop_header_branch
                  %5049 = sbr.rel (%p5047) target = $region62
                $region59: #{double_conv.4} parent=54 // loop_body
                  %v5053 = vld [vmem:[%s5051] sm:$0xff]
                  %5054 = vst [vmem:[%s5052] sm:$0xff] %v5053
                  %v5055 = vld [vmem:[%s5051 + $0x8] sm:$0xff]
                  %5056 = vst [vmem:[%s5052 + $0x8] sm:$0xff] %v5055
                  %v5057 = vld [vmem:[%s5051 + $0x10] sm:$0xff]
                  %5058 = vst [vmem:[%s5052 + $0x10] sm:$0xff] %v5057
                  %v5059 = vld [vmem:[%s5051 + $0x18] sm:$0xff]
                  %5060 = vst [vmem:[%s5052 + $0x18] sm:$0xff] %v5059
                  %v5061 = vld [vmem:[%s5051 + $0x20] sm:$0xff]
                  %5062 = vst [vmem:[%s5052 + $0x20] sm:$0xff] %v5061
                  %v5063 = vld [vmem:[%s5051 + $0x28] sm:$0xff]
                  %5064 = vst [vmem:[%s5052 + $0x28] sm:$0xff] %v5063
                  %v5065 = vld [vmem:[%s5051 + $0x30] sm:$0xff]
                  %5066 = vst [vmem:[%s5052 + $0x30] sm:$0xff] %v5065
                  %v5067 = vld [vmem:[%s5051 + $0x38] sm:$0xff]
                  %5068 = vst [vmem:[%s5052 + $0x38] sm:$0xff] %v5067
                  %v5069 = vld [vmem:[%s5051 + $0x40] sm:$0xff]
                  %5070 = vst [vmem:[%s5052 + $0x40] sm:$0xff] %v5069
                  %v5071 = vld [vmem:[%s5051 + $0x48] sm:$0xff]
                  %5072 = vst [vmem:[%s5052 + $0x48] sm:$0xff] %v5071
                  %v5073 = vld [vmem:[%s5051 + $0x50] sm:$0xff]
                  %5074 = vst [vmem:[%s5052 + $0x50] sm:$0xff] %v5073
                  %v5075 = vld [vmem:[%s5051 + $0x58] sm:$0xff]
                  %5076 = vst [vmem:[%s5052 + $0x58] sm:$0xff] %v5075
                  %v5077 = vld [vmem:[%s5051 + $0x60] sm:$0xff]
                  %5078 = vst [vmem:[%s5052 + $0x60] sm:$0xff] %v5077
                  %v5079 = vld [vmem:[%s5051 + $0x68] sm:$0xff]
                  %5080 = vst [vmem:[%s5052 + $0x68] sm:$0xff] %v5079
                  %v5081 = vld [vmem:[%s5051 + $0x70] sm:$0xff]
                  %5082 = vst [vmem:[%s5052 + $0x70] sm:$0xff] %v5081
                  %v5083 = vld [vmem:[%s5051 + $0x78] sm:$0xff]
                  %5084 = vst [vmem:[%s5052 + $0x78] sm:$0xff] %v5083
                  %v5085 = vld [vmem:[%s5051 + $0x80] sm:$0xff]
                  %5086 = vst [vmem:[%s5052 + $0x100] sm:$0xff] %v5085
                  %v5087 = vld [vmem:[%s5051 + $0x88] sm:$0xff]
                  %5088 = vst [vmem:[%s5052 + $0x108] sm:$0xff] %v5087
                  %v5089 = vld [vmem:[%s5051 + $0x90] sm:$0xff]
                  %5090 = vst [vmem:[%s5052 + $0x110] sm:$0xff] %v5089
                  %v5091 = vld [vmem:[%s5051 + $0x98] sm:$0xff]
                  %5092 = vst [vmem:[%s5052 + $0x118] sm:$0xff] %v5091
                  %v5093 = vld [vmem:[%s5051 + $0xa0] sm:$0xff]
                  %5094 = vst [vmem:[%s5052 + $0x120] sm:$0xff] %v5093
                  %v5095 = vld [vmem:[%s5051 + $0xa8] sm:$0xff]
                  %5096 = vst [vmem:[%s5052 + $0x128] sm:$0xff] %v5095
                  %v5097 = vld [vmem:[%s5051 + $0xb0] sm:$0xff]
                  %5098 = vst [vmem:[%s5052 + $0x130] sm:$0xff] %v5097
                  %v5099 = vld [vmem:[%s5051 + $0xb8] sm:$0xff]
                  %5100 = vst [vmem:[%s5052 + $0x138] sm:$0xff] %v5099
                  %v5101 = vld [vmem:[%s5051 + $0xc0] sm:$0xff]
                  %5102 = vst [vmem:[%s5052 + $0x140] sm:$0xff] %v5101
                  %v5103 = vld [vmem:[%s5051 + $0xc8] sm:$0xff]
                  %5104 = vst [vmem:[%s5052 + $0x148] sm:$0xff] %v5103
                  %v5105 = vld [vmem:[%s5051 + $0xd0] sm:$0xff]
                  %5106 = vst [vmem:[%s5052 + $0x150] sm:$0xff] %v5105
                  %v5107 = vld [vmem:[%s5051 + $0xd8] sm:$0xff]
                  %5108 = vst [vmem:[%s5052 + $0x158] sm:$0xff] %v5107
                  %v5109 = vld [vmem:[%s5051 + $0xe0] sm:$0xff]
                  %5110 = vst [vmem:[%s5052 + $0x160] sm:$0xff] %v5109
                  %v5111 = vld [vmem:[%s5051 + $0xe8] sm:$0xff]
                  %5112 = vst [vmem:[%s5052 + $0x168] sm:$0xff] %v5111
                  %v5113 = vld [vmem:[%s5051 + $0xf0] sm:$0xff]
                  %5114 = vst [vmem:[%s5052 + $0x170] sm:$0xff] %v5113
                  %v5115 = vld [vmem:[%s5051 + $0xf8] sm:$0xff]
                  %5116 = vst [vmem:[%s5052 + $0x178] sm:$0xff] %v5115
                $region60: #{double_conv.4} parent=54 // loop_footer
                  %s5050 = sadd.s32 1, %s5046
                $region61: #{double_conv.4} parent=54 // loop_footer_branch
                  %5045 = sbr.rel target = $region57
                $region62: #{double_conv.4} parent=54 // loop_exit
                  _
              $region55: #{double_conv.4} parent=39 // pred_fallthru
                _
              // Predicated region
              $region63: #{double_conv.4} parent=39 // pred_check
                _
              $region64: #{double_conv.4} parent=39 // pred_check_branch
                %5118 = sbr.rel target = $region66
              $region65: #{double_conv.4} parent=39 // pred_region
                _
              $region66: #{double_conv.4} parent=39 // pred_fallthru
                _
            $region40: #{double_conv.4} parent=35 // pred_fallthru
              _
            // Predicated region
            $region41: #{double_conv.4} parent=35 // pred_check
              _
            $region42: #{double_conv.4} parent=35 // pred_check_branch
              %4968 = sbr.rel target = $region44
            $region43: #{double_conv.4} parent=35 // pred_region
              %s4970 = ssub.s32 256, 1
              loop: start=0, step=1, limit=1
              $region45: #{double_conv.4} parent=43 // loop_pre_header
                _
              $region46: #{double_conv.4} parent=43 // loop_header
                %s4972 = sphi 0, %s4976
                %p4973 = scmp.ge.s32.totalorder %s4972, 1
                %s4977 = sphi %s4951, %s4951
                %s4978 = sphi %s4962, %s4962
              $region47: #{double_conv.4} parent=43 // loop_header_branch
                %4975 = sbr.rel (%p4973) target = $region51
              $region48: #{double_conv.4} parent=43 // loop_body
                %v4979 = vld [vmem:[%s4977] sm:%s4970]
                %4980 = vst [vmem:[%s4978] sm:%s4970] %v4979
                %v4981 = vld [vmem:[%s4977 + $0x8] sm:%s4970]
                %4982 = vst [vmem:[%s4978 + $0x8] sm:%s4970] %v4981
                %v4983 = vld [vmem:[%s4977 + $0x10] sm:%s4970]
                %4984 = vst [vmem:[%s4978 + $0x10] sm:%s4970] %v4983
                %v4985 = vld [vmem:[%s4977 + $0x18] sm:%s4970]
                %4986 = vst [vmem:[%s4978 + $0x18] sm:%s4970] %v4985
                %v4987 = vld [vmem:[%s4977 + $0x20] sm:%s4970]
                %4988 = vst [vmem:[%s4978 + $0x20] sm:%s4970] %v4987
                %v4989 = vld [vmem:[%s4977 + $0x28] sm:%s4970]
                %4990 = vst [vmem:[%s4978 + $0x28] sm:%s4970] %v4989
                %v4991 = vld [vmem:[%s4977 + $0x30] sm:%s4970]
                %4992 = vst [vmem:[%s4978 + $0x30] sm:%s4970] %v4991
                %v4993 = vld [vmem:[%s4977 + $0x38] sm:%s4970]
                %4994 = vst [vmem:[%s4978 + $0x38] sm:%s4970] %v4993
                %v4995 = vld [vmem:[%s4977 + $0x40] sm:%s4970]
                %4996 = vst [vmem:[%s4978 + $0x40] sm:%s4970] %v4995
                %v4997 = vld [vmem:[%s4977 + $0x48] sm:%s4970]
                %4998 = vst [vmem:[%s4978 + $0x48] sm:%s4970] %v4997
                %v4999 = vld [vmem:[%s4977 + $0x50] sm:%s4970]
                %5000 = vst [vmem:[%s4978 + $0x50] sm:%s4970] %v4999
                %v5001 = vld [vmem:[%s4977 + $0x58] sm:%s4970]
                %5002 = vst [vmem:[%s4978 + $0x58] sm:%s4970] %v5001
                %v5003 = vld [vmem:[%s4977 + $0x60] sm:%s4970]
                %5004 = vst [vmem:[%s4978 + $0x60] sm:%s4970] %v5003
                %v5005 = vld [vmem:[%s4977 + $0x68] sm:%s4970]
                %5006 = vst [vmem:[%s4978 + $0x68] sm:%s4970] %v5005
                %v5007 = vld [vmem:[%s4977 + $0x70] sm:%s4970]
                %5008 = vst [vmem:[%s4978 + $0x70] sm:%s4970] %v5007
                %v5009 = vld [vmem:[%s4977 + $0x78] sm:%s4970]
                %5010 = vst [vmem:[%s4978 + $0x78] sm:%s4970] %v5009
                %v5011 = vld [vmem:[%s4977 + $0x80] sm:%s4970]
                %5012 = vst [vmem:[%s4978 + $0x100] sm:%s4970] %v5011
                %v5013 = vld [vmem:[%s4977 + $0x88] sm:%s4970]
                %5014 = vst [vmem:[%s4978 + $0x108] sm:%s4970] %v5013
                %v5015 = vld [vmem:[%s4977 + $0x90] sm:%s4970]
                %5016 = vst [vmem:[%s4978 + $0x110] sm:%s4970] %v5015
                %v5017 = vld [vmem:[%s4977 + $0x98] sm:%s4970]
                %5018 = vst [vmem:[%s4978 + $0x118] sm:%s4970] %v5017
                %v5019 = vld [vmem:[%s4977 + $0xa0] sm:%s4970]
                %5020 = vst [vmem:[%s4978 + $0x120] sm:%s4970] %v5019
                %v5021 = vld [vmem:[%s4977 + $0xa8] sm:%s4970]
                %5022 = vst [vmem:[%s4978 + $0x128] sm:%s4970] %v5021
                %v5023 = vld [vmem:[%s4977 + $0xb0] sm:%s4970]
                %5024 = vst [vmem:[%s4978 + $0x130] sm:%s4970] %v5023
                %v5025 = vld [vmem:[%s4977 + $0xb8] sm:%s4970]
                %5026 = vst [vmem:[%s4978 + $0x138] sm:%s4970] %v5025
                %v5027 = vld [vmem:[%s4977 + $0xc0] sm:%s4970]
                %5028 = vst [vmem:[%s4978 + $0x140] sm:%s4970] %v5027
                %v5029 = vld [vmem:[%s4977 + $0xc8] sm:%s4970]
                %5030 = vst [vmem:[%s4978 + $0x148] sm:%s4970] %v5029
                %v5031 = vld [vmem:[%s4977 + $0xd0] sm:%s4970]
                %5032 = vst [vmem:[%s4978 + $0x150] sm:%s4970] %v5031
                %v5033 = vld [vmem:[%s4977 + $0xd8] sm:%s4970]
                %5034 = vst [vmem:[%s4978 + $0x158] sm:%s4970] %v5033
                %v5035 = vld [vmem:[%s4977 + $0xe0] sm:%s4970]
                %5036 = vst [vmem:[%s4978 + $0x160] sm:%s4970] %v5035
                %v5037 = vld [vmem:[%s4977 + $0xe8] sm:%s4970]
                %5038 = vst [vmem:[%s4978 + $0x168] sm:%s4970] %v5037
                %v5039 = vld [vmem:[%s4977 + $0xf0] sm:%s4970]
                %5040 = vst [vmem:[%s4978 + $0x170] sm:%s4970] %v5039
                %v5041 = vld [vmem:[%s4977 + $0xf8] sm:%s4970]
                %5042 = vst [vmem:[%s4978 + $0x178] sm:%s4970] %v5041
              $region49: #{double_conv.4} parent=43 // loop_footer
                %s4976 = sadd.s32 1, %s4972
              $region50: #{double_conv.4} parent=43 // loop_footer_branch
                %4971 = sbr.rel target = $region46
              $region51: #{double_conv.4} parent=43 // loop_exit
                _
            $region44: #{double_conv.4} parent=35 // pred_fallthru
              _
          $region36: #{double_conv.4} parent=31 // pred_fallthru
            _
          %5119 = vnop
        $region32: #{double_conv.4} parent=27 // pred_fallthru
          _
        // Predicated region
        $region67: #{double_conv.4} parent=27 // pred_check
          %p5120 = pneg %p106
        $region68: #{double_conv.4} parent=27 // pred_check_branch
          %5122 = sbr.rel (%p5120) target = $region70
        $region69: #{double_conv.4} parent=27 // pred_region
          _
        $region70: #{double_conv.4} parent=27 // pred_fallthru
          _
      $region28: #{double_conv.4} parent=5 // pred_fallthru
        _
      %p5123 = scmp.le.s32.totalorder 2, %s10
      // Predicated region
      $region71: #{double_conv.4} parent=5 // pred_check
        %p5124 = pneg %p5123
      $region72: #{double_conv.4} parent=5 // pred_check_branch
        %5126 = sbr.rel (%p5124) target = $region74
      $region73: #{double_conv.4} parent=5 // pred_region
        %s5127 = ssub.s32 %s10, 2
        // Predicated region
        $region75: #{double_conv.4} parent=73 // pred_check
          %p5128 = pneg %p86
        $region76: #{double_conv.4} parent=73 // pred_check_branch
          %5130 = sbr.rel (%p5128) target = $region78
        $region77: #{double_conv.4} parent=73 // pred_region
          %s5131 = sand.u32 %s71, 1
          %s5132 = sand.u32 %s71, 1
          %s5133 = smul.addr %s5132, 256
          %s5134 = scalar_lea.vmem [#allocation2], %s5133
        $region78: #{double_conv.4} parent=73 // pred_fallthru
          _
        // Predicated region
        $region79: #{double_conv.4} parent=73 // pred_check
          %p5135 = pneg %p112
        $region80: #{double_conv.4} parent=73 // pred_check_branch
          %5137 = sbr.rel (%p5135) target = $region82
        $region81: #{double_conv.4} parent=73 // pred_region
          %p5138 = scmp.lt.s32.totalorder %s16, 1
          %s5139 = scalar_select %p5138, %s16, 1
          %s5140 = smul.addr %s5139, 2
          %s5141 = scalar_lea.vmem %s3, %s5140
        $region82: #{double_conv.4} parent=73 // pred_fallthru
          _
      $region74: #{double_conv.4} parent=5 // pred_fallthru
        _
    $region6: #{double_conv.4} parent=1 // loop_footer
      %s14 = sadd.s32 1, %s10
    $region7: #{double_conv.4} parent=1 // loop_footer_branch
      %9 = sbr.rel target = $region3
    $region8: #{double_conv.4} parent=1 // loop_exit
      _

// kernel: double_conv.3
$region0: #{double_conv.3}
  #allocation0 [shape = 'u32[]', space=smem, size = 0x4, offset = 0x4, fixed_abs, tag = 'smem constant byte address 0x4 - core index']
  #allocation1 [shape = 'u32[144,128]{1,0:T(1,128)}', space=vmem, size = 0x12000, scoped, tag = 'internal scratch']
  %s0 = inlined_call_operand.vmem [shape: bf16[4,10,18,4], index: 0, kind: input, shape index: {}]
  %s1 = inlined_call_operand.vmem [shape: bf16[9,4,128], index: 1, kind: input, shape index: {}]
  %s2 = inlined_call_operand.vmem [shape: bf16[2,16,16,128], index: 2, kind: output, shape index: {0}]
  %s3 = inlined_call_operand.vmem [shape: f32[2,2,128], index: 3, kind: output, shape index: {1}]
  %4 = xla_tuple %s2, %s3
  %s5 = sld [smem:[#allocation0]]
  $region86: #{double_conv.3} parent=0
    _
  %s7 = ssub.s32 1, %s5
  %s8 = scalar_select 0, %s7, %s5
  $region1: #{double_conv.3} parent=0
    #allocation2 [shape = 'u8[131072]{0}', space=vmem, size = 0x20000, scoped, tag = 'output window, operand 0']
    loop: start=0, step=1, limit=4
    $region2: #{double_conv.3} parent=1 // loop_pre_header
      _
    $region3: #{double_conv.3} parent=1 // loop_header
      %s10 = sphi 0, %s14
      %p11 = scmp.ge.s32.totalorder %s10, 4
      %s20 = sphi 0, %s22
      %s23 = sphi 0, %s20
      %s24 = sphi 0, %s23
      %s40 = sphi 0, %s24
      %s44 = sphi 0, %s44
      %s46 = sphi 0, %s44
      %s47 = sphi 0, %s46
      %s61 = sphi 0, %s47
      %s67 = sphi 0, %s69
      %s70 = sphi 0, %s67
      %s71 = sphi 0, %s70
      %s87 = sphi 0, %s71
      %s93 = sphi 0, %s95
      %s96 = sphi 0, %s93
      %s97 = sphi 0, %s96
      %s113 = sphi 0, %s97
    $region4: #{double_conv.3} parent=1 // loop_header_branch
      %13 = sbr.rel (%p11) target = $region8
    $region5: #{double_conv.3} parent=1 // loop_body
      %s15 = ssub.s32 %s10, 1
      %s16 = ssub.s32 %s10, 2
      %s17 = sadd.s32 %s10, 1
      %s18 = ssub.s32 %s10, %s17
      %p19 = scmp.eq.s32.totalorder %s18, 0
      %s21 = sadd.s32 %s20, 1
      %s22 = scalar_select %p19, %s20, %s21
      %p25 = pneg %p19
      %p26 = scmp.eq.s32.totalorder %s10, 1
      %p27 = por %p25, %p26
      %p28 = scmp.ne.s32.totalorder %s20, %s23
      %p29 = scmp.eq.s32.totalorder %s10, 0
      %p30 = por %p28, %p29
      %p31 = scmp.ne.s32.totalorder %s20, %s23
      %p32 = scmp.eq.s32.totalorder %s15, 1
      %p33 = por %p31, %p32
      %p34 = scmp.ne.s32.totalorder %s23, %s24
      %p35 = scmp.eq.s32.totalorder %s15, 0
      %p36 = por %p34, %p35
      %p37 = scmp.ne.s32.totalorder %s23, %s24
      %p38 = scmp.eq.s32.totalorder %s16, 1
      %p39 = por %p37, %p38
      %p41 = scmp.ne.s32.totalorder %s24, %s40
      %p42 = scmp.eq.s32.totalorder %s16, 0
      %p43 = por %p41, %p42
      %s45 = sadd.s32 %s44, 1
      %p48 = scmp.eq.s32.totalorder %s10, 1
      %p49 = scmp.ne.s32.totalorder %s44, %s46
      %p50 = scmp.eq.s32.totalorder %s10, 0
      %p51 = por %p49, %p50
      %p52 = scmp.ne.s32.totalorder %s44, %s46
      %p53 = scmp.eq.s32.totalorder %s15, 1
      %p54 = por %p52, %p53
      %p55 = scmp.ne.s32.totalorder %s46, %s47
      %p56 = scmp.eq.s32.totalorder %s15, 0
      %p57 = por %p55, %p56
      %p58 = scmp.ne.s32.totalorder %s46, %s47
      %p59 = scmp.eq.s32.totalorder %s16, 1
      %p60 = por %p58, %p59
      %p62 = scmp.ne.s32.totalorder %s47, %s61
      %p63 = scmp.eq.s32.totalorder %s16, 0
      %p64 = por %p62, %p63
      %s65 = ssub.s32 %s10, %s17
      %p66 = scmp.eq.s32.totalorder %s65, 0
      %s68 = sadd.s32 %s67, 1
      %s69 = scalar_select %p66, %s67, %s68
      %p72 = pneg %p66
      %p73 = scmp.eq.s32.totalorder %s10, 1
      %p74 = por %p72, %p73
      %p75 = scmp.ne.s32.totalorder %s67, %s70
      %p76 = scmp.eq.s32.totalorder %s10, 0
      %p77 = por %p75, %p76
      %p78 = scmp.ne.s32.totalorder %s67, %s70
      %p79 = scmp.eq.s32.totalorder %s15, 1
      %p80 = por %p78, %p79
      %p81 = scmp.ne.s32.totalorder %s70, %s71
      %p82 = scmp.eq.s32.totalorder %s15, 0
      %p83 = por %p81, %p82
      %p84 = scmp.ne.s32.totalorder %s70, %s71
      %p85 = scmp.eq.s32.totalorder %s16, 1
      %p86 = por %p84, %p85
      %p88 = scmp.ne.s32.totalorder %s71, %s87
      %p89 = scmp.eq.s32.totalorder %s16, 0
      %p90 = por %p88, %p89
      %s91 = ssub.s32 %s10, %s17
      %p92 = scmp.eq.s32.totalorder %s91, 0
      %s94 = sadd.s32 %s93, 1
      %s95 = scalar_select %p92, %s93, %s94
      %p98 = pneg %p92
      %p99 = scmp.eq.s32.totalorder %s10, 1
      %p100 = por %p98, %p99
      %p101 = scmp.ne.s32.totalorder %s93, %s96
      %p102 = scmp.eq.s32.totalorder %s10, 0
      %p103 = por %p101, %p102
      %p104 = scmp.ne.s32.totalorder %s93, %s96
      %p105 = scmp.eq.s32.totalorder %s15, 1
      %p106 = por %p104, %p105
      %p107 = scmp.ne.s32.totalorder %s96, %s97
      %p108 = scmp.eq.s32.totalorder %s15, 0
      %p109 = por %p107, %p108
      %p110 = scmp.ne.s32.totalorder %s96, %s97
      %p111 = scmp.eq.s32.totalorder %s16, 1
      %p112 = por %p110, %p111
      %p114 = scmp.ne.s32.totalorder %s97, %s113
      %p115 = scmp.eq.s32.totalorder %s16, 0
      %p116 = por %p114, %p115
      %p117 = scmp.le.s32.totalorder 1, %s10
      %p118 = scmp.lt.s32.totalorder %s10, 3
      %p119 = pnand %p117, %p118
      %p120 = pneg %p119
      // Predicated region
      $region9: #{double_conv.3} parent=5 // pred_check
        _
      $region10: #{double_conv.3} parent=5 // pred_check_branch
        %122 = sbr.rel (%p119) target = $region12
      $region11: #{double_conv.3} parent=5 // pred_region
        %s123 = ssub.s32 %s10, 1
        // Predicated region
        $region13: #{double_conv.3} parent=11 // pred_check
          %p124 = pneg %p57
        $region14: #{double_conv.3} parent=11 // pred_check_branch
          %126 = sbr.rel (%p124) target = $region16
        $region15: #{double_conv.3} parent=11 // pred_region
          _
        $region16: #{double_conv.3} parent=11 // pred_fallthru
          _
      $region12: #{double_conv.3} parent=5 // pred_fallthru
        _
      %p127 = scmp.lt.s32.totalorder %s10, 2
      // Predicated region
      $region17: #{double_conv.3} parent=5 // pred_check
        %p128 = pneg %p127
      $region18: #{double_conv.3} parent=5 // pred_check_branch
        %130 = sbr.rel (%p128) target = $region20
      $region19: #{double_conv.3} parent=5 // pred_region
        // Predicated region
        $region21: #{double_conv.3} parent=19 // pred_check
          %p131 = pneg %p30
        $region22: #{double_conv.3} parent=19 // pred_check_branch
          %133 = sbr.rel (%p131) target = $region24
        $region23: #{double_conv.3} parent=19 // pred_region
          %s134 = smul.u32 2, %s10
          %p135 = scmp.lt.s32.totalorder %s134, 3
          %s136 = scalar_select %p135, %s134, 3
          %s137 = smul.addr %s136, 30
          %s138 = smul.addr %s137, 4
          %s139 = scalar_lea.vmem %s0, %s138
          %s140 = smul.u32 2, %s10
        $region24: #{double_conv.3} parent=19 // pred_fallthru
          _
      $region20: #{double_conv.3} parent=5 // pred_fallthru
        _
      %p141 = scmp.le.s32.totalorder 1, %s10
      %p142 = scmp.lt.s32.totalorder %s10, 3
      %p143 = pnand %p141, %p142
      %p144 = pneg %p143
      // Predicated region
      $region25: #{double_conv.3} parent=5 // pred_check
        _
      $region26: #{double_conv.3} parent=5 // pred_check_branch
        %146 = sbr.rel (%p143) target = $region28
      $region27: #{double_conv.3} parent=5 // pred_region
        %s147 = ssub.s32 %s10, 1
        %s148 = smul.u32 2, %s15
        %p149 = scmp.lt.s32.totalorder %s148, 3
        %s150 = scalar_select %p149, %s148, 3
        %s151 = smul.addr %s150, 30
        %s152 = smul.addr %s151, 4
        %s153 = scalar_lea.vmem %s0, %s152
        %p154 = pneg %p36
        %p155 = pneg %p33
        %p156 = pneg %p57
        %p157 = pneg %p54
        %p158 = pneg %p83
        %p159 = pneg %p80
        %s160 = sand.u32 %s70, 1
        %s161 = sand.u32 %s70, 1
        %s162 = smul.addr %s161, 128
        %s163 = scalar_lea.vmem [#allocation2], %s162
        %p164 = pneg %p109
        %p165 = pneg %p106
        %p166 = scmp.lt.s32.totalorder %s15, 1
        %s167 = scalar_select %p166, %s15, 1
        %s168 = smul.addr %s167, 2
        %s169 = scalar_lea.vmem %s3, %s168
        %s170 = smul.u32 2, %s15
        %p171 = scmp.lt.s32.totalorder %s170, 3
        %s172 = scalar_select %p171, %s170, 3
        %s173 = smul.addr %s172, 30
        %s174 = smul.addr %s173, 4
        %s175 = scalar_lea.vmem %s0, %s174
        %s176 = smul.u32 2, %s15
        %s177 = smul.u32 8, %s15
        %p178 = scmp.lt.s32.totalorder %s15, 1
        %s179 = scalar_select %p178, %s15, 1
        %s180 = smul.addr %s179, 2
        %s181 = scalar_lea.vmem %s3, %s180
        %v183 = vld [vmem:[%s175] sm:$0xf]
        %v184 = vld [vmem:[%s175 + $0x4] sm:$0xf]
        %v185 = vld [vmem:[%s175 + $0xc] sm:$0xf]
        %v186 = vld [vmem:[%s175 + $0x10] sm:$0xf]
        %v187 = vld [vmem:[%s175 + $0x18] sm:$0xf]
        %v188 = vld [vmem:[%s175 + $0x1c] sm:$0xf]
        %v189 = vld [vmem:[%s175 + $0x24] sm:$0xf]
        %v190 = vld [vmem:[%s175 + $0x28] sm:$0xf]
        %v191 = vld [vmem:[%s175 + $0x30] sm:$0xf]
        %v192 = vld [vmem:[%s175 + $0x34] sm:$0xf]
        %v193 = vld [vmem:[%s175 + $0x3c] sm:$0xf]
        %v194 = vld [vmem:[%s175 + $0x40] sm:$0xf]
        %v195 = vld [vmem:[%s175 + $0x48] sm:$0xf]
        %v196 = vld [vmem:[%s175 + $0x4c] sm:$0xf]
        %v197 = vld [vmem:[%s175 + $0x54] sm:$0xf]
        %v198 = vld [vmem:[%s175 + $0x58] sm:$0xf]
        %v199 = vld [vmem:[%s175 + $0x78] sm:$0xf]
        %v200 = vld [vmem:[%s175 + $0x7c] sm:$0xf]
        %v201 = vld [vmem:[%s175 + $0x84] sm:$0xf]
        %v202 = vld [vmem:[%s175 + $0x88] sm:$0xf]
        %v203 = vld [vmem:[%s175 + $0x90] sm:$0xf]
        %v204 = vld [vmem:[%s175 + $0x94] sm:$0xf]
        %v205 = vld [vmem:[%s175 + $0x9c] sm:$0xf]
        %v206 = vld [vmem:[%s175 + $0xa0] sm:$0xf]
        %v207 = vld [vmem:[%s175 + $0xa8] sm:$0xf]
        %v208 = vld [vmem:[%s175 + $0xac] sm:$0xf]
        %v209 = vld [vmem:[%s175 + $0xb4] sm:$0xf]
        %v210 = vld [vmem:[%s175 + $0xb8] sm:$0xf]
        %v211 = vld [vmem:[%s175 + $0xc0] sm:$0xf]
        %v212 = vld [vmem:[%s175 + $0xc4] sm:$0xf]
        %v213 = vld [vmem:[%s175 + $0xcc] sm:$0xf]
        %v214 = vld [vmem:[%s175 + $0xd0] sm:$0xf]
        %v215 = vld [vmem:[%s1] sm:$0x3]
        %v216 = vld [vmem:[%s175 + $0x8] sm:$0x1]
        %v217 = vld [vmem:[%s175 + $0x14] sm:$0x1]
        %v218 = vld [vmem:[%s175 + $0x20] sm:$0x1]
        %v219 = vld [vmem:[%s175 + $0x2c] sm:$0x1]
        %v220 = vld [vmem:[%s175 + $0x38] sm:$0x1]
        %v221 = vld [vmem:[%s175 + $0x44] sm:$0x1]
        %v222 = vld [vmem:[%s175 + $0x50] sm:$0x1]
        %v223 = vld [vmem:[%s175 + $0x5c] sm:$0x1]
        %v224 = vld [vmem:[%s175 + $0x80] sm:$0x1]
        %v225 = vld [vmem:[%s175 + $0x8c] sm:$0x1]
        %v226 = vld [vmem:[%s175 + $0x98] sm:$0x1]
        %v227 = vld [vmem:[%s175 + $0xa4] sm:$0x1]
        %v228 = vld [vmem:[%s175 + $0xb0] sm:$0x1]
        %v229 = vld [vmem:[%s175 + $0xbc] sm:$0x1]
        %v230 = vld [vmem:[%s175 + $0xc8] sm:$0x1]
        %v231 = vld [vmem:[%s175 + $0xd4] sm:$0x1]
        %vm232 = vsmask.f32 3328
        %vm233 = vsmask.f32 7440
        %vm234 = vmor %vm232, %vm233
        %v236 = vshrl.u32 %v183, 16
        %v238 = vrot.slane %v236, 4
        %v239 = vshll.u32 %v183, 16
        %v241 = vrot.slane %v239, 5
        %v242 = vor.u32 %v238, %v241
        %v243 = vrot.slane %v242, 4
        %v245 = vshll.u32 %v184, 16
        %v247 = vrot.slane %v245, 5
        %v248 = vsel %vm234, %v243, %v247
        %v249 = vshrl.u32 %v184, 16
        %v251 = vrot.slane %v249, 4
        %v252 = vor.u32 %v251, %v247
        %v253 = vrot.slane %v252, 4
        %v255 = vshll.u32 %v216, 16
        %v257 = vrot.slane %v255, 5
        %v258 = vsel %vm234, %v253, %v257
        %v260 = vshrl.u32 %v185, 16
        %v262 = vrot.slane %v260, 4
        %v263 = vshll.u32 %v185, 16
        %v265 = vrot.slane %v263, 5
        %v266 = vor.u32 %v262, %v265
        %v267 = vrot.slane %v266, 4
        %v269 = vshll.u32 %v186, 16
        %v271 = vrot.slane %v269, 5
        %v272 = vsel %vm234, %v267, %v271
        %v273 = vshrl.u32 %v186, 16
        %v275 = vrot.slane %v273, 4
        %v276 = vor.u32 %v275, %v271
        %v277 = vrot.slane %v276, 4
        %v279 = vshll.u32 %v217, 16
        %v281 = vrot.slane %v279, 5
        %v282 = vsel %vm234, %v277, %v281
        %v284 = vshrl.u32 %v187, 16
        %v286 = vrot.slane %v284, 4
        %v287 = vshll.u32 %v187, 16
        %v289 = vrot.slane %v287, 5
        %v290 = vor.u32 %v286, %v289
        %v291 = vrot.slane %v290, 4
        %v293 = vshll.u32 %v188, 16
        %v295 = vrot.slane %v293, 5
        %v296 = vsel %vm234, %v291, %v295
        %v297 = vshrl.u32 %v188, 16
        %v299 = vrot.slane %v297, 4
        %v300 = vor.u32 %v299, %v295
        %v301 = vrot.slane %v300, 4
        %v303 = vshll.u32 %v218, 16
        %v305 = vrot.slane %v303, 5
        %v306 = vsel %vm234, %v301, %v305
        %v308 = vshrl.u32 %v189, 16
        %v310 = vrot.slane %v308, 4
        %v311 = vshll.u32 %v189, 16
        %v313 = vrot.slane %v311, 5
        %v314 = vor.u32 %v310, %v313
        %v315 = vrot.slane %v314, 4
        %v317 = vshll.u32 %v190, 16
        %v319 = vrot.slane %v317, 5
        %v320 = vsel %vm234, %v315, %v319
        %v321 = vshrl.u32 %v190, 16
        %v323 = vrot.slane %v321, 4
        %v324 = vor.u32 %v323, %v319
        %v325 = vrot.slane %v324, 4
        %v327 = vshll.u32 %v219, 16
        %v329 = vrot.slane %v327, 5
        %v330 = vsel %vm234, %v325, %v329
        %v332 = vshrl.u32 %v191, 16
        %v334 = vrot.slane %v332, 4
        %v335 = vshll.u32 %v191, 16
        %v337 = vrot.slane %v335, 5
        %v338 = vor.u32 %v334, %v337
        %v339 = vrot.slane %v338, 4
        %v341 = vshll.u32 %v192, 16
        %v343 = vrot.slane %v341, 5
        %v344 = vsel %vm234, %v339, %v343
        %v345 = vshrl.u32 %v192, 16
        %v347 = vrot.slane %v345, 4
        %v348 = vor.u32 %v347, %v343
        %v349 = vrot.slane %v348, 4
        %v351 = vshll.u32 %v220, 16
        %v353 = vrot.slane %v351, 5
        %v354 = vsel %vm234, %v349, %v353
        %v356 = vshrl.u32 %v193, 16
        %v358 = vrot.slane %v356, 4
        %v359 = vshll.u32 %v193, 16
        %v361 = vrot.slane %v359, 5
        %v362 = vor.u32 %v358, %v361
        %v363 = vrot.slane %v362, 4
        %v365 = vshll.u32 %v194, 16
        %v367 = vrot.slane %v365, 5
        %v368 = vsel %vm234, %v363, %v367
        %v369 = vshrl.u32 %v194, 16
        %v371 = vrot.slane %v369, 4
        %v372 = vor.u32 %v371, %v367
        %v373 = vrot.slane %v372, 4
        %v375 = vshll.u32 %v221, 16
        %v377 = vrot.slane %v375, 5
        %v378 = vsel %vm234, %v373, %v377
        %v380 = vshrl.u32 %v195, 16
        %v382 = vrot.slane %v380, 4
        %v383 = vshll.u32 %v195, 16
        %v385 = vrot.slane %v383, 5
        %v386 = vor.u32 %v382, %v385
        %v387 = vrot.slane %v386, 4
        %v389 = vshll.u32 %v196, 16
        %v391 = vrot.slane %v389, 5
        %v392 = vsel %vm234, %v387, %v391
        %v393 = vshrl.u32 %v196, 16
        %v395 = vrot.slane %v393, 4
        %v396 = vor.u32 %v395, %v391
        %v397 = vrot.slane %v396, 4
        %v399 = vshll.u32 %v222, 16
        %v401 = vrot.slane %v399, 5
        %v402 = vsel %vm234, %v397, %v401
        %v404 = vshrl.u32 %v197, 16
        %v406 = vrot.slane %v404, 4
        %v407 = vshll.u32 %v197, 16
        %v409 = vrot.slane %v407, 5
        %v410 = vor.u32 %v406, %v409
        %v411 = vrot.slane %v410, 4
        %v413 = vshll.u32 %v198, 16
        %v415 = vrot.slane %v413, 5
        %v416 = vsel %vm234, %v411, %v415
        %v417 = vshrl.u32 %v198, 16
        %v419 = vrot.slane %v417, 4
        %v420 = vor.u32 %v419, %v415
        %v421 = vrot.slane %v420, 4
        %v423 = vshll.u32 %v223, 16
        %v425 = vrot.slane %v423, 5
        %v426 = vsel %vm234, %v421, %v425
        %v428 = vshrl.u32 %v199, 16
        %v430 = vrot.slane %v428, 4
        %v431 = vshll.u32 %v199, 16
        %v433 = vrot.slane %v431, 5
        %v434 = vor.u32 %v430, %v433
        %v435 = vrot.slane %v434, 4
        %v437 = vshll.u32 %v200, 16
        %v439 = vrot.slane %v437, 5
        %v440 = vsel %vm234, %v435, %v439
        %v441 = vshrl.u32 %v200, 16
        %v443 = vrot.slane %v441, 4
        %v444 = vor.u32 %v443, %v439
        %v445 = vrot.slane %v444, 4
        %v447 = vshll.u32 %v224, 16
        %v449 = vrot.slane %v447, 5
        %v450 = vsel %vm234, %v445, %v449
        %v452 = vshrl.u32 %v201, 16
        %v454 = vrot.slane %v452, 4
        %v455 = vshll.u32 %v201, 16
        %v457 = vrot.slane %v455, 5
        %v458 = vor.u32 %v454, %v457
        %v459 = vrot.slane %v458, 4
        %v461 = vshll.u32 %v202, 16
        %v463 = vrot.slane %v461, 5
        %v464 = vsel %vm234, %v459, %v463
        %v465 = vshrl.u32 %v202, 16
        %v467 = vrot.slane %v465, 4
        %v468 = vor.u32 %v467, %v463
        %v469 = vrot.slane %v468, 4
        %v471 = vshll.u32 %v225, 16
        %v473 = vrot.slane %v471, 5
        %v474 = vsel %vm234, %v469, %v473
        %v476 = vshrl.u32 %v203, 16
        %v478 = vrot.slane %v476, 4
        %v479 = vshll.u32 %v203, 16
        %v481 = vrot.slane %v479, 5
        %v482 = vor.u32 %v478, %v481
        %v483 = vrot.slane %v482, 4
        %v485 = vshll.u32 %v204, 16
        %v487 = vrot.slane %v485, 5
        %v488 = vsel %vm234, %v483, %v487
        %v489 = vshrl.u32 %v204, 16
        %v491 = vrot.slane %v489, 4
        %v492 = vor.u32 %v491, %v487
        %v493 = vrot.slane %v492, 4
        %v495 = vshll.u32 %v226, 16
        %v497 = vrot.slane %v495, 5
        %v498 = vsel %vm234, %v493, %v497
        %v500 = vshrl.u32 %v205, 16
        %v502 = vrot.slane %v500, 4
        %v503 = vshll.u32 %v205, 16
        %v505 = vrot.slane %v503, 5
        %v506 = vor.u32 %v502, %v505
        %v507 = vrot.slane %v506, 4
        %v509 = vshll.u32 %v206, 16
        %v511 = vrot.slane %v509, 5
        %v512 = vsel %vm234, %v507, %v511
        %v513 = vshrl.u32 %v206, 16
        %v515 = vrot.slane %v513, 4
        %v516 = vor.u32 %v515, %v511
        %v517 = vrot.slane %v516, 4
        %v519 = vshll.u32 %v227, 16
        %v521 = vrot.slane %v519, 5
        %v522 = vsel %vm234, %v517, %v521
        %v524 = vshrl.u32 %v207, 16
        %v526 = vrot.slane %v524, 4
        %v527 = vshll.u32 %v207, 16
        %v529 = vrot.slane %v527, 5
        %v530 = vor.u32 %v526, %v529
        %v531 = vrot.slane %v530, 4
        %v533 = vshll.u32 %v208, 16
        %v535 = vrot.slane %v533, 5
        %v536 = vsel %vm234, %v531, %v535
        %v537 = vshrl.u32 %v208, 16
        %v539 = vrot.slane %v537, 4
        %v540 = vor.u32 %v539, %v535
        %v541 = vrot.slane %v540, 4
        %v543 = vshll.u32 %v228, 16
        %v545 = vrot.slane %v543, 5
        %v546 = vsel %vm234, %v541, %v545
        %v548 = vshrl.u32 %v209, 16
        %v550 = vrot.slane %v548, 4
        %v551 = vshll.u32 %v209, 16
        %v553 = vrot.slane %v551, 5
        %v554 = vor.u32 %v550, %v553
        %v555 = vrot.slane %v554, 4
        %v557 = vshll.u32 %v210, 16
        %v559 = vrot.slane %v557, 5
        %v560 = vsel %vm234, %v555, %v559
        %v561 = vshrl.u32 %v210, 16
        %v563 = vrot.slane %v561, 4
        %v564 = vor.u32 %v563, %v559
        %v565 = vrot.slane %v564, 4
        %v567 = vshll.u32 %v229, 16
        %v569 = vrot.slane %v567, 5
        %v570 = vsel %vm234, %v565, %v569
        %v572 = vshrl.u32 %v211, 16
        %v574 = vrot.slane %v572, 4
        %v575 = vshll.u32 %v211, 16
        %v577 = vrot.slane %v575, 5
        %v578 = vor.u32 %v574, %v577
        %v579 = vrot.slane %v578, 4
        %v581 = vshll.u32 %v212, 16
        %v583 = vrot.slane %v581, 5
        %v584 = vsel %vm234, %v579, %v583
        %v585 = vshrl.u32 %v212, 16
        %v587 = vrot.slane %v585, 4
        %v588 = vor.u32 %v587, %v583
        %v589 = vrot.slane %v588, 4
        %v591 = vshll.u32 %v230, 16
        %v593 = vrot.slane %v591, 5
        %v594 = vsel %vm234, %v589, %v593
        %v596 = vshrl.u32 %v213, 16
        %v598 = vrot.slane %v596, 4
        %v599 = vshll.u32 %v213, 16
        %v601 = vrot.slane %v599, 5
        %v602 = vor.u32 %v598, %v601
        %v603 = vrot.slane %v602, 4
        %v605 = vshll.u32 %v214, 16
        %v607 = vrot.slane %v605, 5
        %v608 = vsel %vm234, %v603, %v607
        %v609 = vshrl.u32 %v214, 16
        %v611 = vrot.slane %v609, 4
        %v612 = vor.u32 %v611, %v607
        %v613 = vrot.slane %v612, 4
        %v615 = vshll.u32 %v231, 16
        %v617 = vrot.slane %v615, 5
        %v618 = vsel %vm234, %v613, %v617
        %s619 = scalar_lea.vmem %s1, 2
        %v620 = vld [vmem:[%s619] sm:$0x3]
        %v621 = vunpack.c.l.b16 %v248
        %v622 = vunpack.c.l.b16 %v258
        %v623 = vunpack.c.l.b16 %v272
        %v624 = vunpack.c.l.b16 %v282
        %v625 = vunpack.c.l.b16 %v296
        %v626 = vunpack.c.l.b16 %v306
        %v627 = vunpack.c.l.b16 %v320
        %v628 = vunpack.c.l.b16 %v330
        %v629 = vunpack.c.l.b16 %v344
        %v630 = vunpack.c.l.b16 %v354
        %v631 = vunpack.c.l.b16 %v368
        %v632 = vunpack.c.l.b16 %v378
        %v633 = vunpack.c.l.b16 %v392
        %v634 = vunpack.c.l.b16 %v402
        %v635 = vunpack.c.l.b16 %v416
        %v636 = vunpack.c.l.b16 %v426
        %v637 = vunpack.c.l.b16 %v440
        %v638 = vunpack.c.l.b16 %v450
        %v639 = vunpack.c.l.b16 %v464
        %v640 = vunpack.c.l.b16 %v474
        %v641 = vunpack.c.l.b16 %v488
        %v642 = vunpack.c.l.b16 %v498
        %v643 = vunpack.c.l.b16 %v512
        %v644 = vunpack.c.l.b16 %v522
        %v645 = vunpack.c.l.b16 %v536
        %v646 = vunpack.c.l.b16 %v546
        %v647 = vunpack.c.l.b16 %v560
        %v648 = vunpack.c.l.b16 %v570
        %v649 = vunpack.c.l.b16 %v584
        %v650 = vunpack.c.l.b16 %v594
        %v651 = vunpack.c.l.b16 %v608
        %v652 = vunpack.c.l.b16 %v618
        %v653 = vpack.c.b16 %v622, %v621
        %v654 = vpack.c.b16 %v624, %v623
        %v655 = vpack.c.b16 %v626, %v625
        %v656 = vpack.c.b16 %v628, %v627
        %v657 = vpack.c.b16 %v630, %v629
        %v658 = vpack.c.b16 %v632, %v631
        %v659 = vpack.c.b16 %v634, %v633
        %v660 = vpack.c.b16 %v636, %v635
        %v661 = vpack.c.b16 %v638, %v637
        %v662 = vpack.c.b16 %v640, %v639
        %v663 = vpack.c.b16 %v642, %v641
        %v664 = vpack.c.b16 %v644, %v643
        %v665 = vpack.c.b16 %v646, %v645
        %v666 = vpack.c.b16 %v648, %v647
        %v667 = vpack.c.b16 %v650, %v649
        %v668 = vpack.c.b16 %v652, %v651
        %vm669 = vcmask 31744
        %v671 = vsel %vm669, %v653, 0
        %v674 = vsel %vm669, %v654, 0
        %v677 = vsel %vm669, %v655, 0
        %v680 = vsel %vm669, %v656, 0
        %v683 = vsel %vm669, %v657, 0
        %v686 = vsel %vm669, %v658, 0
        %v689 = vsel %vm669, %v659, 0
        %v692 = vsel %vm669, %v660, 0
        %v695 = vsel %vm669, %v661, 0
        %v698 = vsel %vm669, %v662, 0
        %v701 = vsel %vm669, %v663, 0
        %v704 = vsel %vm669, %v664, 0
        %v707 = vsel %vm669, %v665, 0
        %v710 = vsel %vm669, %v666, 0
        %v713 = vsel %vm669, %v667, 0
        %v716 = vsel %vm669, %v668, 0
        %vm718 = vcmask 1041408
        %v720 = vsel %vm718, %v620, 0
        %722 = vmatprep.subr.bf16.mxu0 0
        %723 = vmatpush1.bf16.msra.mxu0 0
        %724 = vmatprep.subr.bf16.mxu0 0
        %725 = vmatpush1.bf16.msra.mxu0 0
        %726 = vmatprep.subr.bf16.mxu0 0
        %727 = vmatpush1.bf16.msra.mxu0 0
        %728 = vmatprep.subr.bf16.mxu0 0
        %729 = vmatpush1.bf16.msra.mxu0 0
        %730 = vmatprep.subr.bf16.mxu0 0
        %731 = vmatpush1.bf16.msra.mxu0 0
        %732 = vmatprep.subr.bf16.mxu0 0
        %733 = vmatpush1.bf16.msra.mxu0 0
        %734 = vmatprep.subr.bf16.mxu0 0
        %735 = vmatpush1.bf16.msra.mxu0 0
        %736 = vmatprep.subr.bf16.mxu0 0
        %737 = vmatpush1.bf16.msra.mxu0 %v720
        %738 = vmatprep.subr.bf16.mxu0 0
        %739 = vmatpush2.bf16.msra.mxu0 0
        %740 = vmatprep.subr.bf16.mxu0 0
        %741 = vmatpush2.bf16.msra.mxu0 0
        %742 = vmatprep.subr.bf16.mxu0 0
        %743 = vmatpush2.bf16.msra.mxu0 0
        %744 = vmatprep.subr.bf16.mxu0 0
        %745 = vmatpush2.bf16.msra.mxu0 0
        %746 = vmatprep.subr.bf16.mxu0 0
        %747 = vmatpush2.bf16.msra.mxu0 0
        %748 = vmatprep.subr.bf16.mxu0 0
        %749 = vmatpush2.bf16.msra.mxu0 0
        %750 = vmatprep.subr.bf16.mxu0 0
        %751 = vmatpush2.bf16.msra.mxu0 0
        %752 = vmatprep.subr.bf16.mxu0 0
        %753 = vmatpush2.bf16.msra.mxu0 0
        %754 = vmatprep.mubr.bf16.mxu0 0
        %755 = vmatmul.mubr.bf16.gmra.mxu0 %v671
        %v756 = vpop.f32.mrf.mxu0
        %v757 = vadd.f32 0.0, %v756
        %v758 = vpop.f32.mrf.mxu0
        %v759 = vpop.f32.mrf.mxu0
        %v760 = vadd.f32 0.0, %v759
        %v761 = vpop.f32.mrf.mxu0
        %762 = vmatprep.mubr.bf16.mxu0 0
        %763 = vmatmul.mubr.bf16.gmra.mxu0 %v674
        %v764 = vpop.f32.mrf.mxu0
        %v765 = vadd.f32 0.0, %v764
        %v766 = vpop.f32.mrf.mxu0
        %v767 = vpop.f32.mrf.mxu0
        %v768 = vadd.f32 0.0, %v767
        %v769 = vpop.f32.mrf.mxu0
        %770 = vmatprep.mubr.bf16.mxu0 0
        %771 = vmatmul.mubr.bf16.gmra.mxu0 %v677
        %v772 = vpop.f32.mrf.mxu0
        %v773 = vadd.f32 0.0, %v772
        %v774 = vpop.f32.mrf.mxu0
        %v775 = vpop.f32.mrf.mxu0
        %v776 = vadd.f32 0.0, %v775
        %v777 = vpop.f32.mrf.mxu0
        %778 = vmatprep.mubr.bf16.mxu0 0
        %779 = vmatmul.mubr.bf16.gmra.mxu0 %v680
        %v780 = vpop.f32.mrf.mxu0
        %v781 = vadd.f32 0.0, %v780
        %v782 = vpop.f32.mrf.mxu0
        %v783 = vpop.f32.mrf.mxu0
        %v784 = vadd.f32 0.0, %v783
        %v785 = vpop.f32.mrf.mxu0
        %786 = vmatprep.mubr.bf16.mxu0 0
        %787 = vmatmul.mubr.bf16.gmra.mxu0 %v683
        %v788 = vpop.f32.mrf.mxu0
        %v789 = vadd.f32 0.0, %v788
        %v790 = vpop.f32.mrf.mxu0
        %v791 = vpop.f32.mrf.mxu0
        %v792 = vadd.f32 0.0, %v791
        %v793 = vpop.f32.mrf.mxu0
        %794 = vmatprep.mubr.bf16.mxu0 0
        %795 = vmatmul.mubr.bf16.gmra.mxu0 %v686
        %v796 = vpop.f32.mrf.mxu0
        %v797 = vadd.f32 0.0, %v796
        %v798 = vpop.f32.mrf.mxu0
        %v799 = vpop.f32.mrf.mxu0
        %v800 = vadd.f32 0.0, %v799
        %v801 = vpop.f32.mrf.mxu0
        %802 = vmatprep.mubr.bf16.mxu0 0
        %803 = vmatmul.mubr.bf16.gmra.mxu0 %v689
        %v804 = vpop.f32.mrf.mxu0
        %v805 = vadd.f32 0.0, %v804
        %v806 = vpop.f32.mrf.mxu0
        %v807 = vpop.f32.mrf.mxu0
        %v808 = vadd.f32 0.0, %v807
        %v809 = vpop.f32.mrf.mxu0
        %810 = vmatprep.mubr.bf16.mxu0 0
        %811 = vmatmul.mubr.bf16.gmra.mxu0 %v692
        %v812 = vpop.f32.mrf.mxu0
        %v813 = vadd.f32 0.0, %v812
        %v814 = vpop.f32.mrf.mxu0
        %v815 = vpop.f32.mrf.mxu0
        %v816 = vadd.f32 0.0, %v815
        %v817 = vpop.f32.mrf.mxu0
        %818 = vmatprep.mubr.bf16.mxu0 0
        %819 = vmatmul.mubr.bf16.gmra.mxu0 %v695
        %v820 = vpop.f32.mrf.mxu0
        %v821 = vadd.f32 0.0, %v820
        %v822 = vpop.f32.mrf.mxu0
        %v823 = vpop.f32.mrf.mxu0
        %v824 = vadd.f32 0.0, %v823
        %v825 = vpop.f32.mrf.mxu0
        %826 = vmatprep.mubr.bf16.mxu0 0
        %827 = vmatmul.mubr.bf16.gmra.mxu0 %v698
        %v828 = vpop.f32.mrf.mxu0
        %v829 = vadd.f32 0.0, %v828
        %v830 = vpop.f32.mrf.mxu0
        %v831 = vpop.f32.mrf.mxu0
        %v832 = vadd.f32 0.0, %v831
        %v833 = vpop.f32.mrf.mxu0
        %834 = vmatprep.mubr.bf16.mxu0 0
        %835 = vmatmul.mubr.bf16.gmra.mxu0 %v701
        %v836 = vpop.f32.mrf.mxu0
        %v837 = vadd.f32 0.0, %v836
        %v838 = vpop.f32.mrf.mxu0
        %v839 = vpop.f32.mrf.mxu0
        %v840 = vadd.f32 0.0, %v839
        %v841 = vpop.f32.mrf.mxu0
        %842 = vmatprep.mubr.bf16.mxu0 0
        %843 = vmatmul.mubr.bf16.gmra.mxu0 %v704
        %v844 = vpop.f32.mrf.mxu0
        %v845 = vadd.f32 0.0, %v844
        %v846 = vpop.f32.mrf.mxu0
        %v847 = vpop.f32.mrf.mxu0
        %v848 = vadd.f32 0.0, %v847
        %v849 = vpop.f32.mrf.mxu0
        %850 = vmatprep.mubr.bf16.mxu0 0
        %851 = vmatmul.mubr.bf16.gmra.mxu0 %v707
        %v852 = vpop.f32.mrf.mxu0
        %v853 = vadd.f32 0.0, %v852
        %v854 = vpop.f32.mrf.mxu0
        %v855 = vpop.f32.mrf.mxu0
        %v856 = vadd.f32 0.0, %v855
        %v857 = vpop.f32.mrf.mxu0
        %858 = vmatprep.mubr.bf16.mxu0 0
        %859 = vmatmul.mubr.bf16.gmra.mxu0 %v710
        %v860 = vpop.f32.mrf.mxu0
        %v861 = vadd.f32 0.0, %v860
        %v862 = vpop.f32.mrf.mxu0
        %v863 = vpop.f32.mrf.mxu0
        %v864 = vadd.f32 0.0, %v863
        %v865 = vpop.f32.mrf.mxu0
        %866 = vmatprep.mubr.bf16.mxu0 0
        %867 = vmatmul.mubr.bf16.gmra.mxu0 %v713
        %v868 = vpop.f32.mrf.mxu0
        %v869 = vadd.f32 0.0, %v868
        %v870 = vpop.f32.mrf.mxu0
        %v871 = vpop.f32.mrf.mxu0
        %v872 = vadd.f32 0.0, %v871
        %v873 = vpop.f32.mrf.mxu0
        %874 = vmatprep.mubr.bf16.mxu0 0
        %875 = vmatmul.mubr.bf16.gmra.mxu0 %v716
        %v876 = vpop.f32.mrf.mxu0
        %v877 = vadd.f32 0.0, %v876
        %v878 = vpop.f32.mrf.mxu0
        %v879 = vpop.f32.mrf.mxu0
        %v880 = vadd.f32 0.0, %v879
        %v881 = vpop.f32.mrf.mxu0
        %882 = vdwg.mxu0
        %v915 = vunpack.c.l.b16 %v183
        %v916 = vunpack.c.l.b16 %v184
        %v917 = vunpack.c.l.b16 %v185
        %v918 = vunpack.c.l.b16 %v186
        %v919 = vunpack.c.l.b16 %v187
        %v920 = vunpack.c.l.b16 %v188
        %v921 = vunpack.c.l.b16 %v189
        %v922 = vunpack.c.l.b16 %v190
        %v923 = vunpack.c.l.b16 %v191
        %v924 = vunpack.c.l.b16 %v192
        %v925 = vunpack.c.l.b16 %v193
        %v926 = vunpack.c.l.b16 %v194
        %v927 = vunpack.c.l.b16 %v195
        %v928 = vunpack.c.l.b16 %v196
        %v929 = vunpack.c.l.b16 %v197
        %v930 = vunpack.c.l.b16 %v198
        %v931 = vunpack.c.l.b16 %v199
        %v932 = vunpack.c.l.b16 %v200
        %v933 = vunpack.c.l.b16 %v201
        %v934 = vunpack.c.l.b16 %v202
        %v935 = vunpack.c.l.b16 %v203
        %v936 = vunpack.c.l.b16 %v204
        %v937 = vunpack.c.l.b16 %v205
        %v938 = vunpack.c.l.b16 %v206
        %v939 = vunpack.c.l.b16 %v207
        %v940 = vunpack.c.l.b16 %v208
        %v941 = vunpack.c.l.b16 %v209
        %v942 = vunpack.c.l.b16 %v210
        %v943 = vunpack.c.l.b16 %v211
        %v944 = vunpack.c.l.b16 %v212
        %v945 = vunpack.c.l.b16 %v213
        %v946 = vunpack.c.l.b16 %v214
        %v947 = vpack.c.b16 %v916, %v915
        %v948 = vpack.c.b16 %v918, %v917
        %v949 = vpack.c.b16 %v920, %v919
        %v950 = vpack.c.b16 %v922, %v921
        %v951 = vpack.c.b16 %v924, %v923
        %v952 = vpack.c.b16 %v926, %v925
        %v953 = vpack.c.b16 %v928, %v927
        %v954 = vpack.c.b16 %v930, %v929
        %v955 = vpack.c.b16 %v932, %v931
        %v956 = vpack.c.b16 %v934, %v933
        %v957 = vpack.c.b16 %v936, %v935
        %v958 = vpack.c.b16 %v938, %v937
        %v959 = vpack.c.b16 %v940, %v939
        %v960 = vpack.c.b16 %v942, %v941
        %v961 = vpack.c.b16 %v944, %v943
        %v962 = vpack.c.b16 %v946, %v945
        %v964 = vsel %vm669, %v947, 0
        %v967 = vsel %vm669, %v948, 0
        %v970 = vsel %vm669, %v949, 0
        %v973 = vsel %vm669, %v950, 0
        %v976 = vsel %vm669, %v951, 0
        %v979 = vsel %vm669, %v952, 0
        %v982 = vsel %vm669, %v953, 0
        %v985 = vsel %vm669, %v954, 0
        %v988 = vsel %vm669, %v955, 0
        %v991 = vsel %vm669, %v956, 0
        %v994 = vsel %vm669, %v957, 0
        %v997 = vsel %vm669, %v958, 0
        %v1000 = vsel %vm669, %v959, 0
        %v1003 = vsel %vm669, %v960, 0
        %v1006 = vsel %vm669, %v961, 0
        %v1009 = vsel %vm669, %v962, 0
        %v1012 = vsel %vm718, %v215, 0
        %1014 = vmatprep.subr.bf16.mxu0 0
        %1015 = vmatpush1.bf16.msra.mxu0 0
        %1016 = vmatprep.subr.bf16.mxu0 0
        %1017 = vmatpush1.bf16.msra.mxu0 0
        %1018 = vmatprep.subr.bf16.mxu0 0
        %1019 = vmatpush1.bf16.msra.mxu0 0
        %1020 = vmatprep.subr.bf16.mxu0 0
        %1021 = vmatpush1.bf16.msra.mxu0 0
        %1022 = vmatprep.subr.bf16.mxu0 0
        %1023 = vmatpush1.bf16.msra.mxu0 0
        %1024 = vmatprep.subr.bf16.mxu0 0
        %1025 = vmatpush1.bf16.msra.mxu0 0
        %1026 = vmatprep.subr.bf16.mxu0 0
        %1027 = vmatpush1.bf16.msra.mxu0 0
        %1028 = vmatprep.subr.bf16.mxu0 0
        %1029 = vmatpush1.bf16.msra.mxu0 %v1012
        %1030 = vmatprep.subr.bf16.mxu0 0
        %1031 = vmatpush2.bf16.msra.mxu0 0
        %1032 = vmatprep.subr.bf16.mxu0 0
        %1033 = vmatpush2.bf16.msra.mxu0 0
        %1034 = vmatprep.subr.bf16.mxu0 0
        %1035 = vmatpush2.bf16.msra.mxu0 0
        %1036 = vmatprep.subr.bf16.mxu0 0
        %1037 = vmatpush2.bf16.msra.mxu0 0
        %1038 = vmatprep.subr.bf16.mxu0 0
        %1039 = vmatpush2.bf16.msra.mxu0 0
        %1040 = vmatprep.subr.bf16.mxu0 0
        %1041 = vmatpush2.bf16.msra.mxu0 0
        %1042 = vmatprep.subr.bf16.mxu0 0
        %1043 = vmatpush2.bf16.msra.mxu0 0
        %1044 = vmatprep.subr.bf16.mxu0 0
        %1045 = vmatpush2.bf16.msra.mxu0 0
        %1046 = vmatprep.mubr.bf16.mxu0 0
        %1047 = vmatmul.mubr.bf16.gmra.mxu0 %v964
        %v1048 = vpop.f32.mrf.mxu0
        %v1049 = vadd.f32 %v757, %v1048
        %v1050 = vpop.f32.mrf.mxu0
        %v1051 = vpop.f32.mrf.mxu0
        %v1052 = vadd.f32 %v760, %v1051
        %v1053 = vpop.f32.mrf.mxu0
        %1054 = vmatprep.mubr.bf16.mxu0 0
        %1055 = vmatmul.mubr.bf16.gmra.mxu0 %v967
        %v1056 = vpop.f32.mrf.mxu0
        %v1057 = vadd.f32 %v765, %v1056
        %v1058 = vpop.f32.mrf.mxu0
        %v1059 = vpop.f32.mrf.mxu0
        %v1060 = vadd.f32 %v768, %v1059
        %v1061 = vpop.f32.mrf.mxu0
        %1062 = vmatprep.mubr.bf16.mxu0 0
        %1063 = vmatmul.mubr.bf16.gmra.mxu0 %v970
        %v1064 = vpop.f32.mrf.mxu0
        %v1065 = vadd.f32 %v773, %v1064
        %v1066 = vpop.f32.mrf.mxu0
        %v1067 = vpop.f32.mrf.mxu0
        %v1068 = vadd.f32 %v776, %v1067
        %v1069 = vpop.f32.mrf.mxu0
        %1070 = vmatprep.mubr.bf16.mxu0 0
        %1071 = vmatmul.mubr.bf16.gmra.mxu0 %v973
        %v1072 = vpop.f32.mrf.mxu0
        %v1073 = vadd.f32 %v781, %v1072
        %v1074 = vpop.f32.mrf.mxu0
        %v1075 = vpop.f32.mrf.mxu0
        %v1076 = vadd.f32 %v784, %v1075
        %v1077 = vpop.f32.mrf.mxu0
        %1078 = vmatprep.mubr.bf16.mxu0 0
        %1079 = vmatmul.mubr.bf16.gmra.mxu0 %v976
        %v1080 = vpop.f32.mrf.mxu0
        %v1081 = vadd.f32 %v789, %v1080
        %v1082 = vpop.f32.mrf.mxu0
        %v1083 = vpop.f32.mrf.mxu0
        %v1084 = vadd.f32 %v792, %v1083
        %v1085 = vpop.f32.mrf.mxu0
        %1086 = vmatprep.mubr.bf16.mxu0 0
        %1087 = vmatmul.mubr.bf16.gmra.mxu0 %v979
        %v1088 = vpop.f32.mrf.mxu0
        %v1089 = vadd.f32 %v797, %v1088
        %v1090 = vpop.f32.mrf.mxu0
        %v1091 = vpop.f32.mrf.mxu0
        %v1092 = vadd.f32 %v800, %v1091
        %v1093 = vpop.f32.mrf.mxu0
        %1094 = vmatprep.mubr.bf16.mxu0 0
        %1095 = vmatmul.mubr.bf16.gmra.mxu0 %v982
        %v1096 = vpop.f32.mrf.mxu0
        %v1097 = vadd.f32 %v805, %v1096
        %v1098 = vpop.f32.mrf.mxu0
        %v1099 = vpop.f32.mrf.mxu0
        %v1100 = vadd.f32 %v808, %v1099
        %v1101 = vpop.f32.mrf.mxu0
        %1102 = vmatprep.mubr.bf16.mxu0 0
        %1103 = vmatmul.mubr.bf16.gmra.mxu0 %v985
        %v1104 = vpop.f32.mrf.mxu0
        %v1105 = vadd.f32 %v813, %v1104
        %v1106 = vpop.f32.mrf.mxu0
        %v1107 = vpop.f32.mrf.mxu0
        %v1108 = vadd.f32 %v816, %v1107
        %v1109 = vpop.f32.mrf.mxu0
        %1110 = vmatprep.mubr.bf16.mxu0 0
        %1111 = vmatmul.mubr.bf16.gmra.mxu0 %v988
        %v1112 = vpop.f32.mrf.mxu0
        %v1113 = vadd.f32 %v821, %v1112
        %v1114 = vpop.f32.mrf.mxu0
        %v1115 = vpop.f32.mrf.mxu0
        %v1116 = vadd.f32 %v824, %v1115
        %v1117 = vpop.f32.mrf.mxu0
        %1118 = vmatprep.mubr.bf16.mxu0 0
        %1119 = vmatmul.mubr.bf16.gmra.mxu0 %v991
        %v1120 = vpop.f32.mrf.mxu0
        %v1121 = vadd.f32 %v829, %v1120
        %v1122 = vpop.f32.mrf.mxu0
        %v1123 = vpop.f32.mrf.mxu0
        %v1124 = vadd.f32 %v832, %v1123
        %v1125 = vpop.f32.mrf.mxu0
        %1126 = vmatprep.mubr.bf16.mxu0 0
        %1127 = vmatmul.mubr.bf16.gmra.mxu0 %v994
        %v1128 = vpop.f32.mrf.mxu0
        %v1129 = vadd.f32 %v837, %v1128
        %v1130 = vpop.f32.mrf.mxu0
        %v1131 = vpop.f32.mrf.mxu0
        %v1132 = vadd.f32 %v840, %v1131
        %v1133 = vpop.f32.mrf.mxu0
        %1134 = vmatprep.mubr.bf16.mxu0 0
        %1135 = vmatmul.mubr.bf16.gmra.mxu0 %v997
        %v1136 = vpop.f32.mrf.mxu0
        %v1137 = vadd.f32 %v845, %v1136
        %v1138 = vpop.f32.mrf.mxu0
        %v1139 = vpop.f32.mrf.mxu0
        %v1140 = vadd.f32 %v848, %v1139
        %v1141 = vpop.f32.mrf.mxu0
        %1142 = vmatprep.mubr.bf16.mxu0 0
        %1143 = vmatmul.mubr.bf16.gmra.mxu0 %v1000
        %v1144 = vpop.f32.mrf.mxu0
        %v1145 = vadd.f32 %v853, %v1144
        %v1146 = vpop.f32.mrf.mxu0
        %v1147 = vpop.f32.mrf.mxu0
        %v1148 = vadd.f32 %v856, %v1147
        %v1149 = vpop.f32.mrf.mxu0
        %1150 = vmatprep.mubr.bf16.mxu0 0
        %1151 = vmatmul.mubr.bf16.gmra.mxu0 %v1003
        %v1152 = vpop.f32.mrf.mxu0
        %v1153 = vadd.f32 %v861, %v1152
        %v1154 = vpop.f32.mrf.mxu0
        %v1155 = vpop.f32.mrf.mxu0
        %v1156 = vadd.f32 %v864, %v1155
        %v1157 = vpop.f32.mrf.mxu0
        %1158 = vmatprep.mubr.bf16.mxu0 0
        %1159 = vmatmul.mubr.bf16.gmra.mxu0 %v1006
        %v1160 = vpop.f32.mrf.mxu0
        %v1161 = vadd.f32 %v869, %v1160
        %v1162 = vpop.f32.mrf.mxu0
        %v1163 = vpop.f32.mrf.mxu0
        %v1164 = vadd.f32 %v872, %v1163
        %v1165 = vpop.f32.mrf.mxu0
        %1166 = vmatprep.mubr.bf16.mxu0 0
        %1167 = vmatmul.mubr.bf16.gmra.mxu0 %v1009
        %v1168 = vpop.f32.mrf.mxu0
        %v1169 = vadd.f32 %v877, %v1168
        %v1170 = vpop.f32.mrf.mxu0
        %v1171 = vpop.f32.mrf.mxu0
        %v1172 = vadd.f32 %v880, %v1171
        %v1173 = vpop.f32.mrf.mxu0
        %1174 = vdwg.mxu0
        %v1175 = vld [vmem:[%s175] sm:$0xe]
        %v1176 = vld [vmem:[%s175 + $0xc] sm:$0xe]
        %v1177 = vld [vmem:[%s175 + $0x18] sm:$0xe]
        %v1178 = vld [vmem:[%s175 + $0x24] sm:$0xe]
        %v1179 = vld [vmem:[%s175 + $0x30] sm:$0xe]
        %v1180 = vld [vmem:[%s175 + $0x3c] sm:$0xe]
        %v1181 = vld [vmem:[%s175 + $0x48] sm:$0xe]
        %v1182 = vld [vmem:[%s175 + $0x54] sm:$0xe]
        %v1183 = vld [vmem:[%s175 + $0x78] sm:$0xe]
        %v1184 = vld [vmem:[%s175 + $0x84] sm:$0xe]
        %v1185 = vld [vmem:[%s175 + $0x90] sm:$0xe]
        %v1186 = vld [vmem:[%s175 + $0x9c] sm:$0xe]
        %v1187 = vld [vmem:[%s175 + $0xa8] sm:$0xe]
        %v1188 = vld [vmem:[%s175 + $0xb4] sm:$0xe]
        %v1189 = vld [vmem:[%s175 + $0xc0] sm:$0xe]
        %v1190 = vld [vmem:[%s175 + $0xcc] sm:$0xe]
        %vm1223 = vcmask 1042432
        %vm1224 = vcmask 1046532
        %vm1225 = vmor %vm1223, %vm1224
        %v1226 = vrot.slane %v1175, 5
        %v1227 = vrot.slane %v1226, 4
        %v1228 = vrot.slane %v184, 5
        %v1229 = vsel %vm1225, %v1227, %v1228
        %v1230 = vrot.slane %v1228, 4
        %v1231 = vrot.slane %v216, 5
        %v1232 = vsel %vm1225, %v1230, %v1231
        %v1233 = vrot.slane %v1176, 5
        %v1234 = vrot.slane %v1233, 4
        %v1235 = vrot.slane %v186, 5
        %v1236 = vsel %vm1225, %v1234, %v1235
        %v1237 = vrot.slane %v1235, 4
        %v1238 = vrot.slane %v217, 5
        %v1239 = vsel %vm1225, %v1237, %v1238
        %v1240 = vrot.slane %v1177, 5
        %v1241 = vrot.slane %v1240, 4
        %v1242 = vrot.slane %v188, 5
        %v1243 = vsel %vm1225, %v1241, %v1242
        %v1244 = vrot.slane %v1242, 4
        %v1245 = vrot.slane %v218, 5
        %v1246 = vsel %vm1225, %v1244, %v1245
        %v1247 = vrot.slane %v1178, 5
        %v1248 = vrot.slane %v1247, 4
        %v1249 = vrot.slane %v190, 5
        %v1250 = vsel %vm1225, %v1248, %v1249
        %v1251 = vrot.slane %v1249, 4
        %v1252 = vrot.slane %v219, 5
        %v1253 = vsel %vm1225, %v1251, %v1252
        %v1254 = vrot.slane %v1179, 5
        %v1255 = vrot.slane %v1254, 4
        %v1256 = vrot.slane %v192, 5
        %v1257 = vsel %vm1225, %v1255, %v1256
        %v1258 = vrot.slane %v1256, 4
        %v1259 = vrot.slane %v220, 5
        %v1260 = vsel %vm1225, %v1258, %v1259
        %v1261 = vrot.slane %v1180, 5
        %v1262 = vrot.slane %v1261, 4
        %v1263 = vrot.slane %v194, 5
        %v1264 = vsel %vm1225, %v1262, %v1263
        %v1265 = vrot.slane %v1263, 4
        %v1266 = vrot.slane %v221, 5
        %v1267 = vsel %vm1225, %v1265, %v1266
        %v1268 = vrot.slane %v1181, 5
        %v1269 = vrot.slane %v1268, 4
        %v1270 = vrot.slane %v196, 5
        %v1271 = vsel %vm1225, %v1269, %v1270
        %v1272 = vrot.slane %v1270, 4
        %v1273 = vrot.slane %v222, 5
        %v1274 = vsel %vm1225, %v1272, %v1273
        %v1275 = vrot.slane %v1182, 5
        %v1276 = vrot.slane %v1275, 4
        %v1277 = vrot.slane %v198, 5
        %v1278 = vsel %vm1225, %v1276, %v1277
        %v1279 = vrot.slane %v1277, 4
        %v1280 = vrot.slane %v223, 5
        %v1281 = vsel %vm1225, %v1279, %v1280
        %v1282 = vrot.slane %v1183, 5
        %v1283 = vrot.slane %v1282, 4
        %v1284 = vrot.slane %v200, 5
        %v1285 = vsel %vm1225, %v1283, %v1284
        %v1286 = vrot.slane %v1284, 4
        %v1287 = vrot.slane %v224, 5
        %v1288 = vsel %vm1225, %v1286, %v1287
        %v1289 = vrot.slane %v1184, 5
        %v1290 = vrot.slane %v1289, 4
        %v1291 = vrot.slane %v202, 5
        %v1292 = vsel %vm1225, %v1290, %v1291
        %v1293 = vrot.slane %v1291, 4
        %v1294 = vrot.slane %v225, 5
        %v1295 = vsel %vm1225, %v1293, %v1294
        %v1296 = vrot.slane %v1185, 5
        %v1297 = vrot.slane %v1296, 4
        %v1298 = vrot.slane %v204, 5
        %v1299 = vsel %vm1225, %v1297, %v1298
        %v1300 = vrot.slane %v1298, 4
        %v1301 = vrot.slane %v226, 5
        %v1302 = vsel %vm1225, %v1300, %v1301
        %v1303 = vrot.slane %v1186, 5
        %v1304 = vrot.slane %v1303, 4
        %v1305 = vrot.slane %v206, 5
        %v1306 = vsel %vm1225, %v1304, %v1305
        %v1307 = vrot.slane %v1305, 4
        %v1308 = vrot.slane %v227, 5
        %v1309 = vsel %vm1225, %v1307, %v1308
        %v1310 = vrot.slane %v1187, 5
        %v1311 = vrot.slane %v1310, 4
        %v1312 = vrot.slane %v208, 5
        %v1313 = vsel %vm1225, %v1311, %v1312
        %v1314 = vrot.slane %v1312, 4
        %v1315 = vrot.slane %v228, 5
        %v1316 = vsel %vm1225, %v1314, %v1315
        %v1317 = vrot.slane %v1188, 5
        %v1318 = vrot.slane %v1317, 4
        %v1319 = vrot.slane %v210, 5
        %v1320 = vsel %vm1225, %v1318, %v1319
        %v1321 = vrot.slane %v1319, 4
        %v1322 = vrot.slane %v229, 5
        %v1323 = vsel %vm1225, %v1321, %v1322
        %v1324 = vrot.slane %v1189, 5
        %v1325 = vrot.slane %v1324, 4
        %v1326 = vrot.slane %v212, 5
        %v1327 = vsel %vm1225, %v1325, %v1326
        %v1328 = vrot.slane %v1326, 4
        %v1329 = vrot.slane %v230, 5
        %v1330 = vsel %vm1225, %v1328, %v1329
        %v1331 = vrot.slane %v1190, 5
        %v1332 = vrot.slane %v1331, 4
        %v1333 = vrot.slane %v214, 5
        %v1334 = vsel %vm1225, %v1332, %v1333
        %v1335 = vrot.slane %v1333, 4
        %v1336 = vrot.slane %v231, 5
        %v1337 = vsel %vm1225, %v1335, %v1336
        %s1338 = scalar_lea.vmem %s1, 4
        %v1339 = vld [vmem:[%s1338] sm:$0x3]
        %v1340 = vunpack.c.l.b16 %v1229
        %v1341 = vunpack.c.l.b16 %v1232
        %v1342 = vunpack.c.l.b16 %v1236
        %v1343 = vunpack.c.l.b16 %v1239
        %v1344 = vunpack.c.l.b16 %v1243
        %v1345 = vunpack.c.l.b16 %v1246
        %v1346 = vunpack.c.l.b16 %v1250
        %v1347 = vunpack.c.l.b16 %v1253
        %v1348 = vunpack.c.l.b16 %v1257
        %v1349 = vunpack.c.l.b16 %v1260
        %v1350 = vunpack.c.l.b16 %v1264
        %v1351 = vunpack.c.l.b16 %v1267
        %v1352 = vunpack.c.l.b16 %v1271
        %v1353 = vunpack.c.l.b16 %v1274
        %v1354 = vunpack.c.l.b16 %v1278
        %v1355 = vunpack.c.l.b16 %v1281
        %v1356 = vunpack.c.l.b16 %v1285
        %v1357 = vunpack.c.l.b16 %v1288
        %v1358 = vunpack.c.l.b16 %v1292
        %v1359 = vunpack.c.l.b16 %v1295
        %v1360 = vunpack.c.l.b16 %v1299
        %v1361 = vunpack.c.l.b16 %v1302
        %v1362 = vunpack.c.l.b16 %v1306
        %v1363 = vunpack.c.l.b16 %v1309
        %v1364 = vunpack.c.l.b16 %v1313
        %v1365 = vunpack.c.l.b16 %v1316
        %v1366 = vunpack.c.l.b16 %v1320
        %v1367 = vunpack.c.l.b16 %v1323
        %v1368 = vunpack.c.l.b16 %v1327
        %v1369 = vunpack.c.l.b16 %v1330
        %v1370 = vunpack.c.l.b16 %v1334
        %v1371 = vunpack.c.l.b16 %v1337
        %v1372 = vpack.c.b16 %v1341, %v1340
        %v1373 = vpack.c.b16 %v1343, %v1342
        %v1374 = vpack.c.b16 %v1345, %v1344
        %v1375 = vpack.c.b16 %v1347, %v1346
        %v1376 = vpack.c.b16 %v1349, %v1348
        %v1377 = vpack.c.b16 %v1351, %v1350
        %v1378 = vpack.c.b16 %v1353, %v1352
        %v1379 = vpack.c.b16 %v1355, %v1354
        %v1380 = vpack.c.b16 %v1357, %v1356
        %v1381 = vpack.c.b16 %v1359, %v1358
        %v1382 = vpack.c.b16 %v1361, %v1360
        %v1383 = vpack.c.b16 %v1363, %v1362
        %v1384 = vpack.c.b16 %v1365, %v1364
        %v1385 = vpack.c.b16 %v1367, %v1366
        %v1386 = vpack.c.b16 %v1369, %v1368
        %v1387 = vpack.c.b16 %v1371, %v1370
        %v1389 = vsel %vm669, %v1372, 0
        %v1392 = vsel %vm669, %v1373, 0
        %v1395 = vsel %vm669, %v1374, 0
        %v1398 = vsel %vm669, %v1375, 0
        %v1401 = vsel %vm669, %v1376, 0
        %v1404 = vsel %vm669, %v1377, 0
        %v1407 = vsel %vm669, %v1378, 0
        %v1410 = vsel %vm669, %v1379, 0
        %v1413 = vsel %vm669, %v1380, 0
        %v1416 = vsel %vm669, %v1381, 0
        %v1419 = vsel %vm669, %v1382, 0
        %v1422 = vsel %vm669, %v1383, 0
        %v1425 = vsel %vm669, %v1384, 0
        %v1428 = vsel %vm669, %v1385, 0
        %v1431 = vsel %vm669, %v1386, 0
        %v1434 = vsel %vm669, %v1387, 0
        %v1437 = vsel %vm718, %v1339, 0
        %1439 = vmatprep.subr.bf16.mxu0 0
        %1440 = vmatpush1.bf16.msra.mxu0 0
        %1441 = vmatprep.subr.bf16.mxu0 0
        %1442 = vmatpush1.bf16.msra.mxu0 0
        %1443 = vmatprep.subr.bf16.mxu0 0
        %1444 = vmatpush1.bf16.msra.mxu0 0
        %1445 = vmatprep.subr.bf16.mxu0 0
        %1446 = vmatpush1.bf16.msra.mxu0 0
        %1447 = vmatprep.subr.bf16.mxu0 0
        %1448 = vmatpush1.bf16.msra.mxu0 0
        %1449 = vmatprep.subr.bf16.mxu0 0
        %1450 = vmatpush1.bf16.msra.mxu0 0
        %1451 = vmatprep.subr.bf16.mxu0 0
        %1452 = vmatpush1.bf16.msra.mxu0 0
        %1453 = vmatprep.subr.bf16.mxu0 0
        %1454 = vmatpush1.bf16.msra.mxu0 %v1437
        %1455 = vmatprep.subr.bf16.mxu0 0
        %1456 = vmatpush2.bf16.msra.mxu0 0
        %1457 = vmatprep.subr.bf16.mxu0 0
        %1458 = vmatpush2.bf16.msra.mxu0 0
        %1459 = vmatprep.subr.bf16.mxu0 0
        %1460 = vmatpush2.bf16.msra.mxu0 0
        %1461 = vmatprep.subr.bf16.mxu0 0
        %1462 = vmatpush2.bf16.msra.mxu0 0
        %1463 = vmatprep.subr.bf16.mxu0 0
        %1464 = vmatpush2.bf16.msra.mxu0 0
        %1465 = vmatprep.subr.bf16.mxu0 0
        %1466 = vmatpush2.bf16.msra.mxu0 0
        %1467 = vmatprep.subr.bf16.mxu0 0
        %1468 = vmatpush2.bf16.msra.mxu0 0
        %1469 = vmatprep.subr.bf16.mxu0 0
        %1470 = vmatpush2.bf16.msra.mxu0 0
        %1471 = vmatprep.mubr.bf16.mxu0 0
        %1472 = vmatmul.mubr.bf16.gmra.mxu0 %v1389
        %v1473 = vpop.f32.mrf.mxu0
        %v1474 = vadd.f32 0.0, %v1473
        %v1475 = vpop.f32.mrf.mxu0
        %v1476 = vpop.f32.mrf.mxu0
        %v1477 = vadd.f32 0.0, %v1476
        %v1478 = vpop.f32.mrf.mxu0
        %1479 = vmatprep.mubr.bf16.mxu0 0
        %1480 = vmatmul.mubr.bf16.gmra.mxu0 %v1392
        %v1481 = vpop.f32.mrf.mxu0
        %v1482 = vadd.f32 0.0, %v1481
        %v1483 = vpop.f32.mrf.mxu0
        %v1484 = vpop.f32.mrf.mxu0
        %v1485 = vadd.f32 0.0, %v1484
        %v1486 = vpop.f32.mrf.mxu0
        %1487 = vmatprep.mubr.bf16.mxu0 0
        %1488 = vmatmul.mubr.bf16.gmra.mxu0 %v1395
        %v1489 = vpop.f32.mrf.mxu0
        %v1490 = vadd.f32 0.0, %v1489
        %v1491 = vpop.f32.mrf.mxu0
        %v1492 = vpop.f32.mrf.mxu0
        %v1493 = vadd.f32 0.0, %v1492
        %v1494 = vpop.f32.mrf.mxu0
        %1495 = vmatprep.mubr.bf16.mxu0 0
        %1496 = vmatmul.mubr.bf16.gmra.mxu0 %v1398
        %v1497 = vpop.f32.mrf.mxu0
        %v1498 = vadd.f32 0.0, %v1497
        %v1499 = vpop.f32.mrf.mxu0
        %v1500 = vpop.f32.mrf.mxu0
        %v1501 = vadd.f32 0.0, %v1500
        %v1502 = vpop.f32.mrf.mxu0
        %1503 = vmatprep.mubr.bf16.mxu0 0
        %1504 = vmatmul.mubr.bf16.gmra.mxu0 %v1401
        %v1505 = vpop.f32.mrf.mxu0
        %v1506 = vadd.f32 0.0, %v1505
        %v1507 = vpop.f32.mrf.mxu0
        %v1508 = vpop.f32.mrf.mxu0
        %v1509 = vadd.f32 0.0, %v1508
        %v1510 = vpop.f32.mrf.mxu0
        %1511 = vmatprep.mubr.bf16.mxu0 0
        %1512 = vmatmul.mubr.bf16.gmra.mxu0 %v1404
        %v1513 = vpop.f32.mrf.mxu0
        %v1514 = vadd.f32 0.0, %v1513
        %v1515 = vpop.f32.mrf.mxu0
        %v1516 = vpop.f32.mrf.mxu0
        %v1517 = vadd.f32 0.0, %v1516
        %v1518 = vpop.f32.mrf.mxu0
        %1519 = vmatprep.mubr.bf16.mxu0 0
        %1520 = vmatmul.mubr.bf16.gmra.mxu0 %v1407
        %v1521 = vpop.f32.mrf.mxu0
        %v1522 = vadd.f32 0.0, %v1521
        %v1523 = vpop.f32.mrf.mxu0
        %v1524 = vpop.f32.mrf.mxu0
        %v1525 = vadd.f32 0.0, %v1524
        %v1526 = vpop.f32.mrf.mxu0
        %1527 = vmatprep.mubr.bf16.mxu0 0
        %1528 = vmatmul.mubr.bf16.gmra.mxu0 %v1410
        %v1529 = vpop.f32.mrf.mxu0
        %v1530 = vadd.f32 0.0, %v1529
        %v1531 = vpop.f32.mrf.mxu0
        %v1532 = vpop.f32.mrf.mxu0
        %v1533 = vadd.f32 0.0, %v1532
        %v1534 = vpop.f32.mrf.mxu0
        %1535 = vmatprep.mubr.bf16.mxu0 0
        %1536 = vmatmul.mubr.bf16.gmra.mxu0 %v1413
        %v1537 = vpop.f32.mrf.mxu0
        %v1538 = vadd.f32 0.0, %v1537
        %v1539 = vpop.f32.mrf.mxu0
        %v1540 = vpop.f32.mrf.mxu0
        %v1541 = vadd.f32 0.0, %v1540
        %v1542 = vpop.f32.mrf.mxu0
        %1543 = vmatprep.mubr.bf16.mxu0 0
        %1544 = vmatmul.mubr.bf16.gmra.mxu0 %v1416
        %v1545 = vpop.f32.mrf.mxu0
        %v1546 = vadd.f32 0.0, %v1545
        %v1547 = vpop.f32.mrf.mxu0
        %v1548 = vpop.f32.mrf.mxu0
        %v1549 = vadd.f32 0.0, %v1548
        %v1550 = vpop.f32.mrf.mxu0
        %1551 = vmatprep.mubr.bf16.mxu0 0
        %1552 = vmatmul.mubr.bf16.gmra.mxu0 %v1419
        %v1553 = vpop.f32.mrf.mxu0
        %v1554 = vadd.f32 0.0, %v1553
        %v1555 = vpop.f32.mrf.mxu0
        %v1556 = vpop.f32.mrf.mxu0
        %v1557 = vadd.f32 0.0, %v1556
        %v1558 = vpop.f32.mrf.mxu0
        %1559 = vmatprep.mubr.bf16.mxu0 0
        %1560 = vmatmul.mubr.bf16.gmra.mxu0 %v1422
        %v1561 = vpop.f32.mrf.mxu0
        %v1562 = vadd.f32 0.0, %v1561
        %v1563 = vpop.f32.mrf.mxu0
        %v1564 = vpop.f32.mrf.mxu0
        %v1565 = vadd.f32 0.0, %v1564
        %v1566 = vpop.f32.mrf.mxu0
        %1567 = vmatprep.mubr.bf16.mxu0 0
        %1568 = vmatmul.mubr.bf16.gmra.mxu0 %v1425
        %v1569 = vpop.f32.mrf.mxu0
        %v1570 = vadd.f32 0.0, %v1569
        %v1571 = vpop.f32.mrf.mxu0
        %v1572 = vpop.f32.mrf.mxu0
        %v1573 = vadd.f32 0.0, %v1572
        %v1574 = vpop.f32.mrf.mxu0
        %1575 = vmatprep.mubr.bf16.mxu0 0
        %1576 = vmatmul.mubr.bf16.gmra.mxu0 %v1428
        %v1577 = vpop.f32.mrf.mxu0
        %v1578 = vadd.f32 0.0, %v1577
        %v1579 = vpop.f32.mrf.mxu0
        %v1580 = vpop.f32.mrf.mxu0
        %v1581 = vadd.f32 0.0, %v1580
        %v1582 = vpop.f32.mrf.mxu0
        %1583 = vmatprep.mubr.bf16.mxu0 0
        %1584 = vmatmul.mubr.bf16.gmra.mxu0 %v1431
        %v1585 = vpop.f32.mrf.mxu0
        %v1586 = vadd.f32 0.0, %v1585
        %v1587 = vpop.f32.mrf.mxu0
        %v1588 = vpop.f32.mrf.mxu0
        %v1589 = vadd.f32 0.0, %v1588
        %v1590 = vpop.f32.mrf.mxu0
        %1591 = vmatprep.mubr.bf16.mxu0 0
        %1592 = vmatmul.mubr.bf16.gmra.mxu0 %v1434
        %v1593 = vpop.f32.mrf.mxu0
        %v1594 = vadd.f32 0.0, %v1593
        %v1595 = vpop.f32.mrf.mxu0
        %v1596 = vpop.f32.mrf.mxu0
        %v1597 = vadd.f32 0.0, %v1596
        %v1598 = vpop.f32.mrf.mxu0
        %1599 = vdwg.mxu0
        %v1600 = vadd.f32 %v1049, %v1474
        %v1601 = vadd.f32 %v1052, %v1477
        %v1602 = vadd.f32 %v1057, %v1482
        %v1603 = vadd.f32 %v1060, %v1485
        %v1604 = vadd.f32 %v1065, %v1490
        %v1605 = vadd.f32 %v1068, %v1493
        %v1606 = vadd.f32 %v1073, %v1498
        %v1607 = vadd.f32 %v1076, %v1501
        %v1608 = vadd.f32 %v1081, %v1506
        %v1609 = vadd.f32 %v1084, %v1509
        %v1610 = vadd.f32 %v1089, %v1514
        %v1611 = vadd.f32 %v1092, %v1517
        %v1612 = vadd.f32 %v1097, %v1522
        %v1613 = vadd.f32 %v1100, %v1525
        %v1614 = vadd.f32 %v1105, %v1530
        %v1615 = vadd.f32 %v1108, %v1533
        %v1616 = vadd.f32 %v1113, %v1538
        %v1617 = vadd.f32 %v1116, %v1541
        %v1618 = vadd.f32 %v1121, %v1546
        %v1619 = vadd.f32 %v1124, %v1549
        %v1620 = vadd.f32 %v1129, %v1554
        %v1621 = vadd.f32 %v1132, %v1557
        %v1622 = vadd.f32 %v1137, %v1562
        %v1623 = vadd.f32 %v1140, %v1565
        %v1624 = vadd.f32 %v1145, %v1570
        %v1625 = vadd.f32 %v1148, %v1573
        %v1626 = vadd.f32 %v1153, %v1578
        %v1627 = vadd.f32 %v1156, %v1581
        %v1628 = vadd.f32 %v1161, %v1586
        %v1629 = vadd.f32 %v1164, %v1589
        %v1630 = vadd.f32 %v1169, %v1594
        %v1631 = vadd.f32 %v1172, %v1597
        %s1632 = scalar_lea.vmem %s175, 12
        %v1633 = vld [vmem:[%s1632] sm:$0xf]
        %v1634 = vld [vmem:[%s1632 + $0x4] sm:$0xf]
        %v1635 = vld [vmem:[%s1632 + $0xc] sm:$0xf]
        %v1636 = vld [vmem:[%s1632 + $0x10] sm:$0xf]
        %v1637 = vld [vmem:[%s1632 + $0x18] sm:$0xf]
        %v1638 = vld [vmem:[%s1632 + $0x1c] sm:$0xf]
        %v1639 = vld [vmem:[%s1632 + $0x24] sm:$0xf]
        %v1640 = vld [vmem:[%s1632 + $0x28] sm:$0xf]
        %v1641 = vld [vmem:[%s1632 + $0x30] sm:$0xf]
        %v1642 = vld [vmem:[%s1632 + $0x34] sm:$0xf]
        %v1643 = vld [vmem:[%s1632 + $0x3c] sm:$0xf]
        %v1644 = vld [vmem:[%s1632 + $0x40] sm:$0xf]
        %v1645 = vld [vmem:[%s1632 + $0x48] sm:$0xf]
        %v1646 = vld [vmem:[%s1632 + $0x4c] sm:$0xf]
        %v1647 = vld [vmem:[%s1632 + $0x54] sm:$0xf]
        %v1648 = vld [vmem:[%s1632 + $0x58] sm:$0xf]
        %v1649 = vld [vmem:[%s1632 + $0x78] sm:$0xf]
        %v1650 = vld [vmem:[%s1632 + $0x7c] sm:$0xf]
        %v1651 = vld [vmem:[%s1632 + $0x84] sm:$0xf]
        %v1652 = vld [vmem:[%s1632 + $0x88] sm:$0xf]
        %v1653 = vld [vmem:[%s1632 + $0x90] sm:$0xf]
        %v1654 = vld [vmem:[%s1632 + $0x94] sm:$0xf]
        %v1655 = vld [vmem:[%s1632 + $0x9c] sm:$0xf]
        %v1656 = vld [vmem:[%s1632 + $0xa0] sm:$0xf]
        %v1657 = vld [vmem:[%s1632 + $0xa8] sm:$0xf]
        %v1658 = vld [vmem:[%s1632 + $0xac] sm:$0xf]
        %v1659 = vld [vmem:[%s1632 + $0xb4] sm:$0xf]
        %v1660 = vld [vmem:[%s1632 + $0xb8] sm:$0xf]
        %v1661 = vld [vmem:[%s1632 + $0xc0] sm:$0xf]
        %v1662 = vld [vmem:[%s1632 + $0xc4] sm:$0xf]
        %v1663 = vld [vmem:[%s1632 + $0xcc] sm:$0xf]
        %v1664 = vld [vmem:[%s1632 + $0xd0] sm:$0xf]
        %s1665 = scalar_lea.vmem %s1, 6
        %v1666 = vld [vmem:[%s1665] sm:$0x3]
        %v1699 = vunpack.c.l.b16 %v1633
        %v1700 = vunpack.c.l.b16 %v1634
        %v1701 = vunpack.c.l.b16 %v1635
        %v1702 = vunpack.c.l.b16 %v1636
        %v1703 = vunpack.c.l.b16 %v1637
        %v1704 = vunpack.c.l.b16 %v1638
        %v1705 = vunpack.c.l.b16 %v1639
        %v1706 = vunpack.c.l.b16 %v1640
        %v1707 = vunpack.c.l.b16 %v1641
        %v1708 = vunpack.c.l.b16 %v1642
        %v1709 = vunpack.c.l.b16 %v1643
        %v1710 = vunpack.c.l.b16 %v1644
        %v1711 = vunpack.c.l.b16 %v1645
        %v1712 = vunpack.c.l.b16 %v1646
        %v1713 = vunpack.c.l.b16 %v1647
        %v1714 = vunpack.c.l.b16 %v1648
        %v1715 = vunpack.c.l.b16 %v1649
        %v1716 = vunpack.c.l.b16 %v1650
        %v1717 = vunpack.c.l.b16 %v1651
        %v1718 = vunpack.c.l.b16 %v1652
        %v1719 = vunpack.c.l.b16 %v1653
        %v1720 = vunpack.c.l.b16 %v1654
        %v1721 = vunpack.c.l.b16 %v1655
        %v1722 = vunpack.c.l.b16 %v1656
        %v1723 = vunpack.c.l.b16 %v1657
        %v1724 = vunpack.c.l.b16 %v1658
        %v1725 = vunpack.c.l.b16 %v1659
        %v1726 = vunpack.c.l.b16 %v1660
        %v1727 = vunpack.c.l.b16 %v1661
        %v1728 = vunpack.c.l.b16 %v1662
        %v1729 = vunpack.c.l.b16 %v1663
        %v1730 = vunpack.c.l.b16 %v1664
        %v1731 = vpack.c.b16 %v1700, %v1699
        %v1732 = vpack.c.b16 %v1702, %v1701
        %v1733 = vpack.c.b16 %v1704, %v1703
        %v1734 = vpack.c.b16 %v1706, %v1705
        %v1735 = vpack.c.b16 %v1708, %v1707
        %v1736 = vpack.c.b16 %v1710, %v1709
        %v1737 = vpack.c.b16 %v1712, %v1711
        %v1738 = vpack.c.b16 %v1714, %v1713
        %v1739 = vpack.c.b16 %v1716, %v1715
        %v1740 = vpack.c.b16 %v1718, %v1717
        %v1741 = vpack.c.b16 %v1720, %v1719
        %v1742 = vpack.c.b16 %v1722, %v1721
        %v1743 = vpack.c.b16 %v1724, %v1723
        %v1744 = vpack.c.b16 %v1726, %v1725
        %v1745 = vpack.c.b16 %v1728, %v1727
        %v1746 = vpack.c.b16 %v1730, %v1729
        %v1748 = vsel %vm669, %v1731, 0
        %v1751 = vsel %vm669, %v1732, 0
        %v1754 = vsel %vm669, %v1733, 0
        %v1757 = vsel %vm669, %v1734, 0
        %v1760 = vsel %vm669, %v1735, 0
        %v1763 = vsel %vm669, %v1736, 0
        %v1766 = vsel %vm669, %v1737, 0
        %v1769 = vsel %vm669, %v1738, 0
        %v1772 = vsel %vm669, %v1739, 0
        %v1775 = vsel %vm669, %v1740, 0
        %v1778 = vsel %vm669, %v1741, 0
        %v1781 = vsel %vm669, %v1742, 0
        %v1784 = vsel %vm669, %v1743, 0
        %v1787 = vsel %vm669, %v1744, 0
        %v1790 = vsel %vm669, %v1745, 0
        %v1793 = vsel %vm669, %v1746, 0
        %v1796 = vsel %vm718, %v1666, 0
        %1798 = vmatprep.subr.bf16.mxu0 0
        %1799 = vmatpush1.bf16.msra.mxu0 0
        %1800 = vmatprep.subr.bf16.mxu0 0
        %1801 = vmatpush1.bf16.msra.mxu0 0
        %1802 = vmatprep.subr.bf16.mxu0 0
        %1803 = vmatpush1.bf16.msra.mxu0 0
        %1804 = vmatprep.subr.bf16.mxu0 0
        %1805 = vmatpush1.bf16.msra.mxu0 0
        %1806 = vmatprep.subr.bf16.mxu0 0
        %1807 = vmatpush1.bf16.msra.mxu0 0
        %1808 = vmatprep.subr.bf16.mxu0 0
        %1809 = vmatpush1.bf16.msra.mxu0 0
        %1810 = vmatprep.subr.bf16.mxu0 0
        %1811 = vmatpush1.bf16.msra.mxu0 0
        %1812 = vmatprep.subr.bf16.mxu0 0
        %1813 = vmatpush1.bf16.msra.mxu0 %v1796
        %1814 = vmatprep.subr.bf16.mxu0 0
        %1815 = vmatpush2.bf16.msra.mxu0 0
        %1816 = vmatprep.subr.bf16.mxu0 0
        %1817 = vmatpush2.bf16.msra.mxu0 0
        %1818 = vmatprep.subr.bf16.mxu0 0
        %1819 = vmatpush2.bf16.msra.mxu0 0
        %1820 = vmatprep.subr.bf16.mxu0 0
        %1821 = vmatpush2.bf16.msra.mxu0 0
        %1822 = vmatprep.subr.bf16.mxu0 0
        %1823 = vmatpush2.bf16.msra.mxu0 0
        %1824 = vmatprep.subr.bf16.mxu0 0
        %1825 = vmatpush2.bf16.msra.mxu0 0
        %1826 = vmatprep.subr.bf16.mxu0 0
        %1827 = vmatpush2.bf16.msra.mxu0 0
        %1828 = vmatprep.subr.bf16.mxu0 0
        %1829 = vmatpush2.bf16.msra.mxu0 0
        %1830 = vmatprep.mubr.bf16.mxu0 0
        %1831 = vmatmul.mubr.bf16.gmra.mxu0 %v1748
        %v1832 = vpop.f32.mrf.mxu0
        %v1833 = vadd.f32 0.0, %v1832
        %v1834 = vpop.f32.mrf.mxu0
        %v1835 = vpop.f32.mrf.mxu0
        %v1836 = vadd.f32 0.0, %v1835
        %v1837 = vpop.f32.mrf.mxu0
        %1838 = vmatprep.mubr.bf16.mxu0 0
        %1839 = vmatmul.mubr.bf16.gmra.mxu0 %v1751
        %v1840 = vpop.f32.mrf.mxu0
        %v1841 = vadd.f32 0.0, %v1840
        %v1842 = vpop.f32.mrf.mxu0
        %v1843 = vpop.f32.mrf.mxu0
        %v1844 = vadd.f32 0.0, %v1843
        %v1845 = vpop.f32.mrf.mxu0
        %1846 = vmatprep.mubr.bf16.mxu0 0
        %1847 = vmatmul.mubr.bf16.gmra.mxu0 %v1754
        %v1848 = vpop.f32.mrf.mxu0
        %v1849 = vadd.f32 0.0, %v1848
        %v1850 = vpop.f32.mrf.mxu0
        %v1851 = vpop.f32.mrf.mxu0
        %v1852 = vadd.f32 0.0, %v1851
        %v1853 = vpop.f32.mrf.mxu0
        %1854 = vmatprep.mubr.bf16.mxu0 0
        %1855 = vmatmul.mubr.bf16.gmra.mxu0 %v1757
        %v1856 = vpop.f32.mrf.mxu0
        %v1857 = vadd.f32 0.0, %v1856
        %v1858 = vpop.f32.mrf.mxu0
        %v1859 = vpop.f32.mrf.mxu0
        %v1860 = vadd.f32 0.0, %v1859
        %v1861 = vpop.f32.mrf.mxu0
        %1862 = vmatprep.mubr.bf16.mxu0 0
        %1863 = vmatmul.mubr.bf16.gmra.mxu0 %v1760
        %v1864 = vpop.f32.mrf.mxu0
        %v1865 = vadd.f32 0.0, %v1864
        %v1866 = vpop.f32.mrf.mxu0
        %v1867 = vpop.f32.mrf.mxu0
        %v1868 = vadd.f32 0.0, %v1867
        %v1869 = vpop.f32.mrf.mxu0
        %1870 = vmatprep.mubr.bf16.mxu0 0
        %1871 = vmatmul.mubr.bf16.gmra.mxu0 %v1763
        %v1872 = vpop.f32.mrf.mxu0
        %v1873 = vadd.f32 0.0, %v1872
        %v1874 = vpop.f32.mrf.mxu0
        %v1875 = vpop.f32.mrf.mxu0
        %v1876 = vadd.f32 0.0, %v1875
        %v1877 = vpop.f32.mrf.mxu0
        %1878 = vmatprep.mubr.bf16.mxu0 0
        %1879 = vmatmul.mubr.bf16.gmra.mxu0 %v1766
        %v1880 = vpop.f32.mrf.mxu0
        %v1881 = vadd.f32 0.0, %v1880
        %v1882 = vpop.f32.mrf.mxu0
        %v1883 = vpop.f32.mrf.mxu0
        %v1884 = vadd.f32 0.0, %v1883
        %v1885 = vpop.f32.mrf.mxu0
        %1886 = vmatprep.mubr.bf16.mxu0 0
        %1887 = vmatmul.mubr.bf16.gmra.mxu0 %v1769
        %v1888 = vpop.f32.mrf.mxu0
        %v1889 = vadd.f32 0.0, %v1888
        %v1890 = vpop.f32.mrf.mxu0
        %v1891 = vpop.f32.mrf.mxu0
        %v1892 = vadd.f32 0.0, %v1891
        %v1893 = vpop.f32.mrf.mxu0
        %1894 = vmatprep.mubr.bf16.mxu0 0
        %1895 = vmatmul.mubr.bf16.gmra.mxu0 %v1772
        %v1896 = vpop.f32.mrf.mxu0
        %v1897 = vadd.f32 0.0, %v1896
        %v1898 = vpop.f32.mrf.mxu0
        %v1899 = vpop.f32.mrf.mxu0
        %v1900 = vadd.f32 0.0, %v1899
        %v1901 = vpop.f32.mrf.mxu0
        %1902 = vmatprep.mubr.bf16.mxu0 0
        %1903 = vmatmul.mubr.bf16.gmra.mxu0 %v1775
        %v1904 = vpop.f32.mrf.mxu0
        %v1905 = vadd.f32 0.0, %v1904
        %v1906 = vpop.f32.mrf.mxu0
        %v1907 = vpop.f32.mrf.mxu0
        %v1908 = vadd.f32 0.0, %v1907
        %v1909 = vpop.f32.mrf.mxu0
        %1910 = vmatprep.mubr.bf16.mxu0 0
        %1911 = vmatmul.mubr.bf16.gmra.mxu0 %v1778
        %v1912 = vpop.f32.mrf.mxu0
        %v1913 = vadd.f32 0.0, %v1912
        %v1914 = vpop.f32.mrf.mxu0
        %v1915 = vpop.f32.mrf.mxu0
        %v1916 = vadd.f32 0.0, %v1915
        %v1917 = vpop.f32.mrf.mxu0
        %1918 = vmatprep.mubr.bf16.mxu0 0
        %1919 = vmatmul.mubr.bf16.gmra.mxu0 %v1781
        %v1920 = vpop.f32.mrf.mxu0
        %v1921 = vadd.f32 0.0, %v1920
        %v1922 = vpop.f32.mrf.mxu0
        %v1923 = vpop.f32.mrf.mxu0
        %v1924 = vadd.f32 0.0, %v1923
        %v1925 = vpop.f32.mrf.mxu0
        %1926 = vmatprep.mubr.bf16.mxu0 0
        %1927 = vmatmul.mubr.bf16.gmra.mxu0 %v1784
        %v1928 = vpop.f32.mrf.mxu0
        %v1929 = vadd.f32 0.0, %v1928
        %v1930 = vpop.f32.mrf.mxu0
        %v1931 = vpop.f32.mrf.mxu0
        %v1932 = vadd.f32 0.0, %v1931
        %v1933 = vpop.f32.mrf.mxu0
        %1934 = vmatprep.mubr.bf16.mxu0 0
        %1935 = vmatmul.mubr.bf16.gmra.mxu0 %v1787
        %v1936 = vpop.f32.mrf.mxu0
        %v1937 = vadd.f32 0.0, %v1936
        %v1938 = vpop.f32.mrf.mxu0
        %v1939 = vpop.f32.mrf.mxu0
        %v1940 = vadd.f32 0.0, %v1939
        %v1941 = vpop.f32.mrf.mxu0
        %1942 = vmatprep.mubr.bf16.mxu0 0
        %1943 = vmatmul.mubr.bf16.gmra.mxu0 %v1790
        %v1944 = vpop.f32.mrf.mxu0
        %v1945 = vadd.f32 0.0, %v1944
        %v1946 = vpop.f32.mrf.mxu0
        %v1947 = vpop.f32.mrf.mxu0
        %v1948 = vadd.f32 0.0, %v1947
        %v1949 = vpop.f32.mrf.mxu0
        %1950 = vmatprep.mubr.bf16.mxu0 0
        %1951 = vmatmul.mubr.bf16.gmra.mxu0 %v1793
        %v1952 = vpop.f32.mrf.mxu0
        %v1953 = vadd.f32 0.0, %v1952
        %v1954 = vpop.f32.mrf.mxu0
        %v1955 = vpop.f32.mrf.mxu0
        %v1956 = vadd.f32 0.0, %v1955
        %v1957 = vpop.f32.mrf.mxu0
        %1958 = vdwg.mxu0
        %v1959 = vadd.f32 %v1600, %v1833
        %v1960 = vadd.f32 %v1601, %v1836
        %v1961 = vadd.f32 %v1602, %v1841
        %v1962 = vadd.f32 %v1603, %v1844
        %v1963 = vadd.f32 %v1604, %v1849
        %v1964 = vadd.f32 %v1605, %v1852
        %v1965 = vadd.f32 %v1606, %v1857
        %v1966 = vadd.f32 %v1607, %v1860
        %v1967 = vadd.f32 %v1608, %v1865
        %v1968 = vadd.f32 %v1609, %v1868
        %v1969 = vadd.f32 %v1610, %v1873
        %v1970 = vadd.f32 %v1611, %v1876
        %v1971 = vadd.f32 %v1612, %v1881
        %v1972 = vadd.f32 %v1613, %v1884
        %v1973 = vadd.f32 %v1614, %v1889
        %v1974 = vadd.f32 %v1615, %v1892
        %v1975 = vadd.f32 %v1616, %v1897
        %v1976 = vadd.f32 %v1617, %v1900
        %v1977 = vadd.f32 %v1618, %v1905
        %v1978 = vadd.f32 %v1619, %v1908
        %v1979 = vadd.f32 %v1620, %v1913
        %v1980 = vadd.f32 %v1621, %v1916
        %v1981 = vadd.f32 %v1622, %v1921
        %v1982 = vadd.f32 %v1623, %v1924
        %v1983 = vadd.f32 %v1624, %v1929
        %v1984 = vadd.f32 %v1625, %v1932
        %v1985 = vadd.f32 %v1626, %v1937
        %v1986 = vadd.f32 %v1627, %v1940
        %v1987 = vadd.f32 %v1628, %v1945
        %v1988 = vadd.f32 %v1629, %v1948
        %v1989 = vadd.f32 %v1630, %v1953
        %v1990 = vadd.f32 %v1631, %v1956
        %v1991 = vld [vmem:[%s1632] sm:$0xf]
        %v1992 = vld [vmem:[%s1632 + $0x4] sm:$0xf]
        %v1993 = vld [vmem:[%s1632 + $0x8] sm:$0x1]
        %v1994 = vld [vmem:[%s1632 + $0xc] sm:$0xf]
        %v1995 = vld [vmem:[%s1632 + $0x10] sm:$0xf]
        %v1996 = vld [vmem:[%s1632 + $0x14] sm:$0x1]
        %v1997 = vld [vmem:[%s1632 + $0x18] sm:$0xf]
        %v1998 = vld [vmem:[%s1632 + $0x1c] sm:$0xf]
        %v1999 = vld [vmem:[%s1632 + $0x20] sm:$0x1]
        %v2000 = vld [vmem:[%s1632 + $0x24] sm:$0xf]
        %v2001 = vld [vmem:[%s1632 + $0x28] sm:$0xf]
        %v2002 = vld [vmem:[%s1632 + $0x2c] sm:$0x1]
        %v2003 = vld [vmem:[%s1632 + $0x30] sm:$0xf]
        %v2004 = vld [vmem:[%s1632 + $0x34] sm:$0xf]
        %v2005 = vld [vmem:[%s1632 + $0x38] sm:$0x1]
        %v2006 = vld [vmem:[%s1632 + $0x3c] sm:$0xf]
        %v2007 = vld [vmem:[%s1632 + $0x40] sm:$0xf]
        %v2008 = vld [vmem:[%s1632 + $0x44] sm:$0x1]
        %v2009 = vld [vmem:[%s1632 + $0x48] sm:$0xf]
        %v2010 = vld [vmem:[%s1632 + $0x4c] sm:$0xf]
        %v2011 = vld [vmem:[%s1632 + $0x50] sm:$0x1]
        %v2012 = vld [vmem:[%s1632 + $0x54] sm:$0xf]
        %v2013 = vld [vmem:[%s1632 + $0x58] sm:$0xf]
        %v2014 = vld [vmem:[%s1632 + $0x5c] sm:$0x1]
        %v2015 = vld [vmem:[%s1632 + $0x78] sm:$0xf]
        %v2016 = vld [vmem:[%s1632 + $0x7c] sm:$0xf]
        %v2017 = vld [vmem:[%s1632 + $0x80] sm:$0x1]
        %v2018 = vld [vmem:[%s1632 + $0x84] sm:$0xf]
        %v2019 = vld [vmem:[%s1632 + $0x88] sm:$0xf]
        %v2020 = vld [vmem:[%s1632 + $0x8c] sm:$0x1]
        %v2021 = vld [vmem:[%s1632 + $0x90] sm:$0xf]
        %v2022 = vld [vmem:[%s1632 + $0x94] sm:$0xf]
        %v2023 = vld [vmem:[%s1632 + $0x98] sm:$0x1]
        %v2024 = vld [vmem:[%s1632 + $0x9c] sm:$0xf]
        %v2025 = vld [vmem:[%s1632 + $0xa0] sm:$0xf]
        %v2026 = vld [vmem:[%s1632 + $0xa4] sm:$0x1]
        %v2027 = vld [vmem:[%s1632 + $0xa8] sm:$0xf]
        %v2028 = vld [vmem:[%s1632 + $0xac] sm:$0xf]
        %v2029 = vld [vmem:[%s1632 + $0xb0] sm:$0x1]
        %v2030 = vld [vmem:[%s1632 + $0xb4] sm:$0xf]
        %v2031 = vld [vmem:[%s1632 + $0xb8] sm:$0xf]
        %v2032 = vld [vmem:[%s1632 + $0xbc] sm:$0x1]
        %v2033 = vld [vmem:[%s1632 + $0xc0] sm:$0xf]
        %v2034 = vld [vmem:[%s1632 + $0xc4] sm:$0xf]
        %v2035 = vld [vmem:[%s1632 + $0xc8] sm:$0x1]
        %v2036 = vld [vmem:[%s1632 + $0xcc] sm:$0xf]
        %v2037 = vld [vmem:[%s1632 + $0xd0] sm:$0xf]
        %v2038 = vld [vmem:[%s1632 + $0xd4] sm:$0x1]
        %v2040 = vshrl.u32 %v1991, 16
        %v2042 = vrot.slane %v2040, 4
        %v2043 = vshll.u32 %v1991, 16
        %v2045 = vrot.slane %v2043, 5
        %v2046 = vor.u32 %v2042, %v2045
        %v2047 = vrot.slane %v2046, 4
        %v2049 = vshll.u32 %v1992, 16
        %v2051 = vrot.slane %v2049, 5
        %v2052 = vsel %vm234, %v2047, %v2051
        %v2053 = vshrl.u32 %v1992, 16
        %v2055 = vrot.slane %v2053, 4
        %v2056 = vor.u32 %v2055, %v2051
        %v2057 = vrot.slane %v2056, 4
        %v2059 = vshll.u32 %v1993, 16
        %v2061 = vrot.slane %v2059, 5
        %v2062 = vsel %vm234, %v2057, %v2061
        %v2064 = vshrl.u32 %v1994, 16
        %v2066 = vrot.slane %v2064, 4
        %v2067 = vshll.u32 %v1994, 16
        %v2069 = vrot.slane %v2067, 5
        %v2070 = vor.u32 %v2066, %v2069
        %v2071 = vrot.slane %v2070, 4
        %v2073 = vshll.u32 %v1995, 16
        %v2075 = vrot.slane %v2073, 5
        %v2076 = vsel %vm234, %v2071, %v2075
        %v2077 = vshrl.u32 %v1995, 16
        %v2079 = vrot.slane %v2077, 4
        %v2080 = vor.u32 %v2079, %v2075
        %v2081 = vrot.slane %v2080, 4
        %v2083 = vshll.u32 %v1996, 16
        %v2085 = vrot.slane %v2083, 5
        %v2086 = vsel %vm234, %v2081, %v2085
        %v2088 = vshrl.u32 %v1997, 16
        %v2090 = vrot.slane %v2088, 4
        %v2091 = vshll.u32 %v1997, 16
        %v2093 = vrot.slane %v2091, 5
        %v2094 = vor.u32 %v2090, %v2093
        %v2095 = vrot.slane %v2094, 4
        %v2097 = vshll.u32 %v1998, 16
        %v2099 = vrot.slane %v2097, 5
        %v2100 = vsel %vm234, %v2095, %v2099
        %v2101 = vshrl.u32 %v1998, 16
        %v2103 = vrot.slane %v2101, 4
        %v2104 = vor.u32 %v2103, %v2099
        %v2105 = vrot.slane %v2104, 4
        %v2107 = vshll.u32 %v1999, 16
        %v2109 = vrot.slane %v2107, 5
        %v2110 = vsel %vm234, %v2105, %v2109
        %v2112 = vshrl.u32 %v2000, 16
        %v2114 = vrot.slane %v2112, 4
        %v2115 = vshll.u32 %v2000, 16
        %v2117 = vrot.slane %v2115, 5
        %v2118 = vor.u32 %v2114, %v2117
        %v2119 = vrot.slane %v2118, 4
        %v2121 = vshll.u32 %v2001, 16
        %v2123 = vrot.slane %v2121, 5
        %v2124 = vsel %vm234, %v2119, %v2123
        %v2125 = vshrl.u32 %v2001, 16
        %v2127 = vrot.slane %v2125, 4
        %v2128 = vor.u32 %v2127, %v2123
        %v2129 = vrot.slane %v2128, 4
        %v2131 = vshll.u32 %v2002, 16
        %v2133 = vrot.slane %v2131, 5
        %v2134 = vsel %vm234, %v2129, %v2133
        %v2136 = vshrl.u32 %v2003, 16
        %v2138 = vrot.slane %v2136, 4
        %v2139 = vshll.u32 %v2003, 16
        %v2141 = vrot.slane %v2139, 5
        %v2142 = vor.u32 %v2138, %v2141
        %v2143 = vrot.slane %v2142, 4
        %v2145 = vshll.u32 %v2004, 16
        %v2147 = vrot.slane %v2145, 5
        %v2148 = vsel %vm234, %v2143, %v2147
        %v2149 = vshrl.u32 %v2004, 16
        %v2151 = vrot.slane %v2149, 4
        %v2152 = vor.u32 %v2151, %v2147
        %v2153 = vrot.slane %v2152, 4
        %v2155 = vshll.u32 %v2005, 16
        %v2157 = vrot.slane %v2155, 5
        %v2158 = vsel %vm234, %v2153, %v2157
        %v2160 = vshrl.u32 %v2006, 16
        %v2162 = vrot.slane %v2160, 4
        %v2163 = vshll.u32 %v2006, 16
        %v2165 = vrot.slane %v2163, 5
        %v2166 = vor.u32 %v2162, %v2165
        %v2167 = vrot.slane %v2166, 4
        %v2169 = vshll.u32 %v2007, 16
        %v2171 = vrot.slane %v2169, 5
        %v2172 = vsel %vm234, %v2167, %v2171
        %v2173 = vshrl.u32 %v2007, 16
        %v2175 = vrot.slane %v2173, 4
        %v2176 = vor.u32 %v2175, %v2171
        %v2177 = vrot.slane %v2176, 4
        %v2179 = vshll.u32 %v2008, 16
        %v2181 = vrot.slane %v2179, 5
        %v2182 = vsel %vm234, %v2177, %v2181
        %v2184 = vshrl.u32 %v2009, 16
        %v2186 = vrot.slane %v2184, 4
        %v2187 = vshll.u32 %v2009, 16
        %v2189 = vrot.slane %v2187, 5
        %v2190 = vor.u32 %v2186, %v2189
        %v2191 = vrot.slane %v2190, 4
        %v2193 = vshll.u32 %v2010, 16
        %v2195 = vrot.slane %v2193, 5
        %v2196 = vsel %vm234, %v2191, %v2195
        %v2197 = vshrl.u32 %v2010, 16
        %v2199 = vrot.slane %v2197, 4
        %v2200 = vor.u32 %v2199, %v2195
        %v2201 = vrot.slane %v2200, 4
        %v2203 = vshll.u32 %v2011, 16
        %v2205 = vrot.slane %v2203, 5
        %v2206 = vsel %vm234, %v2201, %v2205
        %v2208 = vshrl.u32 %v2012, 16
        %v2210 = vrot.slane %v2208, 4
        %v2211 = vshll.u32 %v2012, 16
        %v2213 = vrot.slane %v2211, 5
        %v2214 = vor.u32 %v2210, %v2213
        %v2215 = vrot.slane %v2214, 4
        %v2217 = vshll.u32 %v2013, 16
        %v2219 = vrot.slane %v2217, 5
        %v2220 = vsel %vm234, %v2215, %v2219
        %v2221 = vshrl.u32 %v2013, 16
        %v2223 = vrot.slane %v2221, 4
        %v2224 = vor.u32 %v2223, %v2219
        %v2225 = vrot.slane %v2224, 4
        %v2227 = vshll.u32 %v2014, 16
        %v2229 = vrot.slane %v2227, 5
        %v2230 = vsel %vm234, %v2225, %v2229
        %v2232 = vshrl.u32 %v2015, 16
        %v2234 = vrot.slane %v2232, 4
        %v2235 = vshll.u32 %v2015, 16
        %v2237 = vrot.slane %v2235, 5
        %v2238 = vor.u32 %v2234, %v2237
        %v2239 = vrot.slane %v2238, 4
        %v2241 = vshll.u32 %v2016, 16
        %v2243 = vrot.slane %v2241, 5
        %v2244 = vsel %vm234, %v2239, %v2243
        %v2245 = vshrl.u32 %v2016, 16
        %v2247 = vrot.slane %v2245, 4
        %v2248 = vor.u32 %v2247, %v2243
        %v2249 = vrot.slane %v2248, 4
        %v2251 = vshll.u32 %v2017, 16
        %v2253 = vrot.slane %v2251, 5
        %v2254 = vsel %vm234, %v2249, %v2253
        %v2256 = vshrl.u32 %v2018, 16
        %v2258 = vrot.slane %v2256, 4
        %v2259 = vshll.u32 %v2018, 16
        %v2261 = vrot.slane %v2259, 5
        %v2262 = vor.u32 %v2258, %v2261
        %v2263 = vrot.slane %v2262, 4
        %v2265 = vshll.u32 %v2019, 16
        %v2267 = vrot.slane %v2265, 5
        %v2268 = vsel %vm234, %v2263, %v2267
        %v2269 = vshrl.u32 %v2019, 16
        %v2271 = vrot.slane %v2269, 4
        %v2272 = vor.u32 %v2271, %v2267
        %v2273 = vrot.slane %v2272, 4
        %v2275 = vshll.u32 %v2020, 16
        %v2277 = vrot.slane %v2275, 5
        %v2278 = vsel %vm234, %v2273, %v2277
        %v2280 = vshrl.u32 %v2021, 16
        %v2282 = vrot.slane %v2280, 4
        %v2283 = vshll.u32 %v2021, 16
        %v2285 = vrot.slane %v2283, 5
        %v2286 = vor.u32 %v2282, %v2285
        %v2287 = vrot.slane %v2286, 4
        %v2289 = vshll.u32 %v2022, 16
        %v2291 = vrot.slane %v2289, 5
        %v2292 = vsel %vm234, %v2287, %v2291
        %v2293 = vshrl.u32 %v2022, 16
        %v2295 = vrot.slane %v2293, 4
        %v2296 = vor.u32 %v2295, %v2291
        %v2297 = vrot.slane %v2296, 4
        %v2299 = vshll.u32 %v2023, 16
        %v2301 = vrot.slane %v2299, 5
        %v2302 = vsel %vm234, %v2297, %v2301
        %v2304 = vshrl.u32 %v2024, 16
        %v2306 = vrot.slane %v2304, 4
        %v2307 = vshll.u32 %v2024, 16
        %v2309 = vrot.slane %v2307, 5
        %v2310 = vor.u32 %v2306, %v2309
        %v2311 = vrot.slane %v2310, 4
        %v2313 = vshll.u32 %v2025, 16
        %v2315 = vrot.slane %v2313, 5
        %v2316 = vsel %vm234, %v2311, %v2315
        %v2317 = vshrl.u32 %v2025, 16
        %v2319 = vrot.slane %v2317, 4
        %v2320 = vor.u32 %v2319, %v2315
        %v2321 = vrot.slane %v2320, 4
        %v2323 = vshll.u32 %v2026, 16
        %v2325 = vrot.slane %v2323, 5
        %v2326 = vsel %vm234, %v2321, %v2325
        %v2328 = vshrl.u32 %v2027, 16
        %v2330 = vrot.slane %v2328, 4
        %v2331 = vshll.u32 %v2027, 16
        %v2333 = vrot.slane %v2331, 5
        %v2334 = vor.u32 %v2330, %v2333
        %v2335 = vrot.slane %v2334, 4
        %v2337 = vshll.u32 %v2028, 16
        %v2339 = vrot.slane %v2337, 5
        %v2340 = vsel %vm234, %v2335, %v2339
        %v2341 = vshrl.u32 %v2028, 16
        %v2343 = vrot.slane %v2341, 4
        %v2344 = vor.u32 %v2343, %v2339
        %v2345 = vrot.slane %v2344, 4
        %v2347 = vshll.u32 %v2029, 16
        %v2349 = vrot.slane %v2347, 5
        %v2350 = vsel %vm234, %v2345, %v2349
        %v2352 = vshrl.u32 %v2030, 16
        %v2354 = vrot.slane %v2352, 4
        %v2355 = vshll.u32 %v2030, 16
        %v2357 = vrot.slane %v2355, 5
        %v2358 = vor.u32 %v2354, %v2357
        %v2359 = vrot.slane %v2358, 4
        %v2361 = vshll.u32 %v2031, 16
        %v2363 = vrot.slane %v2361, 5
        %v2364 = vsel %vm234, %v2359, %v2363
        %v2365 = vshrl.u32 %v2031, 16
        %v2367 = vrot.slane %v2365, 4
        %v2368 = vor.u32 %v2367, %v2363
        %v2369 = vrot.slane %v2368, 4
        %v2371 = vshll.u32 %v2032, 16
        %v2373 = vrot.slane %v2371, 5
        %v2374 = vsel %vm234, %v2369, %v2373
        %v2376 = vshrl.u32 %v2033, 16
        %v2378 = vrot.slane %v2376, 4
        %v2379 = vshll.u32 %v2033, 16
        %v2381 = vrot.slane %v2379, 5
        %v2382 = vor.u32 %v2378, %v2381
        %v2383 = vrot.slane %v2382, 4
        %v2385 = vshll.u32 %v2034, 16
        %v2387 = vrot.slane %v2385, 5
        %v2388 = vsel %vm234, %v2383, %v2387
        %v2389 = vshrl.u32 %v2034, 16
        %v2391 = vrot.slane %v2389, 4
        %v2392 = vor.u32 %v2391, %v2387
        %v2393 = vrot.slane %v2392, 4
        %v2395 = vshll.u32 %v2035, 16
        %v2397 = vrot.slane %v2395, 5
        %v2398 = vsel %vm234, %v2393, %v2397
        %v2400 = vshrl.u32 %v2036, 16
        %v2402 = vrot.slane %v2400, 4
        %v2403 = vshll.u32 %v2036, 16
        %v2405 = vrot.slane %v2403, 5
        %v2406 = vor.u32 %v2402, %v2405
        %v2407 = vrot.slane %v2406, 4
        %v2409 = vshll.u32 %v2037, 16
        %v2411 = vrot.slane %v2409, 5
        %v2412 = vsel %vm234, %v2407, %v2411
        %v2413 = vshrl.u32 %v2037, 16
        %v2415 = vrot.slane %v2413, 4
        %v2416 = vor.u32 %v2415, %v2411
        %v2417 = vrot.slane %v2416, 4
        %v2419 = vshll.u32 %v2038, 16
        %v2421 = vrot.slane %v2419, 5
        %v2422 = vsel %vm234, %v2417, %v2421
        %s2423 = scalar_lea.vmem %s1, 8
        %v2424 = vld [vmem:[%s2423] sm:$0x3]
        %v2425 = vunpack.c.l.b16 %v2052
        %v2426 = vunpack.c.l.b16 %v2062
        %v2427 = vunpack.c.l.b16 %v2076
        %v2428 = vunpack.c.l.b16 %v2086
        %v2429 = vunpack.c.l.b16 %v2100
        %v2430 = vunpack.c.l.b16 %v2110
        %v2431 = vunpack.c.l.b16 %v2124
        %v2432 = vunpack.c.l.b16 %v2134
        %v2433 = vunpack.c.l.b16 %v2148
        %v2434 = vunpack.c.l.b16 %v2158
        %v2435 = vunpack.c.l.b16 %v2172
        %v2436 = vunpack.c.l.b16 %v2182
        %v2437 = vunpack.c.l.b16 %v2196
        %v2438 = vunpack.c.l.b16 %v2206
        %v2439 = vunpack.c.l.b16 %v2220
        %v2440 = vunpack.c.l.b16 %v2230
        %v2441 = vunpack.c.l.b16 %v2244
        %v2442 = vunpack.c.l.b16 %v2254
        %v2443 = vunpack.c.l.b16 %v2268
        %v2444 = vunpack.c.l.b16 %v2278
        %v2445 = vunpack.c.l.b16 %v2292
        %v2446 = vunpack.c.l.b16 %v2302
        %v2447 = vunpack.c.l.b16 %v2316
        %v2448 = vunpack.c.l.b16 %v2326
        %v2449 = vunpack.c.l.b16 %v2340
        %v2450 = vunpack.c.l.b16 %v2350
        %v2451 = vunpack.c.l.b16 %v2364
        %v2452 = vunpack.c.l.b16 %v2374
        %v2453 = vunpack.c.l.b16 %v2388
        %v2454 = vunpack.c.l.b16 %v2398
        %v2455 = vunpack.c.l.b16 %v2412
        %v2456 = vunpack.c.l.b16 %v2422
        %v2457 = vpack.c.b16 %v2426, %v2425
        %v2458 = vpack.c.b16 %v2428, %v2427
        %v2459 = vpack.c.b16 %v2430, %v2429
        %v2460 = vpack.c.b16 %v2432, %v2431
        %v2461 = vpack.c.b16 %v2434, %v2433
        %v2462 = vpack.c.b16 %v2436, %v2435
        %v2463 = vpack.c.b16 %v2438, %v2437
        %v2464 = vpack.c.b16 %v2440, %v2439
        %v2465 = vpack.c.b16 %v2442, %v2441
        %v2466 = vpack.c.b16 %v2444, %v2443
        %v2467 = vpack.c.b16 %v2446, %v2445
        %v2468 = vpack.c.b16 %v2448, %v2447
        %v2469 = vpack.c.b16 %v2450, %v2449
        %v2470 = vpack.c.b16 %v2452, %v2451
        %v2471 = vpack.c.b16 %v2454, %v2453
        %v2472 = vpack.c.b16 %v2456, %v2455
        %v2474 = vsel %vm669, %v2457, 0
        %v2477 = vsel %vm669, %v2458, 0
        %v2480 = vsel %vm669, %v2459, 0
        %v2483 = vsel %vm669, %v2460, 0
        %v2486 = vsel %vm669, %v2461, 0
        %v2489 = vsel %vm669, %v2462, 0
        %v2492 = vsel %vm669, %v2463, 0
        %v2495 = vsel %vm669, %v2464, 0
        %v2498 = vsel %vm669, %v2465, 0
        %v2501 = vsel %vm669, %v2466, 0
        %v2504 = vsel %vm669, %v2467, 0
        %v2507 = vsel %vm669, %v2468, 0
        %v2510 = vsel %vm669, %v2469, 0
        %v2513 = vsel %vm669, %v2470, 0
        %v2516 = vsel %vm669, %v2471, 0
        %v2519 = vsel %vm669, %v2472, 0
        %v2522 = vsel %vm718, %v2424, 0
        %2524 = vmatprep.subr.bf16.mxu0 0
        %2525 = vmatpush1.bf16.msra.mxu0 0
        %2526 = vmatprep.subr.bf16.mxu0 0
        %2527 = vmatpush1.bf16.msra.mxu0 0
        %2528 = vmatprep.subr.bf16.mxu0 0
        %2529 = vmatpush1.bf16.msra.mxu0 0
        %2530 = vmatprep.subr.bf16.mxu0 0
        %2531 = vmatpush1.bf16.msra.mxu0 0
        %2532 = vmatprep.subr.bf16.mxu0 0
        %2533 = vmatpush1.bf16.msra.mxu0 0
        %2534 = vmatprep.subr.bf16.mxu0 0
        %2535 = vmatpush1.bf16.msra.mxu0 0
        %2536 = vmatprep.subr.bf16.mxu0 0
        %2537 = vmatpush1.bf16.msra.mxu0 0
        %2538 = vmatprep.subr.bf16.mxu0 0
        %2539 = vmatpush1.bf16.msra.mxu0 %v2522
        %2540 = vmatprep.subr.bf16.mxu0 0
        %2541 = vmatpush2.bf16.msra.mxu0 0
        %2542 = vmatprep.subr.bf16.mxu0 0
        %2543 = vmatpush2.bf16.msra.mxu0 0
        %2544 = vmatprep.subr.bf16.mxu0 0
        %2545 = vmatpush2.bf16.msra.mxu0 0
        %2546 = vmatprep.subr.bf16.mxu0 0
        %2547 = vmatpush2.bf16.msra.mxu0 0
        %2548 = vmatprep.subr.bf16.mxu0 0
        %2549 = vmatpush2.bf16.msra.mxu0 0
        %2550 = vmatprep.subr.bf16.mxu0 0
        %2551 = vmatpush2.bf16.msra.mxu0 0
        %2552 = vmatprep.subr.bf16.mxu0 0
        %2553 = vmatpush2.bf16.msra.mxu0 0
        %2554 = vmatprep.subr.bf16.mxu0 0
        %2555 = vmatpush2.bf16.msra.mxu0 0
        %2556 = vmatprep.mubr.bf16.mxu0 0
        %2557 = vmatmul.mubr.bf16.gmra.mxu0 %v2474
        %v2558 = vpop.f32.mrf.mxu0
        %v2559 = vadd.f32 0.0, %v2558
        %v2560 = vpop.f32.mrf.mxu0
        %v2561 = vpop.f32.mrf.mxu0
        %v2562 = vadd.f32 0.0, %v2561
        %v2563 = vpop.f32.mrf.mxu0
        %2564 = vmatprep.mubr.bf16.mxu0 0
        %2565 = vmatmul.mubr.bf16.gmra.mxu0 %v2477
        %v2566 = vpop.f32.mrf.mxu0
        %v2567 = vadd.f32 0.0, %v2566
        %v2568 = vpop.f32.mrf.mxu0
        %v2569 = vpop.f32.mrf.mxu0
        %v2570 = vadd.f32 0.0, %v2569
        %v2571 = vpop.f32.mrf.mxu0
        %2572 = vmatprep.mubr.bf16.mxu0 0
        %2573 = vmatmul.mubr.bf16.gmra.mxu0 %v2480
        %v2574 = vpop.f32.mrf.mxu0
        %v2575 = vadd.f32 0.0, %v2574
        %v2576 = vpop.f32.mrf.mxu0
        %v2577 = vpop.f32.mrf.mxu0
        %v2578 = vadd.f32 0.0, %v2577
        %v2579 = vpop.f32.mrf.mxu0
        %2580 = vmatprep.mubr.bf16.mxu0 0
        %2581 = vmatmul.mubr.bf16.gmra.mxu0 %v2483
        %v2582 = vpop.f32.mrf.mxu0
        %v2583 = vadd.f32 0.0, %v2582
        %v2584 = vpop.f32.mrf.mxu0
        %v2585 = vpop.f32.mrf.mxu0
        %v2586 = vadd.f32 0.0, %v2585
        %v2587 = vpop.f32.mrf.mxu0
        %2588 = vmatprep.mubr.bf16.mxu0 0
        %2589 = vmatmul.mubr.bf16.gmra.mxu0 %v2486
        %v2590 = vpop.f32.mrf.mxu0
        %v2591 = vadd.f32 0.0, %v2590
        %v2592 = vpop.f32.mrf.mxu0
        %v2593 = vpop.f32.mrf.mxu0
        %v2594 = vadd.f32 0.0, %v2593
        %v2595 = vpop.f32.mrf.mxu0
        %2596 = vmatprep.mubr.bf16.mxu0 0
        %2597 = vmatmul.mubr.bf16.gmra.mxu0 %v2489
        %v2598 = vpop.f32.mrf.mxu0
        %v2599 = vadd.f32 0.0, %v2598
        %v2600 = vpop.f32.mrf.mxu0
        %v2601 = vpop.f32.mrf.mxu0
        %v2602 = vadd.f32 0.0, %v2601
        %v2603 = vpop.f32.mrf.mxu0
        %2604 = vmatprep.mubr.bf16.mxu0 0
        %2605 = vmatmul.mubr.bf16.gmra.mxu0 %v2492
        %v2606 = vpop.f32.mrf.mxu0
        %v2607 = vadd.f32 0.0, %v2606
        %v2608 = vpop.f32.mrf.mxu0
        %v2609 = vpop.f32.mrf.mxu0
        %v2610 = vadd.f32 0.0, %v2609
        %v2611 = vpop.f32.mrf.mxu0
        %2612 = vmatprep.mubr.bf16.mxu0 0
        %2613 = vmatmul.mubr.bf16.gmra.mxu0 %v2495
        %v2614 = vpop.f32.mrf.mxu0
        %v2615 = vadd.f32 0.0, %v2614
        %v2616 = vpop.f32.mrf.mxu0
        %v2617 = vpop.f32.mrf.mxu0
        %v2618 = vadd.f32 0.0, %v2617
        %v2619 = vpop.f32.mrf.mxu0
        %2620 = vmatprep.mubr.bf16.mxu0 0
        %2621 = vmatmul.mubr.bf16.gmra.mxu0 %v2498
        %v2622 = vpop.f32.mrf.mxu0
        %v2623 = vadd.f32 0.0, %v2622
        %v2624 = vpop.f32.mrf.mxu0
        %v2625 = vpop.f32.mrf.mxu0
        %v2626 = vadd.f32 0.0, %v2625
        %v2627 = vpop.f32.mrf.mxu0
        %2628 = vmatprep.mubr.bf16.mxu0 0
        %2629 = vmatmul.mubr.bf16.gmra.mxu0 %v2501
        %v2630 = vpop.f32.mrf.mxu0
        %v2631 = vadd.f32 0.0, %v2630
        %v2632 = vpop.f32.mrf.mxu0
        %v2633 = vpop.f32.mrf.mxu0
        %v2634 = vadd.f32 0.0, %v2633
        %v2635 = vpop.f32.mrf.mxu0
        %2636 = vmatprep.mubr.bf16.mxu0 0
        %2637 = vmatmul.mubr.bf16.gmra.mxu0 %v2504
        %v2638 = vpop.f32.mrf.mxu0
        %v2639 = vadd.f32 0.0, %v2638
        %v2640 = vpop.f32.mrf.mxu0
        %v2641 = vpop.f32.mrf.mxu0
        %v2642 = vadd.f32 0.0, %v2641
        %v2643 = vpop.f32.mrf.mxu0
        %2644 = vmatprep.mubr.bf16.mxu0 0
        %2645 = vmatmul.mubr.bf16.gmra.mxu0 %v2507
        %v2646 = vpop.f32.mrf.mxu0
        %v2647 = vadd.f32 0.0, %v2646
        %v2648 = vpop.f32.mrf.mxu0
        %v2649 = vpop.f32.mrf.mxu0
        %v2650 = vadd.f32 0.0, %v2649
        %v2651 = vpop.f32.mrf.mxu0
        %2652 = vmatprep.mubr.bf16.mxu0 0
        %2653 = vmatmul.mubr.bf16.gmra.mxu0 %v2510
        %v2654 = vpop.f32.mrf.mxu0
        %v2655 = vadd.f32 0.0, %v2654
        %v2656 = vpop.f32.mrf.mxu0
        %v2657 = vpop.f32.mrf.mxu0
        %v2658 = vadd.f32 0.0, %v2657
        %v2659 = vpop.f32.mrf.mxu0
        %2660 = vmatprep.mubr.bf16.mxu0 0
        %2661 = vmatmul.mubr.bf16.gmra.mxu0 %v2513
        %v2662 = vpop.f32.mrf.mxu0
        %v2663 = vadd.f32 0.0, %v2662
        %v2664 = vpop.f32.mrf.mxu0
        %v2665 = vpop.f32.mrf.mxu0
        %v2666 = vadd.f32 0.0, %v2665
        %v2667 = vpop.f32.mrf.mxu0
        %2668 = vmatprep.mubr.bf16.mxu0 0
        %2669 = vmatmul.mubr.bf16.gmra.mxu0 %v2516
        %v2670 = vpop.f32.mrf.mxu0
        %v2671 = vadd.f32 0.0, %v2670
        %v2672 = vpop.f32.mrf.mxu0
        %v2673 = vpop.f32.mrf.mxu0
        %v2674 = vadd.f32 0.0, %v2673
        %v2675 = vpop.f32.mrf.mxu0
        %2676 = vmatprep.mubr.bf16.mxu0 0
        %2677 = vmatmul.mubr.bf16.gmra.mxu0 %v2519
        %v2678 = vpop.f32.mrf.mxu0
        %v2679 = vadd.f32 0.0, %v2678
        %v2680 = vpop.f32.mrf.mxu0
        %v2681 = vpop.f32.mrf.mxu0
        %v2682 = vadd.f32 0.0, %v2681
        %v2683 = vpop.f32.mrf.mxu0
        %2684 = vdwg.mxu0
        %v2685 = vadd.f32 %v1959, %v2559
        %v2686 = vadd.f32 %v1960, %v2562
        %v2687 = vadd.f32 %v1961, %v2567
        %v2688 = vadd.f32 %v1962, %v2570
        %v2689 = vadd.f32 %v1963, %v2575
        %v2690 = vadd.f32 %v1964, %v2578
        %v2691 = vadd.f32 %v1965, %v2583
        %v2692 = vadd.f32 %v1966, %v2586
        %v2693 = vadd.f32 %v1967, %v2591
        %v2694 = vadd.f32 %v1968, %v2594
        %v2695 = vadd.f32 %v1969, %v2599
        %v2696 = vadd.f32 %v1970, %v2602
        %v2697 = vadd.f32 %v1971, %v2607
        %v2698 = vadd.f32 %v1972, %v2610
        %v2699 = vadd.f32 %v1973, %v2615
        %v2700 = vadd.f32 %v1974, %v2618
        %v2701 = vadd.f32 %v1975, %v2623
        %v2702 = vadd.f32 %v1976, %v2626
        %v2703 = vadd.f32 %v1977, %v2631
        %v2704 = vadd.f32 %v1978, %v2634
        %v2705 = vadd.f32 %v1979, %v2639
        %v2706 = vadd.f32 %v1980, %v2642
        %v2707 = vadd.f32 %v1981, %v2647
        %v2708 = vadd.f32 %v1982, %v2650
        %v2709 = vadd.f32 %v1983, %v2655
        %v2710 = vadd.f32 %v1984, %v2658
        %v2711 = vadd.f32 %v1985, %v2663
        %v2712 = vadd.f32 %v1986, %v2666
        %v2713 = vadd.f32 %v1987, %v2671
        %v2714 = vadd.f32 %v1988, %v2674
        %v2715 = vadd.f32 %v1989, %v2679
        %v2716 = vadd.f32 %v1990, %v2682
        %v2717 = vld [vmem:[%s1632] sm:$0xe]
        %v2718 = vld [vmem:[%s1632 + $0xc] sm:$0xe]
        %v2719 = vld [vmem:[%s1632 + $0x18] sm:$0xe]
        %v2720 = vld [vmem:[%s1632 + $0x24] sm:$0xe]
        %v2721 = vld [vmem:[%s1632 + $0x30] sm:$0xe]
        %v2722 = vld [vmem:[%s1632 + $0x3c] sm:$0xe]
        %v2723 = vld [vmem:[%s1632 + $0x48] sm:$0xe]
        %v2724 = vld [vmem:[%s1632 + $0x54] sm:$0xe]
        %v2725 = vld [vmem:[%s1632 + $0x78] sm:$0xe]
        %v2726 = vld [vmem:[%s1632 + $0x84] sm:$0xe]
        %v2727 = vld [vmem:[%s1632 + $0x90] sm:$0xe]
        %v2728 = vld [vmem:[%s1632 + $0x9c] sm:$0xe]
        %v2729 = vld [vmem:[%s1632 + $0xa8] sm:$0xe]
        %v2730 = vld [vmem:[%s1632 + $0xb4] sm:$0xe]
        %v2731 = vld [vmem:[%s1632 + $0xc0] sm:$0xe]
        %v2732 = vld [vmem:[%s1632 + $0xcc] sm:$0xe]
        %v2781 = vrot.slane %v2717, 5
        %v2782 = vrot.slane %v2781, 4
        %v2783 = vrot.slane %v1992, 5
        %v2784 = vsel %vm1225, %v2782, %v2783
        %v2785 = vrot.slane %v2783, 4
        %v2786 = vrot.slane %v1993, 5
        %v2787 = vsel %vm1225, %v2785, %v2786
        %v2788 = vrot.slane %v2718, 5
        %v2789 = vrot.slane %v2788, 4
        %v2790 = vrot.slane %v1995, 5
        %v2791 = vsel %vm1225, %v2789, %v2790
        %v2792 = vrot.slane %v2790, 4
        %v2793 = vrot.slane %v1996, 5
        %v2794 = vsel %vm1225, %v2792, %v2793
        %v2795 = vrot.slane %v2719, 5
        %v2796 = vrot.slane %v2795, 4
        %v2797 = vrot.slane %v1998, 5
        %v2798 = vsel %vm1225, %v2796, %v2797
        %v2799 = vrot.slane %v2797, 4
        %v2800 = vrot.slane %v1999, 5
        %v2801 = vsel %vm1225, %v2799, %v2800
        %v2802 = vrot.slane %v2720, 5
        %v2803 = vrot.slane %v2802, 4
        %v2804 = vrot.slane %v2001, 5
        %v2805 = vsel %vm1225, %v2803, %v2804
        %v2806 = vrot.slane %v2804, 4
        %v2807 = vrot.slane %v2002, 5
        %v2808 = vsel %vm1225, %v2806, %v2807
        %v2809 = vrot.slane %v2721, 5
        %v2810 = vrot.slane %v2809, 4
        %v2811 = vrot.slane %v2004, 5
        %v2812 = vsel %vm1225, %v2810, %v2811
        %v2813 = vrot.slane %v2811, 4
        %v2814 = vrot.slane %v2005, 5
        %v2815 = vsel %vm1225, %v2813, %v2814
        %v2816 = vrot.slane %v2722, 5
        %v2817 = vrot.slane %v2816, 4
        %v2818 = vrot.slane %v2007, 5
        %v2819 = vsel %vm1225, %v2817, %v2818
        %v2820 = vrot.slane %v2818, 4
        %v2821 = vrot.slane %v2008, 5
        %v2822 = vsel %vm1225, %v2820, %v2821
        %v2823 = vrot.slane %v2723, 5
        %v2824 = vrot.slane %v2823, 4
        %v2825 = vrot.slane %v2010, 5
        %v2826 = vsel %vm1225, %v2824, %v2825
        %v2827 = vrot.slane %v2825, 4
        %v2828 = vrot.slane %v2011, 5
        %v2829 = vsel %vm1225, %v2827, %v2828
        %v2830 = vrot.slane %v2724, 5
        %v2831 = vrot.slane %v2830, 4
        %v2832 = vrot.slane %v2013, 5
        %v2833 = vsel %vm1225, %v2831, %v2832
        %v2834 = vrot.slane %v2832, 4
        %v2835 = vrot.slane %v2014, 5
        %v2836 = vsel %vm1225, %v2834, %v2835
        %v2837 = vrot.slane %v2725, 5
        %v2838 = vrot.slane %v2837, 4
        %v2839 = vrot.slane %v2016, 5
        %v2840 = vsel %vm1225, %v2838, %v2839
        %v2841 = vrot.slane %v2839, 4
        %v2842 = vrot.slane %v2017, 5
        %v2843 = vsel %vm1225, %v2841, %v2842
        %v2844 = vrot.slane %v2726, 5
        %v2845 = vrot.slane %v2844, 4
        %v2846 = vrot.slane %v2019, 5
        %v2847 = vsel %vm1225, %v2845, %v2846
        %v2848 = vrot.slane %v2846, 4
        %v2849 = vrot.slane %v2020, 5
        %v2850 = vsel %vm1225, %v2848, %v2849
        %v2851 = vrot.slane %v2727, 5
        %v2852 = vrot.slane %v2851, 4
        %v2853 = vrot.slane %v2022, 5
        %v2854 = vsel %vm1225, %v2852, %v2853
        %v2855 = vrot.slane %v2853, 4
        %v2856 = vrot.slane %v2023, 5
        %v2857 = vsel %vm1225, %v2855, %v2856
        %v2858 = vrot.slane %v2728, 5
        %v2859 = vrot.slane %v2858, 4
        %v2860 = vrot.slane %v2025, 5
        %v2861 = vsel %vm1225, %v2859, %v2860
        %v2862 = vrot.slane %v2860, 4
        %v2863 = vrot.slane %v2026, 5
        %v2864 = vsel %vm1225, %v2862, %v2863
        %v2865 = vrot.slane %v2729, 5
        %v2866 = vrot.slane %v2865, 4
        %v2867 = vrot.slane %v2028, 5
        %v2868 = vsel %vm1225, %v2866, %v2867
        %v2869 = vrot.slane %v2867, 4
        %v2870 = vrot.slane %v2029, 5
        %v2871 = vsel %vm1225, %v2869, %v2870
        %v2872 = vrot.slane %v2730, 5
        %v2873 = vrot.slane %v2872, 4
        %v2874 = vrot.slane %v2031, 5
        %v2875 = vsel %vm1225, %v2873, %v2874
        %v2876 = vrot.slane %v2874, 4
        %v2877 = vrot.slane %v2032, 5
        %v2878 = vsel %vm1225, %v2876, %v2877
        %v2879 = vrot.slane %v2731, 5
        %v2880 = vrot.slane %v2879, 4
        %v2881 = vrot.slane %v2034, 5
        %v2882 = vsel %vm1225, %v2880, %v2881
        %v2883 = vrot.slane %v2881, 4
        %v2884 = vrot.slane %v2035, 5
        %v2885 = vsel %vm1225, %v2883, %v2884
        %v2886 = vrot.slane %v2732, 5
        %v2887 = vrot.slane %v2886, 4
        %v2888 = vrot.slane %v2037, 5
        %v2889 = vsel %vm1225, %v2887, %v2888
        %v2890 = vrot.slane %v2888, 4
        %v2891 = vrot.slane %v2038, 5
        %v2892 = vsel %vm1225, %v2890, %v2891
        %s2893 = scalar_lea.vmem %s1, 10
        %v2894 = vld [vmem:[%s2893] sm:$0x3]
        %v2895 = vunpack.c.l.b16 %v2784
        %v2896 = vunpack.c.l.b16 %v2787
        %v2897 = vunpack.c.l.b16 %v2791
        %v2898 = vunpack.c.l.b16 %v2794
        %v2899 = vunpack.c.l.b16 %v2798
        %v2900 = vunpack.c.l.b16 %v2801
        %v2901 = vunpack.c.l.b16 %v2805
        %v2902 = vunpack.c.l.b16 %v2808
        %v2903 = vunpack.c.l.b16 %v2812
        %v2904 = vunpack.c.l.b16 %v2815
        %v2905 = vunpack.c.l.b16 %v2819
        %v2906 = vunpack.c.l.b16 %v2822
        %v2907 = vunpack.c.l.b16 %v2826
        %v2908 = vunpack.c.l.b16 %v2829
        %v2909 = vunpack.c.l.b16 %v2833
        %v2910 = vunpack.c.l.b16 %v2836
        %v2911 = vunpack.c.l.b16 %v2840
        %v2912 = vunpack.c.l.b16 %v2843
        %v2913 = vunpack.c.l.b16 %v2847
        %v2914 = vunpack.c.l.b16 %v2850
        %v2915 = vunpack.c.l.b16 %v2854
        %v2916 = vunpack.c.l.b16 %v2857
        %v2917 = vunpack.c.l.b16 %v2861
        %v2918 = vunpack.c.l.b16 %v2864
        %v2919 = vunpack.c.l.b16 %v2868
        %v2920 = vunpack.c.l.b16 %v2871
        %v2921 = vunpack.c.l.b16 %v2875
        %v2922 = vunpack.c.l.b16 %v2878
        %v2923 = vunpack.c.l.b16 %v2882
        %v2924 = vunpack.c.l.b16 %v2885
        %v2925 = vunpack.c.l.b16 %v2889
        %v2926 = vunpack.c.l.b16 %v2892
        %v2927 = vpack.c.b16 %v2896, %v2895
        %v2928 = vpack.c.b16 %v2898, %v2897
        %v2929 = vpack.c.b16 %v2900, %v2899
        %v2930 = vpack.c.b16 %v2902, %v2901
        %v2931 = vpack.c.b16 %v2904, %v2903
        %v2932 = vpack.c.b16 %v2906, %v2905
        %v2933 = vpack.c.b16 %v2908, %v2907
        %v2934 = vpack.c.b16 %v2910, %v2909
        %v2935 = vpack.c.b16 %v2912, %v2911
        %v2936 = vpack.c.b16 %v2914, %v2913
        %v2937 = vpack.c.b16 %v2916, %v2915
        %v2938 = vpack.c.b16 %v2918, %v2917
        %v2939 = vpack.c.b16 %v2920, %v2919
        %v2940 = vpack.c.b16 %v2922, %v2921
        %v2941 = vpack.c.b16 %v2924, %v2923
        %v2942 = vpack.c.b16 %v2926, %v2925
        %v2944 = vsel %vm669, %v2927, 0
        %v2947 = vsel %vm669, %v2928, 0
        %v2950 = vsel %vm669, %v2929, 0
        %v2953 = vsel %vm669, %v2930, 0
        %v2956 = vsel %vm669, %v2931, 0
        %v2959 = vsel %vm669, %v2932, 0
        %v2962 = vsel %vm669, %v2933, 0
        %v2965 = vsel %vm669, %v2934, 0
        %v2968 = vsel %vm669, %v2935, 0
        %v2971 = vsel %vm669, %v2936, 0
        %v2974 = vsel %vm669, %v2937, 0
        %v2977 = vsel %vm669, %v2938, 0
        %v2980 = vsel %vm669, %v2939, 0
        %v2983 = vsel %vm669, %v2940, 0
        %v2986 = vsel %vm669, %v2941, 0
        %v2989 = vsel %vm669, %v2942, 0
        %v2992 = vsel %vm718, %v2894, 0
        %2994 = vmatprep.subr.bf16.mxu0 0
        %2995 = vmatpush1.bf16.msra.mxu0 0
        %2996 = vmatprep.subr.bf16.mxu0 0
        %2997 = vmatpush1.bf16.msra.mxu0 0
        %2998 = vmatprep.subr.bf16.mxu0 0
        %2999 = vmatpush1.bf16.msra.mxu0 0
        %3000 = vmatprep.subr.bf16.mxu0 0
        %3001 = vmatpush1.bf16.msra.mxu0 0
        %3002 = vmatprep.subr.bf16.mxu0 0
        %3003 = vmatpush1.bf16.msra.mxu0 0
        %3004 = vmatprep.subr.bf16.mxu0 0
        %3005 = vmatpush1.bf16.msra.mxu0 0
        %3006 = vmatprep.subr.bf16.mxu0 0
        %3007 = vmatpush1.bf16.msra.mxu0 0
        %3008 = vmatprep.subr.bf16.mxu0 0
        %3009 = vmatpush1.bf16.msra.mxu0 %v2992
        %3010 = vmatprep.subr.bf16.mxu0 0
        %3011 = vmatpush2.bf16.msra.mxu0 0
        %3012 = vmatprep.subr.bf16.mxu0 0
        %3013 = vmatpush2.bf16.msra.mxu0 0
        %3014 = vmatprep.subr.bf16.mxu0 0
        %3015 = vmatpush2.bf16.msra.mxu0 0
        %3016 = vmatprep.subr.bf16.mxu0 0
        %3017 = vmatpush2.bf16.msra.mxu0 0
        %3018 = vmatprep.subr.bf16.mxu0 0
        %3019 = vmatpush2.bf16.msra.mxu0 0
        %3020 = vmatprep.subr.bf16.mxu0 0
        %3021 = vmatpush2.bf16.msra.mxu0 0
        %3022 = vmatprep.subr.bf16.mxu0 0
        %3023 = vmatpush2.bf16.msra.mxu0 0
        %3024 = vmatprep.subr.bf16.mxu0 0
        %3025 = vmatpush2.bf16.msra.mxu0 0
        %3026 = vmatprep.mubr.bf16.mxu0 0
        %3027 = vmatmul.mubr.bf16.gmra.mxu0 %v2944
        %v3028 = vpop.f32.mrf.mxu0
        %v3029 = vadd.f32 0.0, %v3028
        %v3030 = vpop.f32.mrf.mxu0
        %v3031 = vpop.f32.mrf.mxu0
        %v3032 = vadd.f32 0.0, %v3031
        %v3033 = vpop.f32.mrf.mxu0
        %3034 = vmatprep.mubr.bf16.mxu0 0
        %3035 = vmatmul.mubr.bf16.gmra.mxu0 %v2947
        %v3036 = vpop.f32.mrf.mxu0
        %v3037 = vadd.f32 0.0, %v3036
        %v3038 = vpop.f32.mrf.mxu0
        %v3039 = vpop.f32.mrf.mxu0
        %v3040 = vadd.f32 0.0, %v3039
        %v3041 = vpop.f32.mrf.mxu0
        %3042 = vmatprep.mubr.bf16.mxu0 0
        %3043 = vmatmul.mubr.bf16.gmra.mxu0 %v2950
        %v3044 = vpop.f32.mrf.mxu0
        %v3045 = vadd.f32 0.0, %v3044
        %v3046 = vpop.f32.mrf.mxu0
        %v3047 = vpop.f32.mrf.mxu0
        %v3048 = vadd.f32 0.0, %v3047
        %v3049 = vpop.f32.mrf.mxu0
        %3050 = vmatprep.mubr.bf16.mxu0 0
        %3051 = vmatmul.mubr.bf16.gmra.mxu0 %v2953
        %v3052 = vpop.f32.mrf.mxu0
        %v3053 = vadd.f32 0.0, %v3052
        %v3054 = vpop.f32.mrf.mxu0
        %v3055 = vpop.f32.mrf.mxu0
        %v3056 = vadd.f32 0.0, %v3055
        %v3057 = vpop.f32.mrf.mxu0
        %3058 = vmatprep.mubr.bf16.mxu0 0
        %3059 = vmatmul.mubr.bf16.gmra.mxu0 %v2956
        %v3060 = vpop.f32.mrf.mxu0
        %v3061 = vadd.f32 0.0, %v3060
        %v3062 = vpop.f32.mrf.mxu0
        %v3063 = vpop.f32.mrf.mxu0
        %v3064 = vadd.f32 0.0, %v3063
        %v3065 = vpop.f32.mrf.mxu0
        %3066 = vmatprep.mubr.bf16.mxu0 0
        %3067 = vmatmul.mubr.bf16.gmra.mxu0 %v2959
        %v3068 = vpop.f32.mrf.mxu0
        %v3069 = vadd.f32 0.0, %v3068
        %v3070 = vpop.f32.mrf.mxu0
        %v3071 = vpop.f32.mrf.mxu0
        %v3072 = vadd.f32 0.0, %v3071
        %v3073 = vpop.f32.mrf.mxu0
        %3074 = vmatprep.mubr.bf16.mxu0 0
        %3075 = vmatmul.mubr.bf16.gmra.mxu0 %v2962
        %v3076 = vpop.f32.mrf.mxu0
        %v3077 = vadd.f32 0.0, %v3076
        %v3078 = vpop.f32.mrf.mxu0
        %v3079 = vpop.f32.mrf.mxu0
        %v3080 = vadd.f32 0.0, %v3079
        %v3081 = vpop.f32.mrf.mxu0
        %3082 = vmatprep.mubr.bf16.mxu0 0
        %3083 = vmatmul.mubr.bf16.gmra.mxu0 %v2965
        %v3084 = vpop.f32.mrf.mxu0
        %v3085 = vadd.f32 0.0, %v3084
        %v3086 = vpop.f32.mrf.mxu0
        %v3087 = vpop.f32.mrf.mxu0
        %v3088 = vadd.f32 0.0, %v3087
        %v3089 = vpop.f32.mrf.mxu0
        %3090 = vmatprep.mubr.bf16.mxu0 0
        %3091 = vmatmul.mubr.bf16.gmra.mxu0 %v2968
        %v3092 = vpop.f32.mrf.mxu0
        %v3093 = vadd.f32 0.0, %v3092
        %v3094 = vpop.f32.mrf.mxu0
        %v3095 = vpop.f32.mrf.mxu0
        %v3096 = vadd.f32 0.0, %v3095
        %v3097 = vpop.f32.mrf.mxu0
        %3098 = vmatprep.mubr.bf16.mxu0 0
        %3099 = vmatmul.mubr.bf16.gmra.mxu0 %v2971
        %v3100 = vpop.f32.mrf.mxu0
        %v3101 = vadd.f32 0.0, %v3100
        %v3102 = vpop.f32.mrf.mxu0
        %v3103 = vpop.f32.mrf.mxu0
        %v3104 = vadd.f32 0.0, %v3103
        %v3105 = vpop.f32.mrf.mxu0
        %3106 = vmatprep.mubr.bf16.mxu0 0
        %3107 = vmatmul.mubr.bf16.gmra.mxu0 %v2974
        %v3108 = vpop.f32.mrf.mxu0
        %v3109 = vadd.f32 0.0, %v3108
        %v3110 = vpop.f32.mrf.mxu0
        %v3111 = vpop.f32.mrf.mxu0
        %v3112 = vadd.f32 0.0, %v3111
        %v3113 = vpop.f32.mrf.mxu0
        %3114 = vmatprep.mubr.bf16.mxu0 0
        %3115 = vmatmul.mubr.bf16.gmra.mxu0 %v2977
        %v3116 = vpop.f32.mrf.mxu0
        %v3117 = vadd.f32 0.0, %v3116
        %v3118 = vpop.f32.mrf.mxu0
        %v3119 = vpop.f32.mrf.mxu0
        %v3120 = vadd.f32 0.0, %v3119
        %v3121 = vpop.f32.mrf.mxu0
        %3122 = vmatprep.mubr.bf16.mxu0 0
        %3123 = vmatmul.mubr.bf16.gmra.mxu0 %v2980
        %v3124 = vpop.f32.mrf.mxu0
        %v3125 = vadd.f32 0.0, %v3124
        %v3126 = vpop.f32.mrf.mxu0
        %v3127 = vpop.f32.mrf.mxu0
        %v3128 = vadd.f32 0.0, %v3127
        %v3129 = vpop.f32.mrf.mxu0
        %3130 = vmatprep.mubr.bf16.mxu0 0
        %3131 = vmatmul.mubr.bf16.gmra.mxu0 %v2983
        %v3132 = vpop.f32.mrf.mxu0
        %v3133 = vadd.f32 0.0, %v3132
        %v3134 = vpop.f32.mrf.mxu0
        %v3135 = vpop.f32.mrf.mxu0
        %v3136 = vadd.f32 0.0, %v3135
        %v3137 = vpop.f32.mrf.mxu0
        %3138 = vmatprep.mubr.bf16.mxu0 0
        %3139 = vmatmul.mubr.bf16.gmra.mxu0 %v2986
        %v3140 = vpop.f32.mrf.mxu0
        %v3141 = vadd.f32 0.0, %v3140
        %v3142 = vpop.f32.mrf.mxu0
        %v3143 = vpop.f32.mrf.mxu0
        %v3144 = vadd.f32 0.0, %v3143
        %v3145 = vpop.f32.mrf.mxu0
        %3146 = vmatprep.mubr.bf16.mxu0 0
        %3147 = vmatmul.mubr.bf16.gmra.mxu0 %v2989
        %v3148 = vpop.f32.mrf.mxu0
        %v3149 = vadd.f32 0.0, %v3148
        %v3150 = vpop.f32.mrf.mxu0
        %v3151 = vpop.f32.mrf.mxu0
        %v3152 = vadd.f32 0.0, %v3151
        %v3153 = vpop.f32.mrf.mxu0
        %3154 = vdwg.mxu0
        %v3155 = vadd.f32 %v2685, %v3029
        %v3156 = vadd.f32 %v2686, %v3032
        %v3157 = vadd.f32 %v2687, %v3037
        %v3158 = vadd.f32 %v2688, %v3040
        %v3159 = vadd.f32 %v2689, %v3045
        %v3160 = vadd.f32 %v2690, %v3048
        %v3161 = vadd.f32 %v2691, %v3053
        %v3162 = vadd.f32 %v2692, %v3056
        %v3163 = vadd.f32 %v2693, %v3061
        %v3164 = vadd.f32 %v2694, %v3064
        %v3165 = vadd.f32 %v2695, %v3069
        %v3166 = vadd.f32 %v2696, %v3072
        %v3167 = vadd.f32 %v2697, %v3077
        %v3168 = vadd.f32 %v2698, %v3080
        %v3169 = vadd.f32 %v2699, %v3085
        %v3170 = vadd.f32 %v2700, %v3088
        %v3171 = vadd.f32 %v2701, %v3093
        %v3172 = vadd.f32 %v2702, %v3096
        %v3173 = vadd.f32 %v2703, %v3101
        %v3174 = vadd.f32 %v2704, %v3104
        %v3175 = vadd.f32 %v2705, %v3109
        %v3176 = vadd.f32 %v2706, %v3112
        %v3177 = vadd.f32 %v2707, %v3117
        %v3178 = vadd.f32 %v2708, %v3120
        %v3179 = vadd.f32 %v2709, %v3125
        %v3180 = vadd.f32 %v2710, %v3128
        %v3181 = vadd.f32 %v2711, %v3133
        %v3182 = vadd.f32 %v2712, %v3136
        %v3183 = vadd.f32 %v2713, %v3141
        %v3184 = vadd.f32 %v2714, %v3144
        %v3185 = vadd.f32 %v2715, %v3149
        %v3186 = vadd.f32 %v2716, %v3152
        %s3187 = scalar_lea.vmem %s175, 24
        %v3188 = vld [vmem:[%s3187] sm:$0xf]
        %v3189 = vld [vmem:[%s3187 + $0x4] sm:$0xf]
        %v3190 = vld [vmem:[%s3187 + $0xc] sm:$0xf]
        %v3191 = vld [vmem:[%s3187 + $0x10] sm:$0xf]
        %v3192 = vld [vmem:[%s3187 + $0x18] sm:$0xf]
        %v3193 = vld [vmem:[%s3187 + $0x1c] sm:$0xf]
        %v3194 = vld [vmem:[%s3187 + $0x24] sm:$0xf]
        %v3195 = vld [vmem:[%s3187 + $0x28] sm:$0xf]
        %v3196 = vld [vmem:[%s3187 + $0x30] sm:$0xf]
        %v3197 = vld [vmem:[%s3187 + $0x34] sm:$0xf]
        %v3198 = vld [vmem:[%s3187 + $0x3c] sm:$0xf]
        %v3199 = vld [vmem:[%s3187 + $0x40] sm:$0xf]
        %v3200 = vld [vmem:[%s3187 + $0x48] sm:$0xf]
        %v3201 = vld [vmem:[%s3187 + $0x4c] sm:$0xf]
        %v3202 = vld [vmem:[%s3187 + $0x54] sm:$0xf]
        %v3203 = vld [vmem:[%s3187 + $0x58] sm:$0xf]
        %v3204 = vld [vmem:[%s3187 + $0x78] sm:$0xf]
        %v3205 = vld [vmem:[%s3187 + $0x7c] sm:$0xf]
        %v3206 = vld [vmem:[%s3187 + $0x84] sm:$0xf]
        %v3207 = vld [vmem:[%s3187 + $0x88] sm:$0xf]
        %v3208 = vld [vmem:[%s3187 + $0x90] sm:$0xf]
        %v3209 = vld [vmem:[%s3187 + $0x94] sm:$0xf]
        %v3210 = vld [vmem:[%s3187 + $0x9c] sm:$0xf]
        %v3211 = vld [vmem:[%s3187 + $0xa0] sm:$0xf]
        %v3212 = vld [vmem:[%s3187 + $0xa8] sm:$0xf]
        %v3213 = vld [vmem:[%s3187 + $0xac] sm:$0xf]
        %v3214 = vld [vmem:[%s3187 + $0xb4] sm:$0xf]
        %v3215 = vld [vmem:[%s3187 + $0xb8] sm:$0xf]
        %v3216 = vld [vmem:[%s3187 + $0xc0] sm:$0xf]
        %v3217 = vld [vmem:[%s3187 + $0xc4] sm:$0xf]
        %v3218 = vld [vmem:[%s3187 + $0xcc] sm:$0xf]
        %v3219 = vld [vmem:[%s3187 + $0xd0] sm:$0xf]
        %s3220 = scalar_lea.vmem %s1, 12
        %v3221 = vld [vmem:[%s3220] sm:$0x3]
        %v3254 = vunpack.c.l.b16 %v3188
        %v3255 = vunpack.c.l.b16 %v3189
        %v3256 = vunpack.c.l.b16 %v3190
        %v3257 = vunpack.c.l.b16 %v3191
        %v3258 = vunpack.c.l.b16 %v3192
        %v3259 = vunpack.c.l.b16 %v3193
        %v3260 = vunpack.c.l.b16 %v3194
        %v3261 = vunpack.c.l.b16 %v3195
        %v3262 = vunpack.c.l.b16 %v3196
        %v3263 = vunpack.c.l.b16 %v3197
        %v3264 = vunpack.c.l.b16 %v3198
        %v3265 = vunpack.c.l.b16 %v3199
        %v3266 = vunpack.c.l.b16 %v3200
        %v3267 = vunpack.c.l.b16 %v3201
        %v3268 = vunpack.c.l.b16 %v3202
        %v3269 = vunpack.c.l.b16 %v3203
        %v3270 = vunpack.c.l.b16 %v3204
        %v3271 = vunpack.c.l.b16 %v3205
        %v3272 = vunpack.c.l.b16 %v3206
        %v3273 = vunpack.c.l.b16 %v3207
        %v3274 = vunpack.c.l.b16 %v3208
        %v3275 = vunpack.c.l.b16 %v3209
        %v3276 = vunpack.c.l.b16 %v3210
        %v3277 = vunpack.c.l.b16 %v3211
        %v3278 = vunpack.c.l.b16 %v3212
        %v3279 = vunpack.c.l.b16 %v3213
        %v3280 = vunpack.c.l.b16 %v3214
        %v3281 = vunpack.c.l.b16 %v3215
        %v3282 = vunpack.c.l.b16 %v3216
        %v3283 = vunpack.c.l.b16 %v3217
        %v3284 = vunpack.c.l.b16 %v3218
        %v3285 = vunpack.c.l.b16 %v3219
        %v3286 = vpack.c.b16 %v3255, %v3254
        %v3287 = vpack.c.b16 %v3257, %v3256
        %v3288 = vpack.c.b16 %v3259, %v3258
        %v3289 = vpack.c.b16 %v3261, %v3260
        %v3290 = vpack.c.b16 %v3263, %v3262
        %v3291 = vpack.c.b16 %v3265, %v3264
        %v3292 = vpack.c.b16 %v3267, %v3266
        %v3293 = vpack.c.b16 %v3269, %v3268
        %v3294 = vpack.c.b16 %v3271, %v3270
        %v3295 = vpack.c.b16 %v3273, %v3272
        %v3296 = vpack.c.b16 %v3275, %v3274
        %v3297 = vpack.c.b16 %v3277, %v3276
        %v3298 = vpack.c.b16 %v3279, %v3278
        %v3299 = vpack.c.b16 %v3281, %v3280
        %v3300 = vpack.c.b16 %v3283, %v3282
        %v3301 = vpack.c.b16 %v3285, %v3284
        %v3303 = vsel %vm669, %v3286, 0
        %v3306 = vsel %vm669, %v3287, 0
        %v3309 = vsel %vm669, %v3288, 0
        %v3312 = vsel %vm669, %v3289, 0
        %v3315 = vsel %vm669, %v3290, 0
        %v3318 = vsel %vm669, %v3291, 0
        %v3321 = vsel %vm669, %v3292, 0
        %v3324 = vsel %vm669, %v3293, 0
        %v3327 = vsel %vm669, %v3294, 0
        %v3330 = vsel %vm669, %v3295, 0
        %v3333 = vsel %vm669, %v3296, 0
        %v3336 = vsel %vm669, %v3297, 0
        %v3339 = vsel %vm669, %v3298, 0
        %v3342 = vsel %vm669, %v3299, 0
        %v3345 = vsel %vm669, %v3300, 0
        %v3348 = vsel %vm669, %v3301, 0
        %v3351 = vsel %vm718, %v3221, 0
        %3353 = vmatprep.subr.bf16.mxu0 0
        %3354 = vmatpush1.bf16.msra.mxu0 0
        %3355 = vmatprep.subr.bf16.mxu0 0
        %3356 = vmatpush1.bf16.msra.mxu0 0
        %3357 = vmatprep.subr.bf16.mxu0 0
        %3358 = vmatpush1.bf16.msra.mxu0 0
        %3359 = vmatprep.subr.bf16.mxu0 0
        %3360 = vmatpush1.bf16.msra.mxu0 0
        %3361 = vmatprep.subr.bf16.mxu0 0
        %3362 = vmatpush1.bf16.msra.mxu0 0
        %3363 = vmatprep.subr.bf16.mxu0 0
        %3364 = vmatpush1.bf16.msra.mxu0 0
        %3365 = vmatprep.subr.bf16.mxu0 0
        %3366 = vmatpush1.bf16.msra.mxu0 0
        %3367 = vmatprep.subr.bf16.mxu0 0
        %3368 = vmatpush1.bf16.msra.mxu0 %v3351
        %3369 = vmatprep.subr.bf16.mxu0 0
        %3370 = vmatpush2.bf16.msra.mxu0 0
        %3371 = vmatprep.subr.bf16.mxu0 0
        %3372 = vmatpush2.bf16.msra.mxu0 0
        %3373 = vmatprep.subr.bf16.mxu0 0
        %3374 = vmatpush2.bf16.msra.mxu0 0
        %3375 = vmatprep.subr.bf16.mxu0 0
        %3376 = vmatpush2.bf16.msra.mxu0 0
        %3377 = vmatprep.subr.bf16.mxu0 0
        %3378 = vmatpush2.bf16.msra.mxu0 0
        %3379 = vmatprep.subr.bf16.mxu0 0
        %3380 = vmatpush2.bf16.msra.mxu0 0
        %3381 = vmatprep.subr.bf16.mxu0 0
        %3382 = vmatpush2.bf16.msra.mxu0 0
        %3383 = vmatprep.subr.bf16.mxu0 0
        %3384 = vmatpush2.bf16.msra.mxu0 0
        %3385 = vmatprep.mubr.bf16.mxu0 0
        %3386 = vmatmul.mubr.bf16.gmra.mxu0 %v3303
        %v3387 = vpop.f32.mrf.mxu0
        %v3388 = vadd.f32 0.0, %v3387
        %v3389 = vpop.f32.mrf.mxu0
        %v3390 = vpop.f32.mrf.mxu0
        %v3391 = vadd.f32 0.0, %v3390
        %v3392 = vpop.f32.mrf.mxu0
        %3393 = vmatprep.mubr.bf16.mxu0 0
        %3394 = vmatmul.mubr.bf16.gmra.mxu0 %v3306
        %v3395 = vpop.f32.mrf.mxu0
        %v3396 = vadd.f32 0.0, %v3395
        %v3397 = vpop.f32.mrf.mxu0
        %v3398 = vpop.f32.mrf.mxu0
        %v3399 = vadd.f32 0.0, %v3398
        %v3400 = vpop.f32.mrf.mxu0
        %3401 = vmatprep.mubr.bf16.mxu0 0
        %3402 = vmatmul.mubr.bf16.gmra.mxu0 %v3309
        %v3403 = vpop.f32.mrf.mxu0
        %v3404 = vadd.f32 0.0, %v3403
        %v3405 = vpop.f32.mrf.mxu0
        %v3406 = vpop.f32.mrf.mxu0
        %v3407 = vadd.f32 0.0, %v3406
        %v3408 = vpop.f32.mrf.mxu0
        %3409 = vmatprep.mubr.bf16.mxu0 0
        %3410 = vmatmul.mubr.bf16.gmra.mxu0 %v3312
        %v3411 = vpop.f32.mrf.mxu0
        %v3412 = vadd.f32 0.0, %v3411
        %v3413 = vpop.f32.mrf.mxu0
        %v3414 = vpop.f32.mrf.mxu0
        %v3415 = vadd.f32 0.0, %v3414
        %v3416 = vpop.f32.mrf.mxu0
        %3417 = vmatprep.mubr.bf16.mxu0 0
        %3418 = vmatmul.mubr.bf16.gmra.mxu0 %v3315
        %v3419 = vpop.f32.mrf.mxu0
        %v3420 = vadd.f32 0.0, %v3419
        %v3421 = vpop.f32.mrf.mxu0
        %v3422 = vpop.f32.mrf.mxu0
        %v3423 = vadd.f32 0.0, %v3422
        %v3424 = vpop.f32.mrf.mxu0
        %3425 = vmatprep.mubr.bf16.mxu0 0
        %3426 = vmatmul.mubr.bf16.gmra.mxu0 %v3318
        %v3427 = vpop.f32.mrf.mxu0
        %v3428 = vadd.f32 0.0, %v3427
        %v3429 = vpop.f32.mrf.mxu0
        %v3430 = vpop.f32.mrf.mxu0
        %v3431 = vadd.f32 0.0, %v3430
        %v3432 = vpop.f32.mrf.mxu0
        %3433 = vmatprep.mubr.bf16.mxu0 0
        %3434 = vmatmul.mubr.bf16.gmra.mxu0 %v3321
        %v3435 = vpop.f32.mrf.mxu0
        %v3436 = vadd.f32 0.0, %v3435
        %v3437 = vpop.f32.mrf.mxu0
        %v3438 = vpop.f32.mrf.mxu0
        %v3439 = vadd.f32 0.0, %v3438
        %v3440 = vpop.f32.mrf.mxu0
        %3441 = vmatprep.mubr.bf16.mxu0 0
        %3442 = vmatmul.mubr.bf16.gmra.mxu0 %v3324
        %v3443 = vpop.f32.mrf.mxu0
        %v3444 = vadd.f32 0.0, %v3443
        %v3445 = vpop.f32.mrf.mxu0
        %v3446 = vpop.f32.mrf.mxu0
        %v3447 = vadd.f32 0.0, %v3446
        %v3448 = vpop.f32.mrf.mxu0
        %3449 = vmatprep.mubr.bf16.mxu0 0
        %3450 = vmatmul.mubr.bf16.gmra.mxu0 %v3327
        %v3451 = vpop.f32.mrf.mxu0
        %v3452 = vadd.f32 0.0, %v3451
        %v3453 = vpop.f32.mrf.mxu0
        %v3454 = vpop.f32.mrf.mxu0
        %v3455 = vadd.f32 0.0, %v3454
        %v3456 = vpop.f32.mrf.mxu0
        %3457 = vmatprep.mubr.bf16.mxu0 0
        %3458 = vmatmul.mubr.bf16.gmra.mxu0 %v3330
        %v3459 = vpop.f32.mrf.mxu0
        %v3460 = vadd.f32 0.0, %v3459
        %v3461 = vpop.f32.mrf.mxu0
        %v3462 = vpop.f32.mrf.mxu0
        %v3463 = vadd.f32 0.0, %v3462
        %v3464 = vpop.f32.mrf.mxu0
        %3465 = vmatprep.mubr.bf16.mxu0 0
        %3466 = vmatmul.mubr.bf16.gmra.mxu0 %v3333
        %v3467 = vpop.f32.mrf.mxu0
        %v3468 = vadd.f32 0.0, %v3467
        %v3469 = vpop.f32.mrf.mxu0
        %v3470 = vpop.f32.mrf.mxu0
        %v3471 = vadd.f32 0.0, %v3470
        %v3472 = vpop.f32.mrf.mxu0
        %3473 = vmatprep.mubr.bf16.mxu0 0
        %3474 = vmatmul.mubr.bf16.gmra.mxu0 %v3336
        %v3475 = vpop.f32.mrf.mxu0
        %v3476 = vadd.f32 0.0, %v3475
        %v3477 = vpop.f32.mrf.mxu0
        %v3478 = vpop.f32.mrf.mxu0
        %v3479 = vadd.f32 0.0, %v3478
        %v3480 = vpop.f32.mrf.mxu0
        %3481 = vmatprep.mubr.bf16.mxu0 0
        %3482 = vmatmul.mubr.bf16.gmra.mxu0 %v3339
        %v3483 = vpop.f32.mrf.mxu0
        %v3484 = vadd.f32 0.0, %v3483
        %v3485 = vpop.f32.mrf.mxu0
        %v3486 = vpop.f32.mrf.mxu0
        %v3487 = vadd.f32 0.0, %v3486
        %v3488 = vpop.f32.mrf.mxu0
        %3489 = vmatprep.mubr.bf16.mxu0 0
        %3490 = vmatmul.mubr.bf16.gmra.mxu0 %v3342
        %v3491 = vpop.f32.mrf.mxu0
        %v3492 = vadd.f32 0.0, %v3491
        %v3493 = vpop.f32.mrf.mxu0
        %v3494 = vpop.f32.mrf.mxu0
        %v3495 = vadd.f32 0.0, %v3494
        %v3496 = vpop.f32.mrf.mxu0
        %3497 = vmatprep.mubr.bf16.mxu0 0
        %3498 = vmatmul.mubr.bf16.gmra.mxu0 %v3345
        %v3499 = vpop.f32.mrf.mxu0
        %v3500 = vadd.f32 0.0, %v3499
        %v3501 = vpop.f32.mrf.mxu0
        %v3502 = vpop.f32.mrf.mxu0
        %v3503 = vadd.f32 0.0, %v3502
        %v3504 = vpop.f32.mrf.mxu0
        %3505 = vmatprep.mubr.bf16.mxu0 0
        %3506 = vmatmul.mubr.bf16.gmra.mxu0 %v3348
        %v3507 = vpop.f32.mrf.mxu0
        %v3508 = vadd.f32 0.0, %v3507
        %v3509 = vpop.f32.mrf.mxu0
        %v3510 = vpop.f32.mrf.mxu0
        %v3511 = vadd.f32 0.0, %v3510
        %v3512 = vpop.f32.mrf.mxu0
        %3513 = vdwg.mxu0
        %v3514 = vadd.f32 %v3155, %v3388
        %v3515 = vadd.f32 %v3156, %v3391
        %v3516 = vadd.f32 %v3157, %v3396
        %v3517 = vadd.f32 %v3158, %v3399
        %v3518 = vadd.f32 %v3159, %v3404
        %v3519 = vadd.f32 %v3160, %v3407
        %v3520 = vadd.f32 %v3161, %v3412
        %v3521 = vadd.f32 %v3162, %v3415
        %v3522 = vadd.f32 %v3163, %v3420
        %v3523 = vadd.f32 %v3164, %v3423
        %v3524 = vadd.f32 %v3165, %v3428
        %v3525 = vadd.f32 %v3166, %v3431
        %v3526 = vadd.f32 %v3167, %v3436
        %v3527 = vadd.f32 %v3168, %v3439
        %v3528 = vadd.f32 %v3169, %v3444
        %v3529 = vadd.f32 %v3170, %v3447
        %v3530 = vadd.f32 %v3171, %v3452
        %v3531 = vadd.f32 %v3172, %v3455
        %v3532 = vadd.f32 %v3173, %v3460
        %v3533 = vadd.f32 %v3174, %v3463
        %v3534 = vadd.f32 %v3175, %v3468
        %v3535 = vadd.f32 %v3176, %v3471
        %v3536 = vadd.f32 %v3177, %v3476
        %v3537 = vadd.f32 %v3178, %v3479
        %v3538 = vadd.f32 %v3179, %v3484
        %v3539 = vadd.f32 %v3180, %v3487
        %v3540 = vadd.f32 %v3181, %v3492
        %v3541 = vadd.f32 %v3182, %v3495
        %v3542 = vadd.f32 %v3183, %v3500
        %v3543 = vadd.f32 %v3184, %v3503
        %v3544 = vadd.f32 %v3185, %v3508
        %v3545 = vadd.f32 %v3186, %v3511
        %v3546 = vld [vmem:[%s3187] sm:$0xf]
        %v3547 = vld [vmem:[%s3187 + $0x4] sm:$0xf]
        %v3548 = vld [vmem:[%s3187 + $0x8] sm:$0x1]
        %v3549 = vld [vmem:[%s3187 + $0xc] sm:$0xf]
        %v3550 = vld [vmem:[%s3187 + $0x10] sm:$0xf]
        %v3551 = vld [vmem:[%s3187 + $0x14] sm:$0x1]
        %v3552 = vld [vmem:[%s3187 + $0x18] sm:$0xf]
        %v3553 = vld [vmem:[%s3187 + $0x1c] sm:$0xf]
        %v3554 = vld [vmem:[%s3187 + $0x20] sm:$0x1]
        %v3555 = vld [vmem:[%s3187 + $0x24] sm:$0xf]
        %v3556 = vld [vmem:[%s3187 + $0x28] sm:$0xf]
        %v3557 = vld [vmem:[%s3187 + $0x2c] sm:$0x1]
        %v3558 = vld [vmem:[%s3187 + $0x30] sm:$0xf]
        %v3559 = vld [vmem:[%s3187 + $0x34] sm:$0xf]
        %v3560 = vld [vmem:[%s3187 + $0x38] sm:$0x1]
        %v3561 = vld [vmem:[%s3187 + $0x3c] sm:$0xf]
        %v3562 = vld [vmem:[%s3187 + $0x40] sm:$0xf]
        %v3563 = vld [vmem:[%s3187 + $0x44] sm:$0x1]
        %v3564 = vld [vmem:[%s3187 + $0x48] sm:$0xf]
        %v3565 = vld [vmem:[%s3187 + $0x4c] sm:$0xf]
        %v3566 = vld [vmem:[%s3187 + $0x50] sm:$0x1]
        %v3567 = vld [vmem:[%s3187 + $0x54] sm:$0xf]
        %v3568 = vld [vmem:[%s3187 + $0x58] sm:$0xf]
        %v3569 = vld [vmem:[%s3187 + $0x5c] sm:$0x1]
        %v3570 = vld [vmem:[%s3187 + $0x78] sm:$0xf]
        %v3571 = vld [vmem:[%s3187 + $0x7c] sm:$0xf]
        %v3572 = vld [vmem:[%s3187 + $0x80] sm:$0x1]
        %v3573 = vld [vmem:[%s3187 + $0x84] sm:$0xf]
        %v3574 = vld [vmem:[%s3187 + $0x88] sm:$0xf]
        %v3575 = vld [vmem:[%s3187 + $0x8c] sm:$0x1]
        %v3576 = vld [vmem:[%s3187 + $0x90] sm:$0xf]
        %v3577 = vld [vmem:[%s3187 + $0x94] sm:$0xf]
        %v3578 = vld [vmem:[%s3187 + $0x98] sm:$0x1]
        %v3579 = vld [vmem:[%s3187 + $0x9c] sm:$0xf]
        %v3580 = vld [vmem:[%s3187 + $0xa0] sm:$0xf]
        %v3581 = vld [vmem:[%s3187 + $0xa4] sm:$0x1]
        %v3582 = vld [vmem:[%s3187 + $0xa8] sm:$0xf]
        %v3583 = vld [vmem:[%s3187 + $0xac] sm:$0xf]
        %v3584 = vld [vmem:[%s3187 + $0xb0] sm:$0x1]
        %v3585 = vld [vmem:[%s3187 + $0xb4] sm:$0xf]
        %v3586 = vld [vmem:[%s3187 + $0xb8] sm:$0xf]
        %v3587 = vld [vmem:[%s3187 + $0xbc] sm:$0x1]
        %v3588 = vld [vmem:[%s3187 + $0xc0] sm:$0xf]
        %v3589 = vld [vmem:[%s3187 + $0xc4] sm:$0xf]
        %v3590 = vld [vmem:[%s3187 + $0xc8] sm:$0x1]
        %v3591 = vld [vmem:[%s3187 + $0xcc] sm:$0xf]
        %v3592 = vld [vmem:[%s3187 + $0xd0] sm:$0xf]
        %v3593 = vld [vmem:[%s3187 + $0xd4] sm:$0x1]
        %v3595 = vshrl.u32 %v3546, 16
        %v3597 = vrot.slane %v3595, 4
        %v3598 = vshll.u32 %v3546, 16
        %v3600 = vrot.slane %v3598, 5
        %v3601 = vor.u32 %v3597, %v3600
        %v3602 = vrot.slane %v3601, 4
        %v3604 = vshll.u32 %v3547, 16
        %v3606 = vrot.slane %v3604, 5
        %v3607 = vsel %vm234, %v3602, %v3606
        %v3608 = vshrl.u32 %v3547, 16
        %v3610 = vrot.slane %v3608, 4
        %v3611 = vor.u32 %v3610, %v3606
        %v3612 = vrot.slane %v3611, 4
        %v3614 = vshll.u32 %v3548, 16
        %v3616 = vrot.slane %v3614, 5
        %v3617 = vsel %vm234, %v3612, %v3616
        %v3619 = vshrl.u32 %v3549, 16
        %v3621 = vrot.slane %v3619, 4
        %v3622 = vshll.u32 %v3549, 16
        %v3624 = vrot.slane %v3622, 5
        %v3625 = vor.u32 %v3621, %v3624
        %v3626 = vrot.slane %v3625, 4
        %v3628 = vshll.u32 %v3550, 16
        %v3630 = vrot.slane %v3628, 5
        %v3631 = vsel %vm234, %v3626, %v3630
        %v3632 = vshrl.u32 %v3550, 16
        %v3634 = vrot.slane %v3632, 4
        %v3635 = vor.u32 %v3634, %v3630
        %v3636 = vrot.slane %v3635, 4
        %v3638 = vshll.u32 %v3551, 16
        %v3640 = vrot.slane %v3638, 5
        %v3641 = vsel %vm234, %v3636, %v3640
        %v3643 = vshrl.u32 %v3552, 16
        %v3645 = vrot.slane %v3643, 4
        %v3646 = vshll.u32 %v3552, 16
        %v3648 = vrot.slane %v3646, 5
        %v3649 = vor.u32 %v3645, %v3648
        %v3650 = vrot.slane %v3649, 4
        %v3652 = vshll.u32 %v3553, 16
        %v3654 = vrot.slane %v3652, 5
        %v3655 = vsel %vm234, %v3650, %v3654
        %v3656 = vshrl.u32 %v3553, 16
        %v3658 = vrot.slane %v3656, 4
        %v3659 = vor.u32 %v3658, %v3654
        %v3660 = vrot.slane %v3659, 4
        %v3662 = vshll.u32 %v3554, 16
        %v3664 = vrot.slane %v3662, 5
        %v3665 = vsel %vm234, %v3660, %v3664
        %v3667 = vshrl.u32 %v3555, 16
        %v3669 = vrot.slane %v3667, 4
        %v3670 = vshll.u32 %v3555, 16
        %v3672 = vrot.slane %v3670, 5
        %v3673 = vor.u32 %v3669, %v3672
        %v3674 = vrot.slane %v3673, 4
        %v3676 = vshll.u32 %v3556, 16
        %v3678 = vrot.slane %v3676, 5
        %v3679 = vsel %vm234, %v3674, %v3678
        %v3680 = vshrl.u32 %v3556, 16
        %v3682 = vrot.slane %v3680, 4
        %v3683 = vor.u32 %v3682, %v3678
        %v3684 = vrot.slane %v3683, 4
        %v3686 = vshll.u32 %v3557, 16
        %v3688 = vrot.slane %v3686, 5
        %v3689 = vsel %vm234, %v3684, %v3688
        %v3691 = vshrl.u32 %v3558, 16
        %v3693 = vrot.slane %v3691, 4
        %v3694 = vshll.u32 %v3558, 16
        %v3696 = vrot.slane %v3694, 5
        %v3697 = vor.u32 %v3693, %v3696
        %v3698 = vrot.slane %v3697, 4
        %v3700 = vshll.u32 %v3559, 16
        %v3702 = vrot.slane %v3700, 5
        %v3703 = vsel %vm234, %v3698, %v3702
        %v3704 = vshrl.u32 %v3559, 16
        %v3706 = vrot.slane %v3704, 4
        %v3707 = vor.u32 %v3706, %v3702
        %v3708 = vrot.slane %v3707, 4
        %v3710 = vshll.u32 %v3560, 16
        %v3712 = vrot.slane %v3710, 5
        %v3713 = vsel %vm234, %v3708, %v3712
        %v3715 = vshrl.u32 %v3561, 16
        %v3717 = vrot.slane %v3715, 4
        %v3718 = vshll.u32 %v3561, 16
        %v3720 = vrot.slane %v3718, 5
        %v3721 = vor.u32 %v3717, %v3720
        %v3722 = vrot.slane %v3721, 4
        %v3724 = vshll.u32 %v3562, 16
        %v3726 = vrot.slane %v3724, 5
        %v3727 = vsel %vm234, %v3722, %v3726
        %v3728 = vshrl.u32 %v3562, 16
        %v3730 = vrot.slane %v3728, 4
        %v3731 = vor.u32 %v3730, %v3726
        %v3732 = vrot.slane %v3731, 4
        %v3734 = vshll.u32 %v3563, 16
        %v3736 = vrot.slane %v3734, 5
        %v3737 = vsel %vm234, %v3732, %v3736
        %v3739 = vshrl.u32 %v3564, 16
        %v3741 = vrot.slane %v3739, 4
        %v3742 = vshll.u32 %v3564, 16
        %v3744 = vrot.slane %v3742, 5
        %v3745 = vor.u32 %v3741, %v3744
        %v3746 = vrot.slane %v3745, 4
        %v3748 = vshll.u32 %v3565, 16
        %v3750 = vrot.slane %v3748, 5
        %v3751 = vsel %vm234, %v3746, %v3750
        %v3752 = vshrl.u32 %v3565, 16
        %v3754 = vrot.slane %v3752, 4
        %v3755 = vor.u32 %v3754, %v3750
        %v3756 = vrot.slane %v3755, 4
        %v3758 = vshll.u32 %v3566, 16
        %v3760 = vrot.slane %v3758, 5
        %v3761 = vsel %vm234, %v3756, %v3760
        %v3763 = vshrl.u32 %v3567, 16
        %v3765 = vrot.slane %v3763, 4
        %v3766 = vshll.u32 %v3567, 16
        %v3768 = vrot.slane %v3766, 5
        %v3769 = vor.u32 %v3765, %v3768
        %v3770 = vrot.slane %v3769, 4
        %v3772 = vshll.u32 %v3568, 16
        %v3774 = vrot.slane %v3772, 5
        %v3775 = vsel %vm234, %v3770, %v3774
        %v3776 = vshrl.u32 %v3568, 16
        %v3778 = vrot.slane %v3776, 4
        %v3779 = vor.u32 %v3778, %v3774
        %v3780 = vrot.slane %v3779, 4
        %v3782 = vshll.u32 %v3569, 16
        %v3784 = vrot.slane %v3782, 5
        %v3785 = vsel %vm234, %v3780, %v3784
        %v3787 = vshrl.u32 %v3570, 16
        %v3789 = vrot.slane %v3787, 4
        %v3790 = vshll.u32 %v3570, 16
        %v3792 = vrot.slane %v3790, 5
        %v3793 = vor.u32 %v3789, %v3792
        %v3794 = vrot.slane %v3793, 4
        %v3796 = vshll.u32 %v3571, 16
        %v3798 = vrot.slane %v3796, 5
        %v3799 = vsel %vm234, %v3794, %v3798
        %v3800 = vshrl.u32 %v3571, 16
        %v3802 = vrot.slane %v3800, 4
        %v3803 = vor.u32 %v3802, %v3798
        %v3804 = vrot.slane %v3803, 4
        %v3806 = vshll.u32 %v3572, 16
        %v3808 = vrot.slane %v3806, 5
        %v3809 = vsel %vm234, %v3804, %v3808
        %v3811 = vshrl.u32 %v3573, 16
        %v3813 = vrot.slane %v3811, 4
        %v3814 = vshll.u32 %v3573, 16
        %v3816 = vrot.slane %v3814, 5
        %v3817 = vor.u32 %v3813, %v3816
        %v3818 = vrot.slane %v3817, 4
        %v3820 = vshll.u32 %v3574, 16
        %v3822 = vrot.slane %v3820, 5
        %v3823 = vsel %vm234, %v3818, %v3822
        %v3824 = vshrl.u32 %v3574, 16
        %v3826 = vrot.slane %v3824, 4
        %v3827 = vor.u32 %v3826, %v3822
        %v3828 = vrot.slane %v3827, 4
        %v3830 = vshll.u32 %v3575, 16
        %v3832 = vrot.slane %v3830, 5
        %v3833 = vsel %vm234, %v3828, %v3832
        %v3835 = vshrl.u32 %v3576, 16
        %v3837 = vrot.slane %v3835, 4
        %v3838 = vshll.u32 %v3576, 16
        %v3840 = vrot.slane %v3838, 5
        %v3841 = vor.u32 %v3837, %v3840
        %v3842 = vrot.slane %v3841, 4
        %v3844 = vshll.u32 %v3577, 16
        %v3846 = vrot.slane %v3844, 5
        %v3847 = vsel %vm234, %v3842, %v3846
        %v3848 = vshrl.u32 %v3577, 16
        %v3850 = vrot.slane %v3848, 4
        %v3851 = vor.u32 %v3850, %v3846
        %v3852 = vrot.slane %v3851, 4
        %v3854 = vshll.u32 %v3578, 16
        %v3856 = vrot.slane %v3854, 5
        %v3857 = vsel %vm234, %v3852, %v3856
        %v3859 = vshrl.u32 %v3579, 16
        %v3861 = vrot.slane %v3859, 4
        %v3862 = vshll.u32 %v3579, 16
        %v3864 = vrot.slane %v3862, 5
        %v3865 = vor.u32 %v3861, %v3864
        %v3866 = vrot.slane %v3865, 4
        %v3868 = vshll.u32 %v3580, 16
        %v3870 = vrot.slane %v3868, 5
        %v3871 = vsel %vm234, %v3866, %v3870
        %v3872 = vshrl.u32 %v3580, 16
        %v3874 = vrot.slane %v3872, 4
        %v3875 = vor.u32 %v3874, %v3870
        %v3876 = vrot.slane %v3875, 4
        %v3878 = vshll.u32 %v3581, 16
        %v3880 = vrot.slane %v3878, 5
        %v3881 = vsel %vm234, %v3876, %v3880
        %v3883 = vshrl.u32 %v3582, 16
        %v3885 = vrot.slane %v3883, 4
        %v3886 = vshll.u32 %v3582, 16
        %v3888 = vrot.slane %v3886, 5
        %v3889 = vor.u32 %v3885, %v3888
        %v3890 = vrot.slane %v3889, 4
        %v3892 = vshll.u32 %v3583, 16
        %v3894 = vrot.slane %v3892, 5
        %v3895 = vsel %vm234, %v3890, %v3894
        %v3896 = vshrl.u32 %v3583, 16
        %v3898 = vrot.slane %v3896, 4
        %v3899 = vor.u32 %v3898, %v3894
        %v3900 = vrot.slane %v3899, 4
        %v3902 = vshll.u32 %v3584, 16
        %v3904 = vrot.slane %v3902, 5
        %v3905 = vsel %vm234, %v3900, %v3904
        %v3907 = vshrl.u32 %v3585, 16
        %v3909 = vrot.slane %v3907, 4
        %v3910 = vshll.u32 %v3585, 16
        %v3912 = vrot.slane %v3910, 5
        %v3913 = vor.u32 %v3909, %v3912
        %v3914 = vrot.slane %v3913, 4
        %v3916 = vshll.u32 %v3586, 16
        %v3918 = vrot.slane %v3916, 5
        %v3919 = vsel %vm234, %v3914, %v3918
        %v3920 = vshrl.u32 %v3586, 16
        %v3922 = vrot.slane %v3920, 4
        %v3923 = vor.u32 %v3922, %v3918
        %v3924 = vrot.slane %v3923, 4
        %v3926 = vshll.u32 %v3587, 16
        %v3928 = vrot.slane %v3926, 5
        %v3929 = vsel %vm234, %v3924, %v3928
        %v3931 = vshrl.u32 %v3588, 16
        %v3933 = vrot.slane %v3931, 4
        %v3934 = vshll.u32 %v3588, 16
        %v3936 = vrot.slane %v3934, 5
        %v3937 = vor.u32 %v3933, %v3936
        %v3938 = vrot.slane %v3937, 4
        %v3940 = vshll.u32 %v3589, 16
        %v3942 = vrot.slane %v3940, 5
        %v3943 = vsel %vm234, %v3938, %v3942
        %v3944 = vshrl.u32 %v3589, 16
        %v3946 = vrot.slane %v3944, 4
        %v3947 = vor.u32 %v3946, %v3942
        %v3948 = vrot.slane %v3947, 4
        %v3950 = vshll.u32 %v3590, 16
        %v3952 = vrot.slane %v3950, 5
        %v3953 = vsel %vm234, %v3948, %v3952
        %v3955 = vshrl.u32 %v3591, 16
        %v3957 = vrot.slane %v3955, 4
        %v3958 = vshll.u32 %v3591, 16
        %v3960 = vrot.slane %v3958, 5
        %v3961 = vor.u32 %v3957, %v3960
        %v3962 = vrot.slane %v3961, 4
        %v3964 = vshll.u32 %v3592, 16
        %v3966 = vrot.slane %v3964, 5
        %v3967 = vsel %vm234, %v3962, %v3966
        %v3968 = vshrl.u32 %v3592, 16
        %v3970 = vrot.slane %v3968, 4
        %v3971 = vor.u32 %v3970, %v3966
        %v3972 = vrot.slane %v3971, 4
        %v3974 = vshll.u32 %v3593, 16
        %v3976 = vrot.slane %v3974, 5
        %v3977 = vsel %vm234, %v3972, %v3976
        %s3978 = scalar_lea.vmem %s1, 14
        %v3979 = vld [vmem:[%s3978] sm:$0x3]
        %v3980 = vunpack.c.l.b16 %v3607
        %v3981 = vunpack.c.l.b16 %v3617
        %v3982 = vunpack.c.l.b16 %v3631
        %v3983 = vunpack.c.l.b16 %v3641
        %v3984 = vunpack.c.l.b16 %v3655
        %v3985 = vunpack.c.l.b16 %v3665
        %v3986 = vunpack.c.l.b16 %v3679
        %v3987 = vunpack.c.l.b16 %v3689
        %v3988 = vunpack.c.l.b16 %v3703
        %v3989 = vunpack.c.l.b16 %v3713
        %v3990 = vunpack.c.l.b16 %v3727
        %v3991 = vunpack.c.l.b16 %v3737
        %v3992 = vunpack.c.l.b16 %v3751
        %v3993 = vunpack.c.l.b16 %v3761
        %v3994 = vunpack.c.l.b16 %v3775
        %v3995 = vunpack.c.l.b16 %v3785
        %v3996 = vunpack.c.l.b16 %v3799
        %v3997 = vunpack.c.l.b16 %v3809
        %v3998 = vunpack.c.l.b16 %v3823
        %v3999 = vunpack.c.l.b16 %v3833
        %v4000 = vunpack.c.l.b16 %v3847
        %v4001 = vunpack.c.l.b16 %v3857
        %v4002 = vunpack.c.l.b16 %v3871
        %v4003 = vunpack.c.l.b16 %v3881
        %v4004 = vunpack.c.l.b16 %v3895
        %v4005 = vunpack.c.l.b16 %v3905
        %v4006 = vunpack.c.l.b16 %v3919
        %v4007 = vunpack.c.l.b16 %v3929
        %v4008 = vunpack.c.l.b16 %v3943
        %v4009 = vunpack.c.l.b16 %v3953
        %v4010 = vunpack.c.l.b16 %v3967
        %v4011 = vunpack.c.l.b16 %v3977
        %v4012 = vpack.c.b16 %v3981, %v3980
        %v4013 = vpack.c.b16 %v3983, %v3982
        %v4014 = vpack.c.b16 %v3985, %v3984
        %v4015 = vpack.c.b16 %v3987, %v3986
        %v4016 = vpack.c.b16 %v3989, %v3988
        %v4017 = vpack.c.b16 %v3991, %v3990
        %v4018 = vpack.c.b16 %v3993, %v3992
        %v4019 = vpack.c.b16 %v3995, %v3994
        %v4020 = vpack.c.b16 %v3997, %v3996
        %v4021 = vpack.c.b16 %v3999, %v3998
        %v4022 = vpack.c.b16 %v4001, %v4000
        %v4023 = vpack.c.b16 %v4003, %v4002
        %v4024 = vpack.c.b16 %v4005, %v4004
        %v4025 = vpack.c.b16 %v4007, %v4006
        %v4026 = vpack.c.b16 %v4009, %v4008
        %v4027 = vpack.c.b16 %v4011, %v4010
        %v4029 = vsel %vm669, %v4012, 0
        %v4032 = vsel %vm669, %v4013, 0
        %v4035 = vsel %vm669, %v4014, 0
        %v4038 = vsel %vm669, %v4015, 0
        %v4041 = vsel %vm669, %v4016, 0
        %v4044 = vsel %vm669, %v4017, 0
        %v4047 = vsel %vm669, %v4018, 0
        %v4050 = vsel %vm669, %v4019, 0
        %v4053 = vsel %vm669, %v4020, 0
        %v4056 = vsel %vm669, %v4021, 0
        %v4059 = vsel %vm669, %v4022, 0
        %v4062 = vsel %vm669, %v4023, 0
        %v4065 = vsel %vm669, %v4024, 0
        %v4068 = vsel %vm669, %v4025, 0
        %v4071 = vsel %vm669, %v4026, 0
        %v4074 = vsel %vm669, %v4027, 0
        %v4077 = vsel %vm718, %v3979, 0
        %4079 = vmatprep.subr.bf16.mxu0 0
        %4080 = vmatpush1.bf16.msra.mxu0 0
        %4081 = vmatprep.subr.bf16.mxu0 0
        %4082 = vmatpush1.bf16.msra.mxu0 0
        %4083 = vmatprep.subr.bf16.mxu0 0
        %4084 = vmatpush1.bf16.msra.mxu0 0
        %4085 = vmatprep.subr.bf16.mxu0 0
        %4086 = vmatpush1.bf16.msra.mxu0 0
        %4087 = vmatprep.subr.bf16.mxu0 0
        %4088 = vmatpush1.bf16.msra.mxu0 0
        %4089 = vmatprep.subr.bf16.mxu0 0
        %4090 = vmatpush1.bf16.msra.mxu0 0
        %4091 = vmatprep.subr.bf16.mxu0 0
        %4092 = vmatpush1.bf16.msra.mxu0 0
        %4093 = vmatprep.subr.bf16.mxu0 0
        %4094 = vmatpush1.bf16.msra.mxu0 %v4077
        %4095 = vmatprep.subr.bf16.mxu0 0
        %4096 = vmatpush2.bf16.msra.mxu0 0
        %4097 = vmatprep.subr.bf16.mxu0 0
        %4098 = vmatpush2.bf16.msra.mxu0 0
        %4099 = vmatprep.subr.bf16.mxu0 0
        %4100 = vmatpush2.bf16.msra.mxu0 0
        %4101 = vmatprep.subr.bf16.mxu0 0
        %4102 = vmatpush2.bf16.msra.mxu0 0
        %4103 = vmatprep.subr.bf16.mxu0 0
        %4104 = vmatpush2.bf16.msra.mxu0 0
        %4105 = vmatprep.subr.bf16.mxu0 0
        %4106 = vmatpush2.bf16.msra.mxu0 0
        %4107 = vmatprep.subr.bf16.mxu0 0
        %4108 = vmatpush2.bf16.msra.mxu0 0
        %4109 = vmatprep.subr.bf16.mxu0 0
        %4110 = vmatpush2.bf16.msra.mxu0 0
        %4111 = vmatprep.mubr.bf16.mxu0 0
        %4112 = vmatmul.mubr.bf16.gmra.mxu0 %v4029
        %v4113 = vpop.f32.mrf.mxu0
        %v4114 = vadd.f32 0.0, %v4113
        %v4115 = vpop.f32.mrf.mxu0
        %v4116 = vpop.f32.mrf.mxu0
        %v4117 = vadd.f32 0.0, %v4116
        %v4118 = vpop.f32.mrf.mxu0
        %4119 = vmatprep.mubr.bf16.mxu0 0
        %4120 = vmatmul.mubr.bf16.gmra.mxu0 %v4032
        %v4121 = vpop.f32.mrf.mxu0
        %v4122 = vadd.f32 0.0, %v4121
        %v4123 = vpop.f32.mrf.mxu0
        %v4124 = vpop.f32.mrf.mxu0
        %v4125 = vadd.f32 0.0, %v4124
        %v4126 = vpop.f32.mrf.mxu0
        %4127 = vmatprep.mubr.bf16.mxu0 0
        %4128 = vmatmul.mubr.bf16.gmra.mxu0 %v4035
        %v4129 = vpop.f32.mrf.mxu0
        %v4130 = vadd.f32 0.0, %v4129
        %v4131 = vpop.f32.mrf.mxu0
        %v4132 = vpop.f32.mrf.mxu0
        %v4133 = vadd.f32 0.0, %v4132
        %v4134 = vpop.f32.mrf.mxu0
        %4135 = vmatprep.mubr.bf16.mxu0 0
        %4136 = vmatmul.mubr.bf16.gmra.mxu0 %v4038
        %v4137 = vpop.f32.mrf.mxu0
        %v4138 = vadd.f32 0.0, %v4137
        %v4139 = vpop.f32.mrf.mxu0
        %v4140 = vpop.f32.mrf.mxu0
        %v4141 = vadd.f32 0.0, %v4140
        %v4142 = vpop.f32.mrf.mxu0
        %4143 = vmatprep.mubr.bf16.mxu0 0
        %4144 = vmatmul.mubr.bf16.gmra.mxu0 %v4041
        %v4145 = vpop.f32.mrf.mxu0
        %v4146 = vadd.f32 0.0, %v4145
        %v4147 = vpop.f32.mrf.mxu0
        %v4148 = vpop.f32.mrf.mxu0
        %v4149 = vadd.f32 0.0, %v4148
        %v4150 = vpop.f32.mrf.mxu0
        %4151 = vmatprep.mubr.bf16.mxu0 0
        %4152 = vmatmul.mubr.bf16.gmra.mxu0 %v4044
        %v4153 = vpop.f32.mrf.mxu0
        %v4154 = vadd.f32 0.0, %v4153
        %v4155 = vpop.f32.mrf.mxu0
        %v4156 = vpop.f32.mrf.mxu0
        %v4157 = vadd.f32 0.0, %v4156
        %v4158 = vpop.f32.mrf.mxu0
        %4159 = vmatprep.mubr.bf16.mxu0 0
        %4160 = vmatmul.mubr.bf16.gmra.mxu0 %v4047
        %v4161 = vpop.f32.mrf.mxu0
        %v4162 = vadd.f32 0.0, %v4161
        %v4163 = vpop.f32.mrf.mxu0
        %v4164 = vpop.f32.mrf.mxu0
        %v4165 = vadd.f32 0.0, %v4164
        %v4166 = vpop.f32.mrf.mxu0
        %4167 = vmatprep.mubr.bf16.mxu0 0
        %4168 = vmatmul.mubr.bf16.gmra.mxu0 %v4050
        %v4169 = vpop.f32.mrf.mxu0
        %v4170 = vadd.f32 0.0, %v4169
        %v4171 = vpop.f32.mrf.mxu0
        %v4172 = vpop.f32.mrf.mxu0
        %v4173 = vadd.f32 0.0, %v4172
        %v4174 = vpop.f32.mrf.mxu0
        %4175 = vmatprep.mubr.bf16.mxu0 0
        %4176 = vmatmul.mubr.bf16.gmra.mxu0 %v4053
        %v4177 = vpop.f32.mrf.mxu0
        %v4178 = vadd.f32 0.0, %v4177
        %v4179 = vpop.f32.mrf.mxu0
        %v4180 = vpop.f32.mrf.mxu0
        %v4181 = vadd.f32 0.0, %v4180
        %v4182 = vpop.f32.mrf.mxu0
        %4183 = vmatprep.mubr.bf16.mxu0 0
        %4184 = vmatmul.mubr.bf16.gmra.mxu0 %v4056
        %v4185 = vpop.f32.mrf.mxu0
        %v4186 = vadd.f32 0.0, %v4185
        %v4187 = vpop.f32.mrf.mxu0
        %v4188 = vpop.f32.mrf.mxu0
        %v4189 = vadd.f32 0.0, %v4188
        %v4190 = vpop.f32.mrf.mxu0
        %4191 = vmatprep.mubr.bf16.mxu0 0
        %4192 = vmatmul.mubr.bf16.gmra.mxu0 %v4059
        %v4193 = vpop.f32.mrf.mxu0
        %v4194 = vadd.f32 0.0, %v4193
        %v4195 = vpop.f32.mrf.mxu0
        %v4196 = vpop.f32.mrf.mxu0
        %v4197 = vadd.f32 0.0, %v4196
        %v4198 = vpop.f32.mrf.mxu0
        %4199 = vmatprep.mubr.bf16.mxu0 0
        %4200 = vmatmul.mubr.bf16.gmra.mxu0 %v4062
        %v4201 = vpop.f32.mrf.mxu0
        %v4202 = vadd.f32 0.0, %v4201
        %v4203 = vpop.f32.mrf.mxu0
        %v4204 = vpop.f32.mrf.mxu0
        %v4205 = vadd.f32 0.0, %v4204
        %v4206 = vpop.f32.mrf.mxu0
        %4207 = vmatprep.mubr.bf16.mxu0 0
        %4208 = vmatmul.mubr.bf16.gmra.mxu0 %v4065
        %v4209 = vpop.f32.mrf.mxu0
        %v4210 = vadd.f32 0.0, %v4209
        %v4211 = vpop.f32.mrf.mxu0
        %v4212 = vpop.f32.mrf.mxu0
        %v4213 = vadd.f32 0.0, %v4212
        %v4214 = vpop.f32.mrf.mxu0
        %4215 = vmatprep.mubr.bf16.mxu0 0
        %4216 = vmatmul.mubr.bf16.gmra.mxu0 %v4068
        %v4217 = vpop.f32.mrf.mxu0
        %v4218 = vadd.f32 0.0, %v4217
        %v4219 = vpop.f32.mrf.mxu0
        %v4220 = vpop.f32.mrf.mxu0
        %v4221 = vadd.f32 0.0, %v4220
        %v4222 = vpop.f32.mrf.mxu0
        %4223 = vmatprep.mubr.bf16.mxu0 0
        %4224 = vmatmul.mubr.bf16.gmra.mxu0 %v4071
        %v4225 = vpop.f32.mrf.mxu0
        %v4226 = vadd.f32 0.0, %v4225
        %v4227 = vpop.f32.mrf.mxu0
        %v4228 = vpop.f32.mrf.mxu0
        %v4229 = vadd.f32 0.0, %v4228
        %v4230 = vpop.f32.mrf.mxu0
        %4231 = vmatprep.mubr.bf16.mxu0 0
        %4232 = vmatmul.mubr.bf16.gmra.mxu0 %v4074
        %v4233 = vpop.f32.mrf.mxu0
        %v4234 = vadd.f32 0.0, %v4233
        %v4235 = vpop.f32.mrf.mxu0
        %v4236 = vpop.f32.mrf.mxu0
        %v4237 = vadd.f32 0.0, %v4236
        %v4238 = vpop.f32.mrf.mxu0
        %4239 = vdwg.mxu0
        %v4240 = vadd.f32 %v3514, %v4114
        %v4241 = vadd.f32 %v3515, %v4117
        %v4242 = vadd.f32 %v3516, %v4122
        %v4243 = vadd.f32 %v3517, %v4125
        %v4244 = vadd.f32 %v3518, %v4130
        %v4245 = vadd.f32 %v3519, %v4133
        %v4246 = vadd.f32 %v3520, %v4138
        %v4247 = vadd.f32 %v3521, %v4141
        %v4248 = vadd.f32 %v3522, %v4146
        %v4249 = vadd.f32 %v3523, %v4149
        %v4250 = vadd.f32 %v3524, %v4154
        %v4251 = vadd.f32 %v3525, %v4157
        %v4252 = vadd.f32 %v3526, %v4162
        %v4253 = vadd.f32 %v3527, %v4165
        %v4254 = vadd.f32 %v3528, %v4170
        %v4255 = vadd.f32 %v3529, %v4173
        %v4256 = vadd.f32 %v3530, %v4178
        %v4257 = vadd.f32 %v3531, %v4181
        %v4258 = vadd.f32 %v3532, %v4186
        %v4259 = vadd.f32 %v3533, %v4189
        %v4260 = vadd.f32 %v3534, %v4194
        %v4261 = vadd.f32 %v3535, %v4197
        %v4262 = vadd.f32 %v3536, %v4202
        %v4263 = vadd.f32 %v3537, %v4205
        %v4264 = vadd.f32 %v3538, %v4210
        %v4265 = vadd.f32 %v3539, %v4213
        %v4266 = vadd.f32 %v3540, %v4218
        %v4267 = vadd.f32 %v3541, %v4221
        %v4268 = vadd.f32 %v3542, %v4226
        %v4269 = vadd.f32 %v3543, %v4229
        %v4270 = vadd.f32 %v3544, %v4234
        %v4271 = vadd.f32 %v3545, %v4237
        %v4272 = vld [vmem:[%s3187] sm:$0xe]
        %v4273 = vld [vmem:[%s3187 + $0xc] sm:$0xe]
        %v4274 = vld [vmem:[%s3187 + $0x18] sm:$0xe]
        %v4275 = vld [vmem:[%s3187 + $0x24] sm:$0xe]
        %v4276 = vld [vmem:[%s3187 + $0x30] sm:$0xe]
        %v4277 = vld [vmem:[%s3187 + $0x3c] sm:$0xe]
        %v4278 = vld [vmem:[%s3187 + $0x48] sm:$0xe]
        %v4279 = vld [vmem:[%s3187 + $0x54] sm:$0xe]
        %v4280 = vld [vmem:[%s3187 + $0x78] sm:$0xe]
        %v4281 = vld [vmem:[%s3187 + $0x84] sm:$0xe]
        %v4282 = vld [vmem:[%s3187 + $0x90] sm:$0xe]
        %v4283 = vld [vmem:[%s3187 + $0x9c] sm:$0xe]
        %v4284 = vld [vmem:[%s3187 + $0xa8] sm:$0xe]
        %v4285 = vld [vmem:[%s3187 + $0xb4] sm:$0xe]
        %v4286 = vld [vmem:[%s3187 + $0xc0] sm:$0xe]
        %v4287 = vld [vmem:[%s3187 + $0xcc] sm:$0xe]
        %v4336 = vrot.slane %v4272, 5
        %v4337 = vrot.slane %v4336, 4
        %v4338 = vrot.slane %v3547, 5
        %v4339 = vsel %vm1225, %v4337, %v4338
        %v4340 = vrot.slane %v4338, 4
        %v4341 = vrot.slane %v3548, 5
        %v4342 = vsel %vm1225, %v4340, %v4341
        %v4343 = vrot.slane %v4273, 5
        %v4344 = vrot.slane %v4343, 4
        %v4345 = vrot.slane %v3550, 5
        %v4346 = vsel %vm1225, %v4344, %v4345
        %v4347 = vrot.slane %v4345, 4
        %v4348 = vrot.slane %v3551, 5
        %v4349 = vsel %vm1225, %v4347, %v4348
        %v4350 = vrot.slane %v4274, 5
        %v4351 = vrot.slane %v4350, 4
        %v4352 = vrot.slane %v3553, 5
        %v4353 = vsel %vm1225, %v4351, %v4352
        %v4354 = vrot.slane %v4352, 4
        %v4355 = vrot.slane %v3554, 5
        %v4356 = vsel %vm1225, %v4354, %v4355
        %v4357 = vrot.slane %v4275, 5
        %v4358 = vrot.slane %v4357, 4
        %v4359 = vrot.slane %v3556, 5
        %v4360 = vsel %vm1225, %v4358, %v4359
        %v4361 = vrot.slane %v4359, 4
        %v4362 = vrot.slane %v3557, 5
        %v4363 = vsel %vm1225, %v4361, %v4362
        %v4364 = vrot.slane %v4276, 5
        %v4365 = vrot.slane %v4364, 4
        %v4366 = vrot.slane %v3559, 5
        %v4367 = vsel %vm1225, %v4365, %v4366
        %v4368 = vrot.slane %v4366, 4
        %v4369 = vrot.slane %v3560, 5
        %v4370 = vsel %vm1225, %v4368, %v4369
        %v4371 = vrot.slane %v4277, 5
        %v4372 = vrot.slane %v4371, 4
        %v4373 = vrot.slane %v3562, 5
        %v4374 = vsel %vm1225, %v4372, %v4373
        %v4375 = vrot.slane %v4373, 4
        %v4376 = vrot.slane %v3563, 5
        %v4377 = vsel %vm1225, %v4375, %v4376
        %v4378 = vrot.slane %v4278, 5
        %v4379 = vrot.slane %v4378, 4
        %v4380 = vrot.slane %v3565, 5
        %v4381 = vsel %vm1225, %v4379, %v4380
        %v4382 = vrot.slane %v4380, 4
        %v4383 = vrot.slane %v3566, 5
        %v4384 = vsel %vm1225, %v4382, %v4383
        %v4385 = vrot.slane %v4279, 5
        %v4386 = vrot.slane %v4385, 4
        %v4387 = vrot.slane %v3568, 5
        %v4388 = vsel %vm1225, %v4386, %v4387
        %v4389 = vrot.slane %v4387, 4
        %v4390 = vrot.slane %v3569, 5
        %v4391 = vsel %vm1225, %v4389, %v4390
        %v4392 = vrot.slane %v4280, 5
        %v4393 = vrot.slane %v4392, 4
        %v4394 = vrot.slane %v3571, 5
        %v4395 = vsel %vm1225, %v4393, %v4394
        %v4396 = vrot.slane %v4394, 4
        %v4397 = vrot.slane %v3572, 5
        %v4398 = vsel %vm1225, %v4396, %v4397
        %v4399 = vrot.slane %v4281, 5
        %v4400 = vrot.slane %v4399, 4
        %v4401 = vrot.slane %v3574, 5
        %v4402 = vsel %vm1225, %v4400, %v4401
        %v4403 = vrot.slane %v4401, 4
        %v4404 = vrot.slane %v3575, 5
        %v4405 = vsel %vm1225, %v4403, %v4404
        %v4406 = vrot.slane %v4282, 5
        %v4407 = vrot.slane %v4406, 4
        %v4408 = vrot.slane %v3577, 5
        %v4409 = vsel %vm1225, %v4407, %v4408
        %v4410 = vrot.slane %v4408, 4
        %v4411 = vrot.slane %v3578, 5
        %v4412 = vsel %vm1225, %v4410, %v4411
        %v4413 = vrot.slane %v4283, 5
        %v4414 = vrot.slane %v4413, 4
        %v4415 = vrot.slane %v3580, 5
        %v4416 = vsel %vm1225, %v4414, %v4415
        %v4417 = vrot.slane %v4415, 4
        %v4418 = vrot.slane %v3581, 5
        %v4419 = vsel %vm1225, %v4417, %v4418
        %v4420 = vrot.slane %v4284, 5
        %v4421 = vrot.slane %v4420, 4
        %v4422 = vrot.slane %v3583, 5
        %v4423 = vsel %vm1225, %v4421, %v4422
        %v4424 = vrot.slane %v4422, 4
        %v4425 = vrot.slane %v3584, 5
        %v4426 = vsel %vm1225, %v4424, %v4425
        %v4427 = vrot.slane %v4285, 5
        %v4428 = vrot.slane %v4427, 4
        %v4429 = vrot.slane %v3586, 5
        %v4430 = vsel %vm1225, %v4428, %v4429
        %v4431 = vrot.slane %v4429, 4
        %v4432 = vrot.slane %v3587, 5
        %v4433 = vsel %vm1225, %v4431, %v4432
        %v4434 = vrot.slane %v4286, 5
        %v4435 = vrot.slane %v4434, 4
        %v4436 = vrot.slane %v3589, 5
        %v4437 = vsel %vm1225, %v4435, %v4436
        %v4438 = vrot.slane %v4436, 4
        %v4439 = vrot.slane %v3590, 5
        %v4440 = vsel %vm1225, %v4438, %v4439
        %v4441 = vrot.slane %v4287, 5
        %v4442 = vrot.slane %v4441, 4
        %v4443 = vrot.slane %v3592, 5
        %v4444 = vsel %vm1225, %v4442, %v4443
        %v4445 = vrot.slane %v4443, 4
        %v4446 = vrot.slane %v3593, 5
        %v4447 = vsel %vm1225, %v4445, %v4446
        %s4448 = scalar_lea.vmem %s1, 16
        %v4449 = vld [vmem:[%s4448] sm:$0x3]
        %v4450 = vunpack.c.l.b16 %v4339
        %v4451 = vunpack.c.l.b16 %v4342
        %v4452 = vunpack.c.l.b16 %v4346
        %v4453 = vunpack.c.l.b16 %v4349
        %v4454 = vunpack.c.l.b16 %v4353
        %v4455 = vunpack.c.l.b16 %v4356
        %v4456 = vunpack.c.l.b16 %v4360
        %v4457 = vunpack.c.l.b16 %v4363
        %v4458 = vunpack.c.l.b16 %v4367
        %v4459 = vunpack.c.l.b16 %v4370
        %v4460 = vunpack.c.l.b16 %v4374
        %v4461 = vunpack.c.l.b16 %v4377
        %v4462 = vunpack.c.l.b16 %v4381
        %v4463 = vunpack.c.l.b16 %v4384
        %v4464 = vunpack.c.l.b16 %v4388
        %v4465 = vunpack.c.l.b16 %v4391
        %v4466 = vunpack.c.l.b16 %v4395
        %v4467 = vunpack.c.l.b16 %v4398
        %v4468 = vunpack.c.l.b16 %v4402
        %v4469 = vunpack.c.l.b16 %v4405
        %v4470 = vunpack.c.l.b16 %v4409
        %v4471 = vunpack.c.l.b16 %v4412
        %v4472 = vunpack.c.l.b16 %v4416
        %v4473 = vunpack.c.l.b16 %v4419
        %v4474 = vunpack.c.l.b16 %v4423
        %v4475 = vunpack.c.l.b16 %v4426
        %v4476 = vunpack.c.l.b16 %v4430
        %v4477 = vunpack.c.l.b16 %v4433
        %v4478 = vunpack.c.l.b16 %v4437
        %v4479 = vunpack.c.l.b16 %v4440
        %v4480 = vunpack.c.l.b16 %v4444
        %v4481 = vunpack.c.l.b16 %v4447
        %v4482 = vpack.c.b16 %v4451, %v4450
        %v4483 = vpack.c.b16 %v4453, %v4452
        %v4484 = vpack.c.b16 %v4455, %v4454
        %v4485 = vpack.c.b16 %v4457, %v4456
        %v4486 = vpack.c.b16 %v4459, %v4458
        %v4487 = vpack.c.b16 %v4461, %v4460
        %v4488 = vpack.c.b16 %v4463, %v4462
        %v4489 = vpack.c.b16 %v4465, %v4464
        %v4490 = vpack.c.b16 %v4467, %v4466
        %v4491 = vpack.c.b16 %v4469, %v4468
        %v4492 = vpack.c.b16 %v4471, %v4470
        %v4493 = vpack.c.b16 %v4473, %v4472
        %v4494 = vpack.c.b16 %v4475, %v4474
        %v4495 = vpack.c.b16 %v4477, %v4476
        %v4496 = vpack.c.b16 %v4479, %v4478
        %v4497 = vpack.c.b16 %v4481, %v4480
        %v4499 = vsel %vm669, %v4482, 0
        %v4502 = vsel %vm669, %v4483, 0
        %v4505 = vsel %vm669, %v4484, 0
        %v4508 = vsel %vm669, %v4485, 0
        %v4511 = vsel %vm669, %v4486, 0
        %v4514 = vsel %vm669, %v4487, 0
        %v4517 = vsel %vm669, %v4488, 0
        %v4520 = vsel %vm669, %v4489, 0
        %v4523 = vsel %vm669, %v4490, 0
        %v4526 = vsel %vm669, %v4491, 0
        %v4529 = vsel %vm669, %v4492, 0
        %v4532 = vsel %vm669, %v4493, 0
        %v4535 = vsel %vm669, %v4494, 0
        %v4538 = vsel %vm669, %v4495, 0
        %v4541 = vsel %vm669, %v4496, 0
        %v4544 = vsel %vm669, %v4497, 0
        %v4547 = vsel %vm718, %v4449, 0
        %4549 = vmatprep.subr.bf16.mxu0 0
        %4550 = vmatpush1.bf16.msra.mxu0 0
        %4551 = vmatprep.subr.bf16.mxu0 0
        %4552 = vmatpush1.bf16.msra.mxu0 0
        %4553 = vmatprep.subr.bf16.mxu0 0
        %4554 = vmatpush1.bf16.msra.mxu0 0
        %4555 = vmatprep.subr.bf16.mxu0 0
        %4556 = vmatpush1.bf16.msra.mxu0 0
        %4557 = vmatprep.subr.bf16.mxu0 0
        %4558 = vmatpush1.bf16.msra.mxu0 0
        %4559 = vmatprep.subr.bf16.mxu0 0
        %4560 = vmatpush1.bf16.msra.mxu0 0
        %4561 = vmatprep.subr.bf16.mxu0 0
        %4562 = vmatpush1.bf16.msra.mxu0 0
        %4563 = vmatprep.subr.bf16.mxu0 0
        %4564 = vmatpush1.bf16.msra.mxu0 %v4547
        %4565 = vmatprep.subr.bf16.mxu0 0
        %4566 = vmatpush2.bf16.msra.mxu0 0
        %4567 = vmatprep.subr.bf16.mxu0 0
        %4568 = vmatpush2.bf16.msra.mxu0 0
        %4569 = vmatprep.subr.bf16.mxu0 0
        %4570 = vmatpush2.bf16.msra.mxu0 0
        %4571 = vmatprep.subr.bf16.mxu0 0
        %4572 = vmatpush2.bf16.msra.mxu0 0
        %4573 = vmatprep.subr.bf16.mxu0 0
        %4574 = vmatpush2.bf16.msra.mxu0 0
        %4575 = vmatprep.subr.bf16.mxu0 0
        %4576 = vmatpush2.bf16.msra.mxu0 0
        %4577 = vmatprep.subr.bf16.mxu0 0
        %4578 = vmatpush2.bf16.msra.mxu0 0
        %4579 = vmatprep.subr.bf16.mxu0 0
        %4580 = vmatpush2.bf16.msra.mxu0 0
        %4581 = vmatprep.mubr.bf16.mxu0 0
        %4582 = vmatmul.mubr.bf16.gmra.mxu0 %v4499
        %v4583 = vpop.f32.mrf.mxu0
        %v4584 = vadd.f32 0.0, %v4583
        %v4585 = vpop.f32.mrf.mxu0
        %v4586 = vpop.f32.mrf.mxu0
        %v4587 = vadd.f32 0.0, %v4586
        %v4588 = vpop.f32.mrf.mxu0
        %4589 = vmatprep.mubr.bf16.mxu0 0
        %4590 = vmatmul.mubr.bf16.gmra.mxu0 %v4502
        %v4591 = vpop.f32.mrf.mxu0
        %v4592 = vadd.f32 0.0, %v4591
        %v4593 = vpop.f32.mrf.mxu0
        %v4594 = vpop.f32.mrf.mxu0
        %v4595 = vadd.f32 0.0, %v4594
        %v4596 = vpop.f32.mrf.mxu0
        %4597 = vmatprep.mubr.bf16.mxu0 0
        %4598 = vmatmul.mubr.bf16.gmra.mxu0 %v4505
        %v4599 = vpop.f32.mrf.mxu0
        %v4600 = vadd.f32 0.0, %v4599
        %v4601 = vpop.f32.mrf.mxu0
        %v4602 = vpop.f32.mrf.mxu0
        %v4603 = vadd.f32 0.0, %v4602
        %v4604 = vpop.f32.mrf.mxu0
        %4605 = vmatprep.mubr.bf16.mxu0 0
        %4606 = vmatmul.mubr.bf16.gmra.mxu0 %v4508
        %v4607 = vpop.f32.mrf.mxu0
        %v4608 = vadd.f32 0.0, %v4607
        %v4609 = vpop.f32.mrf.mxu0
        %v4610 = vpop.f32.mrf.mxu0
        %v4611 = vadd.f32 0.0, %v4610
        %v4612 = vpop.f32.mrf.mxu0
        %4613 = vmatprep.mubr.bf16.mxu0 0
        %4614 = vmatmul.mubr.bf16.gmra.mxu0 %v4511
        %v4615 = vpop.f32.mrf.mxu0
        %v4616 = vadd.f32 0.0, %v4615
        %v4617 = vpop.f32.mrf.mxu0
        %v4618 = vpop.f32.mrf.mxu0
        %v4619 = vadd.f32 0.0, %v4618
        %v4620 = vpop.f32.mrf.mxu0
        %4621 = vmatprep.mubr.bf16.mxu0 0
        %4622 = vmatmul.mubr.bf16.gmra.mxu0 %v4514
        %v4623 = vpop.f32.mrf.mxu0
        %v4624 = vadd.f32 0.0, %v4623
        %v4625 = vpop.f32.mrf.mxu0
        %v4626 = vpop.f32.mrf.mxu0
        %v4627 = vadd.f32 0.0, %v4626
        %v4628 = vpop.f32.mrf.mxu0
        %4629 = vmatprep.mubr.bf16.mxu0 0
        %4630 = vmatmul.mubr.bf16.gmra.mxu0 %v4517
        %v4631 = vpop.f32.mrf.mxu0
        %v4632 = vadd.f32 0.0, %v4631
        %v4633 = vpop.f32.mrf.mxu0
        %v4634 = vpop.f32.mrf.mxu0
        %v4635 = vadd.f32 0.0, %v4634
        %v4636 = vpop.f32.mrf.mxu0
        %4637 = vmatprep.mubr.bf16.mxu0 0
        %4638 = vmatmul.mubr.bf16.gmra.mxu0 %v4520
        %v4639 = vpop.f32.mrf.mxu0
        %v4640 = vadd.f32 0.0, %v4639
        %v4641 = vpop.f32.mrf.mxu0
        %v4642 = vpop.f32.mrf.mxu0
        %v4643 = vadd.f32 0.0, %v4642
        %v4644 = vpop.f32.mrf.mxu0
        %4645 = vmatprep.mubr.bf16.mxu0 0
        %4646 = vmatmul.mubr.bf16.gmra.mxu0 %v4523
        %v4647 = vpop.f32.mrf.mxu0
        %v4648 = vadd.f32 0.0, %v4647
        %v4649 = vpop.f32.mrf.mxu0
        %v4650 = vpop.f32.mrf.mxu0
        %v4651 = vadd.f32 0.0, %v4650
        %v4652 = vpop.f32.mrf.mxu0
        %4653 = vmatprep.mubr.bf16.mxu0 0
        %4654 = vmatmul.mubr.bf16.gmra.mxu0 %v4526
        %v4655 = vpop.f32.mrf.mxu0
        %v4656 = vadd.f32 0.0, %v4655
        %v4657 = vpop.f32.mrf.mxu0
        %v4658 = vpop.f32.mrf.mxu0
        %v4659 = vadd.f32 0.0, %v4658
        %v4660 = vpop.f32.mrf.mxu0
        %4661 = vmatprep.mubr.bf16.mxu0 0
        %4662 = vmatmul.mubr.bf16.gmra.mxu0 %v4529
        %v4663 = vpop.f32.mrf.mxu0
        %v4664 = vadd.f32 0.0, %v4663
        %v4665 = vpop.f32.mrf.mxu0
        %v4666 = vpop.f32.mrf.mxu0
        %v4667 = vadd.f32 0.0, %v4666
        %v4668 = vpop.f32.mrf.mxu0
        %4669 = vmatprep.mubr.bf16.mxu0 0
        %4670 = vmatmul.mubr.bf16.gmra.mxu0 %v4532
        %v4671 = vpop.f32.mrf.mxu0
        %v4672 = vadd.f32 0.0, %v4671
        %v4673 = vpop.f32.mrf.mxu0
        %v4674 = vpop.f32.mrf.mxu0
        %v4675 = vadd.f32 0.0, %v4674
        %v4676 = vpop.f32.mrf.mxu0
        %4677 = vmatprep.mubr.bf16.mxu0 0
        %4678 = vmatmul.mubr.bf16.gmra.mxu0 %v4535
        %v4679 = vpop.f32.mrf.mxu0
        %v4680 = vadd.f32 0.0, %v4679
        %v4681 = vpop.f32.mrf.mxu0
        %v4682 = vpop.f32.mrf.mxu0
        %v4683 = vadd.f32 0.0, %v4682
        %v4684 = vpop.f32.mrf.mxu0
        %4685 = vmatprep.mubr.bf16.mxu0 0
        %4686 = vmatmul.mubr.bf16.gmra.mxu0 %v4538
        %v4687 = vpop.f32.mrf.mxu0
        %v4688 = vadd.f32 0.0, %v4687
        %v4689 = vpop.f32.mrf.mxu0
        %v4690 = vpop.f32.mrf.mxu0
        %v4691 = vadd.f32 0.0, %v4690
        %v4692 = vpop.f32.mrf.mxu0
        %4693 = vmatprep.mubr.bf16.mxu0 0
        %4694 = vmatmul.mubr.bf16.gmra.mxu0 %v4541
        %v4695 = vpop.f32.mrf.mxu0
        %v4696 = vadd.f32 0.0, %v4695
        %v4697 = vpop.f32.mrf.mxu0
        %v4698 = vpop.f32.mrf.mxu0
        %v4699 = vadd.f32 0.0, %v4698
        %v4700 = vpop.f32.mrf.mxu0
        %4701 = vmatprep.mubr.bf16.mxu0 0
        %4702 = vmatmul.mubr.bf16.gmra.mxu0 %v4544
        %v4703 = vpop.f32.mrf.mxu0
        %v4704 = vadd.f32 0.0, %v4703
        %v4705 = vpop.f32.mrf.mxu0
        %v4706 = vpop.f32.mrf.mxu0
        %v4707 = vadd.f32 0.0, %v4706
        %v4708 = vpop.f32.mrf.mxu0
        %4709 = vdwg.mxu0
        %v4710 = vadd.f32 %v4240, %v4584
        %v4711 = vadd.f32 %v4241, %v4587
        %v4712 = vadd.f32 %v4242, %v4592
        %v4713 = vadd.f32 %v4243, %v4595
        %v4714 = vadd.f32 %v4244, %v4600
        %v4715 = vadd.f32 %v4245, %v4603
        %v4716 = vadd.f32 %v4246, %v4608
        %v4717 = vadd.f32 %v4247, %v4611
        %v4718 = vadd.f32 %v4248, %v4616
        %v4719 = vadd.f32 %v4249, %v4619
        %v4720 = vadd.f32 %v4250, %v4624
        %v4721 = vadd.f32 %v4251, %v4627
        %v4722 = vadd.f32 %v4252, %v4632
        %v4723 = vadd.f32 %v4253, %v4635
        %v4724 = vadd.f32 %v4254, %v4640
        %v4725 = vadd.f32 %v4255, %v4643
        %v4726 = vadd.f32 %v4256, %v4648
        %v4727 = vadd.f32 %v4257, %v4651
        %v4728 = vadd.f32 %v4258, %v4656
        %v4729 = vadd.f32 %v4259, %v4659
        %v4730 = vadd.f32 %v4260, %v4664
        %v4731 = vadd.f32 %v4261, %v4667
        %v4732 = vadd.f32 %v4262, %v4672
        %v4733 = vadd.f32 %v4263, %v4675
        %v4734 = vadd.f32 %v4264, %v4680
        %v4735 = vadd.f32 %v4265, %v4683
        %v4736 = vadd.f32 %v4266, %v4688
        %v4737 = vadd.f32 %v4267, %v4691
        %v4738 = vadd.f32 %v4268, %v4696
        %v4739 = vadd.f32 %v4269, %v4699
        %v4740 = vadd.f32 %v4270, %v4704
        %v4741 = vadd.f32 %v4271, %v4707
        %v4742 = vpack.c.bf16 %v4711, %v4710
        %v4743 = vpack.c.bf16 %v4713, %v4712
        %v4744 = vpack.c.bf16 %v4715, %v4714
        %v4745 = vpack.c.bf16 %v4717, %v4716
        %v4746 = vpack.c.bf16 %v4719, %v4718
        %v4747 = vpack.c.bf16 %v4721, %v4720
        %v4748 = vpack.c.bf16 %v4723, %v4722
        %v4749 = vpack.c.bf16 %v4725, %v4724
        %v4750 = vpack.c.bf16 %v4727, %v4726
        %v4751 = vpack.c.bf16 %v4729, %v4728
        %v4752 = vpack.c.bf16 %v4731, %v4730
        %v4753 = vpack.c.bf16 %v4733, %v4732
        %v4754 = vpack.c.bf16 %v4735, %v4734
        %v4755 = vpack.c.bf16 %v4737, %v4736
        %v4756 = vpack.c.bf16 %v4739, %v4738
        %v4757 = vpack.c.bf16 %v4741, %v4740
        %v4774 = vunpack.c.l.b16 %v4742
        %v4775 = vunpack.c.h.b16 %v4742
        %v4776 = vunpack.c.l.b16 %v4743
        %v4777 = vunpack.c.h.b16 %v4743
        %v4778 = vunpack.c.l.b16 %v4744
        %v4779 = vunpack.c.h.b16 %v4744
        %v4780 = vunpack.c.l.b16 %v4745
        %v4781 = vunpack.c.h.b16 %v4745
        %v4782 = vunpack.c.l.b16 %v4746
        %v4783 = vunpack.c.h.b16 %v4746
        %v4784 = vunpack.c.l.b16 %v4747
        %v4785 = vunpack.c.h.b16 %v4747
        %v4786 = vunpack.c.l.b16 %v4748
        %v4787 = vunpack.c.h.b16 %v4748
        %v4788 = vunpack.c.l.b16 %v4749
        %v4789 = vunpack.c.h.b16 %v4749
        %v4790 = vunpack.c.l.b16 %v4750
        %v4791 = vunpack.c.h.b16 %v4750
        %v4792 = vunpack.c.l.b16 %v4751
        %v4793 = vunpack.c.h.b16 %v4751
        %v4794 = vunpack.c.l.b16 %v4752
        %v4795 = vunpack.c.h.b16 %v4752
        %v4796 = vunpack.c.l.b16 %v4753
        %v4797 = vunpack.c.h.b16 %v4753
        %v4798 = vunpack.c.l.b16 %v4754
        %v4799 = vunpack.c.h.b16 %v4754
        %v4800 = vunpack.c.l.b16 %v4755
        %v4801 = vunpack.c.h.b16 %v4755
        %v4802 = vunpack.c.l.b16 %v4756
        %v4803 = vunpack.c.h.b16 %v4756
        %v4804 = vunpack.c.l.b16 %v4757
        %v4805 = vunpack.c.h.b16 %v4757
        %v4806 = vpack.c.b16 %v4774, %v4774
        %v4807 = vpack.c.b16 %v4775, %v4775
        %v4808 = vpack.c.b16 %v4776, %v4776
        %v4809 = vpack.c.b16 %v4777, %v4777
        %v4810 = vpack.c.b16 %v4778, %v4778
        %v4811 = vpack.c.b16 %v4779, %v4779
        %v4812 = vpack.c.b16 %v4780, %v4780
        %v4813 = vpack.c.b16 %v4781, %v4781
        %v4814 = vpack.c.b16 %v4782, %v4782
        %v4815 = vpack.c.b16 %v4783, %v4783
        %v4816 = vpack.c.b16 %v4784, %v4784
        %v4817 = vpack.c.b16 %v4785, %v4785
        %v4818 = vpack.c.b16 %v4786, %v4786
        %v4819 = vpack.c.b16 %v4787, %v4787
        %v4820 = vpack.c.b16 %v4788, %v4788
        %v4821 = vpack.c.b16 %v4789, %v4789
        %v4822 = vpack.c.b16 %v4790, %v4790
        %v4823 = vpack.c.b16 %v4791, %v4791
        %v4824 = vpack.c.b16 %v4792, %v4792
        %v4825 = vpack.c.b16 %v4793, %v4793
        %v4826 = vpack.c.b16 %v4794, %v4794
        %v4827 = vpack.c.b16 %v4795, %v4795
        %v4828 = vpack.c.b16 %v4796, %v4796
        %v4829 = vpack.c.b16 %v4797, %v4797
        %v4830 = vpack.c.b16 %v4798, %v4798
        %v4831 = vpack.c.b16 %v4799, %v4799
        %v4832 = vpack.c.b16 %v4800, %v4800
        %v4833 = vpack.c.b16 %v4801, %v4801
        %v4834 = vpack.c.b16 %v4802, %v4802
        %v4835 = vpack.c.b16 %v4803, %v4803
        %v4836 = vpack.c.b16 %v4804, %v4804
        %v4837 = vpack.c.b16 %v4805, %v4805
        %4870 = vst [vmem:[%s163] sm:$0xf] %v4806
        %4871 = vst [vmem:[%s163 + $0x4] sm:$0xf] %v4807
        %4872 = vst [vmem:[%s163 + $0x8] sm:$0xf] %v4808
        %4873 = vst [vmem:[%s163 + $0xc] sm:$0xf] %v4809
        %4874 = vst [vmem:[%s163 + $0x10] sm:$0xf] %v4810
        %4875 = vst [vmem:[%s163 + $0x14] sm:$0xf] %v4811
        %4876 = vst [vmem:[%s163 + $0x18] sm:$0xf] %v4812
        %4877 = vst [vmem:[%s163 + $0x1c] sm:$0xf] %v4813
        %4878 = vst [vmem:[%s163 + $0x20] sm:$0xf] %v4814
        %4879 = vst [vmem:[%s163 + $0x24] sm:$0xf] %v4815
        %4880 = vst [vmem:[%s163 + $0x28] sm:$0xf] %v4816
        %4881 = vst [vmem:[%s163 + $0x2c] sm:$0xf] %v4817
        %4882 = vst [vmem:[%s163 + $0x30] sm:$0xf] %v4818
        %4883 = vst [vmem:[%s163 + $0x34] sm:$0xf] %v4819
        %4884 = vst [vmem:[%s163 + $0x38] sm:$0xf] %v4820
        %4885 = vst [vmem:[%s163 + $0x3c] sm:$0xf] %v4821
        %4886 = vst [vmem:[%s163 + $0x40] sm:$0xf] %v4822
        %4887 = vst [vmem:[%s163 + $0x44] sm:$0xf] %v4823
        %4888 = vst [vmem:[%s163 + $0x48] sm:$0xf] %v4824
        %4889 = vst [vmem:[%s163 + $0x4c] sm:$0xf] %v4825
        %4890 = vst [vmem:[%s163 + $0x50] sm:$0xf] %v4826
        %4891 = vst [vmem:[%s163 + $0x54] sm:$0xf] %v4827
        %4892 = vst [vmem:[%s163 + $0x58] sm:$0xf] %v4828
        %4893 = vst [vmem:[%s163 + $0x5c] sm:$0xf] %v4829
        %4894 = vst [vmem:[%s163 + $0x60] sm:$0xf] %v4830
        %4895 = vst [vmem:[%s163 + $0x64] sm:$0xf] %v4831
        %4896 = vst [vmem:[%s163 + $0x68] sm:$0xf] %v4832
        %4897 = vst [vmem:[%s163 + $0x6c] sm:$0xf] %v4833
        %4898 = vst [vmem:[%s163 + $0x70] sm:$0xf] %v4834
        %4899 = vst [vmem:[%s163 + $0x74] sm:$0xf] %v4835
        %4900 = vst [vmem:[%s163 + $0x78] sm:$0xf] %v4836
        %4901 = vst [vmem:[%s163 + $0x7c] sm:$0xf] %v4837
        %4902 = vmatprep.subr.mxu0 0.0
        %4903 = vmatpush1.msra.mxu0 %v4725
        %4904 = vmatprep.subr.mxu0 0.0
        %4905 = vmatpush1.msra.mxu0 %v4724
        %4906 = vmatprep.subr.mxu0 0.0
        %4907 = vmatpush1.msra.mxu0 %v4723
        %4908 = vmatprep.subr.mxu0 0.0
        %4909 = vmatpush1.msra.mxu0 %v4722
        %4910 = vmatprep.subr.mxu0 0.0
        %4911 = vmatpush1.msra.mxu0 %v4721
        %4912 = vmatprep.subr.mxu0 0.0
        %4913 = vmatpush1.msra.mxu0 %v4720
        %4914 = vmatprep.subr.mxu0 0.0
        %4915 = vmatpush1.msra.mxu0 %v4719
        %4916 = vmatprep.subr.mxu0 0.0
        %4917 = vmatpush1.msra.mxu0 %v4718
        %4918 = vmatprep.subr.mxu0 0.0
        %4919 = vmatpush1.msra.mxu0 %v4717
        %4920 = vmatprep.subr.mxu0 0.0
        %4921 = vmatpush1.msra.mxu0 %v4716
        %4922 = vmatprep.subr.mxu0 0.0
        %4923 = vmatpush1.msra.mxu0 %v4715
        %4924 = vmatprep.subr.mxu0 0.0
        %4925 = vmatpush1.msra.mxu0 %v4714
        %4926 = vmatprep.subr.mxu0 0.0
        %4927 = vmatpush1.msra.mxu0 %v4713
        %4928 = vmatprep.subr.mxu0 0.0
        %4929 = vmatpush1.msra.mxu0 %v4712
        %4930 = vmatprep.subr.mxu0 0.0
        %4931 = vmatpush1.msra.mxu0 %v4711
        %4932 = vmatprep.subr.mxu0 0.0
        %4933 = vmatpush1.msra.mxu0 %v4710
        %4934 = vmatprep.subr.mxu0 0.0
        %4935 = vmatpush2.msra.mxu0 %v4741
        %4936 = vmatprep.subr.mxu0 0.0
        %4937 = vmatpush2.msra.mxu0 %v4740
        %4938 = vmatprep.subr.mxu0 0.0
        %4939 = vmatpush2.msra.mxu0 %v4739
        %4940 = vmatprep.subr.mxu0 0.0
        %4941 = vmatpush2.msra.mxu0 %v4738
        %4942 = vmatprep.subr.mxu0 0.0
        %4943 = vmatpush2.msra.mxu0 %v4737
        %4944 = vmatprep.subr.mxu0 0.0
        %4945 = vmatpush2.msra.mxu0 %v4736
        %4946 = vmatprep.subr.mxu0 0.0
        %4947 = vmatpush2.msra.mxu0 %v4735
        %4948 = vmatprep.subr.mxu0 0.0
        %4949 = vmatpush2.msra.mxu0 %v4734
        %4950 = vmatprep.subr.mxu0 0.0
        %4951 = vmatpush2.msra.mxu0 %v4733
        %4952 = vmatprep.subr.mxu0 0.0
        %4953 = vmatpush2.msra.mxu0 %v4732
        %4954 = vmatprep.subr.mxu0 0.0
        %4955 = vmatpush2.msra.mxu0 %v4731
        %4956 = vmatprep.subr.mxu0 0.0
        %4957 = vmatpush2.msra.mxu0 %v4730
        %4958 = vmatprep.subr.mxu0 0.0
        %4959 = vmatpush2.msra.mxu0 %v4729
        %4960 = vmatprep.subr.mxu0 0.0
        %4961 = vmatpush2.msra.mxu0 %v4728
        %4962 = vmatprep.subr.mxu0 0.0
        %4963 = vmatpush2.msra.mxu0 %v4727
        %4964 = vmatprep.subr.mxu0 0.0
        %4965 = vmatpush2.msra.mxu0 %v4726
        %4966 = vmatprep.mubr.f32.mxu0 1.0
        %4967 = vmatmul.mubr.f32.gmra.mxu0 1.0
        %v4968 = vpop.f32.mrf.mxu0
        %v4969 = vadd.f32 0.0, %v4968
        %v4970 = vpop.f32.mrf.mxu0
        %4971 = vdwg.mxu0
        %4972 = vst [vmem:[%s181] sm:$0x1] %v4969
        %v4973 = vmul.f32 %v4710, %v4710
        %v4974 = vmul.f32 %v4711, %v4711
        %v4975 = vmul.f32 %v4712, %v4712
        %v4976 = vmul.f32 %v4713, %v4713
        %v4977 = vmul.f32 %v4714, %v4714
        %v4978 = vmul.f32 %v4715, %v4715
        %v4979 = vmul.f32 %v4716, %v4716
        %v4980 = vmul.f32 %v4717, %v4717
        %v4981 = vmul.f32 %v4718, %v4718
        %v4982 = vmul.f32 %v4719, %v4719
        %v4983 = vmul.f32 %v4720, %v4720
        %v4984 = vmul.f32 %v4721, %v4721
        %v4985 = vmul.f32 %v4722, %v4722
        %v4986 = vmul.f32 %v4723, %v4723
        %v4987 = vmul.f32 %v4724, %v4724
        %v4988 = vmul.f32 %v4725, %v4725
        %v4989 = vmul.f32 %v4726, %v4726
        %v4990 = vmul.f32 %v4727, %v4727
        %v4991 = vmul.f32 %v4728, %v4728
        %v4992 = vmul.f32 %v4729, %v4729
        %v4993 = vmul.f32 %v4730, %v4730
        %v4994 = vmul.f32 %v4731, %v4731
        %v4995 = vmul.f32 %v4732, %v4732
        %v4996 = vmul.f32 %v4733, %v4733
        %v4997 = vmul.f32 %v4734, %v4734
        %v4998 = vmul.f32 %v4735, %v4735
        %v4999 = vmul.f32 %v4736, %v4736
        %v5000 = vmul.f32 %v4737, %v4737
        %v5001 = vmul.f32 %v4738, %v4738
        %v5002 = vmul.f32 %v4739, %v4739
        %v5003 = vmul.f32 %v4740, %v4740
        %v5004 = vmul.f32 %v4741, %v4741
        %5005 = vmatprep.subr.mxu0 0.0
        %5006 = vmatpush1.msra.mxu0 %v4988
        %5007 = vmatprep.subr.mxu0 0.0
        %5008 = vmatpush1.msra.mxu0 %v4987
        %5009 = vmatprep.subr.mxu0 0.0
        %5010 = vmatpush1.msra.mxu0 %v4986
        %5011 = vmatprep.subr.mxu0 0.0
        %5012 = vmatpush1.msra.mxu0 %v4985
        %5013 = vmatprep.subr.mxu0 0.0
        %5014 = vmatpush1.msra.mxu0 %v4984
        %5015 = vmatprep.subr.mxu0 0.0
        %5016 = vmatpush1.msra.mxu0 %v4983
        %5017 = vmatprep.subr.mxu0 0.0
        %5018 = vmatpush1.msra.mxu0 %v4982
        %5019 = vmatprep.subr.mxu0 0.0
        %5020 = vmatpush1.msra.mxu0 %v4981
        %5021 = vmatprep.subr.mxu0 0.0
        %5022 = vmatpush1.msra.mxu0 %v4980
        %5023 = vmatprep.subr.mxu0 0.0
        %5024 = vmatpush1.msra.mxu0 %v4979
        %5025 = vmatprep.subr.mxu0 0.0
        %5026 = vmatpush1.msra.mxu0 %v4978
        %5027 = vmatprep.subr.mxu0 0.0
        %5028 = vmatpush1.msra.mxu0 %v4977
        %5029 = vmatprep.subr.mxu0 0.0
        %5030 = vmatpush1.msra.mxu0 %v4976
        %5031 = vmatprep.subr.mxu0 0.0
        %5032 = vmatpush1.msra.mxu0 %v4975
        %5033 = vmatprep.subr.mxu0 0.0
        %5034 = vmatpush1.msra.mxu0 %v4974
        %5035 = vmatprep.subr.mxu0 0.0
        %5036 = vmatpush1.msra.mxu0 %v4973
        %5037 = vmatprep.subr.mxu0 0.0
        %5038 = vmatpush2.msra.mxu0 %v5004
        %5039 = vmatprep.subr.mxu0 0.0
        %5040 = vmatpush2.msra.mxu0 %v5003
        %5041 = vmatprep.subr.mxu0 0.0
        %5042 = vmatpush2.msra.mxu0 %v5002
        %5043 = vmatprep.subr.mxu0 0.0
        %5044 = vmatpush2.msra.mxu0 %v5001
        %5045 = vmatprep.subr.mxu0 0.0
        %5046 = vmatpush2.msra.mxu0 %v5000
        %5047 = vmatprep.subr.mxu0 0.0
        %5048 = vmatpush2.msra.mxu0 %v4999
        %5049 = vmatprep.subr.mxu0 0.0
        %5050 = vmatpush2.msra.mxu0 %v4998
        %5051 = vmatprep.subr.mxu0 0.0
        %5052 = vmatpush2.msra.mxu0 %v4997
        %5053 = vmatprep.subr.mxu0 0.0
        %5054 = vmatpush2.msra.mxu0 %v4996
        %5055 = vmatprep.subr.mxu0 0.0
        %5056 = vmatpush2.msra.mxu0 %v4995
        %5057 = vmatprep.subr.mxu0 0.0
        %5058 = vmatpush2.msra.mxu0 %v4994
        %5059 = vmatprep.subr.mxu0 0.0
        %5060 = vmatpush2.msra.mxu0 %v4993
        %5061 = vmatprep.subr.mxu0 0.0
        %5062 = vmatpush2.msra.mxu0 %v4992
        %5063 = vmatprep.subr.mxu0 0.0
        %5064 = vmatpush2.msra.mxu0 %v4991
        %5065 = vmatprep.subr.mxu0 0.0
        %5066 = vmatpush2.msra.mxu0 %v4990
        %5067 = vmatprep.subr.mxu0 0.0
        %5068 = vmatpush2.msra.mxu0 %v4989
        %5069 = vmatprep.mubr.f32.mxu0 1.0
        %5070 = vmatmul.mubr.f32.gmra.mxu0 1.0
        %v5071 = vpop.f32.mrf.mxu0
        %v5072 = vadd.f32 0.0, %v5071
        %v5073 = vpop.f32.mrf.mxu0
        %5074 = vdwg.mxu0
        %5075 = vst [vmem:[%s181 + $0x1] sm:$0x1] %v5072
        %s5076 = sand.u32 %s70, 1
        %s5077 = sand.u32 %s70, 1
        %s5078 = smul.addr %s5077, 128
        %s5079 = scalar_lea.vmem [#allocation2], %s5078
        %p5080 = scmp.lt.s32.totalorder %s15, 1
        %s5081 = scalar_select %p5080, %s15, 1
        %s5082 = smul.addr %s5081, 2
        %s5083 = scalar_lea.vmem %s3, %s5082
        // Predicated region
        $region29: #{double_conv.3} parent=27 // pred_check
          %p5084 = pneg %p80
        $region30: #{double_conv.3} parent=27 // pred_check_branch
          %5086 = sbr.rel (%p5084) target = $region32
        $region31: #{double_conv.3} parent=27 // pred_region
          %s5087 = smul.u32 8, %s15
          %s5088 = smul.addr %s5087, 2
          %s5089 = smul.addr %s5088, 4
          %s5090 = scalar_lea.vmem %s2, %s5089
          // Predicated region
          $region33: #{double_conv.3} parent=31 // pred_check
            _
          $region34: #{double_conv.3} parent=31 // pred_check_branch
            %5092 = sbr.rel (0) target = $region36
          $region35: #{double_conv.3} parent=31 // pred_region
            // Predicated region
            $region37: #{double_conv.3} parent=35 // pred_check
              _
            $region38: #{double_conv.3} parent=35 // pred_check_branch
              %5094 = sbr.rel target = $region40
            $region39: #{double_conv.3} parent=35 // pred_region
              // Predicated region
              $region52: #{double_conv.3} parent=39 // pred_check
                _
              $region53: #{double_conv.3} parent=39 // pred_check_branch
                %5172 = sbr.rel (0) target = $region55
              $region54: #{double_conv.3} parent=39 // pred_region
                loop: start=0, step=1, limit=1
                $region56: #{double_conv.3} parent=54 // loop_pre_header
                  _
                $region57: #{double_conv.3} parent=54 // loop_header
                  %s5174 = sphi 0, %s5178
                  %p5175 = scmp.ge.s32.totalorder %s5174, 1
                  %s5179 = sphi %s5079, %s5079
                  %s5180 = sphi %s5090, %s5090
                $region58: #{double_conv.3} parent=54 // loop_header_branch
                  %5177 = sbr.rel (%p5175) target = $region62
                $region59: #{double_conv.3} parent=54 // loop_body
                  _
                $region60: #{double_conv.3} parent=54 // loop_footer
                  %s5178 = sadd.s32 1, %s5174
                $region61: #{double_conv.3} parent=54 // loop_footer_branch
                  %5173 = sbr.rel target = $region57
                $region62: #{double_conv.3} parent=54 // loop_exit
                  _
                %s5182 = ssub.s32 16, 1
                loop: start=0, step=1, limit=1
                $region63: #{double_conv.3} parent=54 // loop_pre_header
                  _
                $region64: #{double_conv.3} parent=54 // loop_header
                  %s5184 = sphi 0, %s5188
                  %p5185 = scmp.ge.s32.totalorder %s5184, 1
                  %s5189 = sphi %s5079, %s5079
                  %s5190 = sphi %s5090, %s5090
                $region65: #{double_conv.3} parent=54 // loop_header_branch
                  %5187 = sbr.rel (%p5185) target = $region69
                $region66: #{double_conv.3} parent=54 // loop_body
                  %v5191 = vld [vmem:[%s5189] sm:%s5182]
                  %5192 = vst [vmem:[%s5190] sm:%s5182] %v5191
                  %v5193 = vld [vmem:[%s5189 + $0x4] sm:%s5182]
                  %5194 = vst [vmem:[%s5190 + $0x4] sm:%s5182] %v5193
                  %v5195 = vld [vmem:[%s5189 + $0x8] sm:%s5182]
                  %5196 = vst [vmem:[%s5190 + $0x8] sm:%s5182] %v5195
                  %v5197 = vld [vmem:[%s5189 + $0xc] sm:%s5182]
                  %5198 = vst [vmem:[%s5190 + $0xc] sm:%s5182] %v5197
                  %v5199 = vld [vmem:[%s5189 + $0x10] sm:%s5182]
                  %5200 = vst [vmem:[%s5190 + $0x10] sm:%s5182] %v5199
                  %v5201 = vld [vmem:[%s5189 + $0x14] sm:%s5182]
                  %5202 = vst [vmem:[%s5190 + $0x14] sm:%s5182] %v5201
                  %v5203 = vld [vmem:[%s5189 + $0x18] sm:%s5182]
                  %5204 = vst [vmem:[%s5190 + $0x18] sm:%s5182] %v5203
                  %v5205 = vld [vmem:[%s5189 + $0x1c] sm:%s5182]
                  %5206 = vst [vmem:[%s5190 + $0x1c] sm:%s5182] %v5205
                  %v5207 = vld [vmem:[%s5189 + $0x20] sm:%s5182]
                  %5208 = vst [vmem:[%s5190 + $0x20] sm:%s5182] %v5207
                  %v5209 = vld [vmem:[%s5189 + $0x24] sm:%s5182]
                  %5210 = vst [vmem:[%s5190 + $0x24] sm:%s5182] %v5209
                  %v5211 = vld [vmem:[%s5189 + $0x28] sm:%s5182]
                  %5212 = vst [vmem:[%s5190 + $0x28] sm:%s5182] %v5211
                  %v5213 = vld [vmem:[%s5189 + $0x2c] sm:%s5182]
                  %5214 = vst [vmem:[%s5190 + $0x2c] sm:%s5182] %v5213
                  %v5215 = vld [vmem:[%s5189 + $0x30] sm:%s5182]
                  %5216 = vst [vmem:[%s5190 + $0x30] sm:%s5182] %v5215
                  %v5217 = vld [vmem:[%s5189 + $0x34] sm:%s5182]
                  %5218 = vst [vmem:[%s5190 + $0x34] sm:%s5182] %v5217
                  %v5219 = vld [vmem:[%s5189 + $0x38] sm:%s5182]
                  %5220 = vst [vmem:[%s5190 + $0x38] sm:%s5182] %v5219
                  %v5221 = vld [vmem:[%s5189 + $0x3c] sm:%s5182]
                  %5222 = vst [vmem:[%s5190 + $0x3c] sm:%s5182] %v5221
                  %v5223 = vld [vmem:[%s5189 + $0x40] sm:%s5182]
                  %5224 = vst [vmem:[%s5190 + $0x80] sm:%s5182] %v5223
                  %v5225 = vld [vmem:[%s5189 + $0x44] sm:%s5182]
                  %5226 = vst [vmem:[%s5190 + $0x84] sm:%s5182] %v5225
                  %v5227 = vld [vmem:[%s5189 + $0x48] sm:%s5182]
                  %5228 = vst [vmem:[%s5190 + $0x88] sm:%s5182] %v5227
                  %v5229 = vld [vmem:[%s5189 + $0x4c] sm:%s5182]
                  %5230 = vst [vmem:[%s5190 + $0x8c] sm:%s5182] %v5229
                  %v5231 = vld [vmem:[%s5189 + $0x50] sm:%s5182]
                  %5232 = vst [vmem:[%s5190 + $0x90] sm:%s5182] %v5231
                  %v5233 = vld [vmem:[%s5189 + $0x54] sm:%s5182]
                  %5234 = vst [vmem:[%s5190 + $0x94] sm:%s5182] %v5233
                  %v5235 = vld [vmem:[%s5189 + $0x58] sm:%s5182]
                  %5236 = vst [vmem:[%s5190 + $0x98] sm:%s5182] %v5235
                  %v5237 = vld [vmem:[%s5189 + $0x5c] sm:%s5182]
                  %5238 = vst [vmem:[%s5190 + $0x9c] sm:%s5182] %v5237
                  %v5239 = vld [vmem:[%s5189 + $0x60] sm:%s5182]
                  %5240 = vst [vmem:[%s5190 + $0xa0] sm:%s5182] %v5239
                  %v5241 = vld [vmem:[%s5189 + $0x64] sm:%s5182]
                  %5242 = vst [vmem:[%s5190 + $0xa4] sm:%s5182] %v5241
                  %v5243 = vld [vmem:[%s5189 + $0x68] sm:%s5182]
                  %5244 = vst [vmem:[%s5190 + $0xa8] sm:%s5182] %v5243
                  %v5245 = vld [vmem:[%s5189 + $0x6c] sm:%s5182]
                  %5246 = vst [vmem:[%s5190 + $0xac] sm:%s5182] %v5245
                  %v5247 = vld [vmem:[%s5189 + $0x70] sm:%s5182]
                  %5248 = vst [vmem:[%s5190 + $0xb0] sm:%s5182] %v5247
                  %v5249 = vld [vmem:[%s5189 + $0x74] sm:%s5182]
                  %5250 = vst [vmem:[%s5190 + $0xb4] sm:%s5182] %v5249
                  %v5251 = vld [vmem:[%s5189 + $0x78] sm:%s5182]
                  %5252 = vst [vmem:[%s5190 + $0xb8] sm:%s5182] %v5251
                  %v5253 = vld [vmem:[%s5189 + $0x7c] sm:%s5182]
                  %5254 = vst [vmem:[%s5190 + $0xbc] sm:%s5182] %v5253
                $region67: #{double_conv.3} parent=54 // loop_footer
                  %s5188 = sadd.s32 1, %s5184
                $region68: #{double_conv.3} parent=54 // loop_footer_branch
                  %5183 = sbr.rel target = $region64
                $region69: #{double_conv.3} parent=54 // loop_exit
                  _
              $region55: #{double_conv.3} parent=39 // pred_fallthru
                _
            $region40: #{double_conv.3} parent=35 // pred_fallthru
              _
            // Predicated region
            $region41: #{double_conv.3} parent=35 // pred_check
              _
            $region42: #{double_conv.3} parent=35 // pred_check_branch
              %5096 = sbr.rel (0) target = $region44
            $region43: #{double_conv.3} parent=35 // pred_region
              %s5098 = ssub.s32 16, 1
              loop: start=0, step=1, limit=1
              $region45: #{double_conv.3} parent=43 // loop_pre_header
                _
              $region46: #{double_conv.3} parent=43 // loop_header
                %s5100 = sphi 0, %s5104
                %p5101 = scmp.ge.s32.totalorder %s5100, 1
                %s5105 = sphi %s5079, %s5079
                %s5106 = sphi %s5090, %s5090
              $region47: #{double_conv.3} parent=43 // loop_header_branch
                %5103 = sbr.rel (%p5101) target = $region51
              $region48: #{double_conv.3} parent=43 // loop_body
                %v5107 = vld [vmem:[%s5105] sm:%s5098]
                %5108 = vst [vmem:[%s5106] sm:%s5098] %v5107
                %v5109 = vld [vmem:[%s5105 + $0x4] sm:%s5098]
                %5110 = vst [vmem:[%s5106 + $0x4] sm:%s5098] %v5109
                %v5111 = vld [vmem:[%s5105 + $0x8] sm:%s5098]
                %5112 = vst [vmem:[%s5106 + $0x8] sm:%s5098] %v5111
                %v5113 = vld [vmem:[%s5105 + $0xc] sm:%s5098]
                %5114 = vst [vmem:[%s5106 + $0xc] sm:%s5098] %v5113
                %v5115 = vld [vmem:[%s5105 + $0x10] sm:%s5098]
                %5116 = vst [vmem:[%s5106 + $0x10] sm:%s5098] %v5115
                %v5117 = vld [vmem:[%s5105 + $0x14] sm:%s5098]
                %5118 = vst [vmem:[%s5106 + $0x14] sm:%s5098] %v5117
                %v5119 = vld [vmem:[%s5105 + $0x18] sm:%s5098]
                %5120 = vst [vmem:[%s5106 + $0x18] sm:%s5098] %v5119
                %v5121 = vld [vmem:[%s5105 + $0x1c] sm:%s5098]
                %5122 = vst [vmem:[%s5106 + $0x1c] sm:%s5098] %v5121
                %v5123 = vld [vmem:[%s5105 + $0x20] sm:%s5098]
                %5124 = vst [vmem:[%s5106 + $0x20] sm:%s5098] %v5123
                %v5125 = vld [vmem:[%s5105 + $0x24] sm:%s5098]
                %5126 = vst [vmem:[%s5106 + $0x24] sm:%s5098] %v5125
                %v5127 = vld [vmem:[%s5105 + $0x28] sm:%s5098]
                %5128 = vst [vmem:[%s5106 + $0x28] sm:%s5098] %v5127
                %v5129 = vld [vmem:[%s5105 + $0x2c] sm:%s5098]
                %5130 = vst [vmem:[%s5106 + $0x2c] sm:%s5098] %v5129
                %v5131 = vld [vmem:[%s5105 + $0x30] sm:%s5098]
                %5132 = vst [vmem:[%s5106 + $0x30] sm:%s5098] %v5131
                %v5133 = vld [vmem:[%s5105 + $0x34] sm:%s5098]
                %5134 = vst [vmem:[%s5106 + $0x34] sm:%s5098] %v5133
                %v5135 = vld [vmem:[%s5105 + $0x38] sm:%s5098]
                %5136 = vst [vmem:[%s5106 + $0x38] sm:%s5098] %v5135
                %v5137 = vld [vmem:[%s5105 + $0x3c] sm:%s5098]
                %5138 = vst [vmem:[%s5106 + $0x3c] sm:%s5098] %v5137
                %v5139 = vld [vmem:[%s5105 + $0x40] sm:%s5098]
                %5140 = vst [vmem:[%s5106 + $0x80] sm:%s5098] %v5139
                %v5141 = vld [vmem:[%s5105 + $0x44] sm:%s5098]
                %5142 = vst [vmem:[%s5106 + $0x84] sm:%s5098] %v5141
                %v5143 = vld [vmem:[%s5105 + $0x48] sm:%s5098]
                %5144 = vst [vmem:[%s5106 + $0x88] sm:%s5098] %v5143
                %v5145 = vld [vmem:[%s5105 + $0x4c] sm:%s5098]
                %5146 = vst [vmem:[%s5106 + $0x8c] sm:%s5098] %v5145
                %v5147 = vld [vmem:[%s5105 + $0x50] sm:%s5098]
                %5148 = vst [vmem:[%s5106 + $0x90] sm:%s5098] %v5147
                %v5149 = vld [vmem:[%s5105 + $0x54] sm:%s5098]
                %5150 = vst [vmem:[%s5106 + $0x94] sm:%s5098] %v5149
                %v5151 = vld [vmem:[%s5105 + $0x58] sm:%s5098]
                %5152 = vst [vmem:[%s5106 + $0x98] sm:%s5098] %v5151
                %v5153 = vld [vmem:[%s5105 + $0x5c] sm:%s5098]
                %5154 = vst [vmem:[%s5106 + $0x9c] sm:%s5098] %v5153
                %v5155 = vld [vmem:[%s5105 + $0x60] sm:%s5098]
                %5156 = vst [vmem:[%s5106 + $0xa0] sm:%s5098] %v5155
                %v5157 = vld [vmem:[%s5105 + $0x64] sm:%s5098]
                %5158 = vst [vmem:[%s5106 + $0xa4] sm:%s5098] %v5157
                %v5159 = vld [vmem:[%s5105 + $0x68] sm:%s5098]
                %5160 = vst [vmem:[%s5106 + $0xa8] sm:%s5098] %v5159
                %v5161 = vld [vmem:[%s5105 + $0x6c] sm:%s5098]
                %5162 = vst [vmem:[%s5106 + $0xac] sm:%s5098] %v5161
                %v5163 = vld [vmem:[%s5105 + $0x70] sm:%s5098]
                %5164 = vst [vmem:[%s5106 + $0xb0] sm:%s5098] %v5163
                %v5165 = vld [vmem:[%s5105 + $0x74] sm:%s5098]
                %5166 = vst [vmem:[%s5106 + $0xb4] sm:%s5098] %v5165
                %v5167 = vld [vmem:[%s5105 + $0x78] sm:%s5098]
                %5168 = vst [vmem:[%s5106 + $0xb8] sm:%s5098] %v5167
                %v5169 = vld [vmem:[%s5105 + $0x7c] sm:%s5098]
                %5170 = vst [vmem:[%s5106 + $0xbc] sm:%s5098] %v5169
              $region49: #{double_conv.3} parent=43 // loop_footer
                %s5104 = sadd.s32 1, %s5100
              $region50: #{double_conv.3} parent=43 // loop_footer_branch
                %5099 = sbr.rel target = $region46
              $region51: #{double_conv.3} parent=43 // loop_exit
                _
            $region44: #{double_conv.3} parent=35 // pred_fallthru
              _
          $region36: #{double_conv.3} parent=31 // pred_fallthru
            _
          %5255 = vnop
        $region32: #{double_conv.3} parent=27 // pred_fallthru
          _
        // Predicated region
        $region70: #{double_conv.3} parent=27 // pred_check
          %p5256 = pneg %p106
        $region71: #{double_conv.3} parent=27 // pred_check_branch
          %5258 = sbr.rel (%p5256) target = $region73
        $region72: #{double_conv.3} parent=27 // pred_region
          _
        $region73: #{double_conv.3} parent=27 // pred_fallthru
          _
      $region28: #{double_conv.3} parent=5 // pred_fallthru
        _
      %p5259 = scmp.le.s32.totalorder 2, %s10
      // Predicated region
      $region74: #{double_conv.3} parent=5 // pred_check
        %p5260 = pneg %p5259
      $region75: #{double_conv.3} parent=5 // pred_check_branch
        %5262 = sbr.rel (%p5260) target = $region77
      $region76: #{double_conv.3} parent=5 // pred_region
        %s5263 = ssub.s32 %s10, 2
        // Predicated region
        $region78: #{double_conv.3} parent=76 // pred_check
          %p5264 = pneg %p86
        $region79: #{double_conv.3} parent=76 // pred_check_branch
          %5266 = sbr.rel (%p5264) target = $region81
        $region80: #{double_conv.3} parent=76 // pred_region
          %s5267 = sand.u32 %s71, 1
          %s5268 = sand.u32 %s71, 1
          %s5269 = smul.addr %s5268, 128
          %s5270 = scalar_lea.vmem [#allocation2], %s5269
        $region81: #{double_conv.3} parent=76 // pred_fallthru
          _
        // Predicated region
        $region82: #{double_conv.3} parent=76 // pred_check
          %p5271 = pneg %p112
        $region83: #{double_conv.3} parent=76 // pred_check_branch
          %5273 = sbr.rel (%p5271) target = $region85
        $region84: #{double_conv.3} parent=76 // pred_region
          %p5274 = scmp.lt.s32.totalorder %s16, 1
          %s5275 = scalar_select %p5274, %s16, 1
          %s5276 = smul.addr %s5275, 2
          %s5277 = scalar_lea.vmem %s3, %s5276
        $region85: #{double_conv.3} parent=76 // pred_fallthru
          _
      $region77: #{double_conv.3} parent=5 // pred_fallthru
        _
    $region6: #{double_conv.3} parent=1 // loop_footer
      %s14 = sadd.s32 1, %s10
    $region7: #{double_conv.3} parent=1 // loop_footer_branch
      %9 = sbr.rel target = $region3
    $region8: #{double_conv.3} parent=1 // loop_exit
      _

</llo_original>
